<compile_context>
chip_gen: v5e
topology: v5e:2x2
jax: 0.10.0
libtpu: 0.0.40
codegen_flags: <defaults>
</compile_context>

<pallas_src>
import functools

import jax
import jax.numpy as jnp
from jax import lax
from jax.experimental import pallas as pl
from jax.experimental.pallas import tpu as pltpu


def _leaky(x, slope=0.1):
    return jnp.where(x > 0, x, slope * x)


# ----------------------------------------------------------------------------
# Pallas kernel 1: DA_conv, fully fused
# ----------------------------------------------------------------------------
def _da_conv_kernel(xpad_ref, x_ref, kd_ref, w1_ref, b1_ref, att_ref, out_ref,
                    *, H, W, C, ks, apply_out_relu):
    xpad = xpad_ref[0].astype(jnp.float32)            # (H+ks-1, W+ks-1, C)
    kd = kd_ref[0].astype(jnp.float32)                # (ks*ks, C)

    # dynamic per-(sample, channel) depthwise k x k conv  (VPU multiply-adds)
    dw = jnp.zeros((H, W, C), jnp.float32)
    for t in range(ks * ks):
        dy, dx = divmod(t, ks)
        win = xpad[dy:dy + H, dx:dx + W, :]
        dw = dw + win * kd[t:t + 1].reshape(1, 1, C)
    dw = _leaky(dw)                                   # relu inside DA_conv

    # 1x1 conv (Cin -> Cout) as a single (H*W, C) x (C, C) MXU matmul
    y = jnp.dot(dw.reshape(H * W, C), w1_ref[...].astype(jnp.float32),
                preferred_element_type=jnp.float32)
    y = y + b1_ref[...]                               # (1, C) broadcast
    y = y.reshape(H, W, C)

    # channel-attention branch:  + x * att
    y = y + x_ref[0].astype(jnp.float32) * att_ref[...].reshape(1, 1, C)

    if apply_out_relu:                                # DAB's outer LeakyReLU, fused
        y = _leaky(y)
    out_ref[0] = y.astype(out_ref.dtype)


def da_conv_pallas(x_nhwc, deg, p, *, ks=3, apply_out_relu=True):
    """DA_conv forward (optionally fused with the caller's LeakyReLU)."""
    B, H, W, C = x_nhwc.shape
    pad = (ks - 1) // 2

    # ---- tiny degradation-conditioned MLPs (batched wrapper glue) ----
    h = _leaky(deg @ p["k_w1"].T)                     # (B, 64)
    kflat = h @ p["k_w2"].T                           # (B, C*ks*ks)
    kd = kflat.reshape(B, C, ks * ks).transpose(0, 2, 1)   # (B, ks*ks, C)
    att = jax.nn.sigmoid(_leaky(deg @ p["ca_w1"].T) @ p["ca_w2"].T)
    att = att.reshape(B, 1, C)

    w1 = p["conv_w"][:, :, 0, 0].T                    # (Cin, Cout)
    b1 = p["conv_b"].reshape(1, C)
    xpad = jnp.pad(x_nhwc, ((0, 0), (pad, pad), (pad, pad), (0, 0)))
    Hp, Wp = H + 2 * pad, W + 2 * pad

    kernel = functools.partial(_da_conv_kernel, H=H, W=W, C=C, ks=ks,
                               apply_out_relu=apply_out_relu)
    return pl.pallas_call(
        kernel,
        out_shape=jax.ShapeDtypeStruct((B, H, W, C), x_nhwc.dtype),
        grid=(B,),
        in_specs=[
            pl.BlockSpec((1, Hp, Wp, C), lambda i: (i, 0, 0, 0)),
            pl.BlockSpec((1, H, W, C), lambda i: (i, 0, 0, 0)),
            pl.BlockSpec((1, ks * ks, C), lambda i: (i, 0, 0)),
            pl.BlockSpec((C, C), lambda i: (0, 0)),
            pl.BlockSpec((1, C), lambda i: (0, 0)),
            pl.BlockSpec((1, 1, C), lambda i: (i, 0, 0)),
        ],
        out_specs=pl.BlockSpec((1, H, W, C), lambda i: (i, 0, 0, 0)),
        compiler_params=pltpu.CompilerParams(
            dimension_semantics=("parallel",)),       # megacore-shard batch (v7x)
    )(xpad, x_nhwc, kd, w1, b1, att)


# ----------------------------------------------------------------------------
# Pallas kernel 2: default_conv (k x k, bias) + optional LeakyReLU + residual
# ----------------------------------------------------------------------------
def _conv_kxk_kernel(xpad_ref, w_ref, b_ref, *rest, H, W, C, ks, apply_relu,
                     add_residual):
    if add_residual:
        res_ref, out_ref = rest
    else:
        (out_ref,) = rest
    xpad = xpad_ref[0].astype(jnp.float32)            # (H+ks-1, W+ks-1, C)
    acc = jnp.zeros((H * W, C), jnp.float32)
    for t in range(ks * ks):                          # k*k shifted MXU matmuls
        dy, dx = divmod(t, ks)
        win = xpad[dy:dy + H, dx:dx + W, :].reshape(H * W, C)
        acc = acc + jnp.dot(win, w_ref[t], preferred_element_type=jnp.float32)
    acc = acc + b_ref[...]
    if apply_relu:
        acc = _leaky(acc)
    out = acc.reshape(H, W, C)
    if add_residual:
        out = out + res_ref[0].astype(jnp.float32)
    out_ref[0] = out.astype(out_ref.dtype)


def conv_kxk_pallas(x_nhwc, w_oihw, b, *, ks=3, apply_relu=False, residual=None):
    B, H, W, C = x_nhwc.shape
    pad = ks // 2                                     # default_conv padding
    # (Cout, Cin, kh, kw) -> (kh*kw, Cin, Cout): each tap is a (Cin, Cout) RHS
    wtaps = jnp.transpose(w_oihw, (2, 3, 1, 0)).reshape(ks * ks, C, C)
    b2 = b.reshape(1, C)
    xpad = jnp.pad(x_nhwc, ((0, 0), (pad, pad), (pad, pad), (0, 0)))
    Hp, Wp = H + 2 * pad, W + 2 * pad

    kernel = functools.partial(_conv_kxk_kernel, H=H, W=W, C=C, ks=ks,
                               apply_relu=apply_relu,
                               add_residual=residual is not None)
    in_specs = [
        pl.BlockSpec((1, Hp, Wp, C), lambda i: (i, 0, 0, 0)),
        pl.BlockSpec((ks * ks, C, C), lambda i: (0, 0, 0)),
        pl.BlockSpec((1, C), lambda i: (0, 0)),
    ]
    args = [xpad, wtaps, b2]
    if residual is not None:
        in_specs.append(pl.BlockSpec((1, H, W, C), lambda i: (i, 0, 0, 0)))
        args.append(residual)
    return pl.pallas_call(
        kernel,
        out_shape=jax.ShapeDtypeStruct((B, H, W, C), x_nhwc.dtype),
        grid=(B,),
        in_specs=in_specs,
        out_specs=pl.BlockSpec((1, H, W, C), lambda i: (i, 0, 0, 0)),
        compiler_params=pltpu.CompilerParams(
            dimension_semantics=("parallel",)),
    )(*args)


# ----------------------------------------------------------------------------
# DAB / DAG forward (Pallas path)
# ----------------------------------------------------------------------------
def dab_pallas(x, deg, bp, *, ks=3):
    out = da_conv_pallas(x, deg, bp["da1"], ks=ks, apply_out_relu=True)
    out = conv_kxk_pallas(out, bp["conv1_w"], bp["conv1_b"], ks=ks,
                          apply_relu=True)
    out = da_conv_pallas(out, deg, bp["da2"], ks=ks, apply_out_relu=True)
    out = conv_kxk_pallas(out, bp["conv2_w"], bp["conv2_b"], ks=ks,
                          apply_relu=False, residual=x)
    return out


def dag_forward_pallas(x_nchw, deg, params, *, ks=3):
    x = jnp.transpose(x_nchw, (0, 2, 3, 1))           # NCHW -> NHWC (glue)
    res = x
    for bp in params["blocks"]:
        res = dab_pallas(res, deg, bp, ks=ks)
    res = conv_kxk_pallas(res, params["last_w"], params["last_b"], ks=ks,
                          apply_relu=False, residual=x)
    return jnp.transpose(res, (0, 3, 1, 2))           # back to NCHW


# ----------------------------------------------------------------------------
# Pure-lax reference (mirrors the PyTorch forward, NCHW / OIHW layouts)
# ----------------------------------------------------------------------------
def _conv2d_ref(x, w, b, padding):
    out = lax.conv_general_dilated(
        x, w, (1, 1), [(padding, padding), (padding, padding)],
        dimension_numbers=("NCHW", "OIHW", "NCHW"))
    return out + b.reshape(1, -1, 1, 1)


def _da_conv_ref(x, deg, p, ks=3):
    B, C, H, W = x.shape
    h = _leaky(deg @ p["k_w1"].T)
    kflat = h @ p["k_w2"].T                           # (B, C*ks*ks)
    kern = kflat.reshape(B * C, 1, ks, ks)
    pad = (ks - 1) // 2
    dw = lax.conv_general_dilated(
        x.reshape(1, B * C, H, W), kern, (1, 1), [(pad, pad), (pad, pad)],
        dimension_numbers=("NCHW", "OIHW", "NCHW"), feature_group_count=B * C)
    dw = _leaky(dw).reshape(B, C, H, W)
    out = _conv2d_ref(dw, p["conv_w"], p["conv_b"], padding=0)
    att = jax.nn.sigmoid(_leaky(deg @ p["ca_w1"].T) @ p["ca_w2"].T)
    return out + x * att[:, :, None, None]


def dag_forward_ref(x, deg, params, ks=3):
    res = x
    for bp in params["blocks"]:
        out = _leaky(_da_conv_ref(res, deg, bp["da1"], ks))
        out = _leaky(_conv2d_ref(out, bp["conv1_w"], bp["conv1_b"], ks // 2))
        out = _leaky(_da_conv_ref(out, deg, bp["da2"], ks))
        res = _conv2d_ref(out, bp["conv2_w"], bp["conv2_b"], ks // 2) + res
    res = _conv2d_ref(res, params["last_w"], params["last_b"], ks // 2) + x
    return res


# ----------------------------------------------------------------------------
# Parameter init (PyTorch layouts: Conv OIHW, Linear (out, in))
# ----------------------------------------------------------------------------
def init_dag_params(key, n_feat=64, ks=3, reduction=8, n_blocks=2):
    assert n_feat == 64, "DA_conv hard-codes a 64-dim degradation representation"

    def nrm(k, shape, scale=0.05):
        return (scale * jax.random.normal(k, shape)).astype(jnp.float32)

    def da_params(k):
        k1, k2, k3, k4, k5, k6 = jax.random.split(k, 6)
        return {
            "k_w1": nrm(k1, (64, 64)),                       # Linear(64, 64)
            "k_w2": nrm(k2, (64 * ks * ks, 64)),             # Linear(64, 64*k*k)
            "conv_w": nrm(k3, (n_feat, n_feat, 1, 1)),       # 1x1 conv
            "conv_b": nrm(k4, (n_feat,)),
            "ca_w1": nrm(k5, (n_feat // reduction, n_feat)),  # CA conv 1
            "ca_w2": nrm(k6, (n_feat, n_feat // reduction), scale=0.5),
        }

    keys = jax.random.split(key, n_blocks + 1)
    blocks = []
    for bk in keys[:-1]:
        k1, k2, k3, k4, k5, k6 = jax.random.split(bk, 6)
        blocks.append({
            "da1": da_params(k1),
            "da2": da_params(k2),
            "conv1_w": nrm(k3, (n_feat, n_feat, ks, ks)),
            "conv1_b": nrm(k4, (n_feat,)),
            "conv2_w": nrm(k5, (n_feat, n_feat, ks, ks)),
            "conv2_b": nrm(k6, (n_feat,)),
        })
    kl1, kl2 = jax.random.split(keys[-1], 2)
    return {
        "blocks": blocks,
        "last_w": nrm(kl1, (n_feat, n_feat, ks, ks)),
        "last_b": nrm(kl2, (n_feat,)),
    }


if __name__ == "__main__":
    # Small but structurally faithful shapes (n_feat is fixed at 64 by DA_conv).
    B, C, H, W = 2, 64, 16, 16
    KS, RED, N_BLOCKS = 3, 8, 2

    root = jax.random.PRNGKey(0)
    kx, kd, kp = jax.random.split(root, 3)
    x = jax.random.normal(kx, (B, C, H, W), jnp.float32)      # feature map
    deg = jax.random.normal(kd, (B, C), jnp.float32)          # degradation rep
    params = init_dag_params(kp, n_feat=C, ks=KS, reduction=RED,
                             n_blocks=N_BLOCKS)

    fwd = jax.jit(dag_forward_pallas)
    out = fwd(x, deg, params)
    jax.block_until_ready(out)
    assert out.shape == (B, C, H, W)

    ref = jax.jit(dag_forward_ref)(x, deg, params)
    jax.block_until_ready(ref)

    err = float(jnp.max(jnp.abs(out - ref)))
    scale = float(jnp.max(jnp.abs(ref)))
    assert err <= 5e-2 * max(1.0, scale), f"max abs err {err} (scale {scale})"

    print("KERNEL_OK")
</pallas_src>

<mosaic_0001>
module attributes {stable_mosaic.version = 11 : i64} {
  func.func @_da_conv_kernel(%arg0: i32, %arg1: memref<1x18x18x64xf32, #tpu.memory_space<vmem>>, %arg2: memref<1x16x16x64xf32, #tpu.memory_space<vmem>>, %arg3: memref<1x9x64xf32, #tpu.memory_space<vmem>>, %arg4: memref<64x64xf32, #tpu.memory_space<vmem>>, %arg5: memref<1x64xf32, #tpu.memory_space<vmem>>, %arg6: memref<1x1x64xf32, #tpu.memory_space<vmem>>, %arg7: memref<1x16x16x64xf32, #tpu.memory_space<vmem>>) attributes {dimension_semantics = [#tpu.dimension_semantics<parallel>], iteration_bounds = array<i64: 2>, scalar_prefetch = 0 : i64, scratch_operands = 0 : i64, tpu.core_type = #tpu.core_type<tc>, window_params = [{transform_indices = @transform_0, window_bounds = array<i64: 1, 18, 18, 64>}, {transform_indices = @transform_1, window_bounds = array<i64: 1, 16, 16, 64>}, {transform_indices = @transform_2, window_bounds = array<i64: 1, 9, 64>}, {pipeline_mode = #tpu.pipeline_mode<synchronous>, transform_indices = @transform_3, window_bounds = array<i64: 64, 64>}, {pipeline_mode = #tpu.pipeline_mode<synchronous>, transform_indices = @transform_4, window_bounds = array<i64: 1, 64>}, {transform_indices = @transform_5, window_bounds = array<i64: 1, 1, 64>}, {transform_indices = @transform_6, window_bounds = array<i64: 1, 16, 16, 64>}]} {
    %c0 = arith.constant 0 : index
    %c0_0 = arith.constant 0 : index
    %c0_1 = arith.constant 0 : index
    %c0_2 = arith.constant 0 : index
    %0 = vector.load %arg1[%c0, %c0_0, %c0_1, %c0_2] : memref<1x18x18x64xf32, #tpu.memory_space<vmem>>, vector<1x18x18x64xf32>
    %1 = vector.shape_cast %0 : vector<1x18x18x64xf32> to vector<18x18x64xf32>
    %c0_3 = arith.constant 0 : index
    %c0_4 = arith.constant 0 : index
    %c0_5 = arith.constant 0 : index
    %2 = vector.load %arg3[%c0_3, %c0_4, %c0_5] : memref<1x9x64xf32, #tpu.memory_space<vmem>>, vector<1x9x64xf32>
    %3 = vector.shape_cast %2 : vector<1x9x64xf32> to vector<9x64xf32>
    %cst = arith.constant 0.000000e+00 : f32
    %4 = vector.broadcast %cst : f32 to vector<16x16x64xf32>
    %5 = vector.extract_strided_slice %1 {offsets = [0, 0, 0], sizes = [16, 16, 64], strides = [1, 1, 1]} : vector<18x18x64xf32> to vector<16x16x64xf32>
    %6 = vector.extract_strided_slice %3 {offsets = [0, 0], sizes = [1, 64], strides = [1, 1]} : vector<9x64xf32> to vector<1x64xf32>
    %7 = vector.shape_cast %6 : vector<1x64xf32> to vector<1x1x64xf32>
    %8 = vector.broadcast %7 : vector<1x1x64xf32> to vector<16x16x64xf32>
    %9 = arith.mulf %5, %8 : vector<16x16x64xf32>
    %10 = arith.addf %4, %9 : vector<16x16x64xf32>
    %11 = vector.extract_strided_slice %1 {offsets = [0, 1, 0], sizes = [16, 16, 64], strides = [1, 1, 1]} : vector<18x18x64xf32> to vector<16x16x64xf32>
    %12 = vector.extract_strided_slice %3 {offsets = [1, 0], sizes = [1, 64], strides = [1, 1]} : vector<9x64xf32> to vector<1x64xf32>
    %13 = vector.shape_cast %12 : vector<1x64xf32> to vector<1x1x64xf32>
    %14 = vector.broadcast %13 : vector<1x1x64xf32> to vector<16x16x64xf32>
    %15 = arith.mulf %11, %14 : vector<16x16x64xf32>
    %16 = arith.addf %10, %15 : vector<16x16x64xf32>
    %17 = vector.extract_strided_slice %1 {offsets = [0, 2, 0], sizes = [16, 16, 64], strides = [1, 1, 1]} : vector<18x18x64xf32> to vector<16x16x64xf32>
    %18 = vector.extract_strided_slice %3 {offsets = [2, 0], sizes = [1, 64], strides = [1, 1]} : vector<9x64xf32> to vector<1x64xf32>
    %19 = vector.shape_cast %18 : vector<1x64xf32> to vector<1x1x64xf32>
    %20 = vector.broadcast %19 : vector<1x1x64xf32> to vector<16x16x64xf32>
    %21 = arith.mulf %17, %20 : vector<16x16x64xf32>
    %22 = arith.addf %16, %21 : vector<16x16x64xf32>
    %23 = vector.extract_strided_slice %1 {offsets = [1, 0, 0], sizes = [16, 16, 64], strides = [1, 1, 1]} : vector<18x18x64xf32> to vector<16x16x64xf32>
    %24 = vector.extract_strided_slice %3 {offsets = [3, 0], sizes = [1, 64], strides = [1, 1]} : vector<9x64xf32> to vector<1x64xf32>
    %25 = vector.shape_cast %24 : vector<1x64xf32> to vector<1x1x64xf32>
    %26 = vector.broadcast %25 : vector<1x1x64xf32> to vector<16x16x64xf32>
    %27 = arith.mulf %23, %26 : vector<16x16x64xf32>
    %28 = arith.addf %22, %27 : vector<16x16x64xf32>
    %29 = vector.extract_strided_slice %1 {offsets = [1, 1, 0], sizes = [16, 16, 64], strides = [1, 1, 1]} : vector<18x18x64xf32> to vector<16x16x64xf32>
    %30 = vector.extract_strided_slice %3 {offsets = [4, 0], sizes = [1, 64], strides = [1, 1]} : vector<9x64xf32> to vector<1x64xf32>
    %31 = vector.shape_cast %30 : vector<1x64xf32> to vector<1x1x64xf32>
    %32 = vector.broadcast %31 : vector<1x1x64xf32> to vector<16x16x64xf32>
    %33 = arith.mulf %29, %32 : vector<16x16x64xf32>
    %34 = arith.addf %28, %33 : vector<16x16x64xf32>
    %35 = vector.extract_strided_slice %1 {offsets = [1, 2, 0], sizes = [16, 16, 64], strides = [1, 1, 1]} : vector<18x18x64xf32> to vector<16x16x64xf32>
    %36 = vector.extract_strided_slice %3 {offsets = [5, 0], sizes = [1, 64], strides = [1, 1]} : vector<9x64xf32> to vector<1x64xf32>
    %37 = vector.shape_cast %36 : vector<1x64xf32> to vector<1x1x64xf32>
    %38 = vector.broadcast %37 : vector<1x1x64xf32> to vector<16x16x64xf32>
    %39 = arith.mulf %35, %38 : vector<16x16x64xf32>
    %40 = arith.addf %34, %39 : vector<16x16x64xf32>
    %41 = vector.extract_strided_slice %1 {offsets = [2, 0, 0], sizes = [16, 16, 64], strides = [1, 1, 1]} : vector<18x18x64xf32> to vector<16x16x64xf32>
    %42 = vector.extract_strided_slice %3 {offsets = [6, 0], sizes = [1, 64], strides = [1, 1]} : vector<9x64xf32> to vector<1x64xf32>
    %43 = vector.shape_cast %42 : vector<1x64xf32> to vector<1x1x64xf32>
    %44 = vector.broadcast %43 : vector<1x1x64xf32> to vector<16x16x64xf32>
    %45 = arith.mulf %41, %44 : vector<16x16x64xf32>
    %46 = arith.addf %40, %45 : vector<16x16x64xf32>
    %47 = vector.extract_strided_slice %1 {offsets = [2, 1, 0], sizes = [16, 16, 64], strides = [1, 1, 1]} : vector<18x18x64xf32> to vector<16x16x64xf32>
    %48 = vector.extract_strided_slice %3 {offsets = [7, 0], sizes = [1, 64], strides = [1, 1]} : vector<9x64xf32> to vector<1x64xf32>
    %49 = vector.shape_cast %48 : vector<1x64xf32> to vector<1x1x64xf32>
    %50 = vector.broadcast %49 : vector<1x1x64xf32> to vector<16x16x64xf32>
    %51 = arith.mulf %47, %50 : vector<16x16x64xf32>
    %52 = arith.addf %46, %51 : vector<16x16x64xf32>
    %53 = vector.extract_strided_slice %1 {offsets = [2, 2, 0], sizes = [16, 16, 64], strides = [1, 1, 1]} : vector<18x18x64xf32> to vector<16x16x64xf32>
    %54 = vector.extract_strided_slice %3 {offsets = [8, 0], sizes = [1, 64], strides = [1, 1]} : vector<9x64xf32> to vector<1x64xf32>
    %55 = vector.shape_cast %54 : vector<1x64xf32> to vector<1x1x64xf32>
    %56 = vector.broadcast %55 : vector<1x1x64xf32> to vector<16x16x64xf32>
    %57 = arith.mulf %53, %56 : vector<16x16x64xf32>
    %58 = arith.addf %52, %57 : vector<16x16x64xf32>
    %cst_6 = arith.constant 0.000000e+00 : f32
    %59 = vector.broadcast %cst_6 : f32 to vector<16x16x64xf32>
    %60 = arith.cmpf ogt, %58, %59 : vector<16x16x64xf32>
    %cst_7 = arith.constant 1.000000e-01 : f32
    %61 = vector.broadcast %cst_7 : f32 to vector<16x16x64xf32>
    %62 = arith.mulf %61, %58 : vector<16x16x64xf32>
    %63 = arith.select %60, %58, %62 : vector<16x16x64xi1>, vector<16x16x64xf32>
    %64 = vector.shape_cast %63 : vector<16x16x64xf32> to vector<256x64xf32>
    %c0_8 = arith.constant 0 : index
    %c0_9 = arith.constant 0 : index
    %65 = vector.load %arg4[%c0_8, %c0_9] : memref<64x64xf32, #tpu.memory_space<vmem>>, vector<64x64xf32>
    %cst_10 = arith.constant dense<0.000000e+00> : vector<256x64xf32>
    %66 = tpu.matmul %64, %65, %cst_10 {dimension_numbers = #tpu.dot_dimension_numbers<[1], [0], [0], [1], [0, 0, 1, 1], [], []>} : vector<256x64xf32>, vector<64x64xf32>, vector<256x64xf32> -> vector<256x64xf32>
    %c0_11 = arith.constant 0 : index
    %c0_12 = arith.constant 0 : index
    %67 = vector.load %arg5[%c0_11, %c0_12] : memref<1x64xf32, #tpu.memory_space<vmem>>, vector<1x64xf32>
    %68 = vector.broadcast %67 : vector<1x64xf32> to vector<256x64xf32>
    %69 = arith.addf %66, %68 : vector<256x64xf32>
    %70 = vector.shape_cast %69 : vector<256x64xf32> to vector<16x16x64xf32>
    %c0_13 = arith.constant 0 : index
    %c0_14 = arith.constant 0 : index
    %c0_15 = arith.constant 0 : index
    %c0_16 = arith.constant 0 : index
    %71 = vector.load %arg2[%c0_13, %c0_14, %c0_15, %c0_16] : memref<1x16x16x64xf32, #tpu.memory_space<vmem>>, vector<1x16x16x64xf32>
    %72 = vector.shape_cast %71 : vector<1x16x16x64xf32> to vector<16x16x64xf32>
    %c0_17 = arith.constant 0 : index
    %c0_18 = arith.constant 0 : index
    %c0_19 = arith.constant 0 : index
    %73 = vector.load %arg6[%c0_17, %c0_18, %c0_19] : memref<1x1x64xf32, #tpu.memory_space<vmem>>, vector<1x1x64xf32>
    %74 = vector.broadcast %73 : vector<1x1x64xf32> to vector<16x16x64xf32>
    %75 = arith.mulf %72, %74 : vector<16x16x64xf32>
    %76 = arith.addf %70, %75 : vector<16x16x64xf32>
    %cst_20 = arith.constant 0.000000e+00 : f32
    %77 = vector.broadcast %cst_20 : f32 to vector<16x16x64xf32>
    %78 = arith.cmpf ogt, %76, %77 : vector<16x16x64xf32>
    %cst_21 = arith.constant 1.000000e-01 : f32
    %79 = vector.broadcast %cst_21 : f32 to vector<16x16x64xf32>
    %80 = arith.mulf %79, %76 : vector<16x16x64xf32>
    %81 = arith.select %78, %76, %80 : vector<16x16x64xi1>, vector<16x16x64xf32>
    %c0_22 = arith.constant 0 : index
    %c0_23 = arith.constant 0 : index
    %c0_24 = arith.constant 0 : index
    %c0_25 = arith.constant 0 : index
    %82 = vector.load %arg7[%c0_22, %c0_23, %c0_24, %c0_25] : memref<1x16x16x64xf32, #tpu.memory_space<vmem>>, vector<1x16x16x64xf32>
    %83 = vector.shape_cast %82 : vector<1x16x16x64xf32> to vector<16x16x64xf32>
    %84 = vector.shape_cast %81 : vector<16x16x64xf32> to vector<1x16x16x64xf32>
    tpu.vector_store %arg7[%c0_22, %c0_23, %c0_24, %c0_25], %84 {strides = array<i32>} : memref<1x16x16x64xf32, #tpu.memory_space<vmem>>, vector<1x16x16x64xf32>,
    return
  }
  func.func @transform_0(%arg0: i32) -> (i32, i32, i32, i32) {
    %c0_i32 = arith.constant 0 : i32
    %c0_i32_0 = arith.constant 0 : i32
    %c0_i32_1 = arith.constant 0 : i32
    %c0_i32_2 = arith.constant 0 : i32
    return %arg0, %c0_i32, %c0_i32_0, %c0_i32_1 : i32, i32, i32, i32
  }
  func.func @transform_1(%arg0: i32) -> (i32, i32, i32, i32) {
    %c0_i32 = arith.constant 0 : i32
    %c0_i32_0 = arith.constant 0 : i32
    %c0_i32_1 = arith.constant 0 : i32
    %c0_i32_2 = arith.constant 0 : i32
    return %arg0, %c0_i32, %c0_i32_0, %c0_i32_1 : i32, i32, i32, i32
  }
  func.func @transform_2(%arg0: i32) -> (i32, i32, i32) {
    %c0_i32 = arith.constant 0 : i32
    %c0_i32_0 = arith.constant 0 : i32
    %c0_i32_1 = arith.constant 0 : i32
    return %arg0, %c0_i32, %c0_i32_0 : i32, i32, i32
  }
  func.func @transform_3(%arg0: i32) -> (i32, i32) {
    %c0_i32 = arith.constant 0 : i32
    %c0_i32_0 = arith.constant 0 : i32
    %c0_i32_1 = arith.constant 0 : i32
    return %c0_i32, %c0_i32_0 : i32, i32
  }
  func.func @transform_4(%arg0: i32) -> (i32, i32) {
    %c0_i32 = arith.constant 0 : i32
    %c0_i32_0 = arith.constant 0 : i32
    %c0_i32_1 = arith.constant 0 : i32
    return %c0_i32, %c0_i32_0 : i32, i32
  }
  func.func @transform_5(%arg0: i32) -> (i32, i32, i32) {
    %c0_i32 = arith.constant 0 : i32
    %c0_i32_0 = arith.constant 0 : i32
    %c0_i32_1 = arith.constant 0 : i32
    return %arg0, %c0_i32, %c0_i32_0 : i32, i32, i32
  }
  func.func @transform_6(%arg0: i32) -> (i32, i32, i32, i32) {
    %c0_i32 = arith.constant 0 : i32
    %c0_i32_0 = arith.constant 0 : i32
    %c0_i32_1 = arith.constant 0 : i32
    %c0_i32_2 = arith.constant 0 : i32
    return %arg0, %c0_i32, %c0_i32_0, %c0_i32_1 : i32, i32, i32, i32
  }
}

module attributes {stable_mosaic.version = 11 : i64} {
  func.func @_conv_kxk_kernel(%arg0: i32, %arg1: memref<1x18x18x64xf32, #tpu.memory_space<vmem>>, %arg2: memref<9x64x64xf32, #tpu.memory_space<vmem>>, %arg3: memref<1x64xf32, #tpu.memory_space<vmem>>, %arg4: memref<1x16x16x64xf32, #tpu.memory_space<vmem>>) attributes {dimension_semantics = [#tpu.dimension_semantics<parallel>], iteration_bounds = array<i64: 2>, scalar_prefetch = 0 : i64, scratch_operands = 0 : i64, tpu.core_type = #tpu.core_type<tc>, window_params = [{transform_indices = @transform_0, window_bounds = array<i64: 1, 18, 18, 64>}, {pipeline_mode = #tpu.pipeline_mode<synchronous>, transform_indices = @transform_1, window_bounds = array<i64: 9, 64, 64>}, {pipeline_mode = #tpu.pipeline_mode<synchronous>, transform_indices = @transform_2, window_bounds = array<i64: 1, 64>}, {transform_indices = @transform_3, window_bounds = array<i64: 1, 16, 16, 64>}]} {
    %c0 = arith.constant 0 : index
    %c0_0 = arith.constant 0 : index
    %c0_1 = arith.constant 0 : index
    %c0_2 = arith.constant 0 : index
    %0 = vector.load %arg1[%c0, %c0_0, %c0_1, %c0_2] : memref<1x18x18x64xf32, #tpu.memory_space<vmem>>, vector<1x18x18x64xf32>
    %1 = vector.shape_cast %0 : vector<1x18x18x64xf32> to vector<18x18x64xf32>
    %cst = arith.constant 0.000000e+00 : f32
    %2 = vector.broadcast %cst : f32 to vector<256x64xf32>
    %3 = vector.extract_strided_slice %1 {offsets = [0, 0, 0], sizes = [16, 16, 64], strides = [1, 1, 1]} : vector<18x18x64xf32> to vector<16x16x64xf32>
    %4 = vector.shape_cast %3 : vector<16x16x64xf32> to vector<256x64xf32>
    %c0_3 = arith.constant 0 : index
    %c0_4 = arith.constant 0 : index
    %c0_5 = arith.constant 0 : index
    %5 = vector.load %arg2[%c0_3, %c0_4, %c0_5] : memref<9x64x64xf32, #tpu.memory_space<vmem>>, vector<1x64x64xf32>
    %6 = vector.shape_cast %5 : vector<1x64x64xf32> to vector<64x64xf32>
    %cst_6 = arith.constant dense<0.000000e+00> : vector<256x64xf32>
    %7 = tpu.matmul %4, %6, %cst_6 {dimension_numbers = #tpu.dot_dimension_numbers<[1], [0], [0], [1], [0, 0, 1, 1], [], []>} : vector<256x64xf32>, vector<64x64xf32>, vector<256x64xf32> -> vector<256x64xf32>
    %8 = arith.addf %2, %7 : vector<256x64xf32>
    %9 = vector.extract_strided_slice %1 {offsets = [0, 1, 0], sizes = [16, 16, 64], strides = [1, 1, 1]} : vector<18x18x64xf32> to vector<16x16x64xf32>
    %10 = vector.shape_cast %9 : vector<16x16x64xf32> to vector<256x64xf32>
    %c1 = arith.constant 1 : index
    %c0_7 = arith.constant 0 : index
    %c0_8 = arith.constant 0 : index
    %11 = vector.load %arg2[%c1, %c0_7, %c0_8] : memref<9x64x64xf32, #tpu.memory_space<vmem>>, vector<1x64x64xf32>
    %12 = vector.shape_cast %11 : vector<1x64x64xf32> to vector<64x64xf32>
    %cst_9 = arith.constant dense<0.000000e+00> : vector<256x64xf32>
    %13 = tpu.matmul %10, %12, %cst_9 {dimension_numbers = #tpu.dot_dimension_numbers<[1], [0], [0], [1], [0, 0, 1, 1], [], []>} : vector<256x64xf32>, vector<64x64xf32>, vector<256x64xf32> -> vector<256x64xf32>
    %14 = arith.addf %8, %13 : vector<256x64xf32>
    %15 = vector.extract_strided_slice %1 {offsets = [0, 2, 0], sizes = [16, 16, 64], strides = [1, 1, 1]} : vector<18x18x64xf32> to vector<16x16x64xf32>
    %16 = vector.shape_cast %15 : vector<16x16x64xf32> to vector<256x64xf32>
    %c2 = arith.constant 2 : index
    %c0_10 = arith.constant 0 : index
    %c0_11 = arith.constant 0 : index
    %17 = vector.load %arg2[%c2, %c0_10, %c0_11] : memref<9x64x64xf32, #tpu.memory_space<vmem>>, vector<1x64x64xf32>
    %18 = vector.shape_cast %17 : vector<1x64x64xf32> to vector<64x64xf32>
    %cst_12 = arith.constant dense<0.000000e+00> : vector<256x64xf32>
    %19 = tpu.matmul %16, %18, %cst_12 {dimension_numbers = #tpu.dot_dimension_numbers<[1], [0], [0], [1], [0, 0, 1, 1], [], []>} : vector<256x64xf32>, vector<64x64xf32>, vector<256x64xf32> -> vector<256x64xf32>
    %20 = arith.addf %14, %19 : vector<256x64xf32>
    %21 = vector.extract_strided_slice %1 {offsets = [1, 0, 0], sizes = [16, 16, 64], strides = [1, 1, 1]} : vector<18x18x64xf32> to vector<16x16x64xf32>
    %22 = vector.shape_cast %21 : vector<16x16x64xf32> to vector<256x64xf32>
    %c3 = arith.constant 3 : index
    %c0_13 = arith.constant 0 : index
    %c0_14 = arith.constant 0 : index
    %23 = vector.load %arg2[%c3, %c0_13, %c0_14] : memref<9x64x64xf32, #tpu.memory_space<vmem>>, vector<1x64x64xf32>
    %24 = vector.shape_cast %23 : vector<1x64x64xf32> to vector<64x64xf32>
    %cst_15 = arith.constant dense<0.000000e+00> : vector<256x64xf32>
    %25 = tpu.matmul %22, %24, %cst_15 {dimension_numbers = #tpu.dot_dimension_numbers<[1], [0], [0], [1], [0, 0, 1, 1], [], []>} : vector<256x64xf32>, vector<64x64xf32>, vector<256x64xf32> -> vector<256x64xf32>
    %26 = arith.addf %20, %25 : vector<256x64xf32>
    %27 = vector.extract_strided_slice %1 {offsets = [1, 1, 0], sizes = [16, 16, 64], strides = [1, 1, 1]} : vector<18x18x64xf32> to vector<16x16x64xf32>
    %28 = vector.shape_cast %27 : vector<16x16x64xf32> to vector<256x64xf32>
    %c4 = arith.constant 4 : index
    %c0_16 = arith.constant 0 : index
    %c0_17 = arith.constant 0 : index
    %29 = vector.load %arg2[%c4, %c0_16, %c0_17] : memref<9x64x64xf32, #tpu.memory_space<vmem>>, vector<1x64x64xf32>
    %30 = vector.shape_cast %29 : vector<1x64x64xf32> to vector<64x64xf32>
    %cst_18 = arith.constant dense<0.000000e+00> : vector<256x64xf32>
    %31 = tpu.matmul %28, %30, %cst_18 {dimension_numbers = #tpu.dot_dimension_numbers<[1], [0], [0], [1], [0, 0, 1, 1], [], []>} : vector<256x64xf32>, vector<64x64xf32>, vector<256x64xf32> -> vector<256x64xf32>
    %32 = arith.addf %26, %31 : vector<256x64xf32>
    %33 = vector.extract_strided_slice %1 {offsets = [1, 2, 0], sizes = [16, 16, 64], strides = [1, 1, 1]} : vector<18x18x64xf32> to vector<16x16x64xf32>
    %34 = vector.shape_cast %33 : vector<16x16x64xf32> to vector<256x64xf32>
    %c5 = arith.constant 5 : index
    %c0_19 = arith.constant 0 : index
    %c0_20 = arith.constant 0 : index
    %35 = vector.load %arg2[%c5, %c0_19, %c0_20] : memref<9x64x64xf32, #tpu.memory_space<vmem>>, vector<1x64x64xf32>
    %36 = vector.shape_cast %35 : vector<1x64x64xf32> to vector<64x64xf32>
    %cst_21 = arith.constant dense<0.000000e+00> : vector<256x64xf32>
    %37 = tpu.matmul %34, %36, %cst_21 {dimension_numbers = #tpu.dot_dimension_numbers<[1], [0], [0], [1], [0, 0, 1, 1], [], []>} : vector<256x64xf32>, vector<64x64xf32>, vector<256x64xf32> -> vector<256x64xf32>
    %38 = arith.addf %32, %37 : vector<256x64xf32>
    %39 = vector.extract_strided_slice %1 {offsets = [2, 0, 0], sizes = [16, 16, 64], strides = [1, 1, 1]} : vector<18x18x64xf32> to vector<16x16x64xf32>
    %40 = vector.shape_cast %39 : vector<16x16x64xf32> to vector<256x64xf32>
    %c6 = arith.constant 6 : index
    %c0_22 = arith.constant 0 : index
    %c0_23 = arith.constant 0 : index
    %41 = vector.load %arg2[%c6, %c0_22, %c0_23] : memref<9x64x64xf32, #tpu.memory_space<vmem>>, vector<1x64x64xf32>
    %42 = vector.shape_cast %41 : vector<1x64x64xf32> to vector<64x64xf32>
    %cst_24 = arith.constant dense<0.000000e+00> : vector<256x64xf32>
    %43 = tpu.matmul %40, %42, %cst_24 {dimension_numbers = #tpu.dot_dimension_numbers<[1], [0], [0], [1], [0, 0, 1, 1], [], []>} : vector<256x64xf32>, vector<64x64xf32>, vector<256x64xf32> -> vector<256x64xf32>
    %44 = arith.addf %38, %43 : vector<256x64xf32>
    %45 = vector.extract_strided_slice %1 {offsets = [2, 1, 0], sizes = [16, 16, 64], strides = [1, 1, 1]} : vector<18x18x64xf32> to vector<16x16x64xf32>
    %46 = vector.shape_cast %45 : vector<16x16x64xf32> to vector<256x64xf32>
    %c7 = arith.constant 7 : index
    %c0_25 = arith.constant 0 : index
    %c0_26 = arith.constant 0 : index
    %47 = vector.load %arg2[%c7, %c0_25, %c0_26] : memref<9x64x64xf32, #tpu.memory_space<vmem>>, vector<1x64x64xf32>
    %48 = vector.shape_cast %47 : vector<1x64x64xf32> to vector<64x64xf32>
    %cst_27 = arith.constant dense<0.000000e+00> : vector<256x64xf32>
    %49 = tpu.matmul %46, %48, %cst_27 {dimension_numbers = #tpu.dot_dimension_numbers<[1], [0], [0], [1], [0, 0, 1, 1], [], []>} : vector<256x64xf32>, vector<64x64xf32>, vector<256x64xf32> -> vector<256x64xf32>
    %50 = arith.addf %44, %49 : vector<256x64xf32>
    %51 = vector.extract_strided_slice %1 {offsets = [2, 2, 0], sizes = [16, 16, 64], strides = [1, 1, 1]} : vector<18x18x64xf32> to vector<16x16x64xf32>
    %52 = vector.shape_cast %51 : vector<16x16x64xf32> to vector<256x64xf32>
    %c8 = arith.constant 8 : index
    %c0_28 = arith.constant 0 : index
    %c0_29 = arith.constant 0 : index
    %53 = vector.load %arg2[%c8, %c0_28, %c0_29] : memref<9x64x64xf32, #tpu.memory_space<vmem>>, vector<1x64x64xf32>
    %54 = vector.shape_cast %53 : vector<1x64x64xf32> to vector<64x64xf32>
    %cst_30 = arith.constant dense<0.000000e+00> : vector<256x64xf32>
    %55 = tpu.matmul %52, %54, %cst_30 {dimension_numbers = #tpu.dot_dimension_numbers<[1], [0], [0], [1], [0, 0, 1, 1], [], []>} : vector<256x64xf32>, vector<64x64xf32>, vector<256x64xf32> -> vector<256x64xf32>
    %56 = arith.addf %50, %55 : vector<256x64xf32>
    %c0_31 = arith.constant 0 : index
    %c0_32 = arith.constant 0 : index
    %57 = vector.load %arg3[%c0_31, %c0_32] : memref<1x64xf32, #tpu.memory_space<vmem>>, vector<1x64xf32>
    %58 = vector.broadcast %57 : vector<1x64xf32> to vector<256x64xf32>
    %59 = arith.addf %56, %58 : vector<256x64xf32>
    %cst_33 = arith.constant 0.000000e+00 : f32
    %60 = vector.broadcast %cst_33 : f32 to vector<256x64xf32>
    %61 = arith.cmpf ogt, %59, %60 : vector<256x64xf32>
    %cst_34 = arith.constant 1.000000e-01 : f32
    %62 = vector.broadcast %cst_34 : f32 to vector<256x64xf32>
    %63 = arith.mulf %62, %59 : vector<256x64xf32>
    %64 = arith.select %61, %59, %63 : vector<256x64xi1>, vector<256x64xf32>
    %65 = vector.shape_cast %64 : vector<256x64xf32> to vector<16x16x64xf32>
    %c0_35 = arith.constant 0 : index
    %c0_36 = arith.constant 0 : index
    %c0_37 = arith.constant 0 : index
    %c0_38 = arith.constant 0 : index
    %66 = vector.load %arg4[%c0_35, %c0_36, %c0_37, %c0_38] : memref<1x16x16x64xf32, #tpu.memory_space<vmem>>, vector<1x16x16x64xf32>
    %67 = vector.shape_cast %66 : vector<1x16x16x64xf32> to vector<16x16x64xf32>
    %68 = vector.shape_cast %65 : vector<16x16x64xf32> to vector<1x16x16x64xf32>
    tpu.vector_store %arg4[%c0_35, %c0_36, %c0_37, %c0_38], %68 {strides = array<i32>} : memref<1x16x16x64xf32, #tpu.memory_space<vmem>>, vector<1x16x16x64xf32>,
    return
  }
  func.func @transform_0(%arg0: i32) -> (i32, i32, i32, i32) {
    %c0_i32 = arith.constant 0 : i32
    %c0_i32_0 = arith.constant 0 : i32
    %c0_i32_1 = arith.constant 0 : i32
    %c0_i32_2 = arith.constant 0 : i32
    return %arg0, %c0_i32, %c0_i32_0, %c0_i32_1 : i32, i32, i32, i32
  }
  func.func @transform_1(%arg0: i32) -> (i32, i32, i32) {
    %c0_i32 = arith.constant 0 : i32
    %c0_i32_0 = arith.constant 0 : i32
    %c0_i32_1 = arith.constant 0 : i32
    %c0_i32_2 = arith.constant 0 : i32
    return %c0_i32, %c0_i32_0, %c0_i32_1 : i32, i32, i32
  }
  func.func @transform_2(%arg0: i32) -> (i32, i32) {
    %c0_i32 = arith.constant 0 : i32
    %c0_i32_0 = arith.constant 0 : i32
    %c0_i32_1 = arith.constant 0 : i32
    return %c0_i32, %c0_i32_0 : i32, i32
  }
  func.func @transform_3(%arg0: i32) -> (i32, i32, i32, i32) {
    %c0_i32 = arith.constant 0 : i32
    %c0_i32_0 = arith.constant 0 : i32
    %c0_i32_1 = arith.constant 0 : i32
    %c0_i32_2 = arith.constant 0 : i32
    return %arg0, %c0_i32, %c0_i32_0, %c0_i32_1 : i32, i32, i32, i32
  }
}

module attributes {stable_mosaic.version = 11 : i64} {
  func.func @_conv_kxk_kernel(%arg0: i32, %arg1: memref<1x18x18x64xf32, #tpu.memory_space<vmem>>, %arg2: memref<9x64x64xf32, #tpu.memory_space<vmem>>, %arg3: memref<1x64xf32, #tpu.memory_space<vmem>>, %arg4: memref<1x16x16x64xf32, #tpu.memory_space<vmem>>, %arg5: memref<1x16x16x64xf32, #tpu.memory_space<vmem>>) attributes {dimension_semantics = [#tpu.dimension_semantics<parallel>], iteration_bounds = array<i64: 2>, scalar_prefetch = 0 : i64, scratch_operands = 0 : i64, tpu.core_type = #tpu.core_type<tc>, window_params = [{transform_indices = @transform_0, window_bounds = array<i64: 1, 18, 18, 64>}, {pipeline_mode = #tpu.pipeline_mode<synchronous>, transform_indices = @transform_1, window_bounds = array<i64: 9, 64, 64>}, {pipeline_mode = #tpu.pipeline_mode<synchronous>, transform_indices = @transform_2, window_bounds = array<i64: 1, 64>}, {transform_indices = @transform_3, window_bounds = array<i64: 1, 16, 16, 64>}, {transform_indices = @transform_4, window_bounds = array<i64: 1, 16, 16, 64>}]} {
    %c0 = arith.constant 0 : index
    %c0_0 = arith.constant 0 : index
    %c0_1 = arith.constant 0 : index
    %c0_2 = arith.constant 0 : index
    %0 = vector.load %arg1[%c0, %c0_0, %c0_1, %c0_2] : memref<1x18x18x64xf32, #tpu.memory_space<vmem>>, vector<1x18x18x64xf32>
    %1 = vector.shape_cast %0 : vector<1x18x18x64xf32> to vector<18x18x64xf32>
    %cst = arith.constant 0.000000e+00 : f32
    %2 = vector.broadcast %cst : f32 to vector<256x64xf32>
    %3 = vector.extract_strided_slice %1 {offsets = [0, 0, 0], sizes = [16, 16, 64], strides = [1, 1, 1]} : vector<18x18x64xf32> to vector<16x16x64xf32>
    %4 = vector.shape_cast %3 : vector<16x16x64xf32> to vector<256x64xf32>
    %c0_3 = arith.constant 0 : index
    %c0_4 = arith.constant 0 : index
    %c0_5 = arith.constant 0 : index
    %5 = vector.load %arg2[%c0_3, %c0_4, %c0_5] : memref<9x64x64xf32, #tpu.memory_space<vmem>>, vector<1x64x64xf32>
    %6 = vector.shape_cast %5 : vector<1x64x64xf32> to vector<64x64xf32>
    %cst_6 = arith.constant dense<0.000000e+00> : vector<256x64xf32>
    %7 = tpu.matmul %4, %6, %cst_6 {dimension_numbers = #tpu.dot_dimension_numbers<[1], [0], [0], [1], [0, 0, 1, 1], [], []>} : vector<256x64xf32>, vector<64x64xf32>, vector<256x64xf32> -> vector<256x64xf32>
    %8 = arith.addf %2, %7 : vector<256x64xf32>
    %9 = vector.extract_strided_slice %1 {offsets = [0, 1, 0], sizes = [16, 16, 64], strides = [1, 1, 1]} : vector<18x18x64xf32> to vector<16x16x64xf32>
    %10 = vector.shape_cast %9 : vector<16x16x64xf32> to vector<256x64xf32>
    %c1 = arith.constant 1 : index
    %c0_7 = arith.constant 0 : index
    %c0_8 = arith.constant 0 : index
    %11 = vector.load %arg2[%c1, %c0_7, %c0_8] : memref<9x64x64xf32, #tpu.memory_space<vmem>>, vector<1x64x64xf32>
    %12 = vector.shape_cast %11 : vector<1x64x64xf32> to vector<64x64xf32>
    %cst_9 = arith.constant dense<0.000000e+00> : vector<256x64xf32>
    %13 = tpu.matmul %10, %12, %cst_9 {dimension_numbers = #tpu.dot_dimension_numbers<[1], [0], [0], [1], [0, 0, 1, 1], [], []>} : vector<256x64xf32>, vector<64x64xf32>, vector<256x64xf32> -> vector<256x64xf32>
    %14 = arith.addf %8, %13 : vector<256x64xf32>
    %15 = vector.extract_strided_slice %1 {offsets = [0, 2, 0], sizes = [16, 16, 64], strides = [1, 1, 1]} : vector<18x18x64xf32> to vector<16x16x64xf32>
    %16 = vector.shape_cast %15 : vector<16x16x64xf32> to vector<256x64xf32>
    %c2 = arith.constant 2 : index
    %c0_10 = arith.constant 0 : index
    %c0_11 = arith.constant 0 : index
    %17 = vector.load %arg2[%c2, %c0_10, %c0_11] : memref<9x64x64xf32, #tpu.memory_space<vmem>>, vector<1x64x64xf32>
    %18 = vector.shape_cast %17 : vector<1x64x64xf32> to vector<64x64xf32>
    %cst_12 = arith.constant dense<0.000000e+00> : vector<256x64xf32>
    %19 = tpu.matmul %16, %18, %cst_12 {dimension_numbers = #tpu.dot_dimension_numbers<[1], [0], [0], [1], [0, 0, 1, 1], [], []>} : vector<256x64xf32>, vector<64x64xf32>, vector<256x64xf32> -> vector<256x64xf32>
    %20 = arith.addf %14, %19 : vector<256x64xf32>
    %21 = vector.extract_strided_slice %1 {offsets = [1, 0, 0], sizes = [16, 16, 64], strides = [1, 1, 1]} : vector<18x18x64xf32> to vector<16x16x64xf32>
    %22 = vector.shape_cast %21 : vector<16x16x64xf32> to vector<256x64xf32>
    %c3 = arith.constant 3 : index
    %c0_13 = arith.constant 0 : index
    %c0_14 = arith.constant 0 : index
    %23 = vector.load %arg2[%c3, %c0_13, %c0_14] : memref<9x64x64xf32, #tpu.memory_space<vmem>>, vector<1x64x64xf32>
    %24 = vector.shape_cast %23 : vector<1x64x64xf32> to vector<64x64xf32>
    %cst_15 = arith.constant dense<0.000000e+00> : vector<256x64xf32>
    %25 = tpu.matmul %22, %24, %cst_15 {dimension_numbers = #tpu.dot_dimension_numbers<[1], [0], [0], [1], [0, 0, 1, 1], [], []>} : vector<256x64xf32>, vector<64x64xf32>, vector<256x64xf32> -> vector<256x64xf32>
    %26 = arith.addf %20, %25 : vector<256x64xf32>
    %27 = vector.extract_strided_slice %1 {offsets = [1, 1, 0], sizes = [16, 16, 64], strides = [1, 1, 1]} : vector<18x18x64xf32> to vector<16x16x64xf32>
    %28 = vector.shape_cast %27 : vector<16x16x64xf32> to vector<256x64xf32>
    %c4 = arith.constant 4 : index
    %c0_16 = arith.constant 0 : index
    %c0_17 = arith.constant 0 : index
    %29 = vector.load %arg2[%c4, %c0_16, %c0_17] : memref<9x64x64xf32, #tpu.memory_space<vmem>>, vector<1x64x64xf32>
    %30 = vector.shape_cast %29 : vector<1x64x64xf32> to vector<64x64xf32>
    %cst_18 = arith.constant dense<0.000000e+00> : vector<256x64xf32>
    %31 = tpu.matmul %28, %30, %cst_18 {dimension_numbers = #tpu.dot_dimension_numbers<[1], [0], [0], [1], [0, 0, 1, 1], [], []>} : vector<256x64xf32>, vector<64x64xf32>, vector<256x64xf32> -> vector<256x64xf32>
    %32 = arith.addf %26, %31 : vector<256x64xf32>
    %33 = vector.extract_strided_slice %1 {offsets = [1, 2, 0], sizes = [16, 16, 64], strides = [1, 1, 1]} : vector<18x18x64xf32> to vector<16x16x64xf32>
    %34 = vector.shape_cast %33 : vector<16x16x64xf32> to vector<256x64xf32>
    %c5 = arith.constant 5 : index
    %c0_19 = arith.constant 0 : index
    %c0_20 = arith.constant 0 : index
    %35 = vector.load %arg2[%c5, %c0_19, %c0_20] : memref<9x64x64xf32, #tpu.memory_space<vmem>>, vector<1x64x64xf32>
    %36 = vector.shape_cast %35 : vector<1x64x64xf32> to vector<64x64xf32>
    %cst_21 = arith.constant dense<0.000000e+00> : vector<256x64xf32>
    %37 = tpu.matmul %34, %36, %cst_21 {dimension_numbers = #tpu.dot_dimension_numbers<[1], [0], [0], [1], [0, 0, 1, 1], [], []>} : vector<256x64xf32>, vector<64x64xf32>, vector<256x64xf32> -> vector<256x64xf32>
    %38 = arith.addf %32, %37 : vector<256x64xf32>
    %39 = vector.extract_strided_slice %1 {offsets = [2, 0, 0], sizes = [16, 16, 64], strides = [1, 1, 1]} : vector<18x18x64xf32> to vector<16x16x64xf32>
    %40 = vector.shape_cast %39 : vector<16x16x64xf32> to vector<256x64xf32>
    %c6 = arith.constant 6 : index
    %c0_22 = arith.constant 0 : index
    %c0_23 = arith.constant 0 : index
    %41 = vector.load %arg2[%c6, %c0_22, %c0_23] : memref<9x64x64xf32, #tpu.memory_space<vmem>>, vector<1x64x64xf32>
    %42 = vector.shape_cast %41 : vector<1x64x64xf32> to vector<64x64xf32>
    %cst_24 = arith.constant dense<0.000000e+00> : vector<256x64xf32>
    %43 = tpu.matmul %40, %42, %cst_24 {dimension_numbers = #tpu.dot_dimension_numbers<[1], [0], [0], [1], [0, 0, 1, 1], [], []>} : vector<256x64xf32>, vector<64x64xf32>, vector<256x64xf32> -> vector<256x64xf32>
    %44 = arith.addf %38, %43 : vector<256x64xf32>
    %45 = vector.extract_strided_slice %1 {offsets = [2, 1, 0], sizes = [16, 16, 64], strides = [1, 1, 1]} : vector<18x18x64xf32> to vector<16x16x64xf32>
    %46 = vector.shape_cast %45 : vector<16x16x64xf32> to vector<256x64xf32>
    %c7 = arith.constant 7 : index
    %c0_25 = arith.constant 0 : index
    %c0_26 = arith.constant 0 : index
    %47 = vector.load %arg2[%c7, %c0_25, %c0_26] : memref<9x64x64xf32, #tpu.memory_space<vmem>>, vector<1x64x64xf32>
    %48 = vector.shape_cast %47 : vector<1x64x64xf32> to vector<64x64xf32>
    %cst_27 = arith.constant dense<0.000000e+00> : vector<256x64xf32>
    %49 = tpu.matmul %46, %48, %cst_27 {dimension_numbers = #tpu.dot_dimension_numbers<[1], [0], [0], [1], [0, 0, 1, 1], [], []>} : vector<256x64xf32>, vector<64x64xf32>, vector<256x64xf32> -> vector<256x64xf32>
    %50 = arith.addf %44, %49 : vector<256x64xf32>
    %51 = vector.extract_strided_slice %1 {offsets = [2, 2, 0], sizes = [16, 16, 64], strides = [1, 1, 1]} : vector<18x18x64xf32> to vector<16x16x64xf32>
    %52 = vector.shape_cast %51 : vector<16x16x64xf32> to vector<256x64xf32>
    %c8 = arith.constant 8 : index
    %c0_28 = arith.constant 0 : index
    %c0_29 = arith.constant 0 : index
    %53 = vector.load %arg2[%c8, %c0_28, %c0_29] : memref<9x64x64xf32, #tpu.memory_space<vmem>>, vector<1x64x64xf32>
    %54 = vector.shape_cast %53 : vector<1x64x64xf32> to vector<64x64xf32>
    %cst_30 = arith.constant dense<0.000000e+00> : vector<256x64xf32>
    %55 = tpu.matmul %52, %54, %cst_30 {dimension_numbers = #tpu.dot_dimension_numbers<[1], [0], [0], [1], [0, 0, 1, 1], [], []>} : vector<256x64xf32>, vector<64x64xf32>, vector<256x64xf32> -> vector<256x64xf32>
    %56 = arith.addf %50, %55 : vector<256x64xf32>
    %c0_31 = arith.constant 0 : index
    %c0_32 = arith.constant 0 : index
    %57 = vector.load %arg3[%c0_31, %c0_32] : memref<1x64xf32, #tpu.memory_space<vmem>>, vector<1x64xf32>
    %58 = vector.broadcast %57 : vector<1x64xf32> to vector<256x64xf32>
    %59 = arith.addf %56, %58 : vector<256x64xf32>
    %60 = vector.shape_cast %59 : vector<256x64xf32> to vector<16x16x64xf32>
    %c0_33 = arith.constant 0 : index
    %c0_34 = arith.constant 0 : index
    %c0_35 = arith.constant 0 : index
    %c0_36 = arith.constant 0 : index
    %61 = vector.load %arg4[%c0_33, %c0_34, %c0_35, %c0_36] : memref<1x16x16x64xf32, #tpu.memory_space<vmem>>, vector<1x16x16x64xf32>
    %62 = vector.shape_cast %61 : vector<1x16x16x64xf32> to vector<16x16x64xf32>
    %63 = arith.addf %60, %62 : vector<16x16x64xf32>
    %c0_37 = arith.constant 0 : index
    %c0_38 = arith.constant 0 : index
    %c0_39 = arith.constant 0 : index
    %c0_40 = arith.constant 0 : index
    %64 = vector.load %arg5[%c0_37, %c0_38, %c0_39, %c0_40] : memref<1x16x16x64xf32, #tpu.memory_space<vmem>>, vector<1x16x16x64xf32>
    %65 = vector.shape_cast %64 : vector<1x16x16x64xf32> to vector<16x16x64xf32>
    %66 = vector.shape_cast %63 : vector<16x16x64xf32> to vector<1x16x16x64xf32>
    tpu.vector_store %arg5[%c0_37, %c0_38, %c0_39, %c0_40], %66 {strides = array<i32>} : memref<1x16x16x64xf32, #tpu.memory_space<vmem>>, vector<1x16x16x64xf32>,
    return
  }
  func.func @transform_0(%arg0: i32) -> (i32, i32, i32, i32) {
    %c0_i32 = arith.constant 0 : i32
    %c0_i32_0 = arith.constant 0 : i32
    %c0_i32_1 = arith.constant 0 : i32
    %c0_i32_2 = arith.constant 0 : i32
    return %arg0, %c0_i32, %c0_i32_0, %c0_i32_1 : i32, i32, i32, i32
  }
  func.func @transform_1(%arg0: i32) -> (i32, i32, i32) {
    %c0_i32 = arith.constant 0 : i32
    %c0_i32_0 = arith.constant 0 : i32
    %c0_i32_1 = arith.constant 0 : i32
    %c0_i32_2 = arith.constant 0 : i32
    return %c0_i32, %c0_i32_0, %c0_i32_1 : i32, i32, i32
  }
  func.func @transform_2(%arg0: i32) -> (i32, i32) {
    %c0_i32 = arith.constant 0 : i32
    %c0_i32_0 = arith.constant 0 : i32
    %c0_i32_1 = arith.constant 0 : i32
    return %c0_i32, %c0_i32_0 : i32, i32
  }
  func.func @transform_3(%arg0: i32) -> (i32, i32, i32, i32) {
    %c0_i32 = arith.constant 0 : i32
    %c0_i32_0 = arith.constant 0 : i32
    %c0_i32_1 = arith.constant 0 : i32
    %c0_i32_2 = arith.constant 0 : i32
    return %arg0, %c0_i32, %c0_i32_0, %c0_i32_1 : i32, i32, i32, i32
  }
  func.func @transform_4(%arg0: i32) -> (i32, i32, i32, i32) {
    %c0_i32 = arith.constant 0 : i32
    %c0_i32_0 = arith.constant 0 : i32
    %c0_i32_1 = arith.constant 0 : i32
    %c0_i32_2 = arith.constant 0 : i32
    return %arg0, %c0_i32, %c0_i32_0, %c0_i32_1 : i32, i32, i32, i32
  }
}

module attributes {stable_mosaic.version = 11 : i64} {
  func.func @_conv_kxk_kernel(%arg0: i32, %arg1: memref<1x18x18x64xf32, #tpu.memory_space<vmem>>, %arg2: memref<9x64x64xf32, #tpu.memory_space<vmem>>, %arg3: memref<1x64xf32, #tpu.memory_space<vmem>>, %arg4: memref<1x16x16x64xf32, #tpu.memory_space<vmem>>, %arg5: memref<1x16x16x64xf32, #tpu.memory_space<vmem>>) attributes {dimension_semantics = [#tpu.dimension_semantics<parallel>], iteration_bounds = array<i64: 2>, scalar_prefetch = 0 : i64, scratch_operands = 0 : i64, tpu.core_type = #tpu.core_type<tc>, window_params = [{transform_indices = @transform_0, window_bounds = array<i64: 1, 18, 18, 64>}, {pipeline_mode = #tpu.pipeline_mode<synchronous>, transform_indices = @transform_1, window_bounds = array<i64: 9, 64, 64>}, {pipeline_mode = #tpu.pipeline_mode<synchronous>, transform_indices = @transform_2, window_bounds = array<i64: 1, 64>}, {transform_indices = @transform_3, window_bounds = array<i64: 1, 16, 16, 64>}, {transform_indices = @transform_4, window_bounds = array<i64: 1, 16, 16, 64>}]} {
    %c0 = arith.constant 0 : index
    %c0_0 = arith.constant 0 : index
    %c0_1 = arith.constant 0 : index
    %c0_2 = arith.constant 0 : index
    %0 = vector.load %arg1[%c0, %c0_0, %c0_1, %c0_2] : memref<1x18x18x64xf32, #tpu.memory_space<vmem>>, vector<1x18x18x64xf32>
    %1 = vector.shape_cast %0 : vector<1x18x18x64xf32> to vector<18x18x64xf32>
    %cst = arith.constant 0.000000e+00 : f32
    %2 = vector.broadcast %cst : f32 to vector<256x64xf32>
    %3 = vector.extract_strided_slice %1 {offsets = [0, 0, 0], sizes = [16, 16, 64], strides = [1, 1, 1]} : vector<18x18x64xf32> to vector<16x16x64xf32>
    %4 = vector.shape_cast %3 : vector<16x16x64xf32> to vector<256x64xf32>
    %c0_3 = arith.constant 0 : index
    %c0_4 = arith.constant 0 : index
    %c0_5 = arith.constant 0 : index
    %5 = vector.load %arg2[%c0_3, %c0_4, %c0_5] : memref<9x64x64xf32, #tpu.memory_space<vmem>>, vector<1x64x64xf32>
    %6 = vector.shape_cast %5 : vector<1x64x64xf32> to vector<64x64xf32>
    %cst_6 = arith.constant dense<0.000000e+00> : vector<256x64xf32>
    %7 = tpu.matmul %4, %6, %cst_6 {dimension_numbers = #tpu.dot_dimension_numbers<[1], [0], [0], [1], [0, 0, 1, 1], [], []>} : vector<256x64xf32>, vector<64x64xf32>, vector<256x64xf32> -> vector<256x64xf32>
    %8 = arith.addf %2, %7 : vector<256x64xf32>
    %9 = vector.extract_strided_slice %1 {offsets = [0, 1, 0], sizes = [16, 16, 64], strides = [1, 1, 1]} : vector<18x18x64xf32> to vector<16x16x64xf32>
    %10 = vector.shape_cast %9 : vector<16x16x64xf32> to vector<256x64xf32>
    %c1 = arith.constant 1 : index
    %c0_7 = arith.constant 0 : index
    %c0_8 = arith.constant 0 : index
    %11 = vector.load %arg2[%c1, %c0_7, %c0_8] : memref<9x64x64xf32, #tpu.memory_space<vmem>>, vector<1x64x64xf32>
    %12 = vector.shape_cast %11 : vector<1x64x64xf32> to vector<64x64xf32>
    %cst_9 = arith.constant dense<0.000000e+00> : vector<256x64xf32>
    %13 = tpu.matmul %10, %12, %cst_9 {dimension_numbers = #tpu.dot_dimension_numbers<[1], [0], [0], [1], [0, 0, 1, 1], [], []>} : vector<256x64xf32>, vector<64x64xf32>, vector<256x64xf32> -> vector<256x64xf32>
    %14 = arith.addf %8, %13 : vector<256x64xf32>
    %15 = vector.extract_strided_slice %1 {offsets = [0, 2, 0], sizes = [16, 16, 64], strides = [1, 1, 1]} : vector<18x18x64xf32> to vector<16x16x64xf32>
    %16 = vector.shape_cast %15 : vector<16x16x64xf32> to vector<256x64xf32>
    %c2 = arith.constant 2 : index
    %c0_10 = arith.constant 0 : index
    %c0_11 = arith.constant 0 : index
    %17 = vector.load %arg2[%c2, %c0_10, %c0_11] : memref<9x64x64xf32, #tpu.memory_space<vmem>>, vector<1x64x64xf32>
    %18 = vector.shape_cast %17 : vector<1x64x64xf32> to vector<64x64xf32>
    %cst_12 = arith.constant dense<0.000000e+00> : vector<256x64xf32>
    %19 = tpu.matmul %16, %18, %cst_12 {dimension_numbers = #tpu.dot_dimension_numbers<[1], [0], [0], [1], [0, 0, 1, 1], [], []>} : vector<256x64xf32>, vector<64x64xf32>, vector<256x64xf32> -> vector<256x64xf32>
    %20 = arith.addf %14, %19 : vector<256x64xf32>
    %21 = vector.extract_strided_slice %1 {offsets = [1, 0, 0], sizes = [16, 16, 64], strides = [1, 1, 1]} : vector<18x18x64xf32> to vector<16x16x64xf32>
    %22 = vector.shape_cast %21 : vector<16x16x64xf32> to vector<256x64xf32>
    %c3 = arith.constant 3 : index
    %c0_13 = arith.constant 0 : index
    %c0_14 = arith.constant 0 : index
    %23 = vector.load %arg2[%c3, %c0_13, %c0_14] : memref<9x64x64xf32, #tpu.memory_space<vmem>>, vector<1x64x64xf32>
    %24 = vector.shape_cast %23 : vector<1x64x64xf32> to vector<64x64xf32>
    %cst_15 = arith.constant dense<0.000000e+00> : vector<256x64xf32>
    %25 = tpu.matmul %22, %24, %cst_15 {dimension_numbers = #tpu.dot_dimension_numbers<[1], [0], [0], [1], [0, 0, 1, 1], [], []>} : vector<256x64xf32>, vector<64x64xf32>, vector<256x64xf32> -> vector<256x64xf32>
    %26 = arith.addf %20, %25 : vector<256x64xf32>
    %27 = vector.extract_strided_slice %1 {offsets = [1, 1, 0], sizes = [16, 16, 64], strides = [1, 1, 1]} : vector<18x18x64xf32> to vector<16x16x64xf32>
    %28 = vector.shape_cast %27 : vector<16x16x64xf32> to vector<256x64xf32>
    %c4 = arith.constant 4 : index
    %c0_16 = arith.constant 0 : index
    %c0_17 = arith.constant 0 : index
    %29 = vector.load %arg2[%c4, %c0_16, %c0_17] : memref<9x64x64xf32, #tpu.memory_space<vmem>>, vector<1x64x64xf32>
    %30 = vector.shape_cast %29 : vector<1x64x64xf32> to vector<64x64xf32>
    %cst_18 = arith.constant dense<0.000000e+00> : vector<256x64xf32>
    %31 = tpu.matmul %28, %30, %cst_18 {dimension_numbers = #tpu.dot_dimension_numbers<[1], [0], [0], [1], [0, 0, 1, 1], [], []>} : vector<256x64xf32>, vector<64x64xf32>, vector<256x64xf32> -> vector<256x64xf32>
    %32 = arith.addf %26, %31 : vector<256x64xf32>
    %33 = vector.extract_strided_slice %1 {offsets = [1, 2, 0], sizes = [16, 16, 64], strides = [1, 1, 1]} : vector<18x18x64xf32> to vector<16x16x64xf32>
    %34 = vector.shape_cast %33 : vector<16x16x64xf32> to vector<256x64xf32>
    %c5 = arith.constant 5 : index
    %c0_19 = arith.constant 0 : index
    %c0_20 = arith.constant 0 : index
    %35 = vector.load %arg2[%c5, %c0_19, %c0_20] : memref<9x64x64xf32, #tpu.memory_space<vmem>>, vector<1x64x64xf32>
    %36 = vector.shape_cast %35 : vector<1x64x64xf32> to vector<64x64xf32>
    %cst_21 = arith.constant dense<0.000000e+00> : vector<256x64xf32>
    %37 = tpu.matmul %34, %36, %cst_21 {dimension_numbers = #tpu.dot_dimension_numbers<[1], [0], [0], [1], [0, 0, 1, 1], [], []>} : vector<256x64xf32>, vector<64x64xf32>, vector<256x64xf32> -> vector<256x64xf32>
    %38 = arith.addf %32, %37 : vector<256x64xf32>
    %39 = vector.extract_strided_slice %1 {offsets = [2, 0, 0], sizes = [16, 16, 64], strides = [1, 1, 1]} : vector<18x18x64xf32> to vector<16x16x64xf32>
    %40 = vector.shape_cast %39 : vector<16x16x64xf32> to vector<256x64xf32>
    %c6 = arith.constant 6 : index
    %c0_22 = arith.constant 0 : index
    %c0_23 = arith.constant 0 : index
    %41 = vector.load %arg2[%c6, %c0_22, %c0_23] : memref<9x64x64xf32, #tpu.memory_space<vmem>>, vector<1x64x64xf32>
    %42 = vector.shape_cast %41 : vector<1x64x64xf32> to vector<64x64xf32>
    %cst_24 = arith.constant dense<0.000000e+00> : vector<256x64xf32>
    %43 = tpu.matmul %40, %42, %cst_24 {dimension_numbers = #tpu.dot_dimension_numbers<[1], [0], [0], [1], [0, 0, 1, 1], [], []>} : vector<256x64xf32>, vector<64x64xf32>, vector<256x64xf32> -> vector<256x64xf32>
    %44 = arith.addf %38, %43 : vector<256x64xf32>
    %45 = vector.extract_strided_slice %1 {offsets = [2, 1, 0], sizes = [16, 16, 64], strides = [1, 1, 1]} : vector<18x18x64xf32> to vector<16x16x64xf32>
    %46 = vector.shape_cast %45 : vector<16x16x64xf32> to vector<256x64xf32>
    %c7 = arith.constant 7 : index
    %c0_25 = arith.constant 0 : index
    %c0_26 = arith.constant 0 : index
    %47 = vector.load %arg2[%c7, %c0_25, %c0_26] : memref<9x64x64xf32, #tpu.memory_space<vmem>>, vector<1x64x64xf32>
    %48 = vector.shape_cast %47 : vector<1x64x64xf32> to vector<64x64xf32>
    %cst_27 = arith.constant dense<0.000000e+00> : vector<256x64xf32>
    %49 = tpu.matmul %46, %48, %cst_27 {dimension_numbers = #tpu.dot_dimension_numbers<[1], [0], [0], [1], [0, 0, 1, 1], [], []>} : vector<256x64xf32>, vector<64x64xf32>, vector<256x64xf32> -> vector<256x64xf32>
    %50 = arith.addf %44, %49 : vector<256x64xf32>
    %51 = vector.extract_strided_slice %1 {offsets = [2, 2, 0], sizes = [16, 16, 64], strides = [1, 1, 1]} : vector<18x18x64xf32> to vector<16x16x64xf32>
    %52 = vector.shape_cast %51 : vector<16x16x64xf32> to vector<256x64xf32>
    %c8 = arith.constant 8 : index
    %c0_28 = arith.constant 0 : index
    %c0_29 = arith.constant 0 : index
    %53 = vector.load %arg2[%c8, %c0_28, %c0_29] : memref<9x64x64xf32, #tpu.memory_space<vmem>>, vector<1x64x64xf32>
    %54 = vector.shape_cast %53 : vector<1x64x64xf32> to vector<64x64xf32>
    %cst_30 = arith.constant dense<0.000000e+00> : vector<256x64xf32>
    %55 = tpu.matmul %52, %54, %cst_30 {dimension_numbers = #tpu.dot_dimension_numbers<[1], [0], [0], [1], [0, 0, 1, 1], [], []>} : vector<256x64xf32>, vector<64x64xf32>, vector<256x64xf32> -> vector<256x64xf32>
    %56 = arith.addf %50, %55 : vector<256x64xf32>
    %c0_31 = arith.constant 0 : index
    %c0_32 = arith.constant 0 : index
    %57 = vector.load %arg3[%c0_31, %c0_32] : memref<1x64xf32, #tpu.memory_space<vmem>>, vector<1x64xf32>
    %58 = vector.broadcast %57 : vector<1x64xf32> to vector<256x64xf32>
    %59 = arith.addf %56, %58 : vector<256x64xf32>
    %60 = vector.shape_cast %59 : vector<256x64xf32> to vector<16x16x64xf32>
    %c0_33 = arith.constant 0 : index
    %c0_34 = arith.constant 0 : index
    %c0_35 = arith.constant 0 : index
    %c0_36 = arith.constant 0 : index
    %61 = vector.load %arg4[%c0_33, %c0_34, %c0_35, %c0_36] : memref<1x16x16x64xf32, #tpu.memory_space<vmem>>, vector<1x16x16x64xf32>
    %62 = vector.shape_cast %61 : vector<1x16x16x64xf32> to vector<16x16x64xf32>
    %63 = arith.addf %60, %62 : vector<16x16x64xf32>
    %c0_37 = arith.constant 0 : index
    %c0_38 = arith.constant 0 : index
    %c0_39 = arith.constant 0 : index
    %c0_40 = arith.constant 0 : index
    %64 = vector.load %arg5[%c0_37, %c0_38, %c0_39, %c0_40] : memref<1x16x16x64xf32, #tpu.memory_space<vmem>>, vector<1x16x16x64xf32>
    %65 = vector.shape_cast %64 : vector<1x16x16x64xf32> to vector<16x16x64xf32>
    %66 = vector.shape_cast %63 : vector<16x16x64xf32> to vector<1x16x16x64xf32>
    tpu.vector_store %arg5[%c0_37, %c0_38, %c0_39, %c0_40], %66 {strides = array<i32>} : memref<1x16x16x64xf32, #tpu.memory_space<vmem>>, vector<1x16x16x64xf32>,
    return
  }
  func.func @transform_0(%arg0: i32) -> (i32, i32, i32, i32) {
    %c0_i32 = arith.constant 0 : i32
    %c0_i32_0 = arith.constant 0 : i32
    %c0_i32_1 = arith.constant 0 : i32
    %c0_i32_2 = arith.constant 0 : i32
    return %arg0, %c0_i32, %c0_i32_0, %c0_i32_1 : i32, i32, i32, i32
  }
  func.func @transform_1(%arg0: i32) -> (i32, i32, i32) {
    %c0_i32 = arith.constant 0 : i32
    %c0_i32_0 = arith.constant 0 : i32
    %c0_i32_1 = arith.constant 0 : i32
    %c0_i32_2 = arith.constant 0 : i32
    return %c0_i32, %c0_i32_0, %c0_i32_1 : i32, i32, i32
  }
  func.func @transform_2(%arg0: i32) -> (i32, i32) {
    %c0_i32 = arith.constant 0 : i32
    %c0_i32_0 = arith.constant 0 : i32
    %c0_i32_1 = arith.constant 0 : i32
    return %c0_i32, %c0_i32_0 : i32, i32
  }
  func.func @transform_3(%arg0: i32) -> (i32, i32, i32, i32) {
    %c0_i32 = arith.constant 0 : i32
    %c0_i32_0 = arith.constant 0 : i32
    %c0_i32_1 = arith.constant 0 : i32
    %c0_i32_2 = arith.constant 0 : i32
    return %arg0, %c0_i32, %c0_i32_0, %c0_i32_1 : i32, i32, i32, i32
  }
  func.func @transform_4(%arg0: i32) -> (i32, i32, i32, i32) {
    %c0_i32 = arith.constant 0 : i32
    %c0_i32_0 = arith.constant 0 : i32
    %c0_i32_1 = arith.constant 0 : i32
    %c0_i32_2 = arith.constant 0 : i32
    return %arg0, %c0_i32, %c0_i32_0, %c0_i32_1 : i32, i32, i32, i32
  }
}

</mosaic_0001>

<llo_original>
// kernel: dag_forward_pallas.17
$region0: #{dag_forward_pallas.17}
  #allocation0 [shape = 'u32[]', space=smem, size = 0x4, offset = 0x4, fixed_abs, tag = 'smem constant byte address 0x4 - core index']
  #allocation1 [shape = 'u32[72,128]{1,0:T(1,128)}', space=vmem, size = 0x9000, scoped, tag = 'internal scratch']
  %s0 = inlined_call_operand.vmem [shape: f32[2,18,18,64], index: 0, kind: input, shape index: {}]
  %s1 = inlined_call_operand.vmem [shape: f32[9,64,64], index: 1, kind: input, shape index: {}]
  %s2 = inlined_call_operand.vmem [shape: f32[1,64], index: 2, kind: input, shape index: {}]
  %s3 = inlined_call_operand.vmem [shape: f32[2,16,16,64], index: 3, kind: input, shape index: {}]
  %s4 = inlined_call_operand.hbm [shape: f32[2,16,16,64], index: 4, kind: output, shape index: {}]
  %s5 = sld [smem:[#allocation0]]
  $region49: #{dag_forward_pallas.17} parent=0
    _
  %s7 = ssub.s32 1, %s5
  %s8 = scalar_select 0, %s7, %s5
  $region1: #{dag_forward_pallas.17} parent=0
    #allocation2 [shape = 'u8[262144]{0}', space=vmem, size = 0x40000, scoped, tag = 'output window, operand 0']
    #allocation3 [shape = 's32[2]{0}', space=sflag, size = 0x8, scoped, tag = 'scoped memory for dag_forward_pallas.17']
    %9 = vsyncpa [#allocation3], 0
    %s10 = scalar_lea.sflag [#allocation3], 1
    %11 = vsyncpa %s10, 0
    loop: start=0, step=1, limit=4
    $region2: #{dag_forward_pallas.17} parent=1 // loop_pre_header
      _
    $region3: #{dag_forward_pallas.17} parent=1 // loop_header
      %s13 = sphi 0, %s17
      %p14 = scmp.ge.s32.totalorder %s13, 4
      %s23 = sphi 0, %s25
      %s26 = sphi 0, %s23
      %s27 = sphi 0, %s26
      %s43 = sphi 0, %s27
      %s47 = sphi 0, %s47
      %s49 = sphi 0, %s47
      %s50 = sphi 0, %s49
      %s64 = sphi 0, %s50
      %s68 = sphi 0, %s68
      %s70 = sphi 0, %s68
      %s71 = sphi 0, %s70
      %s85 = sphi 0, %s71
      %s91 = sphi 0, %s93
      %s94 = sphi 0, %s91
      %s95 = sphi 0, %s94
      %s111 = sphi 0, %s95
      %s117 = sphi 0, %s119
      %s120 = sphi 0, %s117
      %s121 = sphi 0, %s120
      %s137 = sphi 0, %s121
    $region4: #{dag_forward_pallas.17} parent=1 // loop_header_branch
      %16 = sbr.rel (%p14) target = $region8
    $region5: #{dag_forward_pallas.17} parent=1 // loop_body
      %s18 = ssub.s32 %s13, 1
      %s19 = ssub.s32 %s13, 2
      %s20 = sadd.s32 %s13, 1
      %s21 = ssub.s32 %s13, %s20
      %p22 = scmp.eq.s32.totalorder %s21, 0
      %s24 = sadd.s32 %s23, 1
      %s25 = scalar_select %p22, %s23, %s24
      %p28 = pneg %p22
      %p29 = scmp.eq.s32.totalorder %s13, 1
      %p30 = por %p28, %p29
      %p31 = scmp.ne.s32.totalorder %s23, %s26
      %p32 = scmp.eq.s32.totalorder %s13, 0
      %p33 = por %p31, %p32
      %p34 = scmp.ne.s32.totalorder %s23, %s26
      %p35 = scmp.eq.s32.totalorder %s18, 1
      %p36 = por %p34, %p35
      %p37 = scmp.ne.s32.totalorder %s26, %s27
      %p38 = scmp.eq.s32.totalorder %s18, 0
      %p39 = por %p37, %p38
      %p40 = scmp.ne.s32.totalorder %s26, %s27
      %p41 = scmp.eq.s32.totalorder %s19, 1
      %p42 = por %p40, %p41
      %p44 = scmp.ne.s32.totalorder %s27, %s43
      %p45 = scmp.eq.s32.totalorder %s19, 0
      %p46 = por %p44, %p45
      %s48 = sadd.s32 %s47, 1
      %p51 = scmp.eq.s32.totalorder %s13, 1
      %p52 = scmp.ne.s32.totalorder %s47, %s49
      %p53 = scmp.eq.s32.totalorder %s13, 0
      %p54 = por %p52, %p53
      %p55 = scmp.ne.s32.totalorder %s47, %s49
      %p56 = scmp.eq.s32.totalorder %s18, 1
      %p57 = por %p55, %p56
      %p58 = scmp.ne.s32.totalorder %s49, %s50
      %p59 = scmp.eq.s32.totalorder %s18, 0
      %p60 = por %p58, %p59
      %p61 = scmp.ne.s32.totalorder %s49, %s50
      %p62 = scmp.eq.s32.totalorder %s19, 1
      %p63 = por %p61, %p62
      %p65 = scmp.ne.s32.totalorder %s50, %s64
      %p66 = scmp.eq.s32.totalorder %s19, 0
      %p67 = por %p65, %p66
      %s69 = sadd.s32 %s68, 1
      %p72 = scmp.eq.s32.totalorder %s13, 1
      %p73 = scmp.ne.s32.totalorder %s68, %s70
      %p74 = scmp.eq.s32.totalorder %s13, 0
      %p75 = por %p73, %p74
      %p76 = scmp.ne.s32.totalorder %s68, %s70
      %p77 = scmp.eq.s32.totalorder %s18, 1
      %p78 = por %p76, %p77
      %p79 = scmp.ne.s32.totalorder %s70, %s71
      %p80 = scmp.eq.s32.totalorder %s18, 0
      %p81 = por %p79, %p80
      %p82 = scmp.ne.s32.totalorder %s70, %s71
      %p83 = scmp.eq.s32.totalorder %s19, 1
      %p84 = por %p82, %p83
      %p86 = scmp.ne.s32.totalorder %s71, %s85
      %p87 = scmp.eq.s32.totalorder %s19, 0
      %p88 = por %p86, %p87
      %s89 = ssub.s32 %s13, %s20
      %p90 = scmp.eq.s32.totalorder %s89, 0
      %s92 = sadd.s32 %s91, 1
      %s93 = scalar_select %p90, %s91, %s92
      %p96 = pneg %p90
      %p97 = scmp.eq.s32.totalorder %s13, 1
      %p98 = por %p96, %p97
      %p99 = scmp.ne.s32.totalorder %s91, %s94
      %p100 = scmp.eq.s32.totalorder %s13, 0
      %p101 = por %p99, %p100
      %p102 = scmp.ne.s32.totalorder %s91, %s94
      %p103 = scmp.eq.s32.totalorder %s18, 1
      %p104 = por %p102, %p103
      %p105 = scmp.ne.s32.totalorder %s94, %s95
      %p106 = scmp.eq.s32.totalorder %s18, 0
      %p107 = por %p105, %p106
      %p108 = scmp.ne.s32.totalorder %s94, %s95
      %p109 = scmp.eq.s32.totalorder %s19, 1
      %p110 = por %p108, %p109
      %p112 = scmp.ne.s32.totalorder %s95, %s111
      %p113 = scmp.eq.s32.totalorder %s19, 0
      %p114 = por %p112, %p113
      %s115 = ssub.s32 %s13, %s20
      %p116 = scmp.eq.s32.totalorder %s115, 0
      %s118 = sadd.s32 %s117, 1
      %s119 = scalar_select %p116, %s117, %s118
      %p122 = pneg %p116
      %p123 = scmp.eq.s32.totalorder %s13, 1
      %p124 = por %p122, %p123
      %p125 = scmp.ne.s32.totalorder %s117, %s120
      %p126 = scmp.eq.s32.totalorder %s13, 0
      %p127 = por %p125, %p126
      %p128 = scmp.ne.s32.totalorder %s117, %s120
      %p129 = scmp.eq.s32.totalorder %s18, 1
      %p130 = por %p128, %p129
      %p131 = scmp.ne.s32.totalorder %s120, %s121
      %p132 = scmp.eq.s32.totalorder %s18, 0
      %p133 = por %p131, %p132
      %p134 = scmp.ne.s32.totalorder %s120, %s121
      %p135 = scmp.eq.s32.totalorder %s19, 1
      %p136 = por %p134, %p135
      %p138 = scmp.ne.s32.totalorder %s121, %s137
      %p139 = scmp.eq.s32.totalorder %s19, 0
      %p140 = por %p138, %p139
      %p141 = scmp.le.s32.totalorder 1, %s13
      %p142 = scmp.lt.s32.totalorder %s13, 3
      %p143 = pnand %p141, %p142
      %p144 = pneg %p143
      // Predicated region
      $region9: #{dag_forward_pallas.17} parent=5 // pred_check
        _
      $region10: #{dag_forward_pallas.17} parent=5 // pred_check_branch
        %146 = sbr.rel (%p143) target = $region12
      $region11: #{dag_forward_pallas.17} parent=5 // pred_region
        %s147 = ssub.s32 %s13, 1
        // Predicated region
        $region13: #{dag_forward_pallas.17} parent=11 // pred_check
          %p148 = pneg %p60
        $region14: #{dag_forward_pallas.17} parent=11 // pred_check_branch
          %150 = sbr.rel (%p148) target = $region16
        $region15: #{dag_forward_pallas.17} parent=11 // pred_region
          _
        $region16: #{dag_forward_pallas.17} parent=11 // pred_fallthru
          _
        // Predicated region
        $region17: #{dag_forward_pallas.17} parent=11 // pred_check
          %p151 = pneg %p81
        $region18: #{dag_forward_pallas.17} parent=11 // pred_check_branch
          %153 = sbr.rel (%p151) target = $region20
        $region19: #{dag_forward_pallas.17} parent=11 // pred_region
          _
        $region20: #{dag_forward_pallas.17} parent=11 // pred_fallthru
          _
      $region12: #{dag_forward_pallas.17} parent=5 // pred_fallthru
        _
      %p154 = scmp.lt.s32.totalorder %s13, 2
      // Predicated region
      $region21: #{dag_forward_pallas.17} parent=5 // pred_check
        %p155 = pneg %p154
      $region22: #{dag_forward_pallas.17} parent=5 // pred_check_branch
        %157 = sbr.rel (%p155) target = $region24
      $region23: #{dag_forward_pallas.17} parent=5 // pred_region
        // Predicated region
        $region25: #{dag_forward_pallas.17} parent=23 // pred_check
          %p158 = pneg %p33
        $region26: #{dag_forward_pallas.17} parent=23 // pred_check_branch
          %160 = sbr.rel (%p158) target = $region28
        $region27: #{dag_forward_pallas.17} parent=23 // pred_region
          %p161 = scmp.lt.s32.totalorder %s13, 1
          %s162 = scalar_select %p161, %s13, 1
          %s163 = smul.addr %s162, 54
          %s164 = smul.addr %s163, 8
          %s165 = scalar_lea.vmem %s0, %s164
        $region28: #{dag_forward_pallas.17} parent=23 // pred_fallthru
          _
        // Predicated region
        $region29: #{dag_forward_pallas.17} parent=23 // pred_check
          %p166 = pneg %p101
        $region30: #{dag_forward_pallas.17} parent=23 // pred_check_branch
          %168 = sbr.rel (%p166) target = $region32
        $region31: #{dag_forward_pallas.17} parent=23 // pred_region
          %p169 = scmp.lt.s32.totalorder %s13, 1
          %s170 = scalar_select %p169, %s13, 1
          %s171 = smul.addr %s170, 32
          %s172 = smul.addr %s171, 8
          %s173 = scalar_lea.vmem %s3, %s172
        $region32: #{dag_forward_pallas.17} parent=23 // pred_fallthru
          _
      $region24: #{dag_forward_pallas.17} parent=5 // pred_fallthru
        _
      %p174 = scmp.le.s32.totalorder 1, %s13
      %p175 = scmp.lt.s32.totalorder %s13, 3
      %p176 = pnand %p174, %p175
      %p177 = pneg %p176
      // Predicated region
      $region33: #{dag_forward_pallas.17} parent=5 // pred_check
        _
      $region34: #{dag_forward_pallas.17} parent=5 // pred_check_branch
        %179 = sbr.rel (%p176) target = $region36
      $region35: #{dag_forward_pallas.17} parent=5 // pred_region
        %s180 = ssub.s32 %s13, 1
        %p181 = scmp.lt.s32.totalorder %s18, 1
        %s182 = scalar_select %p181, %s18, 1
        %s183 = smul.addr %s182, 54
        %s184 = smul.addr %s183, 8
        %s185 = scalar_lea.vmem %s0, %s184
        %p186 = pneg %p39
        %p187 = pneg %p36
        %p188 = pneg %p60
        %p189 = pneg %p57
        %p190 = pneg %p81
        %p191 = pneg %p78
        %p192 = scmp.lt.s32.totalorder %s18, 1
        %s193 = scalar_select %p192, %s18, 1
        %s194 = smul.addr %s193, 32
        %s195 = smul.addr %s194, 8
        %s196 = scalar_lea.vmem %s3, %s195
        %p197 = pneg %p107
        %p198 = pneg %p104
        %p199 = pneg %p133
        %p200 = pneg %p130
        %s201 = sand.u32 %s120, 1
        %s202 = scalar_lea.sflag [#allocation3], %s201
        %s203 = sand.u32 %s120, 1
        %s204 = smul.addr %s203, 256
        %s205 = scalar_lea.vmem [#allocation2], %s204
        %p206 = scmp.lt.s32.totalorder %s18, 1
        %s207 = scalar_select %p206, %s18, 1
        %s208 = smul.addr %s207, 54
        %s209 = smul.addr %s208, 8
        %s210 = scalar_lea.vmem %s0, %s209
        %p211 = scmp.lt.s32.totalorder %s18, 1
        %s212 = scalar_select %p211, %s18, 1
        %s213 = smul.addr %s212, 32
        %s214 = smul.addr %s213, 8
        %s215 = scalar_lea.vmem %s3, %s214
        %v216 = vld [vmem:[%s210] sm:$0xff]
        %v217 = vld [vmem:[%s210 + $0x8] sm:$0xff]
        %v218 = vld [vmem:[%s210 + $0x10] sm:$0x3]
        %v219 = vld [vmem:[%s210 + $0x18] sm:$0xff]
        %v220 = vld [vmem:[%s210 + $0x20] sm:$0xff]
        %v221 = vld [vmem:[%s210 + $0x28] sm:$0x3]
        %v222 = vld [vmem:[%s210 + $0x30] sm:$0xff]
        %v223 = vld [vmem:[%s210 + $0x38] sm:$0xff]
        %v224 = vld [vmem:[%s210 + $0x40] sm:$0x3]
        %v225 = vld [vmem:[%s210 + $0x48] sm:$0xff]
        %v226 = vld [vmem:[%s210 + $0x50] sm:$0xff]
        %v227 = vld [vmem:[%s210 + $0x58] sm:$0x3]
        %v228 = vld [vmem:[%s210 + $0x60] sm:$0xff]
        %v229 = vld [vmem:[%s210 + $0x68] sm:$0xff]
        %v230 = vld [vmem:[%s210 + $0x70] sm:$0x3]
        %v231 = vld [vmem:[%s210 + $0x78] sm:$0xff]
        %v232 = vld [vmem:[%s210 + $0x80] sm:$0xff]
        %v233 = vld [vmem:[%s210 + $0x88] sm:$0x3]
        %v234 = vld [vmem:[%s210 + $0x90] sm:$0xff]
        %v235 = vld [vmem:[%s210 + $0x98] sm:$0xff]
        %v236 = vld [vmem:[%s210 + $0xa0] sm:$0x3]
        %v237 = vld [vmem:[%s210 + $0xa8] sm:$0xff]
        %v238 = vld [vmem:[%s210 + $0xb0] sm:$0xff]
        %v239 = vld [vmem:[%s210 + $0xb8] sm:$0x3]
        %v240 = vld [vmem:[%s210 + $0xc0] sm:$0xff]
        %v241 = vld [vmem:[%s210 + $0xc8] sm:$0xff]
        %v242 = vld [vmem:[%s210 + $0xd0] sm:$0x3]
        %v243 = vld [vmem:[%s210 + $0xd8] sm:$0xff]
        %v244 = vld [vmem:[%s210 + $0xe0] sm:$0xff]
        %v245 = vld [vmem:[%s210 + $0xe8] sm:$0x3]
        %v246 = vld [vmem:[%s210 + $0xf0] sm:$0xff]
        %v247 = vld [vmem:[%s210 + $0xf8] sm:$0xff]
        %v248 = vld [vmem:[%s210 + $0x100] sm:$0x3]
        %v249 = vld [vmem:[%s210 + $0x108] sm:$0xff]
        %v250 = vld [vmem:[%s210 + $0x110] sm:$0xff]
        %v251 = vld [vmem:[%s210 + $0x118] sm:$0x3]
        %v252 = vld [vmem:[%s210 + $0x120] sm:$0xff]
        %v253 = vld [vmem:[%s210 + $0x128] sm:$0xff]
        %v254 = vld [vmem:[%s210 + $0x130] sm:$0x3]
        %v255 = vld [vmem:[%s210 + $0x138] sm:$0xff]
        %v256 = vld [vmem:[%s210 + $0x140] sm:$0xff]
        %v257 = vld [vmem:[%s210 + $0x148] sm:$0x3]
        %v258 = vld [vmem:[%s210 + $0x150] sm:$0xff]
        %v259 = vld [vmem:[%s210 + $0x158] sm:$0xff]
        %v260 = vld [vmem:[%s210 + $0x160] sm:$0x3]
        %v261 = vld [vmem:[%s210 + $0x168] sm:$0xff]
        %v262 = vld [vmem:[%s210 + $0x170] sm:$0xff]
        %v263 = vld [vmem:[%s210 + $0x178] sm:$0x3]
        %v264 = vld [vmem:[%s210 + $0x180] sm:$0xff]
        %v265 = vld [vmem:[%s210 + $0x188] sm:$0xff]
        %v266 = vld [vmem:[%s210 + $0x190] sm:$0x3]
        %v267 = vld [vmem:[%s210 + $0x198] sm:$0xff]
        %v268 = vld [vmem:[%s210 + $0x1a0] sm:$0xff]
        %v269 = vld [vmem:[%s210 + $0x1a8] sm:$0x3]
        %v270 = vld [vmem:[%s1] sm:$0xff]
        %v271 = vld [vmem:[%s1 + $0x8] sm:$0xff]
        %v272 = vld [vmem:[%s1 + $0x10] sm:$0xff]
        %v273 = vld [vmem:[%s1 + $0x18] sm:$0xff]
        %v274 = vld [vmem:[%s1 + $0x20] sm:$0xff]
        %v275 = vld [vmem:[%s1 + $0x28] sm:$0xff]
        %v276 = vld [vmem:[%s1 + $0x30] sm:$0xff]
        %v277 = vld [vmem:[%s1 + $0x38] sm:$0xff]
        %vm326 = vcmask 1046528
        %v327 = vrot.slane %v216, 1
        %v328 = vrot.slane %v217, 1
        %v329 = vsel %vm326, %v327, %v328
        %v330 = vrot.slane %v218, 1
        %v331 = vsel %vm326, %v328, %v330
        %v332 = vrot.slane %v219, 1
        %v333 = vrot.slane %v220, 1
        %v334 = vsel %vm326, %v332, %v333
        %v335 = vrot.slane %v221, 1
        %v336 = vsel %vm326, %v333, %v335
        %v337 = vrot.slane %v222, 1
        %v338 = vrot.slane %v223, 1
        %v339 = vsel %vm326, %v337, %v338
        %v340 = vrot.slane %v224, 1
        %v341 = vsel %vm326, %v338, %v340
        %v342 = vrot.slane %v225, 1
        %v343 = vrot.slane %v226, 1
        %v344 = vsel %vm326, %v342, %v343
        %v345 = vrot.slane %v227, 1
        %v346 = vsel %vm326, %v343, %v345
        %v347 = vrot.slane %v228, 1
        %v348 = vrot.slane %v229, 1
        %v349 = vsel %vm326, %v347, %v348
        %v350 = vrot.slane %v230, 1
        %v351 = vsel %vm326, %v348, %v350
        %v352 = vrot.slane %v231, 1
        %v353 = vrot.slane %v232, 1
        %v354 = vsel %vm326, %v352, %v353
        %v355 = vrot.slane %v233, 1
        %v356 = vsel %vm326, %v353, %v355
        %v357 = vrot.slane %v234, 1
        %v358 = vrot.slane %v235, 1
        %v359 = vsel %vm326, %v357, %v358
        %v360 = vrot.slane %v236, 1
        %v361 = vsel %vm326, %v358, %v360
        %v362 = vrot.slane %v237, 1
        %v363 = vrot.slane %v238, 1
        %v364 = vsel %vm326, %v362, %v363
        %v365 = vrot.slane %v239, 1
        %v366 = vsel %vm326, %v363, %v365
        %v367 = vrot.slane %v240, 1
        %v368 = vrot.slane %v241, 1
        %v369 = vsel %vm326, %v367, %v368
        %v370 = vrot.slane %v242, 1
        %v371 = vsel %vm326, %v368, %v370
        %v372 = vrot.slane %v243, 1
        %v373 = vrot.slane %v244, 1
        %v374 = vsel %vm326, %v372, %v373
        %v375 = vrot.slane %v245, 1
        %v376 = vsel %vm326, %v373, %v375
        %v377 = vrot.slane %v246, 1
        %v378 = vrot.slane %v247, 1
        %v379 = vsel %vm326, %v377, %v378
        %v380 = vrot.slane %v248, 1
        %v381 = vsel %vm326, %v378, %v380
        %v382 = vrot.slane %v249, 1
        %v383 = vrot.slane %v250, 1
        %v384 = vsel %vm326, %v382, %v383
        %v385 = vrot.slane %v251, 1
        %v386 = vsel %vm326, %v383, %v385
        %v387 = vrot.slane %v252, 1
        %v388 = vrot.slane %v253, 1
        %v389 = vsel %vm326, %v387, %v388
        %v390 = vrot.slane %v254, 1
        %v391 = vsel %vm326, %v388, %v390
        %v392 = vrot.slane %v255, 1
        %v393 = vrot.slane %v256, 1
        %v394 = vsel %vm326, %v392, %v393
        %v395 = vrot.slane %v257, 1
        %v396 = vsel %vm326, %v393, %v395
        %v397 = vrot.slane %v258, 1
        %v398 = vrot.slane %v259, 1
        %v399 = vsel %vm326, %v397, %v398
        %v400 = vrot.slane %v260, 1
        %v401 = vsel %vm326, %v398, %v400
        %v402 = vrot.slane %v261, 1
        %v403 = vrot.slane %v262, 1
        %v404 = vsel %vm326, %v402, %v403
        %v405 = vrot.slane %v263, 1
        %v406 = vsel %vm326, %v403, %v405
        %s407 = scalar_lea.vmem %s1, 64
        %v408 = vld [vmem:[%s407] sm:$0xff]
        %v409 = vld [vmem:[%s407 + $0x8] sm:$0xff]
        %v410 = vld [vmem:[%s407 + $0x10] sm:$0xff]
        %v411 = vld [vmem:[%s407 + $0x18] sm:$0xff]
        %v412 = vld [vmem:[%s407 + $0x20] sm:$0xff]
        %v413 = vld [vmem:[%s407 + $0x28] sm:$0xff]
        %v414 = vld [vmem:[%s407 + $0x30] sm:$0xff]
        %v415 = vld [vmem:[%s407 + $0x38] sm:$0xff]
        %vm416 = vcmask 523264
        %v417 = vsel %vm416, %v329, 0
        %v419 = vsel %vm416, %v331, 0
        %v421 = vsel %vm416, %v334, 0
        %v423 = vsel %vm416, %v336, 0
        %v425 = vsel %vm416, %v339, 0
        %v427 = vsel %vm416, %v341, 0
        %v429 = vsel %vm416, %v344, 0
        %v431 = vsel %vm416, %v346, 0
        %v433 = vsel %vm416, %v349, 0
        %v435 = vsel %vm416, %v351, 0
        %v437 = vsel %vm416, %v354, 0
        %v439 = vsel %vm416, %v356, 0
        %v441 = vsel %vm416, %v359, 0
        %v443 = vsel %vm416, %v361, 0
        %v445 = vsel %vm416, %v364, 0
        %v447 = vsel %vm416, %v366, 0
        %v449 = vsel %vm416, %v369, 0
        %v451 = vsel %vm416, %v371, 0
        %v453 = vsel %vm416, %v374, 0
        %v455 = vsel %vm416, %v376, 0
        %v457 = vsel %vm416, %v379, 0
        %v459 = vsel %vm416, %v381, 0
        %v461 = vsel %vm416, %v384, 0
        %v463 = vsel %vm416, %v386, 0
        %v465 = vsel %vm416, %v389, 0
        %v467 = vsel %vm416, %v391, 0
        %v469 = vsel %vm416, %v394, 0
        %v471 = vsel %vm416, %v396, 0
        %v473 = vsel %vm416, %v399, 0
        %v475 = vsel %vm416, %v401, 0
        %v477 = vsel %vm416, %v404, 0
        %v479 = vsel %vm416, %v406, 0
        %481 = vmatpush.msra.mxu0 0.0
        %482 = vmatpush.msra.mxu0 0.0
        %483 = vmatpush.msra.mxu0 0.0
        %484 = vmatpush.msra.mxu0 0.0
        %485 = vmatpush.msra.mxu0 0.0
        %486 = vmatpush.msra.mxu0 0.0
        %487 = vmatpush.msra.mxu0 0.0
        %488 = vmatpush.msra.mxu0 0.0
        %489 = vmatpush.msra.mxu0 %v415
        %490 = vmatpush.msra.mxu0 %v414
        %491 = vmatpush.msra.mxu0 %v413
        %492 = vmatpush.msra.mxu0 %v412
        %493 = vmatpush.msra.mxu0 %v411
        %494 = vmatpush.msra.mxu0 %v410
        %495 = vmatpush.msra.mxu0 %v409
        %496 = vmatpush.msra.mxu0 %v408
        %497 = vmatmul.f32.gmra.mxu0 %v417
        %v498 = vpop.f32.mrf.mxu0
        %v499 = vadd.f32 0.0, %v498
        %500 = vmatmul.f32.gmra.mxu0 %v419
        %v501 = vpop.f32.mrf.mxu0
        %v502 = vadd.f32 0.0, %v501
        %503 = vmatmul.f32.gmra.mxu0 %v421
        %v504 = vpop.f32.mrf.mxu0
        %v505 = vadd.f32 0.0, %v504
        %506 = vmatmul.f32.gmra.mxu0 %v423
        %v507 = vpop.f32.mrf.mxu0
        %v508 = vadd.f32 0.0, %v507
        %509 = vmatmul.f32.gmra.mxu0 %v425
        %v510 = vpop.f32.mrf.mxu0
        %v511 = vadd.f32 0.0, %v510
        %512 = vmatmul.f32.gmra.mxu0 %v427
        %v513 = vpop.f32.mrf.mxu0
        %v514 = vadd.f32 0.0, %v513
        %515 = vmatmul.f32.gmra.mxu0 %v429
        %v516 = vpop.f32.mrf.mxu0
        %v517 = vadd.f32 0.0, %v516
        %518 = vmatmul.f32.gmra.mxu0 %v431
        %v519 = vpop.f32.mrf.mxu0
        %v520 = vadd.f32 0.0, %v519
        %521 = vmatmul.f32.gmra.mxu0 %v433
        %v522 = vpop.f32.mrf.mxu0
        %v523 = vadd.f32 0.0, %v522
        %524 = vmatmul.f32.gmra.mxu0 %v435
        %v525 = vpop.f32.mrf.mxu0
        %v526 = vadd.f32 0.0, %v525
        %527 = vmatmul.f32.gmra.mxu0 %v437
        %v528 = vpop.f32.mrf.mxu0
        %v529 = vadd.f32 0.0, %v528
        %530 = vmatmul.f32.gmra.mxu0 %v439
        %v531 = vpop.f32.mrf.mxu0
        %v532 = vadd.f32 0.0, %v531
        %533 = vmatmul.f32.gmra.mxu0 %v441
        %v534 = vpop.f32.mrf.mxu0
        %v535 = vadd.f32 0.0, %v534
        %536 = vmatmul.f32.gmra.mxu0 %v443
        %v537 = vpop.f32.mrf.mxu0
        %v538 = vadd.f32 0.0, %v537
        %539 = vmatmul.f32.gmra.mxu0 %v445
        %v540 = vpop.f32.mrf.mxu0
        %v541 = vadd.f32 0.0, %v540
        %542 = vmatmul.f32.gmra.mxu0 %v447
        %v543 = vpop.f32.mrf.mxu0
        %v544 = vadd.f32 0.0, %v543
        %545 = vmatmul.f32.gmra.mxu0 %v449
        %v546 = vpop.f32.mrf.mxu0
        %v547 = vadd.f32 0.0, %v546
        %548 = vmatmul.f32.gmra.mxu0 %v451
        %v549 = vpop.f32.mrf.mxu0
        %v550 = vadd.f32 0.0, %v549
        %551 = vmatmul.f32.gmra.mxu0 %v453
        %v552 = vpop.f32.mrf.mxu0
        %v553 = vadd.f32 0.0, %v552
        %554 = vmatmul.f32.gmra.mxu0 %v455
        %v555 = vpop.f32.mrf.mxu0
        %v556 = vadd.f32 0.0, %v555
        %557 = vmatmul.f32.gmra.mxu0 %v457
        %v558 = vpop.f32.mrf.mxu0
        %v559 = vadd.f32 0.0, %v558
        %560 = vmatmul.f32.gmra.mxu0 %v459
        %v561 = vpop.f32.mrf.mxu0
        %v562 = vadd.f32 0.0, %v561
        %563 = vmatmul.f32.gmra.mxu0 %v461
        %v564 = vpop.f32.mrf.mxu0
        %v565 = vadd.f32 0.0, %v564
        %566 = vmatmul.f32.gmra.mxu0 %v463
        %v567 = vpop.f32.mrf.mxu0
        %v568 = vadd.f32 0.0, %v567
        %569 = vmatmul.f32.gmra.mxu0 %v465
        %v570 = vpop.f32.mrf.mxu0
        %v571 = vadd.f32 0.0, %v570
        %572 = vmatmul.f32.gmra.mxu0 %v467
        %v573 = vpop.f32.mrf.mxu0
        %v574 = vadd.f32 0.0, %v573
        %575 = vmatmul.f32.gmra.mxu0 %v469
        %v576 = vpop.f32.mrf.mxu0
        %v577 = vadd.f32 0.0, %v576
        %578 = vmatmul.f32.gmra.mxu0 %v471
        %v579 = vpop.f32.mrf.mxu0
        %v580 = vadd.f32 0.0, %v579
        %581 = vmatmul.f32.gmra.mxu0 %v473
        %v582 = vpop.f32.mrf.mxu0
        %v583 = vadd.f32 0.0, %v582
        %584 = vmatmul.f32.gmra.mxu0 %v475
        %v585 = vpop.f32.mrf.mxu0
        %v586 = vadd.f32 0.0, %v585
        %587 = vmatmul.f32.gmra.mxu0 %v477
        %v588 = vpop.f32.mrf.mxu0
        %v589 = vadd.f32 0.0, %v588
        %590 = vmatmul.f32.gmra.mxu0 %v479
        %v591 = vpop.f32.mrf.mxu0
        %v592 = vadd.f32 0.0, %v591
        %593 = vdwg.mxu0
        %v594 = vsel %vm416, %v216, 0
        %v596 = vsel %vm416, %v217, 0
        %v598 = vsel %vm416, %v219, 0
        %v600 = vsel %vm416, %v220, 0
        %v602 = vsel %vm416, %v222, 0
        %v604 = vsel %vm416, %v223, 0
        %v606 = vsel %vm416, %v225, 0
        %v608 = vsel %vm416, %v226, 0
        %v610 = vsel %vm416, %v228, 0
        %v612 = vsel %vm416, %v229, 0
        %v614 = vsel %vm416, %v231, 0
        %v616 = vsel %vm416, %v232, 0
        %v618 = vsel %vm416, %v234, 0
        %v620 = vsel %vm416, %v235, 0
        %v622 = vsel %vm416, %v237, 0
        %v624 = vsel %vm416, %v238, 0
        %v626 = vsel %vm416, %v240, 0
        %v628 = vsel %vm416, %v241, 0
        %v630 = vsel %vm416, %v243, 0
        %v632 = vsel %vm416, %v244, 0
        %v634 = vsel %vm416, %v246, 0
        %v636 = vsel %vm416, %v247, 0
        %v638 = vsel %vm416, %v249, 0
        %v640 = vsel %vm416, %v250, 0
        %v642 = vsel %vm416, %v252, 0
        %v644 = vsel %vm416, %v253, 0
        %v646 = vsel %vm416, %v255, 0
        %v648 = vsel %vm416, %v256, 0
        %v650 = vsel %vm416, %v258, 0
        %v652 = vsel %vm416, %v259, 0
        %v654 = vsel %vm416, %v261, 0
        %v656 = vsel %vm416, %v262, 0
        %658 = vmatpush.msra.mxu0 0.0
        %659 = vmatpush.msra.mxu0 0.0
        %660 = vmatpush.msra.mxu0 0.0
        %661 = vmatpush.msra.mxu0 0.0
        %662 = vmatpush.msra.mxu0 0.0
        %663 = vmatpush.msra.mxu0 0.0
        %664 = vmatpush.msra.mxu0 0.0
        %665 = vmatpush.msra.mxu0 0.0
        %666 = vmatpush.msra.mxu0 %v277
        %667 = vmatpush.msra.mxu0 %v276
        %668 = vmatpush.msra.mxu0 %v275
        %669 = vmatpush.msra.mxu0 %v274
        %670 = vmatpush.msra.mxu0 %v273
        %671 = vmatpush.msra.mxu0 %v272
        %672 = vmatpush.msra.mxu0 %v271
        %673 = vmatpush.msra.mxu0 %v270
        %674 = vmatmul.f32.gmra.mxu0 %v594
        %v675 = vpop.f32.mrf.mxu0
        %v676 = vadd.f32 %v499, %v675
        %677 = vmatmul.f32.gmra.mxu0 %v596
        %v678 = vpop.f32.mrf.mxu0
        %v679 = vadd.f32 %v502, %v678
        %680 = vmatmul.f32.gmra.mxu0 %v598
        %v681 = vpop.f32.mrf.mxu0
        %v682 = vadd.f32 %v505, %v681
        %683 = vmatmul.f32.gmra.mxu0 %v600
        %v684 = vpop.f32.mrf.mxu0
        %v685 = vadd.f32 %v508, %v684
        %686 = vmatmul.f32.gmra.mxu0 %v602
        %v687 = vpop.f32.mrf.mxu0
        %v688 = vadd.f32 %v511, %v687
        %689 = vmatmul.f32.gmra.mxu0 %v604
        %v690 = vpop.f32.mrf.mxu0
        %v691 = vadd.f32 %v514, %v690
        %692 = vmatmul.f32.gmra.mxu0 %v606
        %v693 = vpop.f32.mrf.mxu0
        %v694 = vadd.f32 %v517, %v693
        %695 = vmatmul.f32.gmra.mxu0 %v608
        %v696 = vpop.f32.mrf.mxu0
        %v697 = vadd.f32 %v520, %v696
        %698 = vmatmul.f32.gmra.mxu0 %v610
        %v699 = vpop.f32.mrf.mxu0
        %v700 = vadd.f32 %v523, %v699
        %701 = vmatmul.f32.gmra.mxu0 %v612
        %v702 = vpop.f32.mrf.mxu0
        %v703 = vadd.f32 %v526, %v702
        %704 = vmatmul.f32.gmra.mxu0 %v614
        %v705 = vpop.f32.mrf.mxu0
        %v706 = vadd.f32 %v529, %v705
        %707 = vmatmul.f32.gmra.mxu0 %v616
        %v708 = vpop.f32.mrf.mxu0
        %v709 = vadd.f32 %v532, %v708
        %710 = vmatmul.f32.gmra.mxu0 %v618
        %v711 = vpop.f32.mrf.mxu0
        %v712 = vadd.f32 %v535, %v711
        %713 = vmatmul.f32.gmra.mxu0 %v620
        %v714 = vpop.f32.mrf.mxu0
        %v715 = vadd.f32 %v538, %v714
        %716 = vmatmul.f32.gmra.mxu0 %v622
        %v717 = vpop.f32.mrf.mxu0
        %v718 = vadd.f32 %v541, %v717
        %719 = vmatmul.f32.gmra.mxu0 %v624
        %v720 = vpop.f32.mrf.mxu0
        %v721 = vadd.f32 %v544, %v720
        %722 = vmatmul.f32.gmra.mxu0 %v626
        %v723 = vpop.f32.mrf.mxu0
        %v724 = vadd.f32 %v547, %v723
        %725 = vmatmul.f32.gmra.mxu0 %v628
        %v726 = vpop.f32.mrf.mxu0
        %v727 = vadd.f32 %v550, %v726
        %728 = vmatmul.f32.gmra.mxu0 %v630
        %v729 = vpop.f32.mrf.mxu0
        %v730 = vadd.f32 %v553, %v729
        %731 = vmatmul.f32.gmra.mxu0 %v632
        %v732 = vpop.f32.mrf.mxu0
        %v733 = vadd.f32 %v556, %v732
        %734 = vmatmul.f32.gmra.mxu0 %v634
        %v735 = vpop.f32.mrf.mxu0
        %v736 = vadd.f32 %v559, %v735
        %737 = vmatmul.f32.gmra.mxu0 %v636
        %v738 = vpop.f32.mrf.mxu0
        %v739 = vadd.f32 %v562, %v738
        %740 = vmatmul.f32.gmra.mxu0 %v638
        %v741 = vpop.f32.mrf.mxu0
        %v742 = vadd.f32 %v565, %v741
        %743 = vmatmul.f32.gmra.mxu0 %v640
        %v744 = vpop.f32.mrf.mxu0
        %v745 = vadd.f32 %v568, %v744
        %746 = vmatmul.f32.gmra.mxu0 %v642
        %v747 = vpop.f32.mrf.mxu0
        %v748 = vadd.f32 %v571, %v747
        %749 = vmatmul.f32.gmra.mxu0 %v644
        %v750 = vpop.f32.mrf.mxu0
        %v751 = vadd.f32 %v574, %v750
        %752 = vmatmul.f32.gmra.mxu0 %v646
        %v753 = vpop.f32.mrf.mxu0
        %v754 = vadd.f32 %v577, %v753
        %755 = vmatmul.f32.gmra.mxu0 %v648
        %v756 = vpop.f32.mrf.mxu0
        %v757 = vadd.f32 %v580, %v756
        %758 = vmatmul.f32.gmra.mxu0 %v650
        %v759 = vpop.f32.mrf.mxu0
        %v760 = vadd.f32 %v583, %v759
        %761 = vmatmul.f32.gmra.mxu0 %v652
        %v762 = vpop.f32.mrf.mxu0
        %v763 = vadd.f32 %v586, %v762
        %764 = vmatmul.f32.gmra.mxu0 %v654
        %v765 = vpop.f32.mrf.mxu0
        %v766 = vadd.f32 %v589, %v765
        %767 = vmatmul.f32.gmra.mxu0 %v656
        %v768 = vpop.f32.mrf.mxu0
        %v769 = vadd.f32 %v592, %v768
        %770 = vdwg.mxu0
        %vm771 = vcmask 1045504
        %v772 = vrot.slane %v216, 2
        %v773 = vrot.slane %v217, 2
        %v774 = vsel %vm771, %v772, %v773
        %v775 = vrot.slane %v218, 2
        %v776 = vsel %vm771, %v773, %v775
        %v777 = vrot.slane %v219, 2
        %v778 = vrot.slane %v220, 2
        %v779 = vsel %vm771, %v777, %v778
        %v780 = vrot.slane %v221, 2
        %v781 = vsel %vm771, %v778, %v780
        %v782 = vrot.slane %v222, 2
        %v783 = vrot.slane %v223, 2
        %v784 = vsel %vm771, %v782, %v783
        %v785 = vrot.slane %v224, 2
        %v786 = vsel %vm771, %v783, %v785
        %v787 = vrot.slane %v225, 2
        %v788 = vrot.slane %v226, 2
        %v789 = vsel %vm771, %v787, %v788
        %v790 = vrot.slane %v227, 2
        %v791 = vsel %vm771, %v788, %v790
        %v792 = vrot.slane %v228, 2
        %v793 = vrot.slane %v229, 2
        %v794 = vsel %vm771, %v792, %v793
        %v795 = vrot.slane %v230, 2
        %v796 = vsel %vm771, %v793, %v795
        %v797 = vrot.slane %v231, 2
        %v798 = vrot.slane %v232, 2
        %v799 = vsel %vm771, %v797, %v798
        %v800 = vrot.slane %v233, 2
        %v801 = vsel %vm771, %v798, %v800
        %v802 = vrot.slane %v234, 2
        %v803 = vrot.slane %v235, 2
        %v804 = vsel %vm771, %v802, %v803
        %v805 = vrot.slane %v236, 2
        %v806 = vsel %vm771, %v803, %v805
        %v807 = vrot.slane %v237, 2
        %v808 = vrot.slane %v238, 2
        %v809 = vsel %vm771, %v807, %v808
        %v810 = vrot.slane %v239, 2
        %v811 = vsel %vm771, %v808, %v810
        %v812 = vrot.slane %v240, 2
        %v813 = vrot.slane %v241, 2
        %v814 = vsel %vm771, %v812, %v813
        %v815 = vrot.slane %v242, 2
        %v816 = vsel %vm771, %v813, %v815
        %v817 = vrot.slane %v243, 2
        %v818 = vrot.slane %v244, 2
        %v819 = vsel %vm771, %v817, %v818
        %v820 = vrot.slane %v245, 2
        %v821 = vsel %vm771, %v818, %v820
        %v822 = vrot.slane %v246, 2
        %v823 = vrot.slane %v247, 2
        %v824 = vsel %vm771, %v822, %v823
        %v825 = vrot.slane %v248, 2
        %v826 = vsel %vm771, %v823, %v825
        %v827 = vrot.slane %v249, 2
        %v828 = vrot.slane %v250, 2
        %v829 = vsel %vm771, %v827, %v828
        %v830 = vrot.slane %v251, 2
        %v831 = vsel %vm771, %v828, %v830
        %v832 = vrot.slane %v252, 2
        %v833 = vrot.slane %v253, 2
        %v834 = vsel %vm771, %v832, %v833
        %v835 = vrot.slane %v254, 2
        %v836 = vsel %vm771, %v833, %v835
        %v837 = vrot.slane %v255, 2
        %v838 = vrot.slane %v256, 2
        %v839 = vsel %vm771, %v837, %v838
        %v840 = vrot.slane %v257, 2
        %v841 = vsel %vm771, %v838, %v840
        %v842 = vrot.slane %v258, 2
        %v843 = vrot.slane %v259, 2
        %v844 = vsel %vm771, %v842, %v843
        %v845 = vrot.slane %v260, 2
        %v846 = vsel %vm771, %v843, %v845
        %v847 = vrot.slane %v261, 2
        %v848 = vrot.slane %v262, 2
        %v849 = vsel %vm771, %v847, %v848
        %v850 = vrot.slane %v263, 2
        %v851 = vsel %vm771, %v848, %v850
        %s852 = scalar_lea.vmem %s1, 128
        %v853 = vld [vmem:[%s852] sm:$0xff]
        %v854 = vld [vmem:[%s852 + $0x8] sm:$0xff]
        %v855 = vld [vmem:[%s852 + $0x10] sm:$0xff]
        %v856 = vld [vmem:[%s852 + $0x18] sm:$0xff]
        %v857 = vld [vmem:[%s852 + $0x20] sm:$0xff]
        %v858 = vld [vmem:[%s852 + $0x28] sm:$0xff]
        %v859 = vld [vmem:[%s852 + $0x30] sm:$0xff]
        %v860 = vld [vmem:[%s852 + $0x38] sm:$0xff]
        %v861 = vsel %vm416, %v774, 0
        %v863 = vsel %vm416, %v776, 0
        %v865 = vsel %vm416, %v779, 0
        %v867 = vsel %vm416, %v781, 0
        %v869 = vsel %vm416, %v784, 0
        %v871 = vsel %vm416, %v786, 0
        %v873 = vsel %vm416, %v789, 0
        %v875 = vsel %vm416, %v791, 0
        %v877 = vsel %vm416, %v794, 0
        %v879 = vsel %vm416, %v796, 0
        %v881 = vsel %vm416, %v799, 0
        %v883 = vsel %vm416, %v801, 0
        %v885 = vsel %vm416, %v804, 0
        %v887 = vsel %vm416, %v806, 0
        %v889 = vsel %vm416, %v809, 0
        %v891 = vsel %vm416, %v811, 0
        %v893 = vsel %vm416, %v814, 0
        %v895 = vsel %vm416, %v816, 0
        %v897 = vsel %vm416, %v819, 0
        %v899 = vsel %vm416, %v821, 0
        %v901 = vsel %vm416, %v824, 0
        %v903 = vsel %vm416, %v826, 0
        %v905 = vsel %vm416, %v829, 0
        %v907 = vsel %vm416, %v831, 0
        %v909 = vsel %vm416, %v834, 0
        %v911 = vsel %vm416, %v836, 0
        %v913 = vsel %vm416, %v839, 0
        %v915 = vsel %vm416, %v841, 0
        %v917 = vsel %vm416, %v844, 0
        %v919 = vsel %vm416, %v846, 0
        %v921 = vsel %vm416, %v849, 0
        %v923 = vsel %vm416, %v851, 0
        %925 = vmatpush.msra.mxu0 0.0
        %926 = vmatpush.msra.mxu0 0.0
        %927 = vmatpush.msra.mxu0 0.0
        %928 = vmatpush.msra.mxu0 0.0
        %929 = vmatpush.msra.mxu0 0.0
        %930 = vmatpush.msra.mxu0 0.0
        %931 = vmatpush.msra.mxu0 0.0
        %932 = vmatpush.msra.mxu0 0.0
        %933 = vmatpush.msra.mxu0 %v860
        %934 = vmatpush.msra.mxu0 %v859
        %935 = vmatpush.msra.mxu0 %v858
        %936 = vmatpush.msra.mxu0 %v857
        %937 = vmatpush.msra.mxu0 %v856
        %938 = vmatpush.msra.mxu0 %v855
        %939 = vmatpush.msra.mxu0 %v854
        %940 = vmatpush.msra.mxu0 %v853
        %941 = vmatmul.f32.gmra.mxu0 %v861
        %v942 = vpop.f32.mrf.mxu0
        %v943 = vadd.f32 0.0, %v942
        %944 = vmatmul.f32.gmra.mxu0 %v863
        %v945 = vpop.f32.mrf.mxu0
        %v946 = vadd.f32 0.0, %v945
        %947 = vmatmul.f32.gmra.mxu0 %v865
        %v948 = vpop.f32.mrf.mxu0
        %v949 = vadd.f32 0.0, %v948
        %950 = vmatmul.f32.gmra.mxu0 %v867
        %v951 = vpop.f32.mrf.mxu0
        %v952 = vadd.f32 0.0, %v951
        %953 = vmatmul.f32.gmra.mxu0 %v869
        %v954 = vpop.f32.mrf.mxu0
        %v955 = vadd.f32 0.0, %v954
        %956 = vmatmul.f32.gmra.mxu0 %v871
        %v957 = vpop.f32.mrf.mxu0
        %v958 = vadd.f32 0.0, %v957
        %959 = vmatmul.f32.gmra.mxu0 %v873
        %v960 = vpop.f32.mrf.mxu0
        %v961 = vadd.f32 0.0, %v960
        %962 = vmatmul.f32.gmra.mxu0 %v875
        %v963 = vpop.f32.mrf.mxu0
        %v964 = vadd.f32 0.0, %v963
        %965 = vmatmul.f32.gmra.mxu0 %v877
        %v966 = vpop.f32.mrf.mxu0
        %v967 = vadd.f32 0.0, %v966
        %968 = vmatmul.f32.gmra.mxu0 %v879
        %v969 = vpop.f32.mrf.mxu0
        %v970 = vadd.f32 0.0, %v969
        %971 = vmatmul.f32.gmra.mxu0 %v881
        %v972 = vpop.f32.mrf.mxu0
        %v973 = vadd.f32 0.0, %v972
        %974 = vmatmul.f32.gmra.mxu0 %v883
        %v975 = vpop.f32.mrf.mxu0
        %v976 = vadd.f32 0.0, %v975
        %977 = vmatmul.f32.gmra.mxu0 %v885
        %v978 = vpop.f32.mrf.mxu0
        %v979 = vadd.f32 0.0, %v978
        %980 = vmatmul.f32.gmra.mxu0 %v887
        %v981 = vpop.f32.mrf.mxu0
        %v982 = vadd.f32 0.0, %v981
        %983 = vmatmul.f32.gmra.mxu0 %v889
        %v984 = vpop.f32.mrf.mxu0
        %v985 = vadd.f32 0.0, %v984
        %986 = vmatmul.f32.gmra.mxu0 %v891
        %v987 = vpop.f32.mrf.mxu0
        %v988 = vadd.f32 0.0, %v987
        %989 = vmatmul.f32.gmra.mxu0 %v893
        %v990 = vpop.f32.mrf.mxu0
        %v991 = vadd.f32 0.0, %v990
        %992 = vmatmul.f32.gmra.mxu0 %v895
        %v993 = vpop.f32.mrf.mxu0
        %v994 = vadd.f32 0.0, %v993
        %995 = vmatmul.f32.gmra.mxu0 %v897
        %v996 = vpop.f32.mrf.mxu0
        %v997 = vadd.f32 0.0, %v996
        %998 = vmatmul.f32.gmra.mxu0 %v899
        %v999 = vpop.f32.mrf.mxu0
        %v1000 = vadd.f32 0.0, %v999
        %1001 = vmatmul.f32.gmra.mxu0 %v901
        %v1002 = vpop.f32.mrf.mxu0
        %v1003 = vadd.f32 0.0, %v1002
        %1004 = vmatmul.f32.gmra.mxu0 %v903
        %v1005 = vpop.f32.mrf.mxu0
        %v1006 = vadd.f32 0.0, %v1005
        %1007 = vmatmul.f32.gmra.mxu0 %v905
        %v1008 = vpop.f32.mrf.mxu0
        %v1009 = vadd.f32 0.0, %v1008
        %1010 = vmatmul.f32.gmra.mxu0 %v907
        %v1011 = vpop.f32.mrf.mxu0
        %v1012 = vadd.f32 0.0, %v1011
        %1013 = vmatmul.f32.gmra.mxu0 %v909
        %v1014 = vpop.f32.mrf.mxu0
        %v1015 = vadd.f32 0.0, %v1014
        %1016 = vmatmul.f32.gmra.mxu0 %v911
        %v1017 = vpop.f32.mrf.mxu0
        %v1018 = vadd.f32 0.0, %v1017
        %1019 = vmatmul.f32.gmra.mxu0 %v913
        %v1020 = vpop.f32.mrf.mxu0
        %v1021 = vadd.f32 0.0, %v1020
        %1022 = vmatmul.f32.gmra.mxu0 %v915
        %v1023 = vpop.f32.mrf.mxu0
        %v1024 = vadd.f32 0.0, %v1023
        %1025 = vmatmul.f32.gmra.mxu0 %v917
        %v1026 = vpop.f32.mrf.mxu0
        %v1027 = vadd.f32 0.0, %v1026
        %1028 = vmatmul.f32.gmra.mxu0 %v919
        %v1029 = vpop.f32.mrf.mxu0
        %v1030 = vadd.f32 0.0, %v1029
        %1031 = vmatmul.f32.gmra.mxu0 %v921
        %v1032 = vpop.f32.mrf.mxu0
        %v1033 = vadd.f32 0.0, %v1032
        %1034 = vmatmul.f32.gmra.mxu0 %v923
        %v1035 = vpop.f32.mrf.mxu0
        %v1036 = vadd.f32 0.0, %v1035
        %1037 = vdwg.mxu0
        %v1038 = vadd.f32 %v676, %v943
        %v1039 = vadd.f32 %v679, %v946
        %v1040 = vadd.f32 %v682, %v949
        %v1041 = vadd.f32 %v685, %v952
        %v1042 = vadd.f32 %v688, %v955
        %v1043 = vadd.f32 %v691, %v958
        %v1044 = vadd.f32 %v694, %v961
        %v1045 = vadd.f32 %v697, %v964
        %v1046 = vadd.f32 %v700, %v967
        %v1047 = vadd.f32 %v703, %v970
        %v1048 = vadd.f32 %v706, %v973
        %v1049 = vadd.f32 %v709, %v976
        %v1050 = vadd.f32 %v712, %v979
        %v1051 = vadd.f32 %v715, %v982
        %v1052 = vadd.f32 %v718, %v985
        %v1053 = vadd.f32 %v721, %v988
        %v1054 = vadd.f32 %v724, %v991
        %v1055 = vadd.f32 %v727, %v994
        %v1056 = vadd.f32 %v730, %v997
        %v1057 = vadd.f32 %v733, %v1000
        %v1058 = vadd.f32 %v736, %v1003
        %v1059 = vadd.f32 %v739, %v1006
        %v1060 = vadd.f32 %v742, %v1009
        %v1061 = vadd.f32 %v745, %v1012
        %v1062 = vadd.f32 %v748, %v1015
        %v1063 = vadd.f32 %v751, %v1018
        %v1064 = vadd.f32 %v754, %v1021
        %v1065 = vadd.f32 %v757, %v1024
        %v1066 = vadd.f32 %v760, %v1027
        %v1067 = vadd.f32 %v763, %v1030
        %v1068 = vadd.f32 %v766, %v1033
        %v1069 = vadd.f32 %v769, %v1036
        %s1070 = scalar_lea.vmem %s1, 192
        %v1071 = vld [vmem:[%s1070] sm:$0xff]
        %v1072 = vld [vmem:[%s1070 + $0x8] sm:$0xff]
        %v1073 = vld [vmem:[%s1070 + $0x10] sm:$0xff]
        %v1074 = vld [vmem:[%s1070 + $0x18] sm:$0xff]
        %v1075 = vld [vmem:[%s1070 + $0x20] sm:$0xff]
        %v1076 = vld [vmem:[%s1070 + $0x28] sm:$0xff]
        %v1077 = vld [vmem:[%s1070 + $0x30] sm:$0xff]
        %v1078 = vld [vmem:[%s1070 + $0x38] sm:$0xff]
        %v1080 = vsel %vm416, %v264, 0
        %v1083 = vsel %vm416, %v265, 0
        %1085 = vmatpush.msra.mxu0 0.0
        %1086 = vmatpush.msra.mxu0 0.0
        %1087 = vmatpush.msra.mxu0 0.0
        %1088 = vmatpush.msra.mxu0 0.0
        %1089 = vmatpush.msra.mxu0 0.0
        %1090 = vmatpush.msra.mxu0 0.0
        %1091 = vmatpush.msra.mxu0 0.0
        %1092 = vmatpush.msra.mxu0 0.0
        %1093 = vmatpush.msra.mxu0 %v1078
        %1094 = vmatpush.msra.mxu0 %v1077
        %1095 = vmatpush.msra.mxu0 %v1076
        %1096 = vmatpush.msra.mxu0 %v1075
        %1097 = vmatpush.msra.mxu0 %v1074
        %1098 = vmatpush.msra.mxu0 %v1073
        %1099 = vmatpush.msra.mxu0 %v1072
        %1100 = vmatpush.msra.mxu0 %v1071
        %1101 = vmatmul.f32.gmra.mxu0 %v598
        %v1102 = vpop.f32.mrf.mxu0
        %v1103 = vadd.f32 0.0, %v1102
        %1104 = vmatmul.f32.gmra.mxu0 %v600
        %v1105 = vpop.f32.mrf.mxu0
        %v1106 = vadd.f32 0.0, %v1105
        %1107 = vmatmul.f32.gmra.mxu0 %v602
        %v1108 = vpop.f32.mrf.mxu0
        %v1109 = vadd.f32 0.0, %v1108
        %1110 = vmatmul.f32.gmra.mxu0 %v604
        %v1111 = vpop.f32.mrf.mxu0
        %v1112 = vadd.f32 0.0, %v1111
        %1113 = vmatmul.f32.gmra.mxu0 %v606
        %v1114 = vpop.f32.mrf.mxu0
        %v1115 = vadd.f32 0.0, %v1114
        %1116 = vmatmul.f32.gmra.mxu0 %v608
        %v1117 = vpop.f32.mrf.mxu0
        %v1118 = vadd.f32 0.0, %v1117
        %1119 = vmatmul.f32.gmra.mxu0 %v610
        %v1120 = vpop.f32.mrf.mxu0
        %v1121 = vadd.f32 0.0, %v1120
        %1122 = vmatmul.f32.gmra.mxu0 %v612
        %v1123 = vpop.f32.mrf.mxu0
        %v1124 = vadd.f32 0.0, %v1123
        %1125 = vmatmul.f32.gmra.mxu0 %v614
        %v1126 = vpop.f32.mrf.mxu0
        %v1127 = vadd.f32 0.0, %v1126
        %1128 = vmatmul.f32.gmra.mxu0 %v616
        %v1129 = vpop.f32.mrf.mxu0
        %v1130 = vadd.f32 0.0, %v1129
        %1131 = vmatmul.f32.gmra.mxu0 %v618
        %v1132 = vpop.f32.mrf.mxu0
        %v1133 = vadd.f32 0.0, %v1132
        %1134 = vmatmul.f32.gmra.mxu0 %v620
        %v1135 = vpop.f32.mrf.mxu0
        %v1136 = vadd.f32 0.0, %v1135
        %1137 = vmatmul.f32.gmra.mxu0 %v622
        %v1138 = vpop.f32.mrf.mxu0
        %v1139 = vadd.f32 0.0, %v1138
        %1140 = vmatmul.f32.gmra.mxu0 %v624
        %v1141 = vpop.f32.mrf.mxu0
        %v1142 = vadd.f32 0.0, %v1141
        %1143 = vmatmul.f32.gmra.mxu0 %v626
        %v1144 = vpop.f32.mrf.mxu0
        %v1145 = vadd.f32 0.0, %v1144
        %1146 = vmatmul.f32.gmra.mxu0 %v628
        %v1147 = vpop.f32.mrf.mxu0
        %v1148 = vadd.f32 0.0, %v1147
        %1149 = vmatmul.f32.gmra.mxu0 %v630
        %v1150 = vpop.f32.mrf.mxu0
        %v1151 = vadd.f32 0.0, %v1150
        %1152 = vmatmul.f32.gmra.mxu0 %v632
        %v1153 = vpop.f32.mrf.mxu0
        %v1154 = vadd.f32 0.0, %v1153
        %1155 = vmatmul.f32.gmra.mxu0 %v634
        %v1156 = vpop.f32.mrf.mxu0
        %v1157 = vadd.f32 0.0, %v1156
        %1158 = vmatmul.f32.gmra.mxu0 %v636
        %v1159 = vpop.f32.mrf.mxu0
        %v1160 = vadd.f32 0.0, %v1159
        %1161 = vmatmul.f32.gmra.mxu0 %v638
        %v1162 = vpop.f32.mrf.mxu0
        %v1163 = vadd.f32 0.0, %v1162
        %1164 = vmatmul.f32.gmra.mxu0 %v640
        %v1165 = vpop.f32.mrf.mxu0
        %v1166 = vadd.f32 0.0, %v1165
        %1167 = vmatmul.f32.gmra.mxu0 %v642
        %v1168 = vpop.f32.mrf.mxu0
        %v1169 = vadd.f32 0.0, %v1168
        %1170 = vmatmul.f32.gmra.mxu0 %v644
        %v1171 = vpop.f32.mrf.mxu0
        %v1172 = vadd.f32 0.0, %v1171
        %1173 = vmatmul.f32.gmra.mxu0 %v646
        %v1174 = vpop.f32.mrf.mxu0
        %v1175 = vadd.f32 0.0, %v1174
        %1176 = vmatmul.f32.gmra.mxu0 %v648
        %v1177 = vpop.f32.mrf.mxu0
        %v1178 = vadd.f32 0.0, %v1177
        %1179 = vmatmul.f32.gmra.mxu0 %v650
        %v1180 = vpop.f32.mrf.mxu0
        %v1181 = vadd.f32 0.0, %v1180
        %1182 = vmatmul.f32.gmra.mxu0 %v652
        %v1183 = vpop.f32.mrf.mxu0
        %v1184 = vadd.f32 0.0, %v1183
        %1185 = vmatmul.f32.gmra.mxu0 %v654
        %v1186 = vpop.f32.mrf.mxu0
        %v1187 = vadd.f32 0.0, %v1186
        %1188 = vmatmul.f32.gmra.mxu0 %v656
        %v1189 = vpop.f32.mrf.mxu0
        %v1190 = vadd.f32 0.0, %v1189
        %1191 = vmatmul.f32.gmra.mxu0 %v1080
        %v1192 = vpop.f32.mrf.mxu0
        %v1193 = vadd.f32 0.0, %v1192
        %1194 = vmatmul.f32.gmra.mxu0 %v1083
        %v1195 = vpop.f32.mrf.mxu0
        %v1196 = vadd.f32 0.0, %v1195
        %1197 = vdwg.mxu0
        %v1198 = vadd.f32 %v1038, %v1103
        %v1199 = vadd.f32 %v1039, %v1106
        %v1200 = vadd.f32 %v1040, %v1109
        %v1201 = vadd.f32 %v1041, %v1112
        %v1202 = vadd.f32 %v1042, %v1115
        %v1203 = vadd.f32 %v1043, %v1118
        %v1204 = vadd.f32 %v1044, %v1121
        %v1205 = vadd.f32 %v1045, %v1124
        %v1206 = vadd.f32 %v1046, %v1127
        %v1207 = vadd.f32 %v1047, %v1130
        %v1208 = vadd.f32 %v1048, %v1133
        %v1209 = vadd.f32 %v1049, %v1136
        %v1210 = vadd.f32 %v1050, %v1139
        %v1211 = vadd.f32 %v1051, %v1142
        %v1212 = vadd.f32 %v1052, %v1145
        %v1213 = vadd.f32 %v1053, %v1148
        %v1214 = vadd.f32 %v1054, %v1151
        %v1215 = vadd.f32 %v1055, %v1154
        %v1216 = vadd.f32 %v1056, %v1157
        %v1217 = vadd.f32 %v1057, %v1160
        %v1218 = vadd.f32 %v1058, %v1163
        %v1219 = vadd.f32 %v1059, %v1166
        %v1220 = vadd.f32 %v1060, %v1169
        %v1221 = vadd.f32 %v1061, %v1172
        %v1222 = vadd.f32 %v1062, %v1175
        %v1223 = vadd.f32 %v1063, %v1178
        %v1224 = vadd.f32 %v1064, %v1181
        %v1225 = vadd.f32 %v1065, %v1184
        %v1226 = vadd.f32 %v1066, %v1187
        %v1227 = vadd.f32 %v1067, %v1190
        %v1228 = vadd.f32 %v1068, %v1193
        %v1229 = vadd.f32 %v1069, %v1196
        %v1231 = vrot.slane %v264, 1
        %v1232 = vrot.slane %v265, 1
        %v1233 = vsel %vm326, %v1231, %v1232
        %v1234 = vrot.slane %v266, 1
        %v1235 = vsel %vm326, %v1232, %v1234
        %s1236 = scalar_lea.vmem %s1, 256
        %v1237 = vld [vmem:[%s1236] sm:$0xff]
        %v1238 = vld [vmem:[%s1236 + $0x8] sm:$0xff]
        %v1239 = vld [vmem:[%s1236 + $0x10] sm:$0xff]
        %v1240 = vld [vmem:[%s1236 + $0x18] sm:$0xff]
        %v1241 = vld [vmem:[%s1236 + $0x20] sm:$0xff]
        %v1242 = vld [vmem:[%s1236 + $0x28] sm:$0xff]
        %v1243 = vld [vmem:[%s1236 + $0x30] sm:$0xff]
        %v1244 = vld [vmem:[%s1236 + $0x38] sm:$0xff]
        %v1245 = vsel %vm416, %v1233, 0
        %v1247 = vsel %vm416, %v1235, 0
        %1249 = vmatpush.msra.mxu0 0.0
        %1250 = vmatpush.msra.mxu0 0.0
        %1251 = vmatpush.msra.mxu0 0.0
        %1252 = vmatpush.msra.mxu0 0.0
        %1253 = vmatpush.msra.mxu0 0.0
        %1254 = vmatpush.msra.mxu0 0.0
        %1255 = vmatpush.msra.mxu0 0.0
        %1256 = vmatpush.msra.mxu0 0.0
        %1257 = vmatpush.msra.mxu0 %v1244
        %1258 = vmatpush.msra.mxu0 %v1243
        %1259 = vmatpush.msra.mxu0 %v1242
        %1260 = vmatpush.msra.mxu0 %v1241
        %1261 = vmatpush.msra.mxu0 %v1240
        %1262 = vmatpush.msra.mxu0 %v1239
        %1263 = vmatpush.msra.mxu0 %v1238
        %1264 = vmatpush.msra.mxu0 %v1237
        %1265 = vmatmul.f32.gmra.mxu0 %v421
        %v1266 = vpop.f32.mrf.mxu0
        %v1267 = vadd.f32 0.0, %v1266
        %1268 = vmatmul.f32.gmra.mxu0 %v423
        %v1269 = vpop.f32.mrf.mxu0
        %v1270 = vadd.f32 0.0, %v1269
        %1271 = vmatmul.f32.gmra.mxu0 %v425
        %v1272 = vpop.f32.mrf.mxu0
        %v1273 = vadd.f32 0.0, %v1272
        %1274 = vmatmul.f32.gmra.mxu0 %v427
        %v1275 = vpop.f32.mrf.mxu0
        %v1276 = vadd.f32 0.0, %v1275
        %1277 = vmatmul.f32.gmra.mxu0 %v429
        %v1278 = vpop.f32.mrf.mxu0
        %v1279 = vadd.f32 0.0, %v1278
        %1280 = vmatmul.f32.gmra.mxu0 %v431
        %v1281 = vpop.f32.mrf.mxu0
        %v1282 = vadd.f32 0.0, %v1281
        %1283 = vmatmul.f32.gmra.mxu0 %v433
        %v1284 = vpop.f32.mrf.mxu0
        %v1285 = vadd.f32 0.0, %v1284
        %1286 = vmatmul.f32.gmra.mxu0 %v435
        %v1287 = vpop.f32.mrf.mxu0
        %v1288 = vadd.f32 0.0, %v1287
        %1289 = vmatmul.f32.gmra.mxu0 %v437
        %v1290 = vpop.f32.mrf.mxu0
        %v1291 = vadd.f32 0.0, %v1290
        %1292 = vmatmul.f32.gmra.mxu0 %v439
        %v1293 = vpop.f32.mrf.mxu0
        %v1294 = vadd.f32 0.0, %v1293
        %1295 = vmatmul.f32.gmra.mxu0 %v441
        %v1296 = vpop.f32.mrf.mxu0
        %v1297 = vadd.f32 0.0, %v1296
        %1298 = vmatmul.f32.gmra.mxu0 %v443
        %v1299 = vpop.f32.mrf.mxu0
        %v1300 = vadd.f32 0.0, %v1299
        %1301 = vmatmul.f32.gmra.mxu0 %v445
        %v1302 = vpop.f32.mrf.mxu0
        %v1303 = vadd.f32 0.0, %v1302
        %1304 = vmatmul.f32.gmra.mxu0 %v447
        %v1305 = vpop.f32.mrf.mxu0
        %v1306 = vadd.f32 0.0, %v1305
        %1307 = vmatmul.f32.gmra.mxu0 %v449
        %v1308 = vpop.f32.mrf.mxu0
        %v1309 = vadd.f32 0.0, %v1308
        %1310 = vmatmul.f32.gmra.mxu0 %v451
        %v1311 = vpop.f32.mrf.mxu0
        %v1312 = vadd.f32 0.0, %v1311
        %1313 = vmatmul.f32.gmra.mxu0 %v453
        %v1314 = vpop.f32.mrf.mxu0
        %v1315 = vadd.f32 0.0, %v1314
        %1316 = vmatmul.f32.gmra.mxu0 %v455
        %v1317 = vpop.f32.mrf.mxu0
        %v1318 = vadd.f32 0.0, %v1317
        %1319 = vmatmul.f32.gmra.mxu0 %v457
        %v1320 = vpop.f32.mrf.mxu0
        %v1321 = vadd.f32 0.0, %v1320
        %1322 = vmatmul.f32.gmra.mxu0 %v459
        %v1323 = vpop.f32.mrf.mxu0
        %v1324 = vadd.f32 0.0, %v1323
        %1325 = vmatmul.f32.gmra.mxu0 %v461
        %v1326 = vpop.f32.mrf.mxu0
        %v1327 = vadd.f32 0.0, %v1326
        %1328 = vmatmul.f32.gmra.mxu0 %v463
        %v1329 = vpop.f32.mrf.mxu0
        %v1330 = vadd.f32 0.0, %v1329
        %1331 = vmatmul.f32.gmra.mxu0 %v465
        %v1332 = vpop.f32.mrf.mxu0
        %v1333 = vadd.f32 0.0, %v1332
        %1334 = vmatmul.f32.gmra.mxu0 %v467
        %v1335 = vpop.f32.mrf.mxu0
        %v1336 = vadd.f32 0.0, %v1335
        %1337 = vmatmul.f32.gmra.mxu0 %v469
        %v1338 = vpop.f32.mrf.mxu0
        %v1339 = vadd.f32 0.0, %v1338
        %1340 = vmatmul.f32.gmra.mxu0 %v471
        %v1341 = vpop.f32.mrf.mxu0
        %v1342 = vadd.f32 0.0, %v1341
        %1343 = vmatmul.f32.gmra.mxu0 %v473
        %v1344 = vpop.f32.mrf.mxu0
        %v1345 = vadd.f32 0.0, %v1344
        %1346 = vmatmul.f32.gmra.mxu0 %v475
        %v1347 = vpop.f32.mrf.mxu0
        %v1348 = vadd.f32 0.0, %v1347
        %1349 = vmatmul.f32.gmra.mxu0 %v477
        %v1350 = vpop.f32.mrf.mxu0
        %v1351 = vadd.f32 0.0, %v1350
        %1352 = vmatmul.f32.gmra.mxu0 %v479
        %v1353 = vpop.f32.mrf.mxu0
        %v1354 = vadd.f32 0.0, %v1353
        %1355 = vmatmul.f32.gmra.mxu0 %v1245
        %v1356 = vpop.f32.mrf.mxu0
        %v1357 = vadd.f32 0.0, %v1356
        %1358 = vmatmul.f32.gmra.mxu0 %v1247
        %v1359 = vpop.f32.mrf.mxu0
        %v1360 = vadd.f32 0.0, %v1359
        %1361 = vdwg.mxu0
        %v1362 = vadd.f32 %v1198, %v1267
        %v1363 = vadd.f32 %v1199, %v1270
        %v1364 = vadd.f32 %v1200, %v1273
        %v1365 = vadd.f32 %v1201, %v1276
        %v1366 = vadd.f32 %v1202, %v1279
        %v1367 = vadd.f32 %v1203, %v1282
        %v1368 = vadd.f32 %v1204, %v1285
        %v1369 = vadd.f32 %v1205, %v1288
        %v1370 = vadd.f32 %v1206, %v1291
        %v1371 = vadd.f32 %v1207, %v1294
        %v1372 = vadd.f32 %v1208, %v1297
        %v1373 = vadd.f32 %v1209, %v1300
        %v1374 = vadd.f32 %v1210, %v1303
        %v1375 = vadd.f32 %v1211, %v1306
        %v1376 = vadd.f32 %v1212, %v1309
        %v1377 = vadd.f32 %v1213, %v1312
        %v1378 = vadd.f32 %v1214, %v1315
        %v1379 = vadd.f32 %v1215, %v1318
        %v1380 = vadd.f32 %v1216, %v1321
        %v1381 = vadd.f32 %v1217, %v1324
        %v1382 = vadd.f32 %v1218, %v1327
        %v1383 = vadd.f32 %v1219, %v1330
        %v1384 = vadd.f32 %v1220, %v1333
        %v1385 = vadd.f32 %v1221, %v1336
        %v1386 = vadd.f32 %v1222, %v1339
        %v1387 = vadd.f32 %v1223, %v1342
        %v1388 = vadd.f32 %v1224, %v1345
        %v1389 = vadd.f32 %v1225, %v1348
        %v1390 = vadd.f32 %v1226, %v1351
        %v1391 = vadd.f32 %v1227, %v1354
        %v1392 = vadd.f32 %v1228, %v1357
        %v1393 = vadd.f32 %v1229, %v1360
        %v1394 = vrot.slane %v264, 2
        %v1395 = vrot.slane %v265, 2
        %v1396 = vsel %vm771, %v1394, %v1395
        %v1397 = vrot.slane %v266, 2
        %v1398 = vsel %vm771, %v1395, %v1397
        %s1399 = scalar_lea.vmem %s1, 320
        %v1400 = vld [vmem:[%s1399] sm:$0xff]
        %v1401 = vld [vmem:[%s1399 + $0x8] sm:$0xff]
        %v1402 = vld [vmem:[%s1399 + $0x10] sm:$0xff]
        %v1403 = vld [vmem:[%s1399 + $0x18] sm:$0xff]
        %v1404 = vld [vmem:[%s1399 + $0x20] sm:$0xff]
        %v1405 = vld [vmem:[%s1399 + $0x28] sm:$0xff]
        %v1406 = vld [vmem:[%s1399 + $0x30] sm:$0xff]
        %v1407 = vld [vmem:[%s1399 + $0x38] sm:$0xff]
        %v1408 = vsel %vm416, %v1396, 0
        %v1410 = vsel %vm416, %v1398, 0
        %1412 = vmatpush.msra.mxu0 0.0
        %1413 = vmatpush.msra.mxu0 0.0
        %1414 = vmatpush.msra.mxu0 0.0
        %1415 = vmatpush.msra.mxu0 0.0
        %1416 = vmatpush.msra.mxu0 0.0
        %1417 = vmatpush.msra.mxu0 0.0
        %1418 = vmatpush.msra.mxu0 0.0
        %1419 = vmatpush.msra.mxu0 0.0
        %1420 = vmatpush.msra.mxu0 %v1407
        %1421 = vmatpush.msra.mxu0 %v1406
        %1422 = vmatpush.msra.mxu0 %v1405
        %1423 = vmatpush.msra.mxu0 %v1404
        %1424 = vmatpush.msra.mxu0 %v1403
        %1425 = vmatpush.msra.mxu0 %v1402
        %1426 = vmatpush.msra.mxu0 %v1401
        %1427 = vmatpush.msra.mxu0 %v1400
        %1428 = vmatmul.f32.gmra.mxu0 %v865
        %v1429 = vpop.f32.mrf.mxu0
        %v1430 = vadd.f32 0.0, %v1429
        %1431 = vmatmul.f32.gmra.mxu0 %v867
        %v1432 = vpop.f32.mrf.mxu0
        %v1433 = vadd.f32 0.0, %v1432
        %1434 = vmatmul.f32.gmra.mxu0 %v869
        %v1435 = vpop.f32.mrf.mxu0
        %v1436 = vadd.f32 0.0, %v1435
        %1437 = vmatmul.f32.gmra.mxu0 %v871
        %v1438 = vpop.f32.mrf.mxu0
        %v1439 = vadd.f32 0.0, %v1438
        %1440 = vmatmul.f32.gmra.mxu0 %v873
        %v1441 = vpop.f32.mrf.mxu0
        %v1442 = vadd.f32 0.0, %v1441
        %1443 = vmatmul.f32.gmra.mxu0 %v875
        %v1444 = vpop.f32.mrf.mxu0
        %v1445 = vadd.f32 0.0, %v1444
        %1446 = vmatmul.f32.gmra.mxu0 %v877
        %v1447 = vpop.f32.mrf.mxu0
        %v1448 = vadd.f32 0.0, %v1447
        %1449 = vmatmul.f32.gmra.mxu0 %v879
        %v1450 = vpop.f32.mrf.mxu0
        %v1451 = vadd.f32 0.0, %v1450
        %1452 = vmatmul.f32.gmra.mxu0 %v881
        %v1453 = vpop.f32.mrf.mxu0
        %v1454 = vadd.f32 0.0, %v1453
        %1455 = vmatmul.f32.gmra.mxu0 %v883
        %v1456 = vpop.f32.mrf.mxu0
        %v1457 = vadd.f32 0.0, %v1456
        %1458 = vmatmul.f32.gmra.mxu0 %v885
        %v1459 = vpop.f32.mrf.mxu0
        %v1460 = vadd.f32 0.0, %v1459
        %1461 = vmatmul.f32.gmra.mxu0 %v887
        %v1462 = vpop.f32.mrf.mxu0
        %v1463 = vadd.f32 0.0, %v1462
        %1464 = vmatmul.f32.gmra.mxu0 %v889
        %v1465 = vpop.f32.mrf.mxu0
        %v1466 = vadd.f32 0.0, %v1465
        %1467 = vmatmul.f32.gmra.mxu0 %v891
        %v1468 = vpop.f32.mrf.mxu0
        %v1469 = vadd.f32 0.0, %v1468
        %1470 = vmatmul.f32.gmra.mxu0 %v893
        %v1471 = vpop.f32.mrf.mxu0
        %v1472 = vadd.f32 0.0, %v1471
        %1473 = vmatmul.f32.gmra.mxu0 %v895
        %v1474 = vpop.f32.mrf.mxu0
        %v1475 = vadd.f32 0.0, %v1474
        %1476 = vmatmul.f32.gmra.mxu0 %v897
        %v1477 = vpop.f32.mrf.mxu0
        %v1478 = vadd.f32 0.0, %v1477
        %1479 = vmatmul.f32.gmra.mxu0 %v899
        %v1480 = vpop.f32.mrf.mxu0
        %v1481 = vadd.f32 0.0, %v1480
        %1482 = vmatmul.f32.gmra.mxu0 %v901
        %v1483 = vpop.f32.mrf.mxu0
        %v1484 = vadd.f32 0.0, %v1483
        %1485 = vmatmul.f32.gmra.mxu0 %v903
        %v1486 = vpop.f32.mrf.mxu0
        %v1487 = vadd.f32 0.0, %v1486
        %1488 = vmatmul.f32.gmra.mxu0 %v905
        %v1489 = vpop.f32.mrf.mxu0
        %v1490 = vadd.f32 0.0, %v1489
        %1491 = vmatmul.f32.gmra.mxu0 %v907
        %v1492 = vpop.f32.mrf.mxu0
        %v1493 = vadd.f32 0.0, %v1492
        %1494 = vmatmul.f32.gmra.mxu0 %v909
        %v1495 = vpop.f32.mrf.mxu0
        %v1496 = vadd.f32 0.0, %v1495
        %1497 = vmatmul.f32.gmra.mxu0 %v911
        %v1498 = vpop.f32.mrf.mxu0
        %v1499 = vadd.f32 0.0, %v1498
        %1500 = vmatmul.f32.gmra.mxu0 %v913
        %v1501 = vpop.f32.mrf.mxu0
        %v1502 = vadd.f32 0.0, %v1501
        %1503 = vmatmul.f32.gmra.mxu0 %v915
        %v1504 = vpop.f32.mrf.mxu0
        %v1505 = vadd.f32 0.0, %v1504
        %1506 = vmatmul.f32.gmra.mxu0 %v917
        %v1507 = vpop.f32.mrf.mxu0
        %v1508 = vadd.f32 0.0, %v1507
        %1509 = vmatmul.f32.gmra.mxu0 %v919
        %v1510 = vpop.f32.mrf.mxu0
        %v1511 = vadd.f32 0.0, %v1510
        %1512 = vmatmul.f32.gmra.mxu0 %v921
        %v1513 = vpop.f32.mrf.mxu0
        %v1514 = vadd.f32 0.0, %v1513
        %1515 = vmatmul.f32.gmra.mxu0 %v923
        %v1516 = vpop.f32.mrf.mxu0
        %v1517 = vadd.f32 0.0, %v1516
        %1518 = vmatmul.f32.gmra.mxu0 %v1408
        %v1519 = vpop.f32.mrf.mxu0
        %v1520 = vadd.f32 0.0, %v1519
        %1521 = vmatmul.f32.gmra.mxu0 %v1410
        %v1522 = vpop.f32.mrf.mxu0
        %v1523 = vadd.f32 0.0, %v1522
        %1524 = vdwg.mxu0
        %v1525 = vadd.f32 %v1362, %v1430
        %v1526 = vadd.f32 %v1363, %v1433
        %v1527 = vadd.f32 %v1364, %v1436
        %v1528 = vadd.f32 %v1365, %v1439
        %v1529 = vadd.f32 %v1366, %v1442
        %v1530 = vadd.f32 %v1367, %v1445
        %v1531 = vadd.f32 %v1368, %v1448
        %v1532 = vadd.f32 %v1369, %v1451
        %v1533 = vadd.f32 %v1370, %v1454
        %v1534 = vadd.f32 %v1371, %v1457
        %v1535 = vadd.f32 %v1372, %v1460
        %v1536 = vadd.f32 %v1373, %v1463
        %v1537 = vadd.f32 %v1374, %v1466
        %v1538 = vadd.f32 %v1375, %v1469
        %v1539 = vadd.f32 %v1376, %v1472
        %v1540 = vadd.f32 %v1377, %v1475
        %v1541 = vadd.f32 %v1378, %v1478
        %v1542 = vadd.f32 %v1379, %v1481
        %v1543 = vadd.f32 %v1380, %v1484
        %v1544 = vadd.f32 %v1381, %v1487
        %v1545 = vadd.f32 %v1382, %v1490
        %v1546 = vadd.f32 %v1383, %v1493
        %v1547 = vadd.f32 %v1384, %v1496
        %v1548 = vadd.f32 %v1385, %v1499
        %v1549 = vadd.f32 %v1386, %v1502
        %v1550 = vadd.f32 %v1387, %v1505
        %v1551 = vadd.f32 %v1388, %v1508
        %v1552 = vadd.f32 %v1389, %v1511
        %v1553 = vadd.f32 %v1390, %v1514
        %v1554 = vadd.f32 %v1391, %v1517
        %v1555 = vadd.f32 %v1392, %v1520
        %v1556 = vadd.f32 %v1393, %v1523
        %s1557 = scalar_lea.vmem %s1, 384
        %v1558 = vld [vmem:[%s1557] sm:$0xff]
        %v1559 = vld [vmem:[%s1557 + $0x8] sm:$0xff]
        %v1560 = vld [vmem:[%s1557 + $0x10] sm:$0xff]
        %v1561 = vld [vmem:[%s1557 + $0x18] sm:$0xff]
        %v1562 = vld [vmem:[%s1557 + $0x20] sm:$0xff]
        %v1563 = vld [vmem:[%s1557 + $0x28] sm:$0xff]
        %v1564 = vld [vmem:[%s1557 + $0x30] sm:$0xff]
        %v1565 = vld [vmem:[%s1557 + $0x38] sm:$0xff]
        %v1567 = vsel %vm416, %v267, 0
        %v1570 = vsel %vm416, %v268, 0
        %1572 = vmatpush.msra.mxu0 0.0
        %1573 = vmatpush.msra.mxu0 0.0
        %1574 = vmatpush.msra.mxu0 0.0
        %1575 = vmatpush.msra.mxu0 0.0
        %1576 = vmatpush.msra.mxu0 0.0
        %1577 = vmatpush.msra.mxu0 0.0
        %1578 = vmatpush.msra.mxu0 0.0
        %1579 = vmatpush.msra.mxu0 0.0
        %1580 = vmatpush.msra.mxu0 %v1565
        %1581 = vmatpush.msra.mxu0 %v1564
        %1582 = vmatpush.msra.mxu0 %v1563
        %1583 = vmatpush.msra.mxu0 %v1562
        %1584 = vmatpush.msra.mxu0 %v1561
        %1585 = vmatpush.msra.mxu0 %v1560
        %1586 = vmatpush.msra.mxu0 %v1559
        %1587 = vmatpush.msra.mxu0 %v1558
        %1588 = vmatmul.f32.gmra.mxu0 %v602
        %v1589 = vpop.f32.mrf.mxu0
        %v1590 = vadd.f32 0.0, %v1589
        %1591 = vmatmul.f32.gmra.mxu0 %v604
        %v1592 = vpop.f32.mrf.mxu0
        %v1593 = vadd.f32 0.0, %v1592
        %1594 = vmatmul.f32.gmra.mxu0 %v606
        %v1595 = vpop.f32.mrf.mxu0
        %v1596 = vadd.f32 0.0, %v1595
        %1597 = vmatmul.f32.gmra.mxu0 %v608
        %v1598 = vpop.f32.mrf.mxu0
        %v1599 = vadd.f32 0.0, %v1598
        %1600 = vmatmul.f32.gmra.mxu0 %v610
        %v1601 = vpop.f32.mrf.mxu0
        %v1602 = vadd.f32 0.0, %v1601
        %1603 = vmatmul.f32.gmra.mxu0 %v612
        %v1604 = vpop.f32.mrf.mxu0
        %v1605 = vadd.f32 0.0, %v1604
        %1606 = vmatmul.f32.gmra.mxu0 %v614
        %v1607 = vpop.f32.mrf.mxu0
        %v1608 = vadd.f32 0.0, %v1607
        %1609 = vmatmul.f32.gmra.mxu0 %v616
        %v1610 = vpop.f32.mrf.mxu0
        %v1611 = vadd.f32 0.0, %v1610
        %1612 = vmatmul.f32.gmra.mxu0 %v618
        %v1613 = vpop.f32.mrf.mxu0
        %v1614 = vadd.f32 0.0, %v1613
        %1615 = vmatmul.f32.gmra.mxu0 %v620
        %v1616 = vpop.f32.mrf.mxu0
        %v1617 = vadd.f32 0.0, %v1616
        %1618 = vmatmul.f32.gmra.mxu0 %v622
        %v1619 = vpop.f32.mrf.mxu0
        %v1620 = vadd.f32 0.0, %v1619
        %1621 = vmatmul.f32.gmra.mxu0 %v624
        %v1622 = vpop.f32.mrf.mxu0
        %v1623 = vadd.f32 0.0, %v1622
        %1624 = vmatmul.f32.gmra.mxu0 %v626
        %v1625 = vpop.f32.mrf.mxu0
        %v1626 = vadd.f32 0.0, %v1625
        %1627 = vmatmul.f32.gmra.mxu0 %v628
        %v1628 = vpop.f32.mrf.mxu0
        %v1629 = vadd.f32 0.0, %v1628
        %1630 = vmatmul.f32.gmra.mxu0 %v630
        %v1631 = vpop.f32.mrf.mxu0
        %v1632 = vadd.f32 0.0, %v1631
        %1633 = vmatmul.f32.gmra.mxu0 %v632
        %v1634 = vpop.f32.mrf.mxu0
        %v1635 = vadd.f32 0.0, %v1634
        %1636 = vmatmul.f32.gmra.mxu0 %v634
        %v1637 = vpop.f32.mrf.mxu0
        %v1638 = vadd.f32 0.0, %v1637
        %1639 = vmatmul.f32.gmra.mxu0 %v636
        %v1640 = vpop.f32.mrf.mxu0
        %v1641 = vadd.f32 0.0, %v1640
        %1642 = vmatmul.f32.gmra.mxu0 %v638
        %v1643 = vpop.f32.mrf.mxu0
        %v1644 = vadd.f32 0.0, %v1643
        %1645 = vmatmul.f32.gmra.mxu0 %v640
        %v1646 = vpop.f32.mrf.mxu0
        %v1647 = vadd.f32 0.0, %v1646
        %1648 = vmatmul.f32.gmra.mxu0 %v642
        %v1649 = vpop.f32.mrf.mxu0
        %v1650 = vadd.f32 0.0, %v1649
        %1651 = vmatmul.f32.gmra.mxu0 %v644
        %v1652 = vpop.f32.mrf.mxu0
        %v1653 = vadd.f32 0.0, %v1652
        %1654 = vmatmul.f32.gmra.mxu0 %v646
        %v1655 = vpop.f32.mrf.mxu0
        %v1656 = vadd.f32 0.0, %v1655
        %1657 = vmatmul.f32.gmra.mxu0 %v648
        %v1658 = vpop.f32.mrf.mxu0
        %v1659 = vadd.f32 0.0, %v1658
        %1660 = vmatmul.f32.gmra.mxu0 %v650
        %v1661 = vpop.f32.mrf.mxu0
        %v1662 = vadd.f32 0.0, %v1661
        %1663 = vmatmul.f32.gmra.mxu0 %v652
        %v1664 = vpop.f32.mrf.mxu0
        %v1665 = vadd.f32 0.0, %v1664
        %1666 = vmatmul.f32.gmra.mxu0 %v654
        %v1667 = vpop.f32.mrf.mxu0
        %v1668 = vadd.f32 0.0, %v1667
        %1669 = vmatmul.f32.gmra.mxu0 %v656
        %v1670 = vpop.f32.mrf.mxu0
        %v1671 = vadd.f32 0.0, %v1670
        %1672 = vmatmul.f32.gmra.mxu0 %v1080
        %v1673 = vpop.f32.mrf.mxu0
        %v1674 = vadd.f32 0.0, %v1673
        %1675 = vmatmul.f32.gmra.mxu0 %v1083
        %v1676 = vpop.f32.mrf.mxu0
        %v1677 = vadd.f32 0.0, %v1676
        %1678 = vmatmul.f32.gmra.mxu0 %v1567
        %v1679 = vpop.f32.mrf.mxu0
        %v1680 = vadd.f32 0.0, %v1679
        %1681 = vmatmul.f32.gmra.mxu0 %v1570
        %v1682 = vpop.f32.mrf.mxu0
        %v1683 = vadd.f32 0.0, %v1682
        %1684 = vdwg.mxu0
        %v1685 = vadd.f32 %v1525, %v1590
        %v1686 = vadd.f32 %v1526, %v1593
        %v1687 = vadd.f32 %v1527, %v1596
        %v1688 = vadd.f32 %v1528, %v1599
        %v1689 = vadd.f32 %v1529, %v1602
        %v1690 = vadd.f32 %v1530, %v1605
        %v1691 = vadd.f32 %v1531, %v1608
        %v1692 = vadd.f32 %v1532, %v1611
        %v1693 = vadd.f32 %v1533, %v1614
        %v1694 = vadd.f32 %v1534, %v1617
        %v1695 = vadd.f32 %v1535, %v1620
        %v1696 = vadd.f32 %v1536, %v1623
        %v1697 = vadd.f32 %v1537, %v1626
        %v1698 = vadd.f32 %v1538, %v1629
        %v1699 = vadd.f32 %v1539, %v1632
        %v1700 = vadd.f32 %v1540, %v1635
        %v1701 = vadd.f32 %v1541, %v1638
        %v1702 = vadd.f32 %v1542, %v1641
        %v1703 = vadd.f32 %v1543, %v1644
        %v1704 = vadd.f32 %v1544, %v1647
        %v1705 = vadd.f32 %v1545, %v1650
        %v1706 = vadd.f32 %v1546, %v1653
        %v1707 = vadd.f32 %v1547, %v1656
        %v1708 = vadd.f32 %v1548, %v1659
        %v1709 = vadd.f32 %v1549, %v1662
        %v1710 = vadd.f32 %v1550, %v1665
        %v1711 = vadd.f32 %v1551, %v1668
        %v1712 = vadd.f32 %v1552, %v1671
        %v1713 = vadd.f32 %v1553, %v1674
        %v1714 = vadd.f32 %v1554, %v1677
        %v1715 = vadd.f32 %v1555, %v1680
        %v1716 = vadd.f32 %v1556, %v1683
        %v1718 = vrot.slane %v267, 1
        %v1719 = vrot.slane %v268, 1
        %v1720 = vsel %vm326, %v1718, %v1719
        %v1721 = vrot.slane %v269, 1
        %v1722 = vsel %vm326, %v1719, %v1721
        %s1723 = scalar_lea.vmem %s1, 448
        %v1724 = vld [vmem:[%s1723] sm:$0xff]
        %v1725 = vld [vmem:[%s1723 + $0x8] sm:$0xff]
        %v1726 = vld [vmem:[%s1723 + $0x10] sm:$0xff]
        %v1727 = vld [vmem:[%s1723 + $0x18] sm:$0xff]
        %v1728 = vld [vmem:[%s1723 + $0x20] sm:$0xff]
        %v1729 = vld [vmem:[%s1723 + $0x28] sm:$0xff]
        %v1730 = vld [vmem:[%s1723 + $0x30] sm:$0xff]
        %v1731 = vld [vmem:[%s1723 + $0x38] sm:$0xff]
        %v1732 = vsel %vm416, %v1720, 0
        %v1734 = vsel %vm416, %v1722, 0
        %1736 = vmatpush.msra.mxu0 0.0
        %1737 = vmatpush.msra.mxu0 0.0
        %1738 = vmatpush.msra.mxu0 0.0
        %1739 = vmatpush.msra.mxu0 0.0
        %1740 = vmatpush.msra.mxu0 0.0
        %1741 = vmatpush.msra.mxu0 0.0
        %1742 = vmatpush.msra.mxu0 0.0
        %1743 = vmatpush.msra.mxu0 0.0
        %1744 = vmatpush.msra.mxu0 %v1731
        %1745 = vmatpush.msra.mxu0 %v1730
        %1746 = vmatpush.msra.mxu0 %v1729
        %1747 = vmatpush.msra.mxu0 %v1728
        %1748 = vmatpush.msra.mxu0 %v1727
        %1749 = vmatpush.msra.mxu0 %v1726
        %1750 = vmatpush.msra.mxu0 %v1725
        %1751 = vmatpush.msra.mxu0 %v1724
        %1752 = vmatmul.f32.gmra.mxu0 %v425
        %v1753 = vpop.f32.mrf.mxu0
        %v1754 = vadd.f32 0.0, %v1753
        %1755 = vmatmul.f32.gmra.mxu0 %v427
        %v1756 = vpop.f32.mrf.mxu0
        %v1757 = vadd.f32 0.0, %v1756
        %1758 = vmatmul.f32.gmra.mxu0 %v429
        %v1759 = vpop.f32.mrf.mxu0
        %v1760 = vadd.f32 0.0, %v1759
        %1761 = vmatmul.f32.gmra.mxu0 %v431
        %v1762 = vpop.f32.mrf.mxu0
        %v1763 = vadd.f32 0.0, %v1762
        %1764 = vmatmul.f32.gmra.mxu0 %v433
        %v1765 = vpop.f32.mrf.mxu0
        %v1766 = vadd.f32 0.0, %v1765
        %1767 = vmatmul.f32.gmra.mxu0 %v435
        %v1768 = vpop.f32.mrf.mxu0
        %v1769 = vadd.f32 0.0, %v1768
        %1770 = vmatmul.f32.gmra.mxu0 %v437
        %v1771 = vpop.f32.mrf.mxu0
        %v1772 = vadd.f32 0.0, %v1771
        %1773 = vmatmul.f32.gmra.mxu0 %v439
        %v1774 = vpop.f32.mrf.mxu0
        %v1775 = vadd.f32 0.0, %v1774
        %1776 = vmatmul.f32.gmra.mxu0 %v441
        %v1777 = vpop.f32.mrf.mxu0
        %v1778 = vadd.f32 0.0, %v1777
        %1779 = vmatmul.f32.gmra.mxu0 %v443
        %v1780 = vpop.f32.mrf.mxu0
        %v1781 = vadd.f32 0.0, %v1780
        %1782 = vmatmul.f32.gmra.mxu0 %v445
        %v1783 = vpop.f32.mrf.mxu0
        %v1784 = vadd.f32 0.0, %v1783
        %1785 = vmatmul.f32.gmra.mxu0 %v447
        %v1786 = vpop.f32.mrf.mxu0
        %v1787 = vadd.f32 0.0, %v1786
        %1788 = vmatmul.f32.gmra.mxu0 %v449
        %v1789 = vpop.f32.mrf.mxu0
        %v1790 = vadd.f32 0.0, %v1789
        %1791 = vmatmul.f32.gmra.mxu0 %v451
        %v1792 = vpop.f32.mrf.mxu0
        %v1793 = vadd.f32 0.0, %v1792
        %1794 = vmatmul.f32.gmra.mxu0 %v453
        %v1795 = vpop.f32.mrf.mxu0
        %v1796 = vadd.f32 0.0, %v1795
        %1797 = vmatmul.f32.gmra.mxu0 %v455
        %v1798 = vpop.f32.mrf.mxu0
        %v1799 = vadd.f32 0.0, %v1798
        %1800 = vmatmul.f32.gmra.mxu0 %v457
        %v1801 = vpop.f32.mrf.mxu0
        %v1802 = vadd.f32 0.0, %v1801
        %1803 = vmatmul.f32.gmra.mxu0 %v459
        %v1804 = vpop.f32.mrf.mxu0
        %v1805 = vadd.f32 0.0, %v1804
        %1806 = vmatmul.f32.gmra.mxu0 %v461
        %v1807 = vpop.f32.mrf.mxu0
        %v1808 = vadd.f32 0.0, %v1807
        %1809 = vmatmul.f32.gmra.mxu0 %v463
        %v1810 = vpop.f32.mrf.mxu0
        %v1811 = vadd.f32 0.0, %v1810
        %1812 = vmatmul.f32.gmra.mxu0 %v465
        %v1813 = vpop.f32.mrf.mxu0
        %v1814 = vadd.f32 0.0, %v1813
        %1815 = vmatmul.f32.gmra.mxu0 %v467
        %v1816 = vpop.f32.mrf.mxu0
        %v1817 = vadd.f32 0.0, %v1816
        %1818 = vmatmul.f32.gmra.mxu0 %v469
        %v1819 = vpop.f32.mrf.mxu0
        %v1820 = vadd.f32 0.0, %v1819
        %1821 = vmatmul.f32.gmra.mxu0 %v471
        %v1822 = vpop.f32.mrf.mxu0
        %v1823 = vadd.f32 0.0, %v1822
        %1824 = vmatmul.f32.gmra.mxu0 %v473
        %v1825 = vpop.f32.mrf.mxu0
        %v1826 = vadd.f32 0.0, %v1825
        %1827 = vmatmul.f32.gmra.mxu0 %v475
        %v1828 = vpop.f32.mrf.mxu0
        %v1829 = vadd.f32 0.0, %v1828
        %1830 = vmatmul.f32.gmra.mxu0 %v477
        %v1831 = vpop.f32.mrf.mxu0
        %v1832 = vadd.f32 0.0, %v1831
        %1833 = vmatmul.f32.gmra.mxu0 %v479
        %v1834 = vpop.f32.mrf.mxu0
        %v1835 = vadd.f32 0.0, %v1834
        %1836 = vmatmul.f32.gmra.mxu0 %v1245
        %v1837 = vpop.f32.mrf.mxu0
        %v1838 = vadd.f32 0.0, %v1837
        %1839 = vmatmul.f32.gmra.mxu0 %v1247
        %v1840 = vpop.f32.mrf.mxu0
        %v1841 = vadd.f32 0.0, %v1840
        %1842 = vmatmul.f32.gmra.mxu0 %v1732
        %v1843 = vpop.f32.mrf.mxu0
        %v1844 = vadd.f32 0.0, %v1843
        %1845 = vmatmul.f32.gmra.mxu0 %v1734
        %v1846 = vpop.f32.mrf.mxu0
        %v1847 = vadd.f32 0.0, %v1846
        %1848 = vdwg.mxu0
        %v1849 = vadd.f32 %v1685, %v1754
        %v1850 = vadd.f32 %v1686, %v1757
        %v1851 = vadd.f32 %v1687, %v1760
        %v1852 = vadd.f32 %v1688, %v1763
        %v1853 = vadd.f32 %v1689, %v1766
        %v1854 = vadd.f32 %v1690, %v1769
        %v1855 = vadd.f32 %v1691, %v1772
        %v1856 = vadd.f32 %v1692, %v1775
        %v1857 = vadd.f32 %v1693, %v1778
        %v1858 = vadd.f32 %v1694, %v1781
        %v1859 = vadd.f32 %v1695, %v1784
        %v1860 = vadd.f32 %v1696, %v1787
        %v1861 = vadd.f32 %v1697, %v1790
        %v1862 = vadd.f32 %v1698, %v1793
        %v1863 = vadd.f32 %v1699, %v1796
        %v1864 = vadd.f32 %v1700, %v1799
        %v1865 = vadd.f32 %v1701, %v1802
        %v1866 = vadd.f32 %v1702, %v1805
        %v1867 = vadd.f32 %v1703, %v1808
        %v1868 = vadd.f32 %v1704, %v1811
        %v1869 = vadd.f32 %v1705, %v1814
        %v1870 = vadd.f32 %v1706, %v1817
        %v1871 = vadd.f32 %v1707, %v1820
        %v1872 = vadd.f32 %v1708, %v1823
        %v1873 = vadd.f32 %v1709, %v1826
        %v1874 = vadd.f32 %v1710, %v1829
        %v1875 = vadd.f32 %v1711, %v1832
        %v1876 = vadd.f32 %v1712, %v1835
        %v1877 = vadd.f32 %v1713, %v1838
        %v1878 = vadd.f32 %v1714, %v1841
        %v1879 = vadd.f32 %v1715, %v1844
        %v1880 = vadd.f32 %v1716, %v1847
        %v1881 = vrot.slane %v267, 2
        %v1882 = vrot.slane %v268, 2
        %v1883 = vsel %vm771, %v1881, %v1882
        %v1884 = vrot.slane %v269, 2
        %v1885 = vsel %vm771, %v1882, %v1884
        %s1886 = scalar_lea.vmem %s1, 512
        %v1887 = vld [vmem:[%s1886] sm:$0xff]
        %v1888 = vld [vmem:[%s1886 + $0x8] sm:$0xff]
        %v1889 = vld [vmem:[%s1886 + $0x10] sm:$0xff]
        %v1890 = vld [vmem:[%s1886 + $0x18] sm:$0xff]
        %v1891 = vld [vmem:[%s1886 + $0x20] sm:$0xff]
        %v1892 = vld [vmem:[%s1886 + $0x28] sm:$0xff]
        %v1893 = vld [vmem:[%s1886 + $0x30] sm:$0xff]
        %v1894 = vld [vmem:[%s1886 + $0x38] sm:$0xff]
        %v1895 = vsel %vm416, %v1883, 0
        %v1897 = vsel %vm416, %v1885, 0
        %1899 = vmatpush.msra.mxu0 0.0
        %1900 = vmatpush.msra.mxu0 0.0
        %1901 = vmatpush.msra.mxu0 0.0
        %1902 = vmatpush.msra.mxu0 0.0
        %1903 = vmatpush.msra.mxu0 0.0
        %1904 = vmatpush.msra.mxu0 0.0
        %1905 = vmatpush.msra.mxu0 0.0
        %1906 = vmatpush.msra.mxu0 0.0
        %1907 = vmatpush.msra.mxu0 %v1894
        %1908 = vmatpush.msra.mxu0 %v1893
        %1909 = vmatpush.msra.mxu0 %v1892
        %1910 = vmatpush.msra.mxu0 %v1891
        %1911 = vmatpush.msra.mxu0 %v1890
        %1912 = vmatpush.msra.mxu0 %v1889
        %1913 = vmatpush.msra.mxu0 %v1888
        %1914 = vmatpush.msra.mxu0 %v1887
        %1915 = vmatmul.f32.gmra.mxu0 %v869
        %v1916 = vpop.f32.mrf.mxu0
        %v1917 = vadd.f32 0.0, %v1916
        %1918 = vmatmul.f32.gmra.mxu0 %v871
        %v1919 = vpop.f32.mrf.mxu0
        %v1920 = vadd.f32 0.0, %v1919
        %1921 = vmatmul.f32.gmra.mxu0 %v873
        %v1922 = vpop.f32.mrf.mxu0
        %v1923 = vadd.f32 0.0, %v1922
        %1924 = vmatmul.f32.gmra.mxu0 %v875
        %v1925 = vpop.f32.mrf.mxu0
        %v1926 = vadd.f32 0.0, %v1925
        %1927 = vmatmul.f32.gmra.mxu0 %v877
        %v1928 = vpop.f32.mrf.mxu0
        %v1929 = vadd.f32 0.0, %v1928
        %1930 = vmatmul.f32.gmra.mxu0 %v879
        %v1931 = vpop.f32.mrf.mxu0
        %v1932 = vadd.f32 0.0, %v1931
        %1933 = vmatmul.f32.gmra.mxu0 %v881
        %v1934 = vpop.f32.mrf.mxu0
        %v1935 = vadd.f32 0.0, %v1934
        %1936 = vmatmul.f32.gmra.mxu0 %v883
        %v1937 = vpop.f32.mrf.mxu0
        %v1938 = vadd.f32 0.0, %v1937
        %1939 = vmatmul.f32.gmra.mxu0 %v885
        %v1940 = vpop.f32.mrf.mxu0
        %v1941 = vadd.f32 0.0, %v1940
        %1942 = vmatmul.f32.gmra.mxu0 %v887
        %v1943 = vpop.f32.mrf.mxu0
        %v1944 = vadd.f32 0.0, %v1943
        %1945 = vmatmul.f32.gmra.mxu0 %v889
        %v1946 = vpop.f32.mrf.mxu0
        %v1947 = vadd.f32 0.0, %v1946
        %1948 = vmatmul.f32.gmra.mxu0 %v891
        %v1949 = vpop.f32.mrf.mxu0
        %v1950 = vadd.f32 0.0, %v1949
        %1951 = vmatmul.f32.gmra.mxu0 %v893
        %v1952 = vpop.f32.mrf.mxu0
        %v1953 = vadd.f32 0.0, %v1952
        %1954 = vmatmul.f32.gmra.mxu0 %v895
        %v1955 = vpop.f32.mrf.mxu0
        %v1956 = vadd.f32 0.0, %v1955
        %1957 = vmatmul.f32.gmra.mxu0 %v897
        %v1958 = vpop.f32.mrf.mxu0
        %v1959 = vadd.f32 0.0, %v1958
        %1960 = vmatmul.f32.gmra.mxu0 %v899
        %v1961 = vpop.f32.mrf.mxu0
        %v1962 = vadd.f32 0.0, %v1961
        %1963 = vmatmul.f32.gmra.mxu0 %v901
        %v1964 = vpop.f32.mrf.mxu0
        %v1965 = vadd.f32 0.0, %v1964
        %1966 = vmatmul.f32.gmra.mxu0 %v903
        %v1967 = vpop.f32.mrf.mxu0
        %v1968 = vadd.f32 0.0, %v1967
        %1969 = vmatmul.f32.gmra.mxu0 %v905
        %v1970 = vpop.f32.mrf.mxu0
        %v1971 = vadd.f32 0.0, %v1970
        %1972 = vmatmul.f32.gmra.mxu0 %v907
        %v1973 = vpop.f32.mrf.mxu0
        %v1974 = vadd.f32 0.0, %v1973
        %1975 = vmatmul.f32.gmra.mxu0 %v909
        %v1976 = vpop.f32.mrf.mxu0
        %v1977 = vadd.f32 0.0, %v1976
        %1978 = vmatmul.f32.gmra.mxu0 %v911
        %v1979 = vpop.f32.mrf.mxu0
        %v1980 = vadd.f32 0.0, %v1979
        %1981 = vmatmul.f32.gmra.mxu0 %v913
        %v1982 = vpop.f32.mrf.mxu0
        %v1983 = vadd.f32 0.0, %v1982
        %1984 = vmatmul.f32.gmra.mxu0 %v915
        %v1985 = vpop.f32.mrf.mxu0
        %v1986 = vadd.f32 0.0, %v1985
        %1987 = vmatmul.f32.gmra.mxu0 %v917
        %v1988 = vpop.f32.mrf.mxu0
        %v1989 = vadd.f32 0.0, %v1988
        %1990 = vmatmul.f32.gmra.mxu0 %v919
        %v1991 = vpop.f32.mrf.mxu0
        %v1992 = vadd.f32 0.0, %v1991
        %1993 = vmatmul.f32.gmra.mxu0 %v921
        %v1994 = vpop.f32.mrf.mxu0
        %v1995 = vadd.f32 0.0, %v1994
        %1996 = vmatmul.f32.gmra.mxu0 %v923
        %v1997 = vpop.f32.mrf.mxu0
        %v1998 = vadd.f32 0.0, %v1997
        %1999 = vmatmul.f32.gmra.mxu0 %v1408
        %v2000 = vpop.f32.mrf.mxu0
        %v2001 = vadd.f32 0.0, %v2000
        %2002 = vmatmul.f32.gmra.mxu0 %v1410
        %v2003 = vpop.f32.mrf.mxu0
        %v2004 = vadd.f32 0.0, %v2003
        %2005 = vmatmul.f32.gmra.mxu0 %v1895
        %v2006 = vpop.f32.mrf.mxu0
        %v2007 = vadd.f32 0.0, %v2006
        %2008 = vmatmul.f32.gmra.mxu0 %v1897
        %v2009 = vpop.f32.mrf.mxu0
        %v2010 = vadd.f32 0.0, %v2009
        %2011 = vdwg.mxu0
        %v2012 = vadd.f32 %v1849, %v1917
        %v2013 = vadd.f32 %v1850, %v1920
        %v2014 = vadd.f32 %v1851, %v1923
        %v2015 = vadd.f32 %v1852, %v1926
        %v2016 = vadd.f32 %v1853, %v1929
        %v2017 = vadd.f32 %v1854, %v1932
        %v2018 = vadd.f32 %v1855, %v1935
        %v2019 = vadd.f32 %v1856, %v1938
        %v2020 = vadd.f32 %v1857, %v1941
        %v2021 = vadd.f32 %v1858, %v1944
        %v2022 = vadd.f32 %v1859, %v1947
        %v2023 = vadd.f32 %v1860, %v1950
        %v2024 = vadd.f32 %v1861, %v1953
        %v2025 = vadd.f32 %v1862, %v1956
        %v2026 = vadd.f32 %v1863, %v1959
        %v2027 = vadd.f32 %v1864, %v1962
        %v2028 = vadd.f32 %v1865, %v1965
        %v2029 = vadd.f32 %v1866, %v1968
        %v2030 = vadd.f32 %v1867, %v1971
        %v2031 = vadd.f32 %v1868, %v1974
        %v2032 = vadd.f32 %v1869, %v1977
        %v2033 = vadd.f32 %v1870, %v1980
        %v2034 = vadd.f32 %v1871, %v1983
        %v2035 = vadd.f32 %v1872, %v1986
        %v2036 = vadd.f32 %v1873, %v1989
        %v2037 = vadd.f32 %v1874, %v1992
        %v2038 = vadd.f32 %v1875, %v1995
        %v2039 = vadd.f32 %v1876, %v1998
        %v2040 = vadd.f32 %v1877, %v2001
        %v2041 = vadd.f32 %v1878, %v2004
        %v2042 = vadd.f32 %v1879, %v2007
        %v2043 = vadd.f32 %v1880, %v2010
        %v2044 = vld [vmem:[%s2] sm:$0x1]
        %v2046 = vperm.slane %v2044, 0
        %v2048 = vadd.f32 %v2012, %v2046
        %v2049 = vadd.f32 %v2013, %v2046
        %v2050 = vadd.f32 %v2014, %v2046
        %v2051 = vadd.f32 %v2015, %v2046
        %v2052 = vadd.f32 %v2016, %v2046
        %v2053 = vadd.f32 %v2017, %v2046
        %v2054 = vadd.f32 %v2018, %v2046
        %v2055 = vadd.f32 %v2019, %v2046
        %v2056 = vadd.f32 %v2020, %v2046
        %v2057 = vadd.f32 %v2021, %v2046
        %v2058 = vadd.f32 %v2022, %v2046
        %v2059 = vadd.f32 %v2023, %v2046
        %v2060 = vadd.f32 %v2024, %v2046
        %v2061 = vadd.f32 %v2025, %v2046
        %v2062 = vadd.f32 %v2026, %v2046
        %v2063 = vadd.f32 %v2027, %v2046
        %v2064 = vadd.f32 %v2028, %v2046
        %v2065 = vadd.f32 %v2029, %v2046
        %v2066 = vadd.f32 %v2030, %v2046
        %v2067 = vadd.f32 %v2031, %v2046
        %v2068 = vadd.f32 %v2032, %v2046
        %v2069 = vadd.f32 %v2033, %v2046
        %v2070 = vadd.f32 %v2034, %v2046
        %v2071 = vadd.f32 %v2035, %v2046
        %v2072 = vadd.f32 %v2036, %v2046
        %v2073 = vadd.f32 %v2037, %v2046
        %v2074 = vadd.f32 %v2038, %v2046
        %v2075 = vadd.f32 %v2039, %v2046
        %v2076 = vadd.f32 %v2040, %v2046
        %v2077 = vadd.f32 %v2041, %v2046
        %v2078 = vadd.f32 %v2042, %v2046
        %v2079 = vadd.f32 %v2043, %v2046
        %v2080 = vld [vmem:[%s215] sm:$0xff]
        %v2081 = vld [vmem:[%s215 + $0x8] sm:$0xff]
        %v2082 = vld [vmem:[%s215 + $0x10] sm:$0xff]
        %v2083 = vld [vmem:[%s215 + $0x18] sm:$0xff]
        %v2084 = vld [vmem:[%s215 + $0x20] sm:$0xff]
        %v2085 = vld [vmem:[%s215 + $0x28] sm:$0xff]
        %v2086 = vld [vmem:[%s215 + $0x30] sm:$0xff]
        %v2087 = vld [vmem:[%s215 + $0x38] sm:$0xff]
        %v2088 = vld [vmem:[%s215 + $0x40] sm:$0xff]
        %v2089 = vld [vmem:[%s215 + $0x48] sm:$0xff]
        %v2090 = vld [vmem:[%s215 + $0x50] sm:$0xff]
        %v2091 = vld [vmem:[%s215 + $0x58] sm:$0xff]
        %v2092 = vld [vmem:[%s215 + $0x60] sm:$0xff]
        %v2093 = vld [vmem:[%s215 + $0x68] sm:$0xff]
        %v2094 = vld [vmem:[%s215 + $0x70] sm:$0xff]
        %v2095 = vld [vmem:[%s215 + $0x78] sm:$0xff]
        %v2096 = vld [vmem:[%s215 + $0x80] sm:$0xff]
        %v2097 = vld [vmem:[%s215 + $0x88] sm:$0xff]
        %v2098 = vld [vmem:[%s215 + $0x90] sm:$0xff]
        %v2099 = vld [vmem:[%s215 + $0x98] sm:$0xff]
        %v2100 = vld [vmem:[%s215 + $0xa0] sm:$0xff]
        %v2101 = vld [vmem:[%s215 + $0xa8] sm:$0xff]
        %v2102 = vld [vmem:[%s215 + $0xb0] sm:$0xff]
        %v2103 = vld [vmem:[%s215 + $0xb8] sm:$0xff]
        %v2104 = vld [vmem:[%s215 + $0xc0] sm:$0xff]
        %v2105 = vld [vmem:[%s215 + $0xc8] sm:$0xff]
        %v2106 = vld [vmem:[%s215 + $0xd0] sm:$0xff]
        %v2107 = vld [vmem:[%s215 + $0xd8] sm:$0xff]
        %v2108 = vld [vmem:[%s215 + $0xe0] sm:$0xff]
        %v2109 = vld [vmem:[%s215 + $0xe8] sm:$0xff]
        %v2110 = vld [vmem:[%s215 + $0xf0] sm:$0xff]
        %v2111 = vld [vmem:[%s215 + $0xf8] sm:$0xff]
        %v2112 = vadd.f32 %v2048, %v2080
        %v2113 = vadd.f32 %v2049, %v2081
        %v2114 = vadd.f32 %v2050, %v2082
        %v2115 = vadd.f32 %v2051, %v2083
        %v2116 = vadd.f32 %v2052, %v2084
        %v2117 = vadd.f32 %v2053, %v2085
        %v2118 = vadd.f32 %v2054, %v2086
        %v2119 = vadd.f32 %v2055, %v2087
        %v2120 = vadd.f32 %v2056, %v2088
        %v2121 = vadd.f32 %v2057, %v2089
        %v2122 = vadd.f32 %v2058, %v2090
        %v2123 = vadd.f32 %v2059, %v2091
        %v2124 = vadd.f32 %v2060, %v2092
        %v2125 = vadd.f32 %v2061, %v2093
        %v2126 = vadd.f32 %v2062, %v2094
        %v2127 = vadd.f32 %v2063, %v2095
        %v2128 = vadd.f32 %v2064, %v2096
        %v2129 = vadd.f32 %v2065, %v2097
        %v2130 = vadd.f32 %v2066, %v2098
        %v2131 = vadd.f32 %v2067, %v2099
        %v2132 = vadd.f32 %v2068, %v2100
        %v2133 = vadd.f32 %v2069, %v2101
        %v2134 = vadd.f32 %v2070, %v2102
        %v2135 = vadd.f32 %v2071, %v2103
        %v2136 = vadd.f32 %v2072, %v2104
        %v2137 = vadd.f32 %v2073, %v2105
        %v2138 = vadd.f32 %v2074, %v2106
        %v2139 = vadd.f32 %v2075, %v2107
        %v2140 = vadd.f32 %v2076, %v2108
        %v2141 = vadd.f32 %v2077, %v2109
        %v2142 = vadd.f32 %v2078, %v2110
        %v2143 = vadd.f32 %v2079, %v2111
        %2144 = vst.msk [vmem:[%s205] sm:$0xff] %vm416, %v2112
        %2145 = vst.msk [vmem:[%s205 + $0x8] sm:$0xff] %vm416, %v2113
        %2146 = vst.msk [vmem:[%s205 + $0x10] sm:$0xff] %vm416, %v2114
        %2147 = vst.msk [vmem:[%s205 + $0x18] sm:$0xff] %vm416, %v2115
        %2148 = vst.msk [vmem:[%s205 + $0x20] sm:$0xff] %vm416, %v2116
        %2149 = vst.msk [vmem:[%s205 + $0x28] sm:$0xff] %vm416, %v2117
        %2150 = vst.msk [vmem:[%s205 + $0x30] sm:$0xff] %vm416, %v2118
        %2151 = vst.msk [vmem:[%s205 + $0x38] sm:$0xff] %vm416, %v2119
        %2152 = vst.msk [vmem:[%s205 + $0x40] sm:$0xff] %vm416, %v2120
        %2153 = vst.msk [vmem:[%s205 + $0x48] sm:$0xff] %vm416, %v2121
        %2154 = vst.msk [vmem:[%s205 + $0x50] sm:$0xff] %vm416, %v2122
        %2155 = vst.msk [vmem:[%s205 + $0x58] sm:$0xff] %vm416, %v2123
        %2156 = vst.msk [vmem:[%s205 + $0x60] sm:$0xff] %vm416, %v2124
        %2157 = vst.msk [vmem:[%s205 + $0x68] sm:$0xff] %vm416, %v2125
        %2158 = vst.msk [vmem:[%s205 + $0x70] sm:$0xff] %vm416, %v2126
        %2159 = vst.msk [vmem:[%s205 + $0x78] sm:$0xff] %vm416, %v2127
        %2160 = vst.msk [vmem:[%s205 + $0x80] sm:$0xff] %vm416, %v2128
        %2161 = vst.msk [vmem:[%s205 + $0x88] sm:$0xff] %vm416, %v2129
        %2162 = vst.msk [vmem:[%s205 + $0x90] sm:$0xff] %vm416, %v2130
        %2163 = vst.msk [vmem:[%s205 + $0x98] sm:$0xff] %vm416, %v2131
        %2164 = vst.msk [vmem:[%s205 + $0xa0] sm:$0xff] %vm416, %v2132
        %2165 = vst.msk [vmem:[%s205 + $0xa8] sm:$0xff] %vm416, %v2133
        %2166 = vst.msk [vmem:[%s205 + $0xb0] sm:$0xff] %vm416, %v2134
        %2167 = vst.msk [vmem:[%s205 + $0xb8] sm:$0xff] %vm416, %v2135
        %2168 = vst.msk [vmem:[%s205 + $0xc0] sm:$0xff] %vm416, %v2136
        %2169 = vst.msk [vmem:[%s205 + $0xc8] sm:$0xff] %vm416, %v2137
        %2170 = vst.msk [vmem:[%s205 + $0xd0] sm:$0xff] %vm416, %v2138
        %2171 = vst.msk [vmem:[%s205 + $0xd8] sm:$0xff] %vm416, %v2139
        %2172 = vst.msk [vmem:[%s205 + $0xe0] sm:$0xff] %vm416, %v2140
        %2173 = vst.msk [vmem:[%s205 + $0xe8] sm:$0xff] %vm416, %v2141
        %2174 = vst.msk [vmem:[%s205 + $0xf0] sm:$0xff] %vm416, %v2142
        %2175 = vst.msk [vmem:[%s205 + $0xf8] sm:$0xff] %vm416, %v2143
        %s2176 = sand.u32 %s120, 1
        %s2177 = scalar_lea.sflag [#allocation3], %s2176
        %s2178 = sand.u32 %s120, 1
        %s2179 = smul.addr %s2178, 256
        %s2180 = scalar_lea.vmem [#allocation2], %s2179
        // Predicated region
        $region37: #{dag_forward_pallas.17} parent=35 // pred_check
          %p2181 = pneg %p130
        $region38: #{dag_forward_pallas.17} parent=35 // pred_check_branch
          %2183 = sbr.rel (%p2181) target = $region40
        $region39: #{dag_forward_pallas.17} parent=35 // pred_region
          %2185 = vsyncadd %s2177, 0
          %s2186 = smul.addr %s18, 32
          %s2187 = smul.addr %s2186, 8
          %s2188 = scalar_lea.hbm %s4, %s2187
          %s2189 = sshll.u32 %s2180, 4
          %s2190 = int_to_ptr.vmem [resolvable:$true] %s2189
          %s2191 = sshll.u32 %s2188, 4
          %s2192 = int_to_ptr.hbm [resolvable:$true] %s2191
          %2197 = dma.vmem_to_hbm [thread:$0]  %s2190, 4096, %s2192, %s2177, 128, 128, 8
        $region40: #{dag_forward_pallas.17} parent=35 // pred_fallthru
          _
      $region36: #{dag_forward_pallas.17} parent=5 // pred_fallthru
        _
      %p2198 = scmp.le.s32.totalorder 2, %s13
      // Predicated region
      $region41: #{dag_forward_pallas.17} parent=5 // pred_check
        %p2199 = pneg %p2198
      $region42: #{dag_forward_pallas.17} parent=5 // pred_check_branch
        %2201 = sbr.rel (%p2199) target = $region44
      $region43: #{dag_forward_pallas.17} parent=5 // pred_region
        %s2202 = ssub.s32 %s13, 2
        // Predicated region
        $region45: #{dag_forward_pallas.17} parent=43 // pred_check
          %p2203 = pneg %p136
        $region46: #{dag_forward_pallas.17} parent=43 // pred_check_branch
          %2205 = sbr.rel (%p2203) target = $region48
        $region47: #{dag_forward_pallas.17} parent=43 // pred_region
          %s2206 = sand.u32 %s121, 1
          %s2207 = scalar_lea.sflag [#allocation3], %s2206
          %s2208 = sand.u32 %s121, 1
          %s2209 = smul.addr %s2208, 256
          %s2210 = scalar_lea.vmem [#allocation2], %s2209
          %2212 = dma.done %s2207, 4096
        $region48: #{dag_forward_pallas.17} parent=43 // pred_fallthru
          _
      $region44: #{dag_forward_pallas.17} parent=5 // pred_fallthru
        _
    $region6: #{dag_forward_pallas.17} parent=1 // loop_footer
      %s17 = sadd.s32 1, %s13
    $region7: #{dag_forward_pallas.17} parent=1 // loop_footer_branch
      %12 = sbr.rel target = $region3
    $region8: #{dag_forward_pallas.17} parent=1 // loop_exit
      _
    %2213 = vsyncpa [#allocation3], 1
    %s2214 = scalar_lea.sflag [#allocation3], 1
    %2215 = vsyncpa %s2214, 1

// kernel: dag_forward_pallas.10
$region0: #{dag_forward_pallas.10}
  #allocation0 [shape = 'u32[]', space=smem, size = 0x4, offset = 0x4, fixed_abs, tag = 'smem constant byte address 0x4 - core index']
  #allocation1 [shape = 'u32[72,128]{1,0:T(1,128)}', space=vmem, size = 0x9000, scoped, tag = 'internal scratch']
  %s0 = inlined_call_operand.vmem [shape: f32[2,18,18,64], index: 0, kind: input, shape index: {}]
  %s1 = inlined_call_operand.vmem [shape: f32[9,64,64], index: 1, kind: input, shape index: {}]
  %s2 = inlined_call_operand.vmem [shape: f32[1,64], index: 2, kind: input, shape index: {}]
  %s3 = inlined_call_operand.vmem [shape: f32[2,16,16,64], index: 3, kind: output, shape index: {}]
  %s4 = sld [smem:[#allocation0]]
  $region45: #{dag_forward_pallas.10} parent=0
    _
  %s6 = ssub.s32 1, %s4
  %s7 = scalar_select 0, %s6, %s4
  loop: start=0, step=1, limit=4
  $region2: #{dag_forward_pallas.10} parent=0 // loop_pre_header
    _
  $region3: #{dag_forward_pallas.10} parent=0 // loop_header
    %s9 = sphi 0, %s13
    %p10 = scmp.ge.s32.totalorder %s9, 4
    %s19 = sphi 0, %s21
    %s22 = sphi 0, %s19
    %s23 = sphi 0, %s22
    %s39 = sphi 0, %s23
    %s43 = sphi 0, %s43
    %s45 = sphi 0, %s43
    %s46 = sphi 0, %s45
    %s60 = sphi 0, %s46
    %s64 = sphi 0, %s64
    %s66 = sphi 0, %s64
    %s67 = sphi 0, %s66
    %s81 = sphi 0, %s67
    %s87 = sphi 0, %s89
    %s90 = sphi 0, %s87
    %s91 = sphi 0, %s90
    %s107 = sphi 0, %s91
  $region4: #{dag_forward_pallas.10} parent=0 // loop_header_branch
    %12 = sbr.rel (%p10) target = $region8
  $region5: #{dag_forward_pallas.10} parent=0 // loop_body
    %s14 = ssub.s32 %s9, 1
    %s15 = ssub.s32 %s9, 2
    %s16 = sadd.s32 %s9, 1
    %s17 = ssub.s32 %s9, %s16
    %p18 = scmp.eq.s32.totalorder %s17, 0
    %s20 = sadd.s32 %s19, 1
    %s21 = scalar_select %p18, %s19, %s20
    %p24 = pneg %p18
    %p25 = scmp.eq.s32.totalorder %s9, 1
    %p26 = por %p24, %p25
    %p27 = scmp.ne.s32.totalorder %s19, %s22
    %p28 = scmp.eq.s32.totalorder %s9, 0
    %p29 = por %p27, %p28
    %p30 = scmp.ne.s32.totalorder %s19, %s22
    %p31 = scmp.eq.s32.totalorder %s14, 1
    %p32 = por %p30, %p31
    %p33 = scmp.ne.s32.totalorder %s22, %s23
    %p34 = scmp.eq.s32.totalorder %s14, 0
    %p35 = por %p33, %p34
    %p36 = scmp.ne.s32.totalorder %s22, %s23
    %p37 = scmp.eq.s32.totalorder %s15, 1
    %p38 = por %p36, %p37
    %p40 = scmp.ne.s32.totalorder %s23, %s39
    %p41 = scmp.eq.s32.totalorder %s15, 0
    %p42 = por %p40, %p41
    %s44 = sadd.s32 %s43, 1
    %p47 = scmp.eq.s32.totalorder %s9, 1
    %p48 = scmp.ne.s32.totalorder %s43, %s45
    %p49 = scmp.eq.s32.totalorder %s9, 0
    %p50 = por %p48, %p49
    %p51 = scmp.ne.s32.totalorder %s43, %s45
    %p52 = scmp.eq.s32.totalorder %s14, 1
    %p53 = por %p51, %p52
    %p54 = scmp.ne.s32.totalorder %s45, %s46
    %p55 = scmp.eq.s32.totalorder %s14, 0
    %p56 = por %p54, %p55
    %p57 = scmp.ne.s32.totalorder %s45, %s46
    %p58 = scmp.eq.s32.totalorder %s15, 1
    %p59 = por %p57, %p58
    %p61 = scmp.ne.s32.totalorder %s46, %s60
    %p62 = scmp.eq.s32.totalorder %s15, 0
    %p63 = por %p61, %p62
    %s65 = sadd.s32 %s64, 1
    %p68 = scmp.eq.s32.totalorder %s9, 1
    %p69 = scmp.ne.s32.totalorder %s64, %s66
    %p70 = scmp.eq.s32.totalorder %s9, 0
    %p71 = por %p69, %p70
    %p72 = scmp.ne.s32.totalorder %s64, %s66
    %p73 = scmp.eq.s32.totalorder %s14, 1
    %p74 = por %p72, %p73
    %p75 = scmp.ne.s32.totalorder %s66, %s67
    %p76 = scmp.eq.s32.totalorder %s14, 0
    %p77 = por %p75, %p76
    %p78 = scmp.ne.s32.totalorder %s66, %s67
    %p79 = scmp.eq.s32.totalorder %s15, 1
    %p80 = por %p78, %p79
    %p82 = scmp.ne.s32.totalorder %s67, %s81
    %p83 = scmp.eq.s32.totalorder %s15, 0
    %p84 = por %p82, %p83
    %s85 = ssub.s32 %s9, %s16
    %p86 = scmp.eq.s32.totalorder %s85, 0
    %s88 = sadd.s32 %s87, 1
    %s89 = scalar_select %p86, %s87, %s88
    %p92 = pneg %p86
    %p93 = scmp.eq.s32.totalorder %s9, 1
    %p94 = por %p92, %p93
    %p95 = scmp.ne.s32.totalorder %s87, %s90
    %p96 = scmp.eq.s32.totalorder %s9, 0
    %p97 = por %p95, %p96
    %p98 = scmp.ne.s32.totalorder %s87, %s90
    %p99 = scmp.eq.s32.totalorder %s14, 1
    %p100 = por %p98, %p99
    %p101 = scmp.ne.s32.totalorder %s90, %s91
    %p102 = scmp.eq.s32.totalorder %s14, 0
    %p103 = por %p101, %p102
    %p104 = scmp.ne.s32.totalorder %s90, %s91
    %p105 = scmp.eq.s32.totalorder %s15, 1
    %p106 = por %p104, %p105
    %p108 = scmp.ne.s32.totalorder %s91, %s107
    %p109 = scmp.eq.s32.totalorder %s15, 0
    %p110 = por %p108, %p109
    %p111 = scmp.le.s32.totalorder 1, %s9
    %p112 = scmp.lt.s32.totalorder %s9, 3
    %p113 = pnand %p111, %p112
    %p114 = pneg %p113
    // Predicated region
    $region9: #{dag_forward_pallas.10} parent=5 // pred_check
      _
    $region10: #{dag_forward_pallas.10} parent=5 // pred_check_branch
      %116 = sbr.rel (%p113) target = $region12
    $region11: #{dag_forward_pallas.10} parent=5 // pred_region
      %s117 = ssub.s32 %s9, 1
      // Predicated region
      $region13: #{dag_forward_pallas.10} parent=11 // pred_check
        %p118 = pneg %p56
      $region14: #{dag_forward_pallas.10} parent=11 // pred_check_branch
        %120 = sbr.rel (%p118) target = $region16
      $region15: #{dag_forward_pallas.10} parent=11 // pred_region
        _
      $region16: #{dag_forward_pallas.10} parent=11 // pred_fallthru
        _
      // Predicated region
      $region17: #{dag_forward_pallas.10} parent=11 // pred_check
        %p121 = pneg %p77
      $region18: #{dag_forward_pallas.10} parent=11 // pred_check_branch
        %123 = sbr.rel (%p121) target = $region20
      $region19: #{dag_forward_pallas.10} parent=11 // pred_region
        _
      $region20: #{dag_forward_pallas.10} parent=11 // pred_fallthru
        _
    $region12: #{dag_forward_pallas.10} parent=5 // pred_fallthru
      _
    %p124 = scmp.lt.s32.totalorder %s9, 2
    // Predicated region
    $region21: #{dag_forward_pallas.10} parent=5 // pred_check
      %p125 = pneg %p124
    $region22: #{dag_forward_pallas.10} parent=5 // pred_check_branch
      %127 = sbr.rel (%p125) target = $region24
    $region23: #{dag_forward_pallas.10} parent=5 // pred_region
      // Predicated region
      $region25: #{dag_forward_pallas.10} parent=23 // pred_check
        %p128 = pneg %p29
      $region26: #{dag_forward_pallas.10} parent=23 // pred_check_branch
        %130 = sbr.rel (%p128) target = $region28
      $region27: #{dag_forward_pallas.10} parent=23 // pred_region
        %p131 = scmp.lt.s32.totalorder %s9, 1
        %s132 = scalar_select %p131, %s9, 1
        %s133 = smul.addr %s132, 54
        %s134 = smul.addr %s133, 8
        %s135 = scalar_lea.vmem %s0, %s134
      $region28: #{dag_forward_pallas.10} parent=23 // pred_fallthru
        _
    $region24: #{dag_forward_pallas.10} parent=5 // pred_fallthru
      _
    %p136 = scmp.le.s32.totalorder 1, %s9
    %p137 = scmp.lt.s32.totalorder %s9, 3
    %p138 = pnand %p136, %p137
    %p139 = pneg %p138
    // Predicated region
    $region29: #{dag_forward_pallas.10} parent=5 // pred_check
      _
    $region30: #{dag_forward_pallas.10} parent=5 // pred_check_branch
      %141 = sbr.rel (%p138) target = $region32
    $region31: #{dag_forward_pallas.10} parent=5 // pred_region
      %s142 = ssub.s32 %s9, 1
      %p143 = scmp.lt.s32.totalorder %s14, 1
      %s144 = scalar_select %p143, %s14, 1
      %s145 = smul.addr %s144, 54
      %s146 = smul.addr %s145, 8
      %s147 = scalar_lea.vmem %s0, %s146
      %p148 = pneg %p35
      %p149 = pneg %p32
      %p150 = pneg %p56
      %p151 = pneg %p53
      %p152 = pneg %p77
      %p153 = pneg %p74
      %p154 = pneg %p103
      %p155 = pneg %p100
      %p156 = scmp.lt.s32.totalorder %s14, 1
      %s157 = scalar_select %p156, %s14, 1
      %s158 = smul.addr %s157, 32
      %s159 = smul.addr %s158, 8
      %s160 = scalar_lea.vmem %s3, %s159
      %p161 = scmp.lt.s32.totalorder %s14, 1
      %s162 = scalar_select %p161, %s14, 1
      %s163 = smul.addr %s162, 54
      %s164 = smul.addr %s163, 8
      %s165 = scalar_lea.vmem %s0, %s164
      %p166 = scmp.lt.s32.totalorder %s14, 1
      %s167 = scalar_select %p166, %s14, 1
      %s168 = smul.addr %s167, 32
      %s169 = smul.addr %s168, 8
      %s170 = scalar_lea.vmem %s3, %s169
      %v171 = vld [vmem:[%s165] sm:$0xff]
      %v172 = vld [vmem:[%s165 + $0x8] sm:$0xff]
      %v173 = vld [vmem:[%s165 + $0x10] sm:$0x3]
      %v174 = vld [vmem:[%s165 + $0x18] sm:$0xff]
      %v175 = vld [vmem:[%s165 + $0x20] sm:$0xff]
      %v176 = vld [vmem:[%s165 + $0x28] sm:$0x3]
      %v177 = vld [vmem:[%s165 + $0x30] sm:$0xff]
      %v178 = vld [vmem:[%s165 + $0x38] sm:$0xff]
      %v179 = vld [vmem:[%s165 + $0x40] sm:$0x3]
      %v180 = vld [vmem:[%s165 + $0x48] sm:$0xff]
      %v181 = vld [vmem:[%s165 + $0x50] sm:$0xff]
      %v182 = vld [vmem:[%s165 + $0x58] sm:$0x3]
      %v183 = vld [vmem:[%s165 + $0x60] sm:$0xff]
      %v184 = vld [vmem:[%s165 + $0x68] sm:$0xff]
      %v185 = vld [vmem:[%s165 + $0x70] sm:$0x3]
      %v186 = vld [vmem:[%s165 + $0x78] sm:$0xff]
      %v187 = vld [vmem:[%s165 + $0x80] sm:$0xff]
      %v188 = vld [vmem:[%s165 + $0x88] sm:$0x3]
      %v189 = vld [vmem:[%s165 + $0x90] sm:$0xff]
      %v190 = vld [vmem:[%s165 + $0x98] sm:$0xff]
      %v191 = vld [vmem:[%s165 + $0xa0] sm:$0x3]
      %v192 = vld [vmem:[%s165 + $0xa8] sm:$0xff]
      %v193 = vld [vmem:[%s165 + $0xb0] sm:$0xff]
      %v194 = vld [vmem:[%s165 + $0xb8] sm:$0x3]
      %v195 = vld [vmem:[%s165 + $0xc0] sm:$0xff]
      %v196 = vld [vmem:[%s165 + $0xc8] sm:$0xff]
      %v197 = vld [vmem:[%s165 + $0xd0] sm:$0x3]
      %v198 = vld [vmem:[%s165 + $0xd8] sm:$0xff]
      %v199 = vld [vmem:[%s165 + $0xe0] sm:$0xff]
      %v200 = vld [vmem:[%s165 + $0xe8] sm:$0x3]
      %v201 = vld [vmem:[%s165 + $0xf0] sm:$0xff]
      %v202 = vld [vmem:[%s165 + $0xf8] sm:$0xff]
      %v203 = vld [vmem:[%s165 + $0x100] sm:$0x3]
      %v204 = vld [vmem:[%s165 + $0x108] sm:$0xff]
      %v205 = vld [vmem:[%s165 + $0x110] sm:$0xff]
      %v206 = vld [vmem:[%s165 + $0x118] sm:$0x3]
      %v207 = vld [vmem:[%s165 + $0x120] sm:$0xff]
      %v208 = vld [vmem:[%s165 + $0x128] sm:$0xff]
      %v209 = vld [vmem:[%s165 + $0x130] sm:$0x3]
      %v210 = vld [vmem:[%s165 + $0x138] sm:$0xff]
      %v211 = vld [vmem:[%s165 + $0x140] sm:$0xff]
      %v212 = vld [vmem:[%s165 + $0x148] sm:$0x3]
      %v213 = vld [vmem:[%s165 + $0x150] sm:$0xff]
      %v214 = vld [vmem:[%s165 + $0x158] sm:$0xff]
      %v215 = vld [vmem:[%s165 + $0x160] sm:$0x3]
      %v216 = vld [vmem:[%s165 + $0x168] sm:$0xff]
      %v217 = vld [vmem:[%s165 + $0x170] sm:$0xff]
      %v218 = vld [vmem:[%s165 + $0x178] sm:$0x3]
      %v219 = vld [vmem:[%s165 + $0x180] sm:$0xff]
      %v220 = vld [vmem:[%s165 + $0x188] sm:$0xff]
      %v221 = vld [vmem:[%s165 + $0x190] sm:$0x3]
      %v222 = vld [vmem:[%s165 + $0x198] sm:$0xff]
      %v223 = vld [vmem:[%s165 + $0x1a0] sm:$0xff]
      %v224 = vld [vmem:[%s165 + $0x1a8] sm:$0x3]
      %v225 = vld [vmem:[%s1] sm:$0xff]
      %v226 = vld [vmem:[%s1 + $0x8] sm:$0xff]
      %v227 = vld [vmem:[%s1 + $0x10] sm:$0xff]
      %v228 = vld [vmem:[%s1 + $0x18] sm:$0xff]
      %v229 = vld [vmem:[%s1 + $0x20] sm:$0xff]
      %v230 = vld [vmem:[%s1 + $0x28] sm:$0xff]
      %v231 = vld [vmem:[%s1 + $0x30] sm:$0xff]
      %v232 = vld [vmem:[%s1 + $0x38] sm:$0xff]
      %vm281 = vcmask 1046528
      %v282 = vrot.slane %v171, 1
      %v283 = vrot.slane %v172, 1
      %v284 = vsel %vm281, %v282, %v283
      %v285 = vrot.slane %v173, 1
      %v286 = vsel %vm281, %v283, %v285
      %v287 = vrot.slane %v174, 1
      %v288 = vrot.slane %v175, 1
      %v289 = vsel %vm281, %v287, %v288
      %v290 = vrot.slane %v176, 1
      %v291 = vsel %vm281, %v288, %v290
      %v292 = vrot.slane %v177, 1
      %v293 = vrot.slane %v178, 1
      %v294 = vsel %vm281, %v292, %v293
      %v295 = vrot.slane %v179, 1
      %v296 = vsel %vm281, %v293, %v295
      %v297 = vrot.slane %v180, 1
      %v298 = vrot.slane %v181, 1
      %v299 = vsel %vm281, %v297, %v298
      %v300 = vrot.slane %v182, 1
      %v301 = vsel %vm281, %v298, %v300
      %v302 = vrot.slane %v183, 1
      %v303 = vrot.slane %v184, 1
      %v304 = vsel %vm281, %v302, %v303
      %v305 = vrot.slane %v185, 1
      %v306 = vsel %vm281, %v303, %v305
      %v307 = vrot.slane %v186, 1
      %v308 = vrot.slane %v187, 1
      %v309 = vsel %vm281, %v307, %v308
      %v310 = vrot.slane %v188, 1
      %v311 = vsel %vm281, %v308, %v310
      %v312 = vrot.slane %v189, 1
      %v313 = vrot.slane %v190, 1
      %v314 = vsel %vm281, %v312, %v313
      %v315 = vrot.slane %v191, 1
      %v316 = vsel %vm281, %v313, %v315
      %v317 = vrot.slane %v192, 1
      %v318 = vrot.slane %v193, 1
      %v319 = vsel %vm281, %v317, %v318
      %v320 = vrot.slane %v194, 1
      %v321 = vsel %vm281, %v318, %v320
      %v322 = vrot.slane %v195, 1
      %v323 = vrot.slane %v196, 1
      %v324 = vsel %vm281, %v322, %v323
      %v325 = vrot.slane %v197, 1
      %v326 = vsel %vm281, %v323, %v325
      %v327 = vrot.slane %v198, 1
      %v328 = vrot.slane %v199, 1
      %v329 = vsel %vm281, %v327, %v328
      %v330 = vrot.slane %v200, 1
      %v331 = vsel %vm281, %v328, %v330
      %v332 = vrot.slane %v201, 1
      %v333 = vrot.slane %v202, 1
      %v334 = vsel %vm281, %v332, %v333
      %v335 = vrot.slane %v203, 1
      %v336 = vsel %vm281, %v333, %v335
      %v337 = vrot.slane %v204, 1
      %v338 = vrot.slane %v205, 1
      %v339 = vsel %vm281, %v337, %v338
      %v340 = vrot.slane %v206, 1
      %v341 = vsel %vm281, %v338, %v340
      %v342 = vrot.slane %v207, 1
      %v343 = vrot.slane %v208, 1
      %v344 = vsel %vm281, %v342, %v343
      %v345 = vrot.slane %v209, 1
      %v346 = vsel %vm281, %v343, %v345
      %v347 = vrot.slane %v210, 1
      %v348 = vrot.slane %v211, 1
      %v349 = vsel %vm281, %v347, %v348
      %v350 = vrot.slane %v212, 1
      %v351 = vsel %vm281, %v348, %v350
      %v352 = vrot.slane %v213, 1
      %v353 = vrot.slane %v214, 1
      %v354 = vsel %vm281, %v352, %v353
      %v355 = vrot.slane %v215, 1
      %v356 = vsel %vm281, %v353, %v355
      %v357 = vrot.slane %v216, 1
      %v358 = vrot.slane %v217, 1
      %v359 = vsel %vm281, %v357, %v358
      %v360 = vrot.slane %v218, 1
      %v361 = vsel %vm281, %v358, %v360
      %s362 = scalar_lea.vmem %s1, 64
      %v363 = vld [vmem:[%s362] sm:$0xff]
      %v364 = vld [vmem:[%s362 + $0x8] sm:$0xff]
      %v365 = vld [vmem:[%s362 + $0x10] sm:$0xff]
      %v366 = vld [vmem:[%s362 + $0x18] sm:$0xff]
      %v367 = vld [vmem:[%s362 + $0x20] sm:$0xff]
      %v368 = vld [vmem:[%s362 + $0x28] sm:$0xff]
      %v369 = vld [vmem:[%s362 + $0x30] sm:$0xff]
      %v370 = vld [vmem:[%s362 + $0x38] sm:$0xff]
      %vm371 = vcmask 523264
      %v372 = vsel %vm371, %v284, 0
      %v374 = vsel %vm371, %v286, 0
      %v376 = vsel %vm371, %v289, 0
      %v378 = vsel %vm371, %v291, 0
      %v380 = vsel %vm371, %v294, 0
      %v382 = vsel %vm371, %v296, 0
      %v384 = vsel %vm371, %v299, 0
      %v386 = vsel %vm371, %v301, 0
      %v388 = vsel %vm371, %v304, 0
      %v390 = vsel %vm371, %v306, 0
      %v392 = vsel %vm371, %v309, 0
      %v394 = vsel %vm371, %v311, 0
      %v396 = vsel %vm371, %v314, 0
      %v398 = vsel %vm371, %v316, 0
      %v400 = vsel %vm371, %v319, 0
      %v402 = vsel %vm371, %v321, 0
      %v404 = vsel %vm371, %v324, 0
      %v406 = vsel %vm371, %v326, 0
      %v408 = vsel %vm371, %v329, 0
      %v410 = vsel %vm371, %v331, 0
      %v412 = vsel %vm371, %v334, 0
      %v414 = vsel %vm371, %v336, 0
      %v416 = vsel %vm371, %v339, 0
      %v418 = vsel %vm371, %v341, 0
      %v420 = vsel %vm371, %v344, 0
      %v422 = vsel %vm371, %v346, 0
      %v424 = vsel %vm371, %v349, 0
      %v426 = vsel %vm371, %v351, 0
      %v428 = vsel %vm371, %v354, 0
      %v430 = vsel %vm371, %v356, 0
      %v432 = vsel %vm371, %v359, 0
      %v434 = vsel %vm371, %v361, 0
      %436 = vmatpush.msra.mxu0 0.0
      %437 = vmatpush.msra.mxu0 0.0
      %438 = vmatpush.msra.mxu0 0.0
      %439 = vmatpush.msra.mxu0 0.0
      %440 = vmatpush.msra.mxu0 0.0
      %441 = vmatpush.msra.mxu0 0.0
      %442 = vmatpush.msra.mxu0 0.0
      %443 = vmatpush.msra.mxu0 0.0
      %444 = vmatpush.msra.mxu0 %v370
      %445 = vmatpush.msra.mxu0 %v369
      %446 = vmatpush.msra.mxu0 %v368
      %447 = vmatpush.msra.mxu0 %v367
      %448 = vmatpush.msra.mxu0 %v366
      %449 = vmatpush.msra.mxu0 %v365
      %450 = vmatpush.msra.mxu0 %v364
      %451 = vmatpush.msra.mxu0 %v363
      %452 = vmatmul.f32.gmra.mxu0 %v372
      %v453 = vpop.f32.mrf.mxu0
      %v454 = vadd.f32 0.0, %v453
      %455 = vmatmul.f32.gmra.mxu0 %v374
      %v456 = vpop.f32.mrf.mxu0
      %v457 = vadd.f32 0.0, %v456
      %458 = vmatmul.f32.gmra.mxu0 %v376
      %v459 = vpop.f32.mrf.mxu0
      %v460 = vadd.f32 0.0, %v459
      %461 = vmatmul.f32.gmra.mxu0 %v378
      %v462 = vpop.f32.mrf.mxu0
      %v463 = vadd.f32 0.0, %v462
      %464 = vmatmul.f32.gmra.mxu0 %v380
      %v465 = vpop.f32.mrf.mxu0
      %v466 = vadd.f32 0.0, %v465
      %467 = vmatmul.f32.gmra.mxu0 %v382
      %v468 = vpop.f32.mrf.mxu0
      %v469 = vadd.f32 0.0, %v468
      %470 = vmatmul.f32.gmra.mxu0 %v384
      %v471 = vpop.f32.mrf.mxu0
      %v472 = vadd.f32 0.0, %v471
      %473 = vmatmul.f32.gmra.mxu0 %v386
      %v474 = vpop.f32.mrf.mxu0
      %v475 = vadd.f32 0.0, %v474
      %476 = vmatmul.f32.gmra.mxu0 %v388
      %v477 = vpop.f32.mrf.mxu0
      %v478 = vadd.f32 0.0, %v477
      %479 = vmatmul.f32.gmra.mxu0 %v390
      %v480 = vpop.f32.mrf.mxu0
      %v481 = vadd.f32 0.0, %v480
      %482 = vmatmul.f32.gmra.mxu0 %v392
      %v483 = vpop.f32.mrf.mxu0
      %v484 = vadd.f32 0.0, %v483
      %485 = vmatmul.f32.gmra.mxu0 %v394
      %v486 = vpop.f32.mrf.mxu0
      %v487 = vadd.f32 0.0, %v486
      %488 = vmatmul.f32.gmra.mxu0 %v396
      %v489 = vpop.f32.mrf.mxu0
      %v490 = vadd.f32 0.0, %v489
      %491 = vmatmul.f32.gmra.mxu0 %v398
      %v492 = vpop.f32.mrf.mxu0
      %v493 = vadd.f32 0.0, %v492
      %494 = vmatmul.f32.gmra.mxu0 %v400
      %v495 = vpop.f32.mrf.mxu0
      %v496 = vadd.f32 0.0, %v495
      %497 = vmatmul.f32.gmra.mxu0 %v402
      %v498 = vpop.f32.mrf.mxu0
      %v499 = vadd.f32 0.0, %v498
      %500 = vmatmul.f32.gmra.mxu0 %v404
      %v501 = vpop.f32.mrf.mxu0
      %v502 = vadd.f32 0.0, %v501
      %503 = vmatmul.f32.gmra.mxu0 %v406
      %v504 = vpop.f32.mrf.mxu0
      %v505 = vadd.f32 0.0, %v504
      %506 = vmatmul.f32.gmra.mxu0 %v408
      %v507 = vpop.f32.mrf.mxu0
      %v508 = vadd.f32 0.0, %v507
      %509 = vmatmul.f32.gmra.mxu0 %v410
      %v510 = vpop.f32.mrf.mxu0
      %v511 = vadd.f32 0.0, %v510
      %512 = vmatmul.f32.gmra.mxu0 %v412
      %v513 = vpop.f32.mrf.mxu0
      %v514 = vadd.f32 0.0, %v513
      %515 = vmatmul.f32.gmra.mxu0 %v414
      %v516 = vpop.f32.mrf.mxu0
      %v517 = vadd.f32 0.0, %v516
      %518 = vmatmul.f32.gmra.mxu0 %v416
      %v519 = vpop.f32.mrf.mxu0
      %v520 = vadd.f32 0.0, %v519
      %521 = vmatmul.f32.gmra.mxu0 %v418
      %v522 = vpop.f32.mrf.mxu0
      %v523 = vadd.f32 0.0, %v522
      %524 = vmatmul.f32.gmra.mxu0 %v420
      %v525 = vpop.f32.mrf.mxu0
      %v526 = vadd.f32 0.0, %v525
      %527 = vmatmul.f32.gmra.mxu0 %v422
      %v528 = vpop.f32.mrf.mxu0
      %v529 = vadd.f32 0.0, %v528
      %530 = vmatmul.f32.gmra.mxu0 %v424
      %v531 = vpop.f32.mrf.mxu0
      %v532 = vadd.f32 0.0, %v531
      %533 = vmatmul.f32.gmra.mxu0 %v426
      %v534 = vpop.f32.mrf.mxu0
      %v535 = vadd.f32 0.0, %v534
      %536 = vmatmul.f32.gmra.mxu0 %v428
      %v537 = vpop.f32.mrf.mxu0
      %v538 = vadd.f32 0.0, %v537
      %539 = vmatmul.f32.gmra.mxu0 %v430
      %v540 = vpop.f32.mrf.mxu0
      %v541 = vadd.f32 0.0, %v540
      %542 = vmatmul.f32.gmra.mxu0 %v432
      %v543 = vpop.f32.mrf.mxu0
      %v544 = vadd.f32 0.0, %v543
      %545 = vmatmul.f32.gmra.mxu0 %v434
      %v546 = vpop.f32.mrf.mxu0
      %v547 = vadd.f32 0.0, %v546
      %548 = vdwg.mxu0
      %v549 = vsel %vm371, %v171, 0
      %v551 = vsel %vm371, %v172, 0
      %v553 = vsel %vm371, %v174, 0
      %v555 = vsel %vm371, %v175, 0
      %v557 = vsel %vm371, %v177, 0
      %v559 = vsel %vm371, %v178, 0
      %v561 = vsel %vm371, %v180, 0
      %v563 = vsel %vm371, %v181, 0
      %v565 = vsel %vm371, %v183, 0
      %v567 = vsel %vm371, %v184, 0
      %v569 = vsel %vm371, %v186, 0
      %v571 = vsel %vm371, %v187, 0
      %v573 = vsel %vm371, %v189, 0
      %v575 = vsel %vm371, %v190, 0
      %v577 = vsel %vm371, %v192, 0
      %v579 = vsel %vm371, %v193, 0
      %v581 = vsel %vm371, %v195, 0
      %v583 = vsel %vm371, %v196, 0
      %v585 = vsel %vm371, %v198, 0
      %v587 = vsel %vm371, %v199, 0
      %v589 = vsel %vm371, %v201, 0
      %v591 = vsel %vm371, %v202, 0
      %v593 = vsel %vm371, %v204, 0
      %v595 = vsel %vm371, %v205, 0
      %v597 = vsel %vm371, %v207, 0
      %v599 = vsel %vm371, %v208, 0
      %v601 = vsel %vm371, %v210, 0
      %v603 = vsel %vm371, %v211, 0
      %v605 = vsel %vm371, %v213, 0
      %v607 = vsel %vm371, %v214, 0
      %v609 = vsel %vm371, %v216, 0
      %v611 = vsel %vm371, %v217, 0
      %613 = vmatpush.msra.mxu0 0.0
      %614 = vmatpush.msra.mxu0 0.0
      %615 = vmatpush.msra.mxu0 0.0
      %616 = vmatpush.msra.mxu0 0.0
      %617 = vmatpush.msra.mxu0 0.0
      %618 = vmatpush.msra.mxu0 0.0
      %619 = vmatpush.msra.mxu0 0.0
      %620 = vmatpush.msra.mxu0 0.0
      %621 = vmatpush.msra.mxu0 %v232
      %622 = vmatpush.msra.mxu0 %v231
      %623 = vmatpush.msra.mxu0 %v230
      %624 = vmatpush.msra.mxu0 %v229
      %625 = vmatpush.msra.mxu0 %v228
      %626 = vmatpush.msra.mxu0 %v227
      %627 = vmatpush.msra.mxu0 %v226
      %628 = vmatpush.msra.mxu0 %v225
      %629 = vmatmul.f32.gmra.mxu0 %v549
      %v630 = vpop.f32.mrf.mxu0
      %v631 = vadd.f32 %v454, %v630
      %632 = vmatmul.f32.gmra.mxu0 %v551
      %v633 = vpop.f32.mrf.mxu0
      %v634 = vadd.f32 %v457, %v633
      %635 = vmatmul.f32.gmra.mxu0 %v553
      %v636 = vpop.f32.mrf.mxu0
      %v637 = vadd.f32 %v460, %v636
      %638 = vmatmul.f32.gmra.mxu0 %v555
      %v639 = vpop.f32.mrf.mxu0
      %v640 = vadd.f32 %v463, %v639
      %641 = vmatmul.f32.gmra.mxu0 %v557
      %v642 = vpop.f32.mrf.mxu0
      %v643 = vadd.f32 %v466, %v642
      %644 = vmatmul.f32.gmra.mxu0 %v559
      %v645 = vpop.f32.mrf.mxu0
      %v646 = vadd.f32 %v469, %v645
      %647 = vmatmul.f32.gmra.mxu0 %v561
      %v648 = vpop.f32.mrf.mxu0
      %v649 = vadd.f32 %v472, %v648
      %650 = vmatmul.f32.gmra.mxu0 %v563
      %v651 = vpop.f32.mrf.mxu0
      %v652 = vadd.f32 %v475, %v651
      %653 = vmatmul.f32.gmra.mxu0 %v565
      %v654 = vpop.f32.mrf.mxu0
      %v655 = vadd.f32 %v478, %v654
      %656 = vmatmul.f32.gmra.mxu0 %v567
      %v657 = vpop.f32.mrf.mxu0
      %v658 = vadd.f32 %v481, %v657
      %659 = vmatmul.f32.gmra.mxu0 %v569
      %v660 = vpop.f32.mrf.mxu0
      %v661 = vadd.f32 %v484, %v660
      %662 = vmatmul.f32.gmra.mxu0 %v571
      %v663 = vpop.f32.mrf.mxu0
      %v664 = vadd.f32 %v487, %v663
      %665 = vmatmul.f32.gmra.mxu0 %v573
      %v666 = vpop.f32.mrf.mxu0
      %v667 = vadd.f32 %v490, %v666
      %668 = vmatmul.f32.gmra.mxu0 %v575
      %v669 = vpop.f32.mrf.mxu0
      %v670 = vadd.f32 %v493, %v669
      %671 = vmatmul.f32.gmra.mxu0 %v577
      %v672 = vpop.f32.mrf.mxu0
      %v673 = vadd.f32 %v496, %v672
      %674 = vmatmul.f32.gmra.mxu0 %v579
      %v675 = vpop.f32.mrf.mxu0
      %v676 = vadd.f32 %v499, %v675
      %677 = vmatmul.f32.gmra.mxu0 %v581
      %v678 = vpop.f32.mrf.mxu0
      %v679 = vadd.f32 %v502, %v678
      %680 = vmatmul.f32.gmra.mxu0 %v583
      %v681 = vpop.f32.mrf.mxu0
      %v682 = vadd.f32 %v505, %v681
      %683 = vmatmul.f32.gmra.mxu0 %v585
      %v684 = vpop.f32.mrf.mxu0
      %v685 = vadd.f32 %v508, %v684
      %686 = vmatmul.f32.gmra.mxu0 %v587
      %v687 = vpop.f32.mrf.mxu0
      %v688 = vadd.f32 %v511, %v687
      %689 = vmatmul.f32.gmra.mxu0 %v589
      %v690 = vpop.f32.mrf.mxu0
      %v691 = vadd.f32 %v514, %v690
      %692 = vmatmul.f32.gmra.mxu0 %v591
      %v693 = vpop.f32.mrf.mxu0
      %v694 = vadd.f32 %v517, %v693
      %695 = vmatmul.f32.gmra.mxu0 %v593
      %v696 = vpop.f32.mrf.mxu0
      %v697 = vadd.f32 %v520, %v696
      %698 = vmatmul.f32.gmra.mxu0 %v595
      %v699 = vpop.f32.mrf.mxu0
      %v700 = vadd.f32 %v523, %v699
      %701 = vmatmul.f32.gmra.mxu0 %v597
      %v702 = vpop.f32.mrf.mxu0
      %v703 = vadd.f32 %v526, %v702
      %704 = vmatmul.f32.gmra.mxu0 %v599
      %v705 = vpop.f32.mrf.mxu0
      %v706 = vadd.f32 %v529, %v705
      %707 = vmatmul.f32.gmra.mxu0 %v601
      %v708 = vpop.f32.mrf.mxu0
      %v709 = vadd.f32 %v532, %v708
      %710 = vmatmul.f32.gmra.mxu0 %v603
      %v711 = vpop.f32.mrf.mxu0
      %v712 = vadd.f32 %v535, %v711
      %713 = vmatmul.f32.gmra.mxu0 %v605
      %v714 = vpop.f32.mrf.mxu0
      %v715 = vadd.f32 %v538, %v714
      %716 = vmatmul.f32.gmra.mxu0 %v607
      %v717 = vpop.f32.mrf.mxu0
      %v718 = vadd.f32 %v541, %v717
      %719 = vmatmul.f32.gmra.mxu0 %v609
      %v720 = vpop.f32.mrf.mxu0
      %v721 = vadd.f32 %v544, %v720
      %722 = vmatmul.f32.gmra.mxu0 %v611
      %v723 = vpop.f32.mrf.mxu0
      %v724 = vadd.f32 %v547, %v723
      %725 = vdwg.mxu0
      %vm726 = vcmask 1045504
      %v727 = vrot.slane %v171, 2
      %v728 = vrot.slane %v172, 2
      %v729 = vsel %vm726, %v727, %v728
      %v730 = vrot.slane %v173, 2
      %v731 = vsel %vm726, %v728, %v730
      %v732 = vrot.slane %v174, 2
      %v733 = vrot.slane %v175, 2
      %v734 = vsel %vm726, %v732, %v733
      %v735 = vrot.slane %v176, 2
      %v736 = vsel %vm726, %v733, %v735
      %v737 = vrot.slane %v177, 2
      %v738 = vrot.slane %v178, 2
      %v739 = vsel %vm726, %v737, %v738
      %v740 = vrot.slane %v179, 2
      %v741 = vsel %vm726, %v738, %v740
      %v742 = vrot.slane %v180, 2
      %v743 = vrot.slane %v181, 2
      %v744 = vsel %vm726, %v742, %v743
      %v745 = vrot.slane %v182, 2
      %v746 = vsel %vm726, %v743, %v745
      %v747 = vrot.slane %v183, 2
      %v748 = vrot.slane %v184, 2
      %v749 = vsel %vm726, %v747, %v748
      %v750 = vrot.slane %v185, 2
      %v751 = vsel %vm726, %v748, %v750
      %v752 = vrot.slane %v186, 2
      %v753 = vrot.slane %v187, 2
      %v754 = vsel %vm726, %v752, %v753
      %v755 = vrot.slane %v188, 2
      %v756 = vsel %vm726, %v753, %v755
      %v757 = vrot.slane %v189, 2
      %v758 = vrot.slane %v190, 2
      %v759 = vsel %vm726, %v757, %v758
      %v760 = vrot.slane %v191, 2
      %v761 = vsel %vm726, %v758, %v760
      %v762 = vrot.slane %v192, 2
      %v763 = vrot.slane %v193, 2
      %v764 = vsel %vm726, %v762, %v763
      %v765 = vrot.slane %v194, 2
      %v766 = vsel %vm726, %v763, %v765
      %v767 = vrot.slane %v195, 2
      %v768 = vrot.slane %v196, 2
      %v769 = vsel %vm726, %v767, %v768
      %v770 = vrot.slane %v197, 2
      %v771 = vsel %vm726, %v768, %v770
      %v772 = vrot.slane %v198, 2
      %v773 = vrot.slane %v199, 2
      %v774 = vsel %vm726, %v772, %v773
      %v775 = vrot.slane %v200, 2
      %v776 = vsel %vm726, %v773, %v775
      %v777 = vrot.slane %v201, 2
      %v778 = vrot.slane %v202, 2
      %v779 = vsel %vm726, %v777, %v778
      %v780 = vrot.slane %v203, 2
      %v781 = vsel %vm726, %v778, %v780
      %v782 = vrot.slane %v204, 2
      %v783 = vrot.slane %v205, 2
      %v784 = vsel %vm726, %v782, %v783
      %v785 = vrot.slane %v206, 2
      %v786 = vsel %vm726, %v783, %v785
      %v787 = vrot.slane %v207, 2
      %v788 = vrot.slane %v208, 2
      %v789 = vsel %vm726, %v787, %v788
      %v790 = vrot.slane %v209, 2
      %v791 = vsel %vm726, %v788, %v790
      %v792 = vrot.slane %v210, 2
      %v793 = vrot.slane %v211, 2
      %v794 = vsel %vm726, %v792, %v793
      %v795 = vrot.slane %v212, 2
      %v796 = vsel %vm726, %v793, %v795
      %v797 = vrot.slane %v213, 2
      %v798 = vrot.slane %v214, 2
      %v799 = vsel %vm726, %v797, %v798
      %v800 = vrot.slane %v215, 2
      %v801 = vsel %vm726, %v798, %v800
      %v802 = vrot.slane %v216, 2
      %v803 = vrot.slane %v217, 2
      %v804 = vsel %vm726, %v802, %v803
      %v805 = vrot.slane %v218, 2
      %v806 = vsel %vm726, %v803, %v805
      %s807 = scalar_lea.vmem %s1, 128
      %v808 = vld [vmem:[%s807] sm:$0xff]
      %v809 = vld [vmem:[%s807 + $0x8] sm:$0xff]
      %v810 = vld [vmem:[%s807 + $0x10] sm:$0xff]
      %v811 = vld [vmem:[%s807 + $0x18] sm:$0xff]
      %v812 = vld [vmem:[%s807 + $0x20] sm:$0xff]
      %v813 = vld [vmem:[%s807 + $0x28] sm:$0xff]
      %v814 = vld [vmem:[%s807 + $0x30] sm:$0xff]
      %v815 = vld [vmem:[%s807 + $0x38] sm:$0xff]
      %v816 = vsel %vm371, %v729, 0
      %v818 = vsel %vm371, %v731, 0
      %v820 = vsel %vm371, %v734, 0
      %v822 = vsel %vm371, %v736, 0
      %v824 = vsel %vm371, %v739, 0
      %v826 = vsel %vm371, %v741, 0
      %v828 = vsel %vm371, %v744, 0
      %v830 = vsel %vm371, %v746, 0
      %v832 = vsel %vm371, %v749, 0
      %v834 = vsel %vm371, %v751, 0
      %v836 = vsel %vm371, %v754, 0
      %v838 = vsel %vm371, %v756, 0
      %v840 = vsel %vm371, %v759, 0
      %v842 = vsel %vm371, %v761, 0
      %v844 = vsel %vm371, %v764, 0
      %v846 = vsel %vm371, %v766, 0
      %v848 = vsel %vm371, %v769, 0
      %v850 = vsel %vm371, %v771, 0
      %v852 = vsel %vm371, %v774, 0
      %v854 = vsel %vm371, %v776, 0
      %v856 = vsel %vm371, %v779, 0
      %v858 = vsel %vm371, %v781, 0
      %v860 = vsel %vm371, %v784, 0
      %v862 = vsel %vm371, %v786, 0
      %v864 = vsel %vm371, %v789, 0
      %v866 = vsel %vm371, %v791, 0
      %v868 = vsel %vm371, %v794, 0
      %v870 = vsel %vm371, %v796, 0
      %v872 = vsel %vm371, %v799, 0
      %v874 = vsel %vm371, %v801, 0
      %v876 = vsel %vm371, %v804, 0
      %v878 = vsel %vm371, %v806, 0
      %880 = vmatpush.msra.mxu0 0.0
      %881 = vmatpush.msra.mxu0 0.0
      %882 = vmatpush.msra.mxu0 0.0
      %883 = vmatpush.msra.mxu0 0.0
      %884 = vmatpush.msra.mxu0 0.0
      %885 = vmatpush.msra.mxu0 0.0
      %886 = vmatpush.msra.mxu0 0.0
      %887 = vmatpush.msra.mxu0 0.0
      %888 = vmatpush.msra.mxu0 %v815
      %889 = vmatpush.msra.mxu0 %v814
      %890 = vmatpush.msra.mxu0 %v813
      %891 = vmatpush.msra.mxu0 %v812
      %892 = vmatpush.msra.mxu0 %v811
      %893 = vmatpush.msra.mxu0 %v810
      %894 = vmatpush.msra.mxu0 %v809
      %895 = vmatpush.msra.mxu0 %v808
      %896 = vmatmul.f32.gmra.mxu0 %v816
      %v897 = vpop.f32.mrf.mxu0
      %v898 = vadd.f32 0.0, %v897
      %899 = vmatmul.f32.gmra.mxu0 %v818
      %v900 = vpop.f32.mrf.mxu0
      %v901 = vadd.f32 0.0, %v900
      %902 = vmatmul.f32.gmra.mxu0 %v820
      %v903 = vpop.f32.mrf.mxu0
      %v904 = vadd.f32 0.0, %v903
      %905 = vmatmul.f32.gmra.mxu0 %v822
      %v906 = vpop.f32.mrf.mxu0
      %v907 = vadd.f32 0.0, %v906
      %908 = vmatmul.f32.gmra.mxu0 %v824
      %v909 = vpop.f32.mrf.mxu0
      %v910 = vadd.f32 0.0, %v909
      %911 = vmatmul.f32.gmra.mxu0 %v826
      %v912 = vpop.f32.mrf.mxu0
      %v913 = vadd.f32 0.0, %v912
      %914 = vmatmul.f32.gmra.mxu0 %v828
      %v915 = vpop.f32.mrf.mxu0
      %v916 = vadd.f32 0.0, %v915
      %917 = vmatmul.f32.gmra.mxu0 %v830
      %v918 = vpop.f32.mrf.mxu0
      %v919 = vadd.f32 0.0, %v918
      %920 = vmatmul.f32.gmra.mxu0 %v832
      %v921 = vpop.f32.mrf.mxu0
      %v922 = vadd.f32 0.0, %v921
      %923 = vmatmul.f32.gmra.mxu0 %v834
      %v924 = vpop.f32.mrf.mxu0
      %v925 = vadd.f32 0.0, %v924
      %926 = vmatmul.f32.gmra.mxu0 %v836
      %v927 = vpop.f32.mrf.mxu0
      %v928 = vadd.f32 0.0, %v927
      %929 = vmatmul.f32.gmra.mxu0 %v838
      %v930 = vpop.f32.mrf.mxu0
      %v931 = vadd.f32 0.0, %v930
      %932 = vmatmul.f32.gmra.mxu0 %v840
      %v933 = vpop.f32.mrf.mxu0
      %v934 = vadd.f32 0.0, %v933
      %935 = vmatmul.f32.gmra.mxu0 %v842
      %v936 = vpop.f32.mrf.mxu0
      %v937 = vadd.f32 0.0, %v936
      %938 = vmatmul.f32.gmra.mxu0 %v844
      %v939 = vpop.f32.mrf.mxu0
      %v940 = vadd.f32 0.0, %v939
      %941 = vmatmul.f32.gmra.mxu0 %v846
      %v942 = vpop.f32.mrf.mxu0
      %v943 = vadd.f32 0.0, %v942
      %944 = vmatmul.f32.gmra.mxu0 %v848
      %v945 = vpop.f32.mrf.mxu0
      %v946 = vadd.f32 0.0, %v945
      %947 = vmatmul.f32.gmra.mxu0 %v850
      %v948 = vpop.f32.mrf.mxu0
      %v949 = vadd.f32 0.0, %v948
      %950 = vmatmul.f32.gmra.mxu0 %v852
      %v951 = vpop.f32.mrf.mxu0
      %v952 = vadd.f32 0.0, %v951
      %953 = vmatmul.f32.gmra.mxu0 %v854
      %v954 = vpop.f32.mrf.mxu0
      %v955 = vadd.f32 0.0, %v954
      %956 = vmatmul.f32.gmra.mxu0 %v856
      %v957 = vpop.f32.mrf.mxu0
      %v958 = vadd.f32 0.0, %v957
      %959 = vmatmul.f32.gmra.mxu0 %v858
      %v960 = vpop.f32.mrf.mxu0
      %v961 = vadd.f32 0.0, %v960
      %962 = vmatmul.f32.gmra.mxu0 %v860
      %v963 = vpop.f32.mrf.mxu0
      %v964 = vadd.f32 0.0, %v963
      %965 = vmatmul.f32.gmra.mxu0 %v862
      %v966 = vpop.f32.mrf.mxu0
      %v967 = vadd.f32 0.0, %v966
      %968 = vmatmul.f32.gmra.mxu0 %v864
      %v969 = vpop.f32.mrf.mxu0
      %v970 = vadd.f32 0.0, %v969
      %971 = vmatmul.f32.gmra.mxu0 %v866
      %v972 = vpop.f32.mrf.mxu0
      %v973 = vadd.f32 0.0, %v972
      %974 = vmatmul.f32.gmra.mxu0 %v868
      %v975 = vpop.f32.mrf.mxu0
      %v976 = vadd.f32 0.0, %v975
      %977 = vmatmul.f32.gmra.mxu0 %v870
      %v978 = vpop.f32.mrf.mxu0
      %v979 = vadd.f32 0.0, %v978
      %980 = vmatmul.f32.gmra.mxu0 %v872
      %v981 = vpop.f32.mrf.mxu0
      %v982 = vadd.f32 0.0, %v981
      %983 = vmatmul.f32.gmra.mxu0 %v874
      %v984 = vpop.f32.mrf.mxu0
      %v985 = vadd.f32 0.0, %v984
      %986 = vmatmul.f32.gmra.mxu0 %v876
      %v987 = vpop.f32.mrf.mxu0
      %v988 = vadd.f32 0.0, %v987
      %989 = vmatmul.f32.gmra.mxu0 %v878
      %v990 = vpop.f32.mrf.mxu0
      %v991 = vadd.f32 0.0, %v990
      %992 = vdwg.mxu0
      %v993 = vadd.f32 %v631, %v898
      %v994 = vadd.f32 %v634, %v901
      %v995 = vadd.f32 %v637, %v904
      %v996 = vadd.f32 %v640, %v907
      %v997 = vadd.f32 %v643, %v910
      %v998 = vadd.f32 %v646, %v913
      %v999 = vadd.f32 %v649, %v916
      %v1000 = vadd.f32 %v652, %v919
      %v1001 = vadd.f32 %v655, %v922
      %v1002 = vadd.f32 %v658, %v925
      %v1003 = vadd.f32 %v661, %v928
      %v1004 = vadd.f32 %v664, %v931
      %v1005 = vadd.f32 %v667, %v934
      %v1006 = vadd.f32 %v670, %v937
      %v1007 = vadd.f32 %v673, %v940
      %v1008 = vadd.f32 %v676, %v943
      %v1009 = vadd.f32 %v679, %v946
      %v1010 = vadd.f32 %v682, %v949
      %v1011 = vadd.f32 %v685, %v952
      %v1012 = vadd.f32 %v688, %v955
      %v1013 = vadd.f32 %v691, %v958
      %v1014 = vadd.f32 %v694, %v961
      %v1015 = vadd.f32 %v697, %v964
      %v1016 = vadd.f32 %v700, %v967
      %v1017 = vadd.f32 %v703, %v970
      %v1018 = vadd.f32 %v706, %v973
      %v1019 = vadd.f32 %v709, %v976
      %v1020 = vadd.f32 %v712, %v979
      %v1021 = vadd.f32 %v715, %v982
      %v1022 = vadd.f32 %v718, %v985
      %v1023 = vadd.f32 %v721, %v988
      %v1024 = vadd.f32 %v724, %v991
      %s1025 = scalar_lea.vmem %s1, 192
      %v1026 = vld [vmem:[%s1025] sm:$0xff]
      %v1027 = vld [vmem:[%s1025 + $0x8] sm:$0xff]
      %v1028 = vld [vmem:[%s1025 + $0x10] sm:$0xff]
      %v1029 = vld [vmem:[%s1025 + $0x18] sm:$0xff]
      %v1030 = vld [vmem:[%s1025 + $0x20] sm:$0xff]
      %v1031 = vld [vmem:[%s1025 + $0x28] sm:$0xff]
      %v1032 = vld [vmem:[%s1025 + $0x30] sm:$0xff]
      %v1033 = vld [vmem:[%s1025 + $0x38] sm:$0xff]
      %v1035 = vsel %vm371, %v219, 0
      %v1038 = vsel %vm371, %v220, 0
      %1040 = vmatpush.msra.mxu0 0.0
      %1041 = vmatpush.msra.mxu0 0.0
      %1042 = vmatpush.msra.mxu0 0.0
      %1043 = vmatpush.msra.mxu0 0.0
      %1044 = vmatpush.msra.mxu0 0.0
      %1045 = vmatpush.msra.mxu0 0.0
      %1046 = vmatpush.msra.mxu0 0.0
      %1047 = vmatpush.msra.mxu0 0.0
      %1048 = vmatpush.msra.mxu0 %v1033
      %1049 = vmatpush.msra.mxu0 %v1032
      %1050 = vmatpush.msra.mxu0 %v1031
      %1051 = vmatpush.msra.mxu0 %v1030
      %1052 = vmatpush.msra.mxu0 %v1029
      %1053 = vmatpush.msra.mxu0 %v1028
      %1054 = vmatpush.msra.mxu0 %v1027
      %1055 = vmatpush.msra.mxu0 %v1026
      %1056 = vmatmul.f32.gmra.mxu0 %v553
      %v1057 = vpop.f32.mrf.mxu0
      %v1058 = vadd.f32 0.0, %v1057
      %1059 = vmatmul.f32.gmra.mxu0 %v555
      %v1060 = vpop.f32.mrf.mxu0
      %v1061 = vadd.f32 0.0, %v1060
      %1062 = vmatmul.f32.gmra.mxu0 %v557
      %v1063 = vpop.f32.mrf.mxu0
      %v1064 = vadd.f32 0.0, %v1063
      %1065 = vmatmul.f32.gmra.mxu0 %v559
      %v1066 = vpop.f32.mrf.mxu0
      %v1067 = vadd.f32 0.0, %v1066
      %1068 = vmatmul.f32.gmra.mxu0 %v561
      %v1069 = vpop.f32.mrf.mxu0
      %v1070 = vadd.f32 0.0, %v1069
      %1071 = vmatmul.f32.gmra.mxu0 %v563
      %v1072 = vpop.f32.mrf.mxu0
      %v1073 = vadd.f32 0.0, %v1072
      %1074 = vmatmul.f32.gmra.mxu0 %v565
      %v1075 = vpop.f32.mrf.mxu0
      %v1076 = vadd.f32 0.0, %v1075
      %1077 = vmatmul.f32.gmra.mxu0 %v567
      %v1078 = vpop.f32.mrf.mxu0
      %v1079 = vadd.f32 0.0, %v1078
      %1080 = vmatmul.f32.gmra.mxu0 %v569
      %v1081 = vpop.f32.mrf.mxu0
      %v1082 = vadd.f32 0.0, %v1081
      %1083 = vmatmul.f32.gmra.mxu0 %v571
      %v1084 = vpop.f32.mrf.mxu0
      %v1085 = vadd.f32 0.0, %v1084
      %1086 = vmatmul.f32.gmra.mxu0 %v573
      %v1087 = vpop.f32.mrf.mxu0
      %v1088 = vadd.f32 0.0, %v1087
      %1089 = vmatmul.f32.gmra.mxu0 %v575
      %v1090 = vpop.f32.mrf.mxu0
      %v1091 = vadd.f32 0.0, %v1090
      %1092 = vmatmul.f32.gmra.mxu0 %v577
      %v1093 = vpop.f32.mrf.mxu0
      %v1094 = vadd.f32 0.0, %v1093
      %1095 = vmatmul.f32.gmra.mxu0 %v579
      %v1096 = vpop.f32.mrf.mxu0
      %v1097 = vadd.f32 0.0, %v1096
      %1098 = vmatmul.f32.gmra.mxu0 %v581
      %v1099 = vpop.f32.mrf.mxu0
      %v1100 = vadd.f32 0.0, %v1099
      %1101 = vmatmul.f32.gmra.mxu0 %v583
      %v1102 = vpop.f32.mrf.mxu0
      %v1103 = vadd.f32 0.0, %v1102
      %1104 = vmatmul.f32.gmra.mxu0 %v585
      %v1105 = vpop.f32.mrf.mxu0
      %v1106 = vadd.f32 0.0, %v1105
      %1107 = vmatmul.f32.gmra.mxu0 %v587
      %v1108 = vpop.f32.mrf.mxu0
      %v1109 = vadd.f32 0.0, %v1108
      %1110 = vmatmul.f32.gmra.mxu0 %v589
      %v1111 = vpop.f32.mrf.mxu0
      %v1112 = vadd.f32 0.0, %v1111
      %1113 = vmatmul.f32.gmra.mxu0 %v591
      %v1114 = vpop.f32.mrf.mxu0
      %v1115 = vadd.f32 0.0, %v1114
      %1116 = vmatmul.f32.gmra.mxu0 %v593
      %v1117 = vpop.f32.mrf.mxu0
      %v1118 = vadd.f32 0.0, %v1117
      %1119 = vmatmul.f32.gmra.mxu0 %v595
      %v1120 = vpop.f32.mrf.mxu0
      %v1121 = vadd.f32 0.0, %v1120
      %1122 = vmatmul.f32.gmra.mxu0 %v597
      %v1123 = vpop.f32.mrf.mxu0
      %v1124 = vadd.f32 0.0, %v1123
      %1125 = vmatmul.f32.gmra.mxu0 %v599
      %v1126 = vpop.f32.mrf.mxu0
      %v1127 = vadd.f32 0.0, %v1126
      %1128 = vmatmul.f32.gmra.mxu0 %v601
      %v1129 = vpop.f32.mrf.mxu0
      %v1130 = vadd.f32 0.0, %v1129
      %1131 = vmatmul.f32.gmra.mxu0 %v603
      %v1132 = vpop.f32.mrf.mxu0
      %v1133 = vadd.f32 0.0, %v1132
      %1134 = vmatmul.f32.gmra.mxu0 %v605
      %v1135 = vpop.f32.mrf.mxu0
      %v1136 = vadd.f32 0.0, %v1135
      %1137 = vmatmul.f32.gmra.mxu0 %v607
      %v1138 = vpop.f32.mrf.mxu0
      %v1139 = vadd.f32 0.0, %v1138
      %1140 = vmatmul.f32.gmra.mxu0 %v609
      %v1141 = vpop.f32.mrf.mxu0
      %v1142 = vadd.f32 0.0, %v1141
      %1143 = vmatmul.f32.gmra.mxu0 %v611
      %v1144 = vpop.f32.mrf.mxu0
      %v1145 = vadd.f32 0.0, %v1144
      %1146 = vmatmul.f32.gmra.mxu0 %v1035
      %v1147 = vpop.f32.mrf.mxu0
      %v1148 = vadd.f32 0.0, %v1147
      %1149 = vmatmul.f32.gmra.mxu0 %v1038
      %v1150 = vpop.f32.mrf.mxu0
      %v1151 = vadd.f32 0.0, %v1150
      %1152 = vdwg.mxu0
      %v1153 = vadd.f32 %v993, %v1058
      %v1154 = vadd.f32 %v994, %v1061
      %v1155 = vadd.f32 %v995, %v1064
      %v1156 = vadd.f32 %v996, %v1067
      %v1157 = vadd.f32 %v997, %v1070
      %v1158 = vadd.f32 %v998, %v1073
      %v1159 = vadd.f32 %v999, %v1076
      %v1160 = vadd.f32 %v1000, %v1079
      %v1161 = vadd.f32 %v1001, %v1082
      %v1162 = vadd.f32 %v1002, %v1085
      %v1163 = vadd.f32 %v1003, %v1088
      %v1164 = vadd.f32 %v1004, %v1091
      %v1165 = vadd.f32 %v1005, %v1094
      %v1166 = vadd.f32 %v1006, %v1097
      %v1167 = vadd.f32 %v1007, %v1100
      %v1168 = vadd.f32 %v1008, %v1103
      %v1169 = vadd.f32 %v1009, %v1106
      %v1170 = vadd.f32 %v1010, %v1109
      %v1171 = vadd.f32 %v1011, %v1112
      %v1172 = vadd.f32 %v1012, %v1115
      %v1173 = vadd.f32 %v1013, %v1118
      %v1174 = vadd.f32 %v1014, %v1121
      %v1175 = vadd.f32 %v1015, %v1124
      %v1176 = vadd.f32 %v1016, %v1127
      %v1177 = vadd.f32 %v1017, %v1130
      %v1178 = vadd.f32 %v1018, %v1133
      %v1179 = vadd.f32 %v1019, %v1136
      %v1180 = vadd.f32 %v1020, %v1139
      %v1181 = vadd.f32 %v1021, %v1142
      %v1182 = vadd.f32 %v1022, %v1145
      %v1183 = vadd.f32 %v1023, %v1148
      %v1184 = vadd.f32 %v1024, %v1151
      %v1186 = vrot.slane %v219, 1
      %v1187 = vrot.slane %v220, 1
      %v1188 = vsel %vm281, %v1186, %v1187
      %v1189 = vrot.slane %v221, 1
      %v1190 = vsel %vm281, %v1187, %v1189
      %s1191 = scalar_lea.vmem %s1, 256
      %v1192 = vld [vmem:[%s1191] sm:$0xff]
      %v1193 = vld [vmem:[%s1191 + $0x8] sm:$0xff]
      %v1194 = vld [vmem:[%s1191 + $0x10] sm:$0xff]
      %v1195 = vld [vmem:[%s1191 + $0x18] sm:$0xff]
      %v1196 = vld [vmem:[%s1191 + $0x20] sm:$0xff]
      %v1197 = vld [vmem:[%s1191 + $0x28] sm:$0xff]
      %v1198 = vld [vmem:[%s1191 + $0x30] sm:$0xff]
      %v1199 = vld [vmem:[%s1191 + $0x38] sm:$0xff]
      %v1200 = vsel %vm371, %v1188, 0
      %v1202 = vsel %vm371, %v1190, 0
      %1204 = vmatpush.msra.mxu0 0.0
      %1205 = vmatpush.msra.mxu0 0.0
      %1206 = vmatpush.msra.mxu0 0.0
      %1207 = vmatpush.msra.mxu0 0.0
      %1208 = vmatpush.msra.mxu0 0.0
      %1209 = vmatpush.msra.mxu0 0.0
      %1210 = vmatpush.msra.mxu0 0.0
      %1211 = vmatpush.msra.mxu0 0.0
      %1212 = vmatpush.msra.mxu0 %v1199
      %1213 = vmatpush.msra.mxu0 %v1198
      %1214 = vmatpush.msra.mxu0 %v1197
      %1215 = vmatpush.msra.mxu0 %v1196
      %1216 = vmatpush.msra.mxu0 %v1195
      %1217 = vmatpush.msra.mxu0 %v1194
      %1218 = vmatpush.msra.mxu0 %v1193
      %1219 = vmatpush.msra.mxu0 %v1192
      %1220 = vmatmul.f32.gmra.mxu0 %v376
      %v1221 = vpop.f32.mrf.mxu0
      %v1222 = vadd.f32 0.0, %v1221
      %1223 = vmatmul.f32.gmra.mxu0 %v378
      %v1224 = vpop.f32.mrf.mxu0
      %v1225 = vadd.f32 0.0, %v1224
      %1226 = vmatmul.f32.gmra.mxu0 %v380
      %v1227 = vpop.f32.mrf.mxu0
      %v1228 = vadd.f32 0.0, %v1227
      %1229 = vmatmul.f32.gmra.mxu0 %v382
      %v1230 = vpop.f32.mrf.mxu0
      %v1231 = vadd.f32 0.0, %v1230
      %1232 = vmatmul.f32.gmra.mxu0 %v384
      %v1233 = vpop.f32.mrf.mxu0
      %v1234 = vadd.f32 0.0, %v1233
      %1235 = vmatmul.f32.gmra.mxu0 %v386
      %v1236 = vpop.f32.mrf.mxu0
      %v1237 = vadd.f32 0.0, %v1236
      %1238 = vmatmul.f32.gmra.mxu0 %v388
      %v1239 = vpop.f32.mrf.mxu0
      %v1240 = vadd.f32 0.0, %v1239
      %1241 = vmatmul.f32.gmra.mxu0 %v390
      %v1242 = vpop.f32.mrf.mxu0
      %v1243 = vadd.f32 0.0, %v1242
      %1244 = vmatmul.f32.gmra.mxu0 %v392
      %v1245 = vpop.f32.mrf.mxu0
      %v1246 = vadd.f32 0.0, %v1245
      %1247 = vmatmul.f32.gmra.mxu0 %v394
      %v1248 = vpop.f32.mrf.mxu0
      %v1249 = vadd.f32 0.0, %v1248
      %1250 = vmatmul.f32.gmra.mxu0 %v396
      %v1251 = vpop.f32.mrf.mxu0
      %v1252 = vadd.f32 0.0, %v1251
      %1253 = vmatmul.f32.gmra.mxu0 %v398
      %v1254 = vpop.f32.mrf.mxu0
      %v1255 = vadd.f32 0.0, %v1254
      %1256 = vmatmul.f32.gmra.mxu0 %v400
      %v1257 = vpop.f32.mrf.mxu0
      %v1258 = vadd.f32 0.0, %v1257
      %1259 = vmatmul.f32.gmra.mxu0 %v402
      %v1260 = vpop.f32.mrf.mxu0
      %v1261 = vadd.f32 0.0, %v1260
      %1262 = vmatmul.f32.gmra.mxu0 %v404
      %v1263 = vpop.f32.mrf.mxu0
      %v1264 = vadd.f32 0.0, %v1263
      %1265 = vmatmul.f32.gmra.mxu0 %v406
      %v1266 = vpop.f32.mrf.mxu0
      %v1267 = vadd.f32 0.0, %v1266
      %1268 = vmatmul.f32.gmra.mxu0 %v408
      %v1269 = vpop.f32.mrf.mxu0
      %v1270 = vadd.f32 0.0, %v1269
      %1271 = vmatmul.f32.gmra.mxu0 %v410
      %v1272 = vpop.f32.mrf.mxu0
      %v1273 = vadd.f32 0.0, %v1272
      %1274 = vmatmul.f32.gmra.mxu0 %v412
      %v1275 = vpop.f32.mrf.mxu0
      %v1276 = vadd.f32 0.0, %v1275
      %1277 = vmatmul.f32.gmra.mxu0 %v414
      %v1278 = vpop.f32.mrf.mxu0
      %v1279 = vadd.f32 0.0, %v1278
      %1280 = vmatmul.f32.gmra.mxu0 %v416
      %v1281 = vpop.f32.mrf.mxu0
      %v1282 = vadd.f32 0.0, %v1281
      %1283 = vmatmul.f32.gmra.mxu0 %v418
      %v1284 = vpop.f32.mrf.mxu0
      %v1285 = vadd.f32 0.0, %v1284
      %1286 = vmatmul.f32.gmra.mxu0 %v420
      %v1287 = vpop.f32.mrf.mxu0
      %v1288 = vadd.f32 0.0, %v1287
      %1289 = vmatmul.f32.gmra.mxu0 %v422
      %v1290 = vpop.f32.mrf.mxu0
      %v1291 = vadd.f32 0.0, %v1290
      %1292 = vmatmul.f32.gmra.mxu0 %v424
      %v1293 = vpop.f32.mrf.mxu0
      %v1294 = vadd.f32 0.0, %v1293
      %1295 = vmatmul.f32.gmra.mxu0 %v426
      %v1296 = vpop.f32.mrf.mxu0
      %v1297 = vadd.f32 0.0, %v1296
      %1298 = vmatmul.f32.gmra.mxu0 %v428
      %v1299 = vpop.f32.mrf.mxu0
      %v1300 = vadd.f32 0.0, %v1299
      %1301 = vmatmul.f32.gmra.mxu0 %v430
      %v1302 = vpop.f32.mrf.mxu0
      %v1303 = vadd.f32 0.0, %v1302
      %1304 = vmatmul.f32.gmra.mxu0 %v432
      %v1305 = vpop.f32.mrf.mxu0
      %v1306 = vadd.f32 0.0, %v1305
      %1307 = vmatmul.f32.gmra.mxu0 %v434
      %v1308 = vpop.f32.mrf.mxu0
      %v1309 = vadd.f32 0.0, %v1308
      %1310 = vmatmul.f32.gmra.mxu0 %v1200
      %v1311 = vpop.f32.mrf.mxu0
      %v1312 = vadd.f32 0.0, %v1311
      %1313 = vmatmul.f32.gmra.mxu0 %v1202
      %v1314 = vpop.f32.mrf.mxu0
      %v1315 = vadd.f32 0.0, %v1314
      %1316 = vdwg.mxu0
      %v1317 = vadd.f32 %v1153, %v1222
      %v1318 = vadd.f32 %v1154, %v1225
      %v1319 = vadd.f32 %v1155, %v1228
      %v1320 = vadd.f32 %v1156, %v1231
      %v1321 = vadd.f32 %v1157, %v1234
      %v1322 = vadd.f32 %v1158, %v1237
      %v1323 = vadd.f32 %v1159, %v1240
      %v1324 = vadd.f32 %v1160, %v1243
      %v1325 = vadd.f32 %v1161, %v1246
      %v1326 = vadd.f32 %v1162, %v1249
      %v1327 = vadd.f32 %v1163, %v1252
      %v1328 = vadd.f32 %v1164, %v1255
      %v1329 = vadd.f32 %v1165, %v1258
      %v1330 = vadd.f32 %v1166, %v1261
      %v1331 = vadd.f32 %v1167, %v1264
      %v1332 = vadd.f32 %v1168, %v1267
      %v1333 = vadd.f32 %v1169, %v1270
      %v1334 = vadd.f32 %v1170, %v1273
      %v1335 = vadd.f32 %v1171, %v1276
      %v1336 = vadd.f32 %v1172, %v1279
      %v1337 = vadd.f32 %v1173, %v1282
      %v1338 = vadd.f32 %v1174, %v1285
      %v1339 = vadd.f32 %v1175, %v1288
      %v1340 = vadd.f32 %v1176, %v1291
      %v1341 = vadd.f32 %v1177, %v1294
      %v1342 = vadd.f32 %v1178, %v1297
      %v1343 = vadd.f32 %v1179, %v1300
      %v1344 = vadd.f32 %v1180, %v1303
      %v1345 = vadd.f32 %v1181, %v1306
      %v1346 = vadd.f32 %v1182, %v1309
      %v1347 = vadd.f32 %v1183, %v1312
      %v1348 = vadd.f32 %v1184, %v1315
      %v1349 = vrot.slane %v219, 2
      %v1350 = vrot.slane %v220, 2
      %v1351 = vsel %vm726, %v1349, %v1350
      %v1352 = vrot.slane %v221, 2
      %v1353 = vsel %vm726, %v1350, %v1352
      %s1354 = scalar_lea.vmem %s1, 320
      %v1355 = vld [vmem:[%s1354] sm:$0xff]
      %v1356 = vld [vmem:[%s1354 + $0x8] sm:$0xff]
      %v1357 = vld [vmem:[%s1354 + $0x10] sm:$0xff]
      %v1358 = vld [vmem:[%s1354 + $0x18] sm:$0xff]
      %v1359 = vld [vmem:[%s1354 + $0x20] sm:$0xff]
      %v1360 = vld [vmem:[%s1354 + $0x28] sm:$0xff]
      %v1361 = vld [vmem:[%s1354 + $0x30] sm:$0xff]
      %v1362 = vld [vmem:[%s1354 + $0x38] sm:$0xff]
      %v1363 = vsel %vm371, %v1351, 0
      %v1365 = vsel %vm371, %v1353, 0
      %1367 = vmatpush.msra.mxu0 0.0
      %1368 = vmatpush.msra.mxu0 0.0
      %1369 = vmatpush.msra.mxu0 0.0
      %1370 = vmatpush.msra.mxu0 0.0
      %1371 = vmatpush.msra.mxu0 0.0
      %1372 = vmatpush.msra.mxu0 0.0
      %1373 = vmatpush.msra.mxu0 0.0
      %1374 = vmatpush.msra.mxu0 0.0
      %1375 = vmatpush.msra.mxu0 %v1362
      %1376 = vmatpush.msra.mxu0 %v1361
      %1377 = vmatpush.msra.mxu0 %v1360
      %1378 = vmatpush.msra.mxu0 %v1359
      %1379 = vmatpush.msra.mxu0 %v1358
      %1380 = vmatpush.msra.mxu0 %v1357
      %1381 = vmatpush.msra.mxu0 %v1356
      %1382 = vmatpush.msra.mxu0 %v1355
      %1383 = vmatmul.f32.gmra.mxu0 %v820
      %v1384 = vpop.f32.mrf.mxu0
      %v1385 = vadd.f32 0.0, %v1384
      %1386 = vmatmul.f32.gmra.mxu0 %v822
      %v1387 = vpop.f32.mrf.mxu0
      %v1388 = vadd.f32 0.0, %v1387
      %1389 = vmatmul.f32.gmra.mxu0 %v824
      %v1390 = vpop.f32.mrf.mxu0
      %v1391 = vadd.f32 0.0, %v1390
      %1392 = vmatmul.f32.gmra.mxu0 %v826
      %v1393 = vpop.f32.mrf.mxu0
      %v1394 = vadd.f32 0.0, %v1393
      %1395 = vmatmul.f32.gmra.mxu0 %v828
      %v1396 = vpop.f32.mrf.mxu0
      %v1397 = vadd.f32 0.0, %v1396
      %1398 = vmatmul.f32.gmra.mxu0 %v830
      %v1399 = vpop.f32.mrf.mxu0
      %v1400 = vadd.f32 0.0, %v1399
      %1401 = vmatmul.f32.gmra.mxu0 %v832
      %v1402 = vpop.f32.mrf.mxu0
      %v1403 = vadd.f32 0.0, %v1402
      %1404 = vmatmul.f32.gmra.mxu0 %v834
      %v1405 = vpop.f32.mrf.mxu0
      %v1406 = vadd.f32 0.0, %v1405
      %1407 = vmatmul.f32.gmra.mxu0 %v836
      %v1408 = vpop.f32.mrf.mxu0
      %v1409 = vadd.f32 0.0, %v1408
      %1410 = vmatmul.f32.gmra.mxu0 %v838
      %v1411 = vpop.f32.mrf.mxu0
      %v1412 = vadd.f32 0.0, %v1411
      %1413 = vmatmul.f32.gmra.mxu0 %v840
      %v1414 = vpop.f32.mrf.mxu0
      %v1415 = vadd.f32 0.0, %v1414
      %1416 = vmatmul.f32.gmra.mxu0 %v842
      %v1417 = vpop.f32.mrf.mxu0
      %v1418 = vadd.f32 0.0, %v1417
      %1419 = vmatmul.f32.gmra.mxu0 %v844
      %v1420 = vpop.f32.mrf.mxu0
      %v1421 = vadd.f32 0.0, %v1420
      %1422 = vmatmul.f32.gmra.mxu0 %v846
      %v1423 = vpop.f32.mrf.mxu0
      %v1424 = vadd.f32 0.0, %v1423
      %1425 = vmatmul.f32.gmra.mxu0 %v848
      %v1426 = vpop.f32.mrf.mxu0
      %v1427 = vadd.f32 0.0, %v1426
      %1428 = vmatmul.f32.gmra.mxu0 %v850
      %v1429 = vpop.f32.mrf.mxu0
      %v1430 = vadd.f32 0.0, %v1429
      %1431 = vmatmul.f32.gmra.mxu0 %v852
      %v1432 = vpop.f32.mrf.mxu0
      %v1433 = vadd.f32 0.0, %v1432
      %1434 = vmatmul.f32.gmra.mxu0 %v854
      %v1435 = vpop.f32.mrf.mxu0
      %v1436 = vadd.f32 0.0, %v1435
      %1437 = vmatmul.f32.gmra.mxu0 %v856
      %v1438 = vpop.f32.mrf.mxu0
      %v1439 = vadd.f32 0.0, %v1438
      %1440 = vmatmul.f32.gmra.mxu0 %v858
      %v1441 = vpop.f32.mrf.mxu0
      %v1442 = vadd.f32 0.0, %v1441
      %1443 = vmatmul.f32.gmra.mxu0 %v860
      %v1444 = vpop.f32.mrf.mxu0
      %v1445 = vadd.f32 0.0, %v1444
      %1446 = vmatmul.f32.gmra.mxu0 %v862
      %v1447 = vpop.f32.mrf.mxu0
      %v1448 = vadd.f32 0.0, %v1447
      %1449 = vmatmul.f32.gmra.mxu0 %v864
      %v1450 = vpop.f32.mrf.mxu0
      %v1451 = vadd.f32 0.0, %v1450
      %1452 = vmatmul.f32.gmra.mxu0 %v866
      %v1453 = vpop.f32.mrf.mxu0
      %v1454 = vadd.f32 0.0, %v1453
      %1455 = vmatmul.f32.gmra.mxu0 %v868
      %v1456 = vpop.f32.mrf.mxu0
      %v1457 = vadd.f32 0.0, %v1456
      %1458 = vmatmul.f32.gmra.mxu0 %v870
      %v1459 = vpop.f32.mrf.mxu0
      %v1460 = vadd.f32 0.0, %v1459
      %1461 = vmatmul.f32.gmra.mxu0 %v872
      %v1462 = vpop.f32.mrf.mxu0
      %v1463 = vadd.f32 0.0, %v1462
      %1464 = vmatmul.f32.gmra.mxu0 %v874
      %v1465 = vpop.f32.mrf.mxu0
      %v1466 = vadd.f32 0.0, %v1465
      %1467 = vmatmul.f32.gmra.mxu0 %v876
      %v1468 = vpop.f32.mrf.mxu0
      %v1469 = vadd.f32 0.0, %v1468
      %1470 = vmatmul.f32.gmra.mxu0 %v878
      %v1471 = vpop.f32.mrf.mxu0
      %v1472 = vadd.f32 0.0, %v1471
      %1473 = vmatmul.f32.gmra.mxu0 %v1363
      %v1474 = vpop.f32.mrf.mxu0
      %v1475 = vadd.f32 0.0, %v1474
      %1476 = vmatmul.f32.gmra.mxu0 %v1365
      %v1477 = vpop.f32.mrf.mxu0
      %v1478 = vadd.f32 0.0, %v1477
      %1479 = vdwg.mxu0
      %v1480 = vadd.f32 %v1317, %v1385
      %v1481 = vadd.f32 %v1318, %v1388
      %v1482 = vadd.f32 %v1319, %v1391
      %v1483 = vadd.f32 %v1320, %v1394
      %v1484 = vadd.f32 %v1321, %v1397
      %v1485 = vadd.f32 %v1322, %v1400
      %v1486 = vadd.f32 %v1323, %v1403
      %v1487 = vadd.f32 %v1324, %v1406
      %v1488 = vadd.f32 %v1325, %v1409
      %v1489 = vadd.f32 %v1326, %v1412
      %v1490 = vadd.f32 %v1327, %v1415
      %v1491 = vadd.f32 %v1328, %v1418
      %v1492 = vadd.f32 %v1329, %v1421
      %v1493 = vadd.f32 %v1330, %v1424
      %v1494 = vadd.f32 %v1331, %v1427
      %v1495 = vadd.f32 %v1332, %v1430
      %v1496 = vadd.f32 %v1333, %v1433
      %v1497 = vadd.f32 %v1334, %v1436
      %v1498 = vadd.f32 %v1335, %v1439
      %v1499 = vadd.f32 %v1336, %v1442
      %v1500 = vadd.f32 %v1337, %v1445
      %v1501 = vadd.f32 %v1338, %v1448
      %v1502 = vadd.f32 %v1339, %v1451
      %v1503 = vadd.f32 %v1340, %v1454
      %v1504 = vadd.f32 %v1341, %v1457
      %v1505 = vadd.f32 %v1342, %v1460
      %v1506 = vadd.f32 %v1343, %v1463
      %v1507 = vadd.f32 %v1344, %v1466
      %v1508 = vadd.f32 %v1345, %v1469
      %v1509 = vadd.f32 %v1346, %v1472
      %v1510 = vadd.f32 %v1347, %v1475
      %v1511 = vadd.f32 %v1348, %v1478
      %s1512 = scalar_lea.vmem %s1, 384
      %v1513 = vld [vmem:[%s1512] sm:$0xff]
      %v1514 = vld [vmem:[%s1512 + $0x8] sm:$0xff]
      %v1515 = vld [vmem:[%s1512 + $0x10] sm:$0xff]
      %v1516 = vld [vmem:[%s1512 + $0x18] sm:$0xff]
      %v1517 = vld [vmem:[%s1512 + $0x20] sm:$0xff]
      %v1518 = vld [vmem:[%s1512 + $0x28] sm:$0xff]
      %v1519 = vld [vmem:[%s1512 + $0x30] sm:$0xff]
      %v1520 = vld [vmem:[%s1512 + $0x38] sm:$0xff]
      %v1522 = vsel %vm371, %v222, 0
      %v1525 = vsel %vm371, %v223, 0
      %1527 = vmatpush.msra.mxu0 0.0
      %1528 = vmatpush.msra.mxu0 0.0
      %1529 = vmatpush.msra.mxu0 0.0
      %1530 = vmatpush.msra.mxu0 0.0
      %1531 = vmatpush.msra.mxu0 0.0
      %1532 = vmatpush.msra.mxu0 0.0
      %1533 = vmatpush.msra.mxu0 0.0
      %1534 = vmatpush.msra.mxu0 0.0
      %1535 = vmatpush.msra.mxu0 %v1520
      %1536 = vmatpush.msra.mxu0 %v1519
      %1537 = vmatpush.msra.mxu0 %v1518
      %1538 = vmatpush.msra.mxu0 %v1517
      %1539 = vmatpush.msra.mxu0 %v1516
      %1540 = vmatpush.msra.mxu0 %v1515
      %1541 = vmatpush.msra.mxu0 %v1514
      %1542 = vmatpush.msra.mxu0 %v1513
      %1543 = vmatmul.f32.gmra.mxu0 %v557
      %v1544 = vpop.f32.mrf.mxu0
      %v1545 = vadd.f32 0.0, %v1544
      %1546 = vmatmul.f32.gmra.mxu0 %v559
      %v1547 = vpop.f32.mrf.mxu0
      %v1548 = vadd.f32 0.0, %v1547
      %1549 = vmatmul.f32.gmra.mxu0 %v561
      %v1550 = vpop.f32.mrf.mxu0
      %v1551 = vadd.f32 0.0, %v1550
      %1552 = vmatmul.f32.gmra.mxu0 %v563
      %v1553 = vpop.f32.mrf.mxu0
      %v1554 = vadd.f32 0.0, %v1553
      %1555 = vmatmul.f32.gmra.mxu0 %v565
      %v1556 = vpop.f32.mrf.mxu0
      %v1557 = vadd.f32 0.0, %v1556
      %1558 = vmatmul.f32.gmra.mxu0 %v567
      %v1559 = vpop.f32.mrf.mxu0
      %v1560 = vadd.f32 0.0, %v1559
      %1561 = vmatmul.f32.gmra.mxu0 %v569
      %v1562 = vpop.f32.mrf.mxu0
      %v1563 = vadd.f32 0.0, %v1562
      %1564 = vmatmul.f32.gmra.mxu0 %v571
      %v1565 = vpop.f32.mrf.mxu0
      %v1566 = vadd.f32 0.0, %v1565
      %1567 = vmatmul.f32.gmra.mxu0 %v573
      %v1568 = vpop.f32.mrf.mxu0
      %v1569 = vadd.f32 0.0, %v1568
      %1570 = vmatmul.f32.gmra.mxu0 %v575
      %v1571 = vpop.f32.mrf.mxu0
      %v1572 = vadd.f32 0.0, %v1571
      %1573 = vmatmul.f32.gmra.mxu0 %v577
      %v1574 = vpop.f32.mrf.mxu0
      %v1575 = vadd.f32 0.0, %v1574
      %1576 = vmatmul.f32.gmra.mxu0 %v579
      %v1577 = vpop.f32.mrf.mxu0
      %v1578 = vadd.f32 0.0, %v1577
      %1579 = vmatmul.f32.gmra.mxu0 %v581
      %v1580 = vpop.f32.mrf.mxu0
      %v1581 = vadd.f32 0.0, %v1580
      %1582 = vmatmul.f32.gmra.mxu0 %v583
      %v1583 = vpop.f32.mrf.mxu0
      %v1584 = vadd.f32 0.0, %v1583
      %1585 = vmatmul.f32.gmra.mxu0 %v585
      %v1586 = vpop.f32.mrf.mxu0
      %v1587 = vadd.f32 0.0, %v1586
      %1588 = vmatmul.f32.gmra.mxu0 %v587
      %v1589 = vpop.f32.mrf.mxu0
      %v1590 = vadd.f32 0.0, %v1589
      %1591 = vmatmul.f32.gmra.mxu0 %v589
      %v1592 = vpop.f32.mrf.mxu0
      %v1593 = vadd.f32 0.0, %v1592
      %1594 = vmatmul.f32.gmra.mxu0 %v591
      %v1595 = vpop.f32.mrf.mxu0
      %v1596 = vadd.f32 0.0, %v1595
      %1597 = vmatmul.f32.gmra.mxu0 %v593
      %v1598 = vpop.f32.mrf.mxu0
      %v1599 = vadd.f32 0.0, %v1598
      %1600 = vmatmul.f32.gmra.mxu0 %v595
      %v1601 = vpop.f32.mrf.mxu0
      %v1602 = vadd.f32 0.0, %v1601
      %1603 = vmatmul.f32.gmra.mxu0 %v597
      %v1604 = vpop.f32.mrf.mxu0
      %v1605 = vadd.f32 0.0, %v1604
      %1606 = vmatmul.f32.gmra.mxu0 %v599
      %v1607 = vpop.f32.mrf.mxu0
      %v1608 = vadd.f32 0.0, %v1607
      %1609 = vmatmul.f32.gmra.mxu0 %v601
      %v1610 = vpop.f32.mrf.mxu0
      %v1611 = vadd.f32 0.0, %v1610
      %1612 = vmatmul.f32.gmra.mxu0 %v603
      %v1613 = vpop.f32.mrf.mxu0
      %v1614 = vadd.f32 0.0, %v1613
      %1615 = vmatmul.f32.gmra.mxu0 %v605
      %v1616 = vpop.f32.mrf.mxu0
      %v1617 = vadd.f32 0.0, %v1616
      %1618 = vmatmul.f32.gmra.mxu0 %v607
      %v1619 = vpop.f32.mrf.mxu0
      %v1620 = vadd.f32 0.0, %v1619
      %1621 = vmatmul.f32.gmra.mxu0 %v609
      %v1622 = vpop.f32.mrf.mxu0
      %v1623 = vadd.f32 0.0, %v1622
      %1624 = vmatmul.f32.gmra.mxu0 %v611
      %v1625 = vpop.f32.mrf.mxu0
      %v1626 = vadd.f32 0.0, %v1625
      %1627 = vmatmul.f32.gmra.mxu0 %v1035
      %v1628 = vpop.f32.mrf.mxu0
      %v1629 = vadd.f32 0.0, %v1628
      %1630 = vmatmul.f32.gmra.mxu0 %v1038
      %v1631 = vpop.f32.mrf.mxu0
      %v1632 = vadd.f32 0.0, %v1631
      %1633 = vmatmul.f32.gmra.mxu0 %v1522
      %v1634 = vpop.f32.mrf.mxu0
      %v1635 = vadd.f32 0.0, %v1634
      %1636 = vmatmul.f32.gmra.mxu0 %v1525
      %v1637 = vpop.f32.mrf.mxu0
      %v1638 = vadd.f32 0.0, %v1637
      %1639 = vdwg.mxu0
      %v1640 = vadd.f32 %v1480, %v1545
      %v1641 = vadd.f32 %v1481, %v1548
      %v1642 = vadd.f32 %v1482, %v1551
      %v1643 = vadd.f32 %v1483, %v1554
      %v1644 = vadd.f32 %v1484, %v1557
      %v1645 = vadd.f32 %v1485, %v1560
      %v1646 = vadd.f32 %v1486, %v1563
      %v1647 = vadd.f32 %v1487, %v1566
      %v1648 = vadd.f32 %v1488, %v1569
      %v1649 = vadd.f32 %v1489, %v1572
      %v1650 = vadd.f32 %v1490, %v1575
      %v1651 = vadd.f32 %v1491, %v1578
      %v1652 = vadd.f32 %v1492, %v1581
      %v1653 = vadd.f32 %v1493, %v1584
      %v1654 = vadd.f32 %v1494, %v1587
      %v1655 = vadd.f32 %v1495, %v1590
      %v1656 = vadd.f32 %v1496, %v1593
      %v1657 = vadd.f32 %v1497, %v1596
      %v1658 = vadd.f32 %v1498, %v1599
      %v1659 = vadd.f32 %v1499, %v1602
      %v1660 = vadd.f32 %v1500, %v1605
      %v1661 = vadd.f32 %v1501, %v1608
      %v1662 = vadd.f32 %v1502, %v1611
      %v1663 = vadd.f32 %v1503, %v1614
      %v1664 = vadd.f32 %v1504, %v1617
      %v1665 = vadd.f32 %v1505, %v1620
      %v1666 = vadd.f32 %v1506, %v1623
      %v1667 = vadd.f32 %v1507, %v1626
      %v1668 = vadd.f32 %v1508, %v1629
      %v1669 = vadd.f32 %v1509, %v1632
      %v1670 = vadd.f32 %v1510, %v1635
      %v1671 = vadd.f32 %v1511, %v1638
      %v1673 = vrot.slane %v222, 1
      %v1674 = vrot.slane %v223, 1
      %v1675 = vsel %vm281, %v1673, %v1674
      %v1676 = vrot.slane %v224, 1
      %v1677 = vsel %vm281, %v1674, %v1676
      %s1678 = scalar_lea.vmem %s1, 448
      %v1679 = vld [vmem:[%s1678] sm:$0xff]
      %v1680 = vld [vmem:[%s1678 + $0x8] sm:$0xff]
      %v1681 = vld [vmem:[%s1678 + $0x10] sm:$0xff]
      %v1682 = vld [vmem:[%s1678 + $0x18] sm:$0xff]
      %v1683 = vld [vmem:[%s1678 + $0x20] sm:$0xff]
      %v1684 = vld [vmem:[%s1678 + $0x28] sm:$0xff]
      %v1685 = vld [vmem:[%s1678 + $0x30] sm:$0xff]
      %v1686 = vld [vmem:[%s1678 + $0x38] sm:$0xff]
      %v1687 = vsel %vm371, %v1675, 0
      %v1689 = vsel %vm371, %v1677, 0
      %1691 = vmatpush.msra.mxu0 0.0
      %1692 = vmatpush.msra.mxu0 0.0
      %1693 = vmatpush.msra.mxu0 0.0
      %1694 = vmatpush.msra.mxu0 0.0
      %1695 = vmatpush.msra.mxu0 0.0
      %1696 = vmatpush.msra.mxu0 0.0
      %1697 = vmatpush.msra.mxu0 0.0
      %1698 = vmatpush.msra.mxu0 0.0
      %1699 = vmatpush.msra.mxu0 %v1686
      %1700 = vmatpush.msra.mxu0 %v1685
      %1701 = vmatpush.msra.mxu0 %v1684
      %1702 = vmatpush.msra.mxu0 %v1683
      %1703 = vmatpush.msra.mxu0 %v1682
      %1704 = vmatpush.msra.mxu0 %v1681
      %1705 = vmatpush.msra.mxu0 %v1680
      %1706 = vmatpush.msra.mxu0 %v1679
      %1707 = vmatmul.f32.gmra.mxu0 %v380
      %v1708 = vpop.f32.mrf.mxu0
      %v1709 = vadd.f32 0.0, %v1708
      %1710 = vmatmul.f32.gmra.mxu0 %v382
      %v1711 = vpop.f32.mrf.mxu0
      %v1712 = vadd.f32 0.0, %v1711
      %1713 = vmatmul.f32.gmra.mxu0 %v384
      %v1714 = vpop.f32.mrf.mxu0
      %v1715 = vadd.f32 0.0, %v1714
      %1716 = vmatmul.f32.gmra.mxu0 %v386
      %v1717 = vpop.f32.mrf.mxu0
      %v1718 = vadd.f32 0.0, %v1717
      %1719 = vmatmul.f32.gmra.mxu0 %v388
      %v1720 = vpop.f32.mrf.mxu0
      %v1721 = vadd.f32 0.0, %v1720
      %1722 = vmatmul.f32.gmra.mxu0 %v390
      %v1723 = vpop.f32.mrf.mxu0
      %v1724 = vadd.f32 0.0, %v1723
      %1725 = vmatmul.f32.gmra.mxu0 %v392
      %v1726 = vpop.f32.mrf.mxu0
      %v1727 = vadd.f32 0.0, %v1726
      %1728 = vmatmul.f32.gmra.mxu0 %v394
      %v1729 = vpop.f32.mrf.mxu0
      %v1730 = vadd.f32 0.0, %v1729
      %1731 = vmatmul.f32.gmra.mxu0 %v396
      %v1732 = vpop.f32.mrf.mxu0
      %v1733 = vadd.f32 0.0, %v1732
      %1734 = vmatmul.f32.gmra.mxu0 %v398
      %v1735 = vpop.f32.mrf.mxu0
      %v1736 = vadd.f32 0.0, %v1735
      %1737 = vmatmul.f32.gmra.mxu0 %v400
      %v1738 = vpop.f32.mrf.mxu0
      %v1739 = vadd.f32 0.0, %v1738
      %1740 = vmatmul.f32.gmra.mxu0 %v402
      %v1741 = vpop.f32.mrf.mxu0
      %v1742 = vadd.f32 0.0, %v1741
      %1743 = vmatmul.f32.gmra.mxu0 %v404
      %v1744 = vpop.f32.mrf.mxu0
      %v1745 = vadd.f32 0.0, %v1744
      %1746 = vmatmul.f32.gmra.mxu0 %v406
      %v1747 = vpop.f32.mrf.mxu0
      %v1748 = vadd.f32 0.0, %v1747
      %1749 = vmatmul.f32.gmra.mxu0 %v408
      %v1750 = vpop.f32.mrf.mxu0
      %v1751 = vadd.f32 0.0, %v1750
      %1752 = vmatmul.f32.gmra.mxu0 %v410
      %v1753 = vpop.f32.mrf.mxu0
      %v1754 = vadd.f32 0.0, %v1753
      %1755 = vmatmul.f32.gmra.mxu0 %v412
      %v1756 = vpop.f32.mrf.mxu0
      %v1757 = vadd.f32 0.0, %v1756
      %1758 = vmatmul.f32.gmra.mxu0 %v414
      %v1759 = vpop.f32.mrf.mxu0
      %v1760 = vadd.f32 0.0, %v1759
      %1761 = vmatmul.f32.gmra.mxu0 %v416
      %v1762 = vpop.f32.mrf.mxu0
      %v1763 = vadd.f32 0.0, %v1762
      %1764 = vmatmul.f32.gmra.mxu0 %v418
      %v1765 = vpop.f32.mrf.mxu0
      %v1766 = vadd.f32 0.0, %v1765
      %1767 = vmatmul.f32.gmra.mxu0 %v420
      %v1768 = vpop.f32.mrf.mxu0
      %v1769 = vadd.f32 0.0, %v1768
      %1770 = vmatmul.f32.gmra.mxu0 %v422
      %v1771 = vpop.f32.mrf.mxu0
      %v1772 = vadd.f32 0.0, %v1771
      %1773 = vmatmul.f32.gmra.mxu0 %v424
      %v1774 = vpop.f32.mrf.mxu0
      %v1775 = vadd.f32 0.0, %v1774
      %1776 = vmatmul.f32.gmra.mxu0 %v426
      %v1777 = vpop.f32.mrf.mxu0
      %v1778 = vadd.f32 0.0, %v1777
      %1779 = vmatmul.f32.gmra.mxu0 %v428
      %v1780 = vpop.f32.mrf.mxu0
      %v1781 = vadd.f32 0.0, %v1780
      %1782 = vmatmul.f32.gmra.mxu0 %v430
      %v1783 = vpop.f32.mrf.mxu0
      %v1784 = vadd.f32 0.0, %v1783
      %1785 = vmatmul.f32.gmra.mxu0 %v432
      %v1786 = vpop.f32.mrf.mxu0
      %v1787 = vadd.f32 0.0, %v1786
      %1788 = vmatmul.f32.gmra.mxu0 %v434
      %v1789 = vpop.f32.mrf.mxu0
      %v1790 = vadd.f32 0.0, %v1789
      %1791 = vmatmul.f32.gmra.mxu0 %v1200
      %v1792 = vpop.f32.mrf.mxu0
      %v1793 = vadd.f32 0.0, %v1792
      %1794 = vmatmul.f32.gmra.mxu0 %v1202
      %v1795 = vpop.f32.mrf.mxu0
      %v1796 = vadd.f32 0.0, %v1795
      %1797 = vmatmul.f32.gmra.mxu0 %v1687
      %v1798 = vpop.f32.mrf.mxu0
      %v1799 = vadd.f32 0.0, %v1798
      %1800 = vmatmul.f32.gmra.mxu0 %v1689
      %v1801 = vpop.f32.mrf.mxu0
      %v1802 = vadd.f32 0.0, %v1801
      %1803 = vdwg.mxu0
      %v1804 = vadd.f32 %v1640, %v1709
      %v1805 = vadd.f32 %v1641, %v1712
      %v1806 = vadd.f32 %v1642, %v1715
      %v1807 = vadd.f32 %v1643, %v1718
      %v1808 = vadd.f32 %v1644, %v1721
      %v1809 = vadd.f32 %v1645, %v1724
      %v1810 = vadd.f32 %v1646, %v1727
      %v1811 = vadd.f32 %v1647, %v1730
      %v1812 = vadd.f32 %v1648, %v1733
      %v1813 = vadd.f32 %v1649, %v1736
      %v1814 = vadd.f32 %v1650, %v1739
      %v1815 = vadd.f32 %v1651, %v1742
      %v1816 = vadd.f32 %v1652, %v1745
      %v1817 = vadd.f32 %v1653, %v1748
      %v1818 = vadd.f32 %v1654, %v1751
      %v1819 = vadd.f32 %v1655, %v1754
      %v1820 = vadd.f32 %v1656, %v1757
      %v1821 = vadd.f32 %v1657, %v1760
      %v1822 = vadd.f32 %v1658, %v1763
      %v1823 = vadd.f32 %v1659, %v1766
      %v1824 = vadd.f32 %v1660, %v1769
      %v1825 = vadd.f32 %v1661, %v1772
      %v1826 = vadd.f32 %v1662, %v1775
      %v1827 = vadd.f32 %v1663, %v1778
      %v1828 = vadd.f32 %v1664, %v1781
      %v1829 = vadd.f32 %v1665, %v1784
      %v1830 = vadd.f32 %v1666, %v1787
      %v1831 = vadd.f32 %v1667, %v1790
      %v1832 = vadd.f32 %v1668, %v1793
      %v1833 = vadd.f32 %v1669, %v1796
      %v1834 = vadd.f32 %v1670, %v1799
      %v1835 = vadd.f32 %v1671, %v1802
      %v1836 = vrot.slane %v222, 2
      %v1837 = vrot.slane %v223, 2
      %v1838 = vsel %vm726, %v1836, %v1837
      %v1839 = vrot.slane %v224, 2
      %v1840 = vsel %vm726, %v1837, %v1839
      %s1841 = scalar_lea.vmem %s1, 512
      %v1842 = vld [vmem:[%s1841] sm:$0xff]
      %v1843 = vld [vmem:[%s1841 + $0x8] sm:$0xff]
      %v1844 = vld [vmem:[%s1841 + $0x10] sm:$0xff]
      %v1845 = vld [vmem:[%s1841 + $0x18] sm:$0xff]
      %v1846 = vld [vmem:[%s1841 + $0x20] sm:$0xff]
      %v1847 = vld [vmem:[%s1841 + $0x28] sm:$0xff]
      %v1848 = vld [vmem:[%s1841 + $0x30] sm:$0xff]
      %v1849 = vld [vmem:[%s1841 + $0x38] sm:$0xff]
      %v1850 = vsel %vm371, %v1838, 0
      %v1852 = vsel %vm371, %v1840, 0
      %1854 = vmatpush.msra.mxu0 0.0
      %1855 = vmatpush.msra.mxu0 0.0
      %1856 = vmatpush.msra.mxu0 0.0
      %1857 = vmatpush.msra.mxu0 0.0
      %1858 = vmatpush.msra.mxu0 0.0
      %1859 = vmatpush.msra.mxu0 0.0
      %1860 = vmatpush.msra.mxu0 0.0
      %1861 = vmatpush.msra.mxu0 0.0
      %1862 = vmatpush.msra.mxu0 %v1849
      %1863 = vmatpush.msra.mxu0 %v1848
      %1864 = vmatpush.msra.mxu0 %v1847
      %1865 = vmatpush.msra.mxu0 %v1846
      %1866 = vmatpush.msra.mxu0 %v1845
      %1867 = vmatpush.msra.mxu0 %v1844
      %1868 = vmatpush.msra.mxu0 %v1843
      %1869 = vmatpush.msra.mxu0 %v1842
      %1870 = vmatmul.f32.gmra.mxu0 %v824
      %v1871 = vpop.f32.mrf.mxu0
      %v1872 = vadd.f32 0.0, %v1871
      %1873 = vmatmul.f32.gmra.mxu0 %v826
      %v1874 = vpop.f32.mrf.mxu0
      %v1875 = vadd.f32 0.0, %v1874
      %1876 = vmatmul.f32.gmra.mxu0 %v828
      %v1877 = vpop.f32.mrf.mxu0
      %v1878 = vadd.f32 0.0, %v1877
      %1879 = vmatmul.f32.gmra.mxu0 %v830
      %v1880 = vpop.f32.mrf.mxu0
      %v1881 = vadd.f32 0.0, %v1880
      %1882 = vmatmul.f32.gmra.mxu0 %v832
      %v1883 = vpop.f32.mrf.mxu0
      %v1884 = vadd.f32 0.0, %v1883
      %1885 = vmatmul.f32.gmra.mxu0 %v834
      %v1886 = vpop.f32.mrf.mxu0
      %v1887 = vadd.f32 0.0, %v1886
      %1888 = vmatmul.f32.gmra.mxu0 %v836
      %v1889 = vpop.f32.mrf.mxu0
      %v1890 = vadd.f32 0.0, %v1889
      %1891 = vmatmul.f32.gmra.mxu0 %v838
      %v1892 = vpop.f32.mrf.mxu0
      %v1893 = vadd.f32 0.0, %v1892
      %1894 = vmatmul.f32.gmra.mxu0 %v840
      %v1895 = vpop.f32.mrf.mxu0
      %v1896 = vadd.f32 0.0, %v1895
      %1897 = vmatmul.f32.gmra.mxu0 %v842
      %v1898 = vpop.f32.mrf.mxu0
      %v1899 = vadd.f32 0.0, %v1898
      %1900 = vmatmul.f32.gmra.mxu0 %v844
      %v1901 = vpop.f32.mrf.mxu0
      %v1902 = vadd.f32 0.0, %v1901
      %1903 = vmatmul.f32.gmra.mxu0 %v846
      %v1904 = vpop.f32.mrf.mxu0
      %v1905 = vadd.f32 0.0, %v1904
      %1906 = vmatmul.f32.gmra.mxu0 %v848
      %v1907 = vpop.f32.mrf.mxu0
      %v1908 = vadd.f32 0.0, %v1907
      %1909 = vmatmul.f32.gmra.mxu0 %v850
      %v1910 = vpop.f32.mrf.mxu0
      %v1911 = vadd.f32 0.0, %v1910
      %1912 = vmatmul.f32.gmra.mxu0 %v852
      %v1913 = vpop.f32.mrf.mxu0
      %v1914 = vadd.f32 0.0, %v1913
      %1915 = vmatmul.f32.gmra.mxu0 %v854
      %v1916 = vpop.f32.mrf.mxu0
      %v1917 = vadd.f32 0.0, %v1916
      %1918 = vmatmul.f32.gmra.mxu0 %v856
      %v1919 = vpop.f32.mrf.mxu0
      %v1920 = vadd.f32 0.0, %v1919
      %1921 = vmatmul.f32.gmra.mxu0 %v858
      %v1922 = vpop.f32.mrf.mxu0
      %v1923 = vadd.f32 0.0, %v1922
      %1924 = vmatmul.f32.gmra.mxu0 %v860
      %v1925 = vpop.f32.mrf.mxu0
      %v1926 = vadd.f32 0.0, %v1925
      %1927 = vmatmul.f32.gmra.mxu0 %v862
      %v1928 = vpop.f32.mrf.mxu0
      %v1929 = vadd.f32 0.0, %v1928
      %1930 = vmatmul.f32.gmra.mxu0 %v864
      %v1931 = vpop.f32.mrf.mxu0
      %v1932 = vadd.f32 0.0, %v1931
      %1933 = vmatmul.f32.gmra.mxu0 %v866
      %v1934 = vpop.f32.mrf.mxu0
      %v1935 = vadd.f32 0.0, %v1934
      %1936 = vmatmul.f32.gmra.mxu0 %v868
      %v1937 = vpop.f32.mrf.mxu0
      %v1938 = vadd.f32 0.0, %v1937
      %1939 = vmatmul.f32.gmra.mxu0 %v870
      %v1940 = vpop.f32.mrf.mxu0
      %v1941 = vadd.f32 0.0, %v1940
      %1942 = vmatmul.f32.gmra.mxu0 %v872
      %v1943 = vpop.f32.mrf.mxu0
      %v1944 = vadd.f32 0.0, %v1943
      %1945 = vmatmul.f32.gmra.mxu0 %v874
      %v1946 = vpop.f32.mrf.mxu0
      %v1947 = vadd.f32 0.0, %v1946
      %1948 = vmatmul.f32.gmra.mxu0 %v876
      %v1949 = vpop.f32.mrf.mxu0
      %v1950 = vadd.f32 0.0, %v1949
      %1951 = vmatmul.f32.gmra.mxu0 %v878
      %v1952 = vpop.f32.mrf.mxu0
      %v1953 = vadd.f32 0.0, %v1952
      %1954 = vmatmul.f32.gmra.mxu0 %v1363
      %v1955 = vpop.f32.mrf.mxu0
      %v1956 = vadd.f32 0.0, %v1955
      %1957 = vmatmul.f32.gmra.mxu0 %v1365
      %v1958 = vpop.f32.mrf.mxu0
      %v1959 = vadd.f32 0.0, %v1958
      %1960 = vmatmul.f32.gmra.mxu0 %v1850
      %v1961 = vpop.f32.mrf.mxu0
      %v1962 = vadd.f32 0.0, %v1961
      %1963 = vmatmul.f32.gmra.mxu0 %v1852
      %v1964 = vpop.f32.mrf.mxu0
      %v1965 = vadd.f32 0.0, %v1964
      %1966 = vdwg.mxu0
      %v1967 = vadd.f32 %v1804, %v1872
      %v1968 = vadd.f32 %v1805, %v1875
      %v1969 = vadd.f32 %v1806, %v1878
      %v1970 = vadd.f32 %v1807, %v1881
      %v1971 = vadd.f32 %v1808, %v1884
      %v1972 = vadd.f32 %v1809, %v1887
      %v1973 = vadd.f32 %v1810, %v1890
      %v1974 = vadd.f32 %v1811, %v1893
      %v1975 = vadd.f32 %v1812, %v1896
      %v1976 = vadd.f32 %v1813, %v1899
      %v1977 = vadd.f32 %v1814, %v1902
      %v1978 = vadd.f32 %v1815, %v1905
      %v1979 = vadd.f32 %v1816, %v1908
      %v1980 = vadd.f32 %v1817, %v1911
      %v1981 = vadd.f32 %v1818, %v1914
      %v1982 = vadd.f32 %v1819, %v1917
      %v1983 = vadd.f32 %v1820, %v1920
      %v1984 = vadd.f32 %v1821, %v1923
      %v1985 = vadd.f32 %v1822, %v1926
      %v1986 = vadd.f32 %v1823, %v1929
      %v1987 = vadd.f32 %v1824, %v1932
      %v1988 = vadd.f32 %v1825, %v1935
      %v1989 = vadd.f32 %v1826, %v1938
      %v1990 = vadd.f32 %v1827, %v1941
      %v1991 = vadd.f32 %v1828, %v1944
      %v1992 = vadd.f32 %v1829, %v1947
      %v1993 = vadd.f32 %v1830, %v1950
      %v1994 = vadd.f32 %v1831, %v1953
      %v1995 = vadd.f32 %v1832, %v1956
      %v1996 = vadd.f32 %v1833, %v1959
      %v1997 = vadd.f32 %v1834, %v1962
      %v1998 = vadd.f32 %v1835, %v1965
      %v1999 = vld [vmem:[%s2] sm:$0x1]
      %v2001 = vperm.slane %v1999, 0
      %v2003 = vadd.f32 %v1967, %v2001
      %v2004 = vadd.f32 %v1968, %v2001
      %v2005 = vadd.f32 %v1969, %v2001
      %v2006 = vadd.f32 %v1970, %v2001
      %v2007 = vadd.f32 %v1971, %v2001
      %v2008 = vadd.f32 %v1972, %v2001
      %v2009 = vadd.f32 %v1973, %v2001
      %v2010 = vadd.f32 %v1974, %v2001
      %v2011 = vadd.f32 %v1975, %v2001
      %v2012 = vadd.f32 %v1976, %v2001
      %v2013 = vadd.f32 %v1977, %v2001
      %v2014 = vadd.f32 %v1978, %v2001
      %v2015 = vadd.f32 %v1979, %v2001
      %v2016 = vadd.f32 %v1980, %v2001
      %v2017 = vadd.f32 %v1981, %v2001
      %v2018 = vadd.f32 %v1982, %v2001
      %v2019 = vadd.f32 %v1983, %v2001
      %v2020 = vadd.f32 %v1984, %v2001
      %v2021 = vadd.f32 %v1985, %v2001
      %v2022 = vadd.f32 %v1986, %v2001
      %v2023 = vadd.f32 %v1987, %v2001
      %v2024 = vadd.f32 %v1988, %v2001
      %v2025 = vadd.f32 %v1989, %v2001
      %v2026 = vadd.f32 %v1990, %v2001
      %v2027 = vadd.f32 %v1991, %v2001
      %v2028 = vadd.f32 %v1992, %v2001
      %v2029 = vadd.f32 %v1993, %v2001
      %v2030 = vadd.f32 %v1994, %v2001
      %v2031 = vadd.f32 %v1995, %v2001
      %v2032 = vadd.f32 %v1996, %v2001
      %v2033 = vadd.f32 %v1997, %v2001
      %v2034 = vadd.f32 %v1998, %v2001
      %vm2035 = vcmp.gt.f32.partialorder %v2003, 0.0
      %vm2036 = vcmp.gt.f32.partialorder %v2004, 0.0
      %vm2037 = vcmp.gt.f32.partialorder %v2005, 0.0
      %vm2038 = vcmp.gt.f32.partialorder %v2006, 0.0
      %vm2039 = vcmp.gt.f32.partialorder %v2007, 0.0
      %vm2040 = vcmp.gt.f32.partialorder %v2008, 0.0
      %vm2041 = vcmp.gt.f32.partialorder %v2009, 0.0
      %vm2042 = vcmp.gt.f32.partialorder %v2010, 0.0
      %vm2043 = vcmp.gt.f32.partialorder %v2011, 0.0
      %vm2044 = vcmp.gt.f32.partialorder %v2012, 0.0
      %vm2045 = vcmp.gt.f32.partialorder %v2013, 0.0
      %vm2046 = vcmp.gt.f32.partialorder %v2014, 0.0
      %vm2047 = vcmp.gt.f32.partialorder %v2015, 0.0
      %vm2048 = vcmp.gt.f32.partialorder %v2016, 0.0
      %vm2049 = vcmp.gt.f32.partialorder %v2017, 0.0
      %vm2050 = vcmp.gt.f32.partialorder %v2018, 0.0
      %vm2051 = vcmp.gt.f32.partialorder %v2019, 0.0
      %vm2052 = vcmp.gt.f32.partialorder %v2020, 0.0
      %vm2053 = vcmp.gt.f32.partialorder %v2021, 0.0
      %vm2054 = vcmp.gt.f32.partialorder %v2022, 0.0
      %vm2055 = vcmp.gt.f32.partialorder %v2023, 0.0
      %vm2056 = vcmp.gt.f32.partialorder %v2024, 0.0
      %vm2057 = vcmp.gt.f32.partialorder %v2025, 0.0
      %vm2058 = vcmp.gt.f32.partialorder %v2026, 0.0
      %vm2059 = vcmp.gt.f32.partialorder %v2027, 0.0
      %vm2060 = vcmp.gt.f32.partialorder %v2028, 0.0
      %vm2061 = vcmp.gt.f32.partialorder %v2029, 0.0
      %vm2062 = vcmp.gt.f32.partialorder %v2030, 0.0
      %vm2063 = vcmp.gt.f32.partialorder %v2031, 0.0
      %vm2064 = vcmp.gt.f32.partialorder %v2032, 0.0
      %vm2065 = vcmp.gt.f32.partialorder %v2033, 0.0
      %vm2066 = vcmp.gt.f32.partialorder %v2034, 0.0
      %v2067 = vmul.f32 %v2003, 0.1
      %v2068 = vmul.f32 %v2004, 0.1
      %v2069 = vmul.f32 %v2005, 0.1
      %v2070 = vmul.f32 %v2006, 0.1
      %v2071 = vmul.f32 %v2007, 0.1
      %v2072 = vmul.f32 %v2008, 0.1
      %v2073 = vmul.f32 %v2009, 0.1
      %v2074 = vmul.f32 %v2010, 0.1
      %v2075 = vmul.f32 %v2011, 0.1
      %v2076 = vmul.f32 %v2012, 0.1
      %v2077 = vmul.f32 %v2013, 0.1
      %v2078 = vmul.f32 %v2014, 0.1
      %v2079 = vmul.f32 %v2015, 0.1
      %v2080 = vmul.f32 %v2016, 0.1
      %v2081 = vmul.f32 %v2017, 0.1
      %v2082 = vmul.f32 %v2018, 0.1
      %v2083 = vmul.f32 %v2019, 0.1
      %v2084 = vmul.f32 %v2020, 0.1
      %v2085 = vmul.f32 %v2021, 0.1
      %v2086 = vmul.f32 %v2022, 0.1
      %v2087 = vmul.f32 %v2023, 0.1
      %v2088 = vmul.f32 %v2024, 0.1
      %v2089 = vmul.f32 %v2025, 0.1
      %v2090 = vmul.f32 %v2026, 0.1
      %v2091 = vmul.f32 %v2027, 0.1
      %v2092 = vmul.f32 %v2028, 0.1
      %v2093 = vmul.f32 %v2029, 0.1
      %v2094 = vmul.f32 %v2030, 0.1
      %v2095 = vmul.f32 %v2031, 0.1
      %v2096 = vmul.f32 %v2032, 0.1
      %v2097 = vmul.f32 %v2033, 0.1
      %v2098 = vmul.f32 %v2034, 0.1
      %v2099 = vsel %vm2035, %v2003, %v2067
      %v2100 = vsel %vm2036, %v2004, %v2068
      %v2101 = vsel %vm2037, %v2005, %v2069
      %v2102 = vsel %vm2038, %v2006, %v2070
      %v2103 = vsel %vm2039, %v2007, %v2071
      %v2104 = vsel %vm2040, %v2008, %v2072
      %v2105 = vsel %vm2041, %v2009, %v2073
      %v2106 = vsel %vm2042, %v2010, %v2074
      %v2107 = vsel %vm2043, %v2011, %v2075
      %v2108 = vsel %vm2044, %v2012, %v2076
      %v2109 = vsel %vm2045, %v2013, %v2077
      %v2110 = vsel %vm2046, %v2014, %v2078
      %v2111 = vsel %vm2047, %v2015, %v2079
      %v2112 = vsel %vm2048, %v2016, %v2080
      %v2113 = vsel %vm2049, %v2017, %v2081
      %v2114 = vsel %vm2050, %v2018, %v2082
      %v2115 = vsel %vm2051, %v2019, %v2083
      %v2116 = vsel %vm2052, %v2020, %v2084
      %v2117 = vsel %vm2053, %v2021, %v2085
      %v2118 = vsel %vm2054, %v2022, %v2086
      %v2119 = vsel %vm2055, %v2023, %v2087
      %v2120 = vsel %vm2056, %v2024, %v2088
      %v2121 = vsel %vm2057, %v2025, %v2089
      %v2122 = vsel %vm2058, %v2026, %v2090
      %v2123 = vsel %vm2059, %v2027, %v2091
      %v2124 = vsel %vm2060, %v2028, %v2092
      %v2125 = vsel %vm2061, %v2029, %v2093
      %v2126 = vsel %vm2062, %v2030, %v2094
      %v2127 = vsel %vm2063, %v2031, %v2095
      %v2128 = vsel %vm2064, %v2032, %v2096
      %v2129 = vsel %vm2065, %v2033, %v2097
      %v2130 = vsel %vm2066, %v2034, %v2098
      %2131 = vst.msk [vmem:[%s170] sm:$0xff] %vm371, %v2099
      %2132 = vst.msk [vmem:[%s170 + $0x8] sm:$0xff] %vm371, %v2100
      %2133 = vst.msk [vmem:[%s170 + $0x10] sm:$0xff] %vm371, %v2101
      %2134 = vst.msk [vmem:[%s170 + $0x18] sm:$0xff] %vm371, %v2102
      %2135 = vst.msk [vmem:[%s170 + $0x20] sm:$0xff] %vm371, %v2103
      %2136 = vst.msk [vmem:[%s170 + $0x28] sm:$0xff] %vm371, %v2104
      %2137 = vst.msk [vmem:[%s170 + $0x30] sm:$0xff] %vm371, %v2105
      %2138 = vst.msk [vmem:[%s170 + $0x38] sm:$0xff] %vm371, %v2106
      %2139 = vst.msk [vmem:[%s170 + $0x40] sm:$0xff] %vm371, %v2107
      %2140 = vst.msk [vmem:[%s170 + $0x48] sm:$0xff] %vm371, %v2108
      %2141 = vst.msk [vmem:[%s170 + $0x50] sm:$0xff] %vm371, %v2109
      %2142 = vst.msk [vmem:[%s170 + $0x58] sm:$0xff] %vm371, %v2110
      %2143 = vst.msk [vmem:[%s170 + $0x60] sm:$0xff] %vm371, %v2111
      %2144 = vst.msk [vmem:[%s170 + $0x68] sm:$0xff] %vm371, %v2112
      %2145 = vst.msk [vmem:[%s170 + $0x70] sm:$0xff] %vm371, %v2113
      %2146 = vst.msk [vmem:[%s170 + $0x78] sm:$0xff] %vm371, %v2114
      %2147 = vst.msk [vmem:[%s170 + $0x80] sm:$0xff] %vm371, %v2115
      %2148 = vst.msk [vmem:[%s170 + $0x88] sm:$0xff] %vm371, %v2116
      %2149 = vst.msk [vmem:[%s170 + $0x90] sm:$0xff] %vm371, %v2117
      %2150 = vst.msk [vmem:[%s170 + $0x98] sm:$0xff] %vm371, %v2118
      %2151 = vst.msk [vmem:[%s170 + $0xa0] sm:$0xff] %vm371, %v2119
      %2152 = vst.msk [vmem:[%s170 + $0xa8] sm:$0xff] %vm371, %v2120
      %2153 = vst.msk [vmem:[%s170 + $0xb0] sm:$0xff] %vm371, %v2121
      %2154 = vst.msk [vmem:[%s170 + $0xb8] sm:$0xff] %vm371, %v2122
      %2155 = vst.msk [vmem:[%s170 + $0xc0] sm:$0xff] %vm371, %v2123
      %2156 = vst.msk [vmem:[%s170 + $0xc8] sm:$0xff] %vm371, %v2124
      %2157 = vst.msk [vmem:[%s170 + $0xd0] sm:$0xff] %vm371, %v2125
      %2158 = vst.msk [vmem:[%s170 + $0xd8] sm:$0xff] %vm371, %v2126
      %2159 = vst.msk [vmem:[%s170 + $0xe0] sm:$0xff] %vm371, %v2127
      %2160 = vst.msk [vmem:[%s170 + $0xe8] sm:$0xff] %vm371, %v2128
      %2161 = vst.msk [vmem:[%s170 + $0xf0] sm:$0xff] %vm371, %v2129
      %2162 = vst.msk [vmem:[%s170 + $0xf8] sm:$0xff] %vm371, %v2130
      %p2163 = scmp.lt.s32.totalorder %s14, 1
      %s2164 = scalar_select %p2163, %s14, 1
      %s2165 = smul.addr %s2164, 32
      %s2166 = smul.addr %s2165, 8
      %s2167 = scalar_lea.vmem %s3, %s2166
      // Predicated region
      $region33: #{dag_forward_pallas.10} parent=31 // pred_check
        %p2168 = pneg %p100
      $region34: #{dag_forward_pallas.10} parent=31 // pred_check_branch
        %2170 = sbr.rel (%p2168) target = $region36
      $region35: #{dag_forward_pallas.10} parent=31 // pred_region
        _
      $region36: #{dag_forward_pallas.10} parent=31 // pred_fallthru
        _
    $region32: #{dag_forward_pallas.10} parent=5 // pred_fallthru
      _
    %p2171 = scmp.le.s32.totalorder 2, %s9
    // Predicated region
    $region37: #{dag_forward_pallas.10} parent=5 // pred_check
      %p2172 = pneg %p2171
    $region38: #{dag_forward_pallas.10} parent=5 // pred_check_branch
      %2174 = sbr.rel (%p2172) target = $region40
    $region39: #{dag_forward_pallas.10} parent=5 // pred_region
      %s2175 = ssub.s32 %s9, 2
      // Predicated region
      $region41: #{dag_forward_pallas.10} parent=39 // pred_check
        %p2176 = pneg %p106
      $region42: #{dag_forward_pallas.10} parent=39 // pred_check_branch
        %2178 = sbr.rel (%p2176) target = $region44
      $region43: #{dag_forward_pallas.10} parent=39 // pred_region
        %p2179 = scmp.lt.s32.totalorder %s15, 1
        %s2180 = scalar_select %p2179, %s15, 1
        %s2181 = smul.addr %s2180, 32
        %s2182 = smul.addr %s2181, 8
        %s2183 = scalar_lea.vmem %s3, %s2182
      $region44: #{dag_forward_pallas.10} parent=39 // pred_fallthru
        _
    $region40: #{dag_forward_pallas.10} parent=5 // pred_fallthru
      _
  $region6: #{dag_forward_pallas.10} parent=0 // loop_footer
    %s13 = sadd.s32 1, %s9
  $region7: #{dag_forward_pallas.10} parent=0 // loop_footer_branch
    %8 = sbr.rel target = $region3
  $region8: #{dag_forward_pallas.10} parent=0 // loop_exit
    _

// kernel: dag_forward_pallas.12
$region0: #{dag_forward_pallas.12}
  #allocation0 [shape = 'u32[]', space=smem, size = 0x4, offset = 0x4, fixed_abs, tag = 'smem constant byte address 0x4 - core index']
  #allocation1 [shape = 'u32[72,128]{1,0:T(1,128)}', space=vmem, size = 0x9000, scoped, tag = 'internal scratch']
  %s0 = inlined_call_operand.vmem [shape: f32[2,18,18,64], index: 0, kind: input, shape index: {}]
  %s1 = inlined_call_operand.vmem [shape: f32[9,64,64], index: 1, kind: input, shape index: {}]
  %s2 = inlined_call_operand.vmem [shape: f32[1,64], index: 2, kind: input, shape index: {}]
  %s3 = inlined_call_operand.vmem [shape: f32[2,16,16,64], index: 3, kind: input, shape index: {}]
  %s4 = inlined_call_operand.vmem [shape: f32[2,16,16,64], index: 4, kind: output, shape index: {}]
  %s5 = sld [smem:[#allocation0]]
  $region49: #{dag_forward_pallas.12} parent=0
    _
  %s7 = ssub.s32 1, %s5
  %s8 = scalar_select 0, %s7, %s5
  loop: start=0, step=1, limit=4
  $region2: #{dag_forward_pallas.12} parent=0 // loop_pre_header
    _
  $region3: #{dag_forward_pallas.12} parent=0 // loop_header
    %s10 = sphi 0, %s14
    %p11 = scmp.ge.s32.totalorder %s10, 4
    %s20 = sphi 0, %s22
    %s23 = sphi 0, %s20
    %s24 = sphi 0, %s23
    %s40 = sphi 0, %s24
    %s44 = sphi 0, %s44
    %s46 = sphi 0, %s44
    %s47 = sphi 0, %s46
    %s61 = sphi 0, %s47
    %s65 = sphi 0, %s65
    %s67 = sphi 0, %s65
    %s68 = sphi 0, %s67
    %s82 = sphi 0, %s68
    %s88 = sphi 0, %s90
    %s91 = sphi 0, %s88
    %s92 = sphi 0, %s91
    %s108 = sphi 0, %s92
    %s114 = sphi 0, %s116
    %s117 = sphi 0, %s114
    %s118 = sphi 0, %s117
    %s134 = sphi 0, %s118
  $region4: #{dag_forward_pallas.12} parent=0 // loop_header_branch
    %13 = sbr.rel (%p11) target = $region8
  $region5: #{dag_forward_pallas.12} parent=0 // loop_body
    %s15 = ssub.s32 %s10, 1
    %s16 = ssub.s32 %s10, 2
    %s17 = sadd.s32 %s10, 1
    %s18 = ssub.s32 %s10, %s17
    %p19 = scmp.eq.s32.totalorder %s18, 0
    %s21 = sadd.s32 %s20, 1
    %s22 = scalar_select %p19, %s20, %s21
    %p25 = pneg %p19
    %p26 = scmp.eq.s32.totalorder %s10, 1
    %p27 = por %p25, %p26
    %p28 = scmp.ne.s32.totalorder %s20, %s23
    %p29 = scmp.eq.s32.totalorder %s10, 0
    %p30 = por %p28, %p29
    %p31 = scmp.ne.s32.totalorder %s20, %s23
    %p32 = scmp.eq.s32.totalorder %s15, 1
    %p33 = por %p31, %p32
    %p34 = scmp.ne.s32.totalorder %s23, %s24
    %p35 = scmp.eq.s32.totalorder %s15, 0
    %p36 = por %p34, %p35
    %p37 = scmp.ne.s32.totalorder %s23, %s24
    %p38 = scmp.eq.s32.totalorder %s16, 1
    %p39 = por %p37, %p38
    %p41 = scmp.ne.s32.totalorder %s24, %s40
    %p42 = scmp.eq.s32.totalorder %s16, 0
    %p43 = por %p41, %p42
    %s45 = sadd.s32 %s44, 1
    %p48 = scmp.eq.s32.totalorder %s10, 1
    %p49 = scmp.ne.s32.totalorder %s44, %s46
    %p50 = scmp.eq.s32.totalorder %s10, 0
    %p51 = por %p49, %p50
    %p52 = scmp.ne.s32.totalorder %s44, %s46
    %p53 = scmp.eq.s32.totalorder %s15, 1
    %p54 = por %p52, %p53
    %p55 = scmp.ne.s32.totalorder %s46, %s47
    %p56 = scmp.eq.s32.totalorder %s15, 0
    %p57 = por %p55, %p56
    %p58 = scmp.ne.s32.totalorder %s46, %s47
    %p59 = scmp.eq.s32.totalorder %s16, 1
    %p60 = por %p58, %p59
    %p62 = scmp.ne.s32.totalorder %s47, %s61
    %p63 = scmp.eq.s32.totalorder %s16, 0
    %p64 = por %p62, %p63
    %s66 = sadd.s32 %s65, 1
    %p69 = scmp.eq.s32.totalorder %s10, 1
    %p70 = scmp.ne.s32.totalorder %s65, %s67
    %p71 = scmp.eq.s32.totalorder %s10, 0
    %p72 = por %p70, %p71
    %p73 = scmp.ne.s32.totalorder %s65, %s67
    %p74 = scmp.eq.s32.totalorder %s15, 1
    %p75 = por %p73, %p74
    %p76 = scmp.ne.s32.totalorder %s67, %s68
    %p77 = scmp.eq.s32.totalorder %s15, 0
    %p78 = por %p76, %p77
    %p79 = scmp.ne.s32.totalorder %s67, %s68
    %p80 = scmp.eq.s32.totalorder %s16, 1
    %p81 = por %p79, %p80
    %p83 = scmp.ne.s32.totalorder %s68, %s82
    %p84 = scmp.eq.s32.totalorder %s16, 0
    %p85 = por %p83, %p84
    %s86 = ssub.s32 %s10, %s17
    %p87 = scmp.eq.s32.totalorder %s86, 0
    %s89 = sadd.s32 %s88, 1
    %s90 = scalar_select %p87, %s88, %s89
    %p93 = pneg %p87
    %p94 = scmp.eq.s32.totalorder %s10, 1
    %p95 = por %p93, %p94
    %p96 = scmp.ne.s32.totalorder %s88, %s91
    %p97 = scmp.eq.s32.totalorder %s10, 0
    %p98 = por %p96, %p97
    %p99 = scmp.ne.s32.totalorder %s88, %s91
    %p100 = scmp.eq.s32.totalorder %s15, 1
    %p101 = por %p99, %p100
    %p102 = scmp.ne.s32.totalorder %s91, %s92
    %p103 = scmp.eq.s32.totalorder %s15, 0
    %p104 = por %p102, %p103
    %p105 = scmp.ne.s32.totalorder %s91, %s92
    %p106 = scmp.eq.s32.totalorder %s16, 1
    %p107 = por %p105, %p106
    %p109 = scmp.ne.s32.totalorder %s92, %s108
    %p110 = scmp.eq.s32.totalorder %s16, 0
    %p111 = por %p109, %p110
    %s112 = ssub.s32 %s10, %s17
    %p113 = scmp.eq.s32.totalorder %s112, 0
    %s115 = sadd.s32 %s114, 1
    %s116 = scalar_select %p113, %s114, %s115
    %p119 = pneg %p113
    %p120 = scmp.eq.s32.totalorder %s10, 1
    %p121 = por %p119, %p120
    %p122 = scmp.ne.s32.totalorder %s114, %s117
    %p123 = scmp.eq.s32.totalorder %s10, 0
    %p124 = por %p122, %p123
    %p125 = scmp.ne.s32.totalorder %s114, %s117
    %p126 = scmp.eq.s32.totalorder %s15, 1
    %p127 = por %p125, %p126
    %p128 = scmp.ne.s32.totalorder %s117, %s118
    %p129 = scmp.eq.s32.totalorder %s15, 0
    %p130 = por %p128, %p129
    %p131 = scmp.ne.s32.totalorder %s117, %s118
    %p132 = scmp.eq.s32.totalorder %s16, 1
    %p133 = por %p131, %p132
    %p135 = scmp.ne.s32.totalorder %s118, %s134
    %p136 = scmp.eq.s32.totalorder %s16, 0
    %p137 = por %p135, %p136
    %p138 = scmp.le.s32.totalorder 1, %s10
    %p139 = scmp.lt.s32.totalorder %s10, 3
    %p140 = pnand %p138, %p139
    %p141 = pneg %p140
    // Predicated region
    $region9: #{dag_forward_pallas.12} parent=5 // pred_check
      _
    $region10: #{dag_forward_pallas.12} parent=5 // pred_check_branch
      %143 = sbr.rel (%p140) target = $region12
    $region11: #{dag_forward_pallas.12} parent=5 // pred_region
      %s144 = ssub.s32 %s10, 1
      // Predicated region
      $region13: #{dag_forward_pallas.12} parent=11 // pred_check
        %p145 = pneg %p57
      $region14: #{dag_forward_pallas.12} parent=11 // pred_check_branch
        %147 = sbr.rel (%p145) target = $region16
      $region15: #{dag_forward_pallas.12} parent=11 // pred_region
        _
      $region16: #{dag_forward_pallas.12} parent=11 // pred_fallthru
        _
      // Predicated region
      $region17: #{dag_forward_pallas.12} parent=11 // pred_check
        %p148 = pneg %p78
      $region18: #{dag_forward_pallas.12} parent=11 // pred_check_branch
        %150 = sbr.rel (%p148) target = $region20
      $region19: #{dag_forward_pallas.12} parent=11 // pred_region
        _
      $region20: #{dag_forward_pallas.12} parent=11 // pred_fallthru
        _
    $region12: #{dag_forward_pallas.12} parent=5 // pred_fallthru
      _
    %p151 = scmp.lt.s32.totalorder %s10, 2
    // Predicated region
    $region21: #{dag_forward_pallas.12} parent=5 // pred_check
      %p152 = pneg %p151
    $region22: #{dag_forward_pallas.12} parent=5 // pred_check_branch
      %154 = sbr.rel (%p152) target = $region24
    $region23: #{dag_forward_pallas.12} parent=5 // pred_region
      // Predicated region
      $region25: #{dag_forward_pallas.12} parent=23 // pred_check
        %p155 = pneg %p30
      $region26: #{dag_forward_pallas.12} parent=23 // pred_check_branch
        %157 = sbr.rel (%p155) target = $region28
      $region27: #{dag_forward_pallas.12} parent=23 // pred_region
        %p158 = scmp.lt.s32.totalorder %s10, 1
        %s159 = scalar_select %p158, %s10, 1
        %s160 = smul.addr %s159, 54
        %s161 = smul.addr %s160, 8
        %s162 = scalar_lea.vmem %s0, %s161
      $region28: #{dag_forward_pallas.12} parent=23 // pred_fallthru
        _
      // Predicated region
      $region29: #{dag_forward_pallas.12} parent=23 // pred_check
        %p163 = pneg %p98
      $region30: #{dag_forward_pallas.12} parent=23 // pred_check_branch
        %165 = sbr.rel (%p163) target = $region32
      $region31: #{dag_forward_pallas.12} parent=23 // pred_region
        %p166 = scmp.lt.s32.totalorder %s10, 1
        %s167 = scalar_select %p166, %s10, 1
        %s168 = smul.addr %s167, 32
        %s169 = smul.addr %s168, 8
        %s170 = scalar_lea.vmem %s3, %s169
      $region32: #{dag_forward_pallas.12} parent=23 // pred_fallthru
        _
    $region24: #{dag_forward_pallas.12} parent=5 // pred_fallthru
      _
    %p171 = scmp.le.s32.totalorder 1, %s10
    %p172 = scmp.lt.s32.totalorder %s10, 3
    %p173 = pnand %p171, %p172
    %p174 = pneg %p173
    // Predicated region
    $region33: #{dag_forward_pallas.12} parent=5 // pred_check
      _
    $region34: #{dag_forward_pallas.12} parent=5 // pred_check_branch
      %176 = sbr.rel (%p173) target = $region36
    $region35: #{dag_forward_pallas.12} parent=5 // pred_region
      %s177 = ssub.s32 %s10, 1
      %p178 = scmp.lt.s32.totalorder %s15, 1
      %s179 = scalar_select %p178, %s15, 1
      %s180 = smul.addr %s179, 54
      %s181 = smul.addr %s180, 8
      %s182 = scalar_lea.vmem %s0, %s181
      %p183 = pneg %p36
      %p184 = pneg %p33
      %p185 = pneg %p57
      %p186 = pneg %p54
      %p187 = pneg %p78
      %p188 = pneg %p75
      %p189 = scmp.lt.s32.totalorder %s15, 1
      %s190 = scalar_select %p189, %s15, 1
      %s191 = smul.addr %s190, 32
      %s192 = smul.addr %s191, 8
      %s193 = scalar_lea.vmem %s3, %s192
      %p194 = pneg %p104
      %p195 = pneg %p101
      %p196 = pneg %p130
      %p197 = pneg %p127
      %p198 = scmp.lt.s32.totalorder %s15, 1
      %s199 = scalar_select %p198, %s15, 1
      %s200 = smul.addr %s199, 32
      %s201 = smul.addr %s200, 8
      %s202 = scalar_lea.vmem %s4, %s201
      %p203 = scmp.lt.s32.totalorder %s15, 1
      %s204 = scalar_select %p203, %s15, 1
      %s205 = smul.addr %s204, 54
      %s206 = smul.addr %s205, 8
      %s207 = scalar_lea.vmem %s0, %s206
      %p208 = scmp.lt.s32.totalorder %s15, 1
      %s209 = scalar_select %p208, %s15, 1
      %s210 = smul.addr %s209, 32
      %s211 = smul.addr %s210, 8
      %s212 = scalar_lea.vmem %s3, %s211
      %p213 = scmp.lt.s32.totalorder %s15, 1
      %s214 = scalar_select %p213, %s15, 1
      %s215 = smul.addr %s214, 32
      %s216 = smul.addr %s215, 8
      %s217 = scalar_lea.vmem %s4, %s216
      %v218 = vld [vmem:[%s207] sm:$0xff]
      %v219 = vld [vmem:[%s207 + $0x8] sm:$0xff]
      %v220 = vld [vmem:[%s207 + $0x10] sm:$0x3]
      %v221 = vld [vmem:[%s207 + $0x18] sm:$0xff]
      %v222 = vld [vmem:[%s207 + $0x20] sm:$0xff]
      %v223 = vld [vmem:[%s207 + $0x28] sm:$0x3]
      %v224 = vld [vmem:[%s207 + $0x30] sm:$0xff]
      %v225 = vld [vmem:[%s207 + $0x38] sm:$0xff]
      %v226 = vld [vmem:[%s207 + $0x40] sm:$0x3]
      %v227 = vld [vmem:[%s207 + $0x48] sm:$0xff]
      %v228 = vld [vmem:[%s207 + $0x50] sm:$0xff]
      %v229 = vld [vmem:[%s207 + $0x58] sm:$0x3]
      %v230 = vld [vmem:[%s207 + $0x60] sm:$0xff]
      %v231 = vld [vmem:[%s207 + $0x68] sm:$0xff]
      %v232 = vld [vmem:[%s207 + $0x70] sm:$0x3]
      %v233 = vld [vmem:[%s207 + $0x78] sm:$0xff]
      %v234 = vld [vmem:[%s207 + $0x80] sm:$0xff]
      %v235 = vld [vmem:[%s207 + $0x88] sm:$0x3]
      %v236 = vld [vmem:[%s207 + $0x90] sm:$0xff]
      %v237 = vld [vmem:[%s207 + $0x98] sm:$0xff]
      %v238 = vld [vmem:[%s207 + $0xa0] sm:$0x3]
      %v239 = vld [vmem:[%s207 + $0xa8] sm:$0xff]
      %v240 = vld [vmem:[%s207 + $0xb0] sm:$0xff]
      %v241 = vld [vmem:[%s207 + $0xb8] sm:$0x3]
      %v242 = vld [vmem:[%s207 + $0xc0] sm:$0xff]
      %v243 = vld [vmem:[%s207 + $0xc8] sm:$0xff]
      %v244 = vld [vmem:[%s207 + $0xd0] sm:$0x3]
      %v245 = vld [vmem:[%s207 + $0xd8] sm:$0xff]
      %v246 = vld [vmem:[%s207 + $0xe0] sm:$0xff]
      %v247 = vld [vmem:[%s207 + $0xe8] sm:$0x3]
      %v248 = vld [vmem:[%s207 + $0xf0] sm:$0xff]
      %v249 = vld [vmem:[%s207 + $0xf8] sm:$0xff]
      %v250 = vld [vmem:[%s207 + $0x100] sm:$0x3]
      %v251 = vld [vmem:[%s207 + $0x108] sm:$0xff]
      %v252 = vld [vmem:[%s207 + $0x110] sm:$0xff]
      %v253 = vld [vmem:[%s207 + $0x118] sm:$0x3]
      %v254 = vld [vmem:[%s207 + $0x120] sm:$0xff]
      %v255 = vld [vmem:[%s207 + $0x128] sm:$0xff]
      %v256 = vld [vmem:[%s207 + $0x130] sm:$0x3]
      %v257 = vld [vmem:[%s207 + $0x138] sm:$0xff]
      %v258 = vld [vmem:[%s207 + $0x140] sm:$0xff]
      %v259 = vld [vmem:[%s207 + $0x148] sm:$0x3]
      %v260 = vld [vmem:[%s207 + $0x150] sm:$0xff]
      %v261 = vld [vmem:[%s207 + $0x158] sm:$0xff]
      %v262 = vld [vmem:[%s207 + $0x160] sm:$0x3]
      %v263 = vld [vmem:[%s207 + $0x168] sm:$0xff]
      %v264 = vld [vmem:[%s207 + $0x170] sm:$0xff]
      %v265 = vld [vmem:[%s207 + $0x178] sm:$0x3]
      %v266 = vld [vmem:[%s207 + $0x180] sm:$0xff]
      %v267 = vld [vmem:[%s207 + $0x188] sm:$0xff]
      %v268 = vld [vmem:[%s207 + $0x190] sm:$0x3]
      %v269 = vld [vmem:[%s207 + $0x198] sm:$0xff]
      %v270 = vld [vmem:[%s207 + $0x1a0] sm:$0xff]
      %v271 = vld [vmem:[%s207 + $0x1a8] sm:$0x3]
      %v272 = vld [vmem:[%s1] sm:$0xff]
      %v273 = vld [vmem:[%s1 + $0x8] sm:$0xff]
      %v274 = vld [vmem:[%s1 + $0x10] sm:$0xff]
      %v275 = vld [vmem:[%s1 + $0x18] sm:$0xff]
      %v276 = vld [vmem:[%s1 + $0x20] sm:$0xff]
      %v277 = vld [vmem:[%s1 + $0x28] sm:$0xff]
      %v278 = vld [vmem:[%s1 + $0x30] sm:$0xff]
      %v279 = vld [vmem:[%s1 + $0x38] sm:$0xff]
      %vm328 = vcmask 1046528
      %v329 = vrot.slane %v218, 1
      %v330 = vrot.slane %v219, 1
      %v331 = vsel %vm328, %v329, %v330
      %v332 = vrot.slane %v220, 1
      %v333 = vsel %vm328, %v330, %v332
      %v334 = vrot.slane %v221, 1
      %v335 = vrot.slane %v222, 1
      %v336 = vsel %vm328, %v334, %v335
      %v337 = vrot.slane %v223, 1
      %v338 = vsel %vm328, %v335, %v337
      %v339 = vrot.slane %v224, 1
      %v340 = vrot.slane %v225, 1
      %v341 = vsel %vm328, %v339, %v340
      %v342 = vrot.slane %v226, 1
      %v343 = vsel %vm328, %v340, %v342
      %v344 = vrot.slane %v227, 1
      %v345 = vrot.slane %v228, 1
      %v346 = vsel %vm328, %v344, %v345
      %v347 = vrot.slane %v229, 1
      %v348 = vsel %vm328, %v345, %v347
      %v349 = vrot.slane %v230, 1
      %v350 = vrot.slane %v231, 1
      %v351 = vsel %vm328, %v349, %v350
      %v352 = vrot.slane %v232, 1
      %v353 = vsel %vm328, %v350, %v352
      %v354 = vrot.slane %v233, 1
      %v355 = vrot.slane %v234, 1
      %v356 = vsel %vm328, %v354, %v355
      %v357 = vrot.slane %v235, 1
      %v358 = vsel %vm328, %v355, %v357
      %v359 = vrot.slane %v236, 1
      %v360 = vrot.slane %v237, 1
      %v361 = vsel %vm328, %v359, %v360
      %v362 = vrot.slane %v238, 1
      %v363 = vsel %vm328, %v360, %v362
      %v364 = vrot.slane %v239, 1
      %v365 = vrot.slane %v240, 1
      %v366 = vsel %vm328, %v364, %v365
      %v367 = vrot.slane %v241, 1
      %v368 = vsel %vm328, %v365, %v367
      %v369 = vrot.slane %v242, 1
      %v370 = vrot.slane %v243, 1
      %v371 = vsel %vm328, %v369, %v370
      %v372 = vrot.slane %v244, 1
      %v373 = vsel %vm328, %v370, %v372
      %v374 = vrot.slane %v245, 1
      %v375 = vrot.slane %v246, 1
      %v376 = vsel %vm328, %v374, %v375
      %v377 = vrot.slane %v247, 1
      %v378 = vsel %vm328, %v375, %v377
      %v379 = vrot.slane %v248, 1
      %v380 = vrot.slane %v249, 1
      %v381 = vsel %vm328, %v379, %v380
      %v382 = vrot.slane %v250, 1
      %v383 = vsel %vm328, %v380, %v382
      %v384 = vrot.slane %v251, 1
      %v385 = vrot.slane %v252, 1
      %v386 = vsel %vm328, %v384, %v385
      %v387 = vrot.slane %v253, 1
      %v388 = vsel %vm328, %v385, %v387
      %v389 = vrot.slane %v254, 1
      %v390 = vrot.slane %v255, 1
      %v391 = vsel %vm328, %v389, %v390
      %v392 = vrot.slane %v256, 1
      %v393 = vsel %vm328, %v390, %v392
      %v394 = vrot.slane %v257, 1
      %v395 = vrot.slane %v258, 1
      %v396 = vsel %vm328, %v394, %v395
      %v397 = vrot.slane %v259, 1
      %v398 = vsel %vm328, %v395, %v397
      %v399 = vrot.slane %v260, 1
      %v400 = vrot.slane %v261, 1
      %v401 = vsel %vm328, %v399, %v400
      %v402 = vrot.slane %v262, 1
      %v403 = vsel %vm328, %v400, %v402
      %v404 = vrot.slane %v263, 1
      %v405 = vrot.slane %v264, 1
      %v406 = vsel %vm328, %v404, %v405
      %v407 = vrot.slane %v265, 1
      %v408 = vsel %vm328, %v405, %v407
      %s409 = scalar_lea.vmem %s1, 64
      %v410 = vld [vmem:[%s409] sm:$0xff]
      %v411 = vld [vmem:[%s409 + $0x8] sm:$0xff]
      %v412 = vld [vmem:[%s409 + $0x10] sm:$0xff]
      %v413 = vld [vmem:[%s409 + $0x18] sm:$0xff]
      %v414 = vld [vmem:[%s409 + $0x20] sm:$0xff]
      %v415 = vld [vmem:[%s409 + $0x28] sm:$0xff]
      %v416 = vld [vmem:[%s409 + $0x30] sm:$0xff]
      %v417 = vld [vmem:[%s409 + $0x38] sm:$0xff]
      %vm418 = vcmask 523264
      %v419 = vsel %vm418, %v331, 0
      %v421 = vsel %vm418, %v333, 0
      %v423 = vsel %vm418, %v336, 0
      %v425 = vsel %vm418, %v338, 0
      %v427 = vsel %vm418, %v341, 0
      %v429 = vsel %vm418, %v343, 0
      %v431 = vsel %vm418, %v346, 0
      %v433 = vsel %vm418, %v348, 0
      %v435 = vsel %vm418, %v351, 0
      %v437 = vsel %vm418, %v353, 0
      %v439 = vsel %vm418, %v356, 0
      %v441 = vsel %vm418, %v358, 0
      %v443 = vsel %vm418, %v361, 0
      %v445 = vsel %vm418, %v363, 0
      %v447 = vsel %vm418, %v366, 0
      %v449 = vsel %vm418, %v368, 0
      %v451 = vsel %vm418, %v371, 0
      %v453 = vsel %vm418, %v373, 0
      %v455 = vsel %vm418, %v376, 0
      %v457 = vsel %vm418, %v378, 0
      %v459 = vsel %vm418, %v381, 0
      %v461 = vsel %vm418, %v383, 0
      %v463 = vsel %vm418, %v386, 0
      %v465 = vsel %vm418, %v388, 0
      %v467 = vsel %vm418, %v391, 0
      %v469 = vsel %vm418, %v393, 0
      %v471 = vsel %vm418, %v396, 0
      %v473 = vsel %vm418, %v398, 0
      %v475 = vsel %vm418, %v401, 0
      %v477 = vsel %vm418, %v403, 0
      %v479 = vsel %vm418, %v406, 0
      %v481 = vsel %vm418, %v408, 0
      %483 = vmatpush.msra.mxu0 0.0
      %484 = vmatpush.msra.mxu0 0.0
      %485 = vmatpush.msra.mxu0 0.0
      %486 = vmatpush.msra.mxu0 0.0
      %487 = vmatpush.msra.mxu0 0.0
      %488 = vmatpush.msra.mxu0 0.0
      %489 = vmatpush.msra.mxu0 0.0
      %490 = vmatpush.msra.mxu0 0.0
      %491 = vmatpush.msra.mxu0 %v417
      %492 = vmatpush.msra.mxu0 %v416
      %493 = vmatpush.msra.mxu0 %v415
      %494 = vmatpush.msra.mxu0 %v414
      %495 = vmatpush.msra.mxu0 %v413
      %496 = vmatpush.msra.mxu0 %v412
      %497 = vmatpush.msra.mxu0 %v411
      %498 = vmatpush.msra.mxu0 %v410
      %499 = vmatmul.f32.gmra.mxu0 %v419
      %v500 = vpop.f32.mrf.mxu0
      %v501 = vadd.f32 0.0, %v500
      %502 = vmatmul.f32.gmra.mxu0 %v421
      %v503 = vpop.f32.mrf.mxu0
      %v504 = vadd.f32 0.0, %v503
      %505 = vmatmul.f32.gmra.mxu0 %v423
      %v506 = vpop.f32.mrf.mxu0
      %v507 = vadd.f32 0.0, %v506
      %508 = vmatmul.f32.gmra.mxu0 %v425
      %v509 = vpop.f32.mrf.mxu0
      %v510 = vadd.f32 0.0, %v509
      %511 = vmatmul.f32.gmra.mxu0 %v427
      %v512 = vpop.f32.mrf.mxu0
      %v513 = vadd.f32 0.0, %v512
      %514 = vmatmul.f32.gmra.mxu0 %v429
      %v515 = vpop.f32.mrf.mxu0
      %v516 = vadd.f32 0.0, %v515
      %517 = vmatmul.f32.gmra.mxu0 %v431
      %v518 = vpop.f32.mrf.mxu0
      %v519 = vadd.f32 0.0, %v518
      %520 = vmatmul.f32.gmra.mxu0 %v433
      %v521 = vpop.f32.mrf.mxu0
      %v522 = vadd.f32 0.0, %v521
      %523 = vmatmul.f32.gmra.mxu0 %v435
      %v524 = vpop.f32.mrf.mxu0
      %v525 = vadd.f32 0.0, %v524
      %526 = vmatmul.f32.gmra.mxu0 %v437
      %v527 = vpop.f32.mrf.mxu0
      %v528 = vadd.f32 0.0, %v527
      %529 = vmatmul.f32.gmra.mxu0 %v439
      %v530 = vpop.f32.mrf.mxu0
      %v531 = vadd.f32 0.0, %v530
      %532 = vmatmul.f32.gmra.mxu0 %v441
      %v533 = vpop.f32.mrf.mxu0
      %v534 = vadd.f32 0.0, %v533
      %535 = vmatmul.f32.gmra.mxu0 %v443
      %v536 = vpop.f32.mrf.mxu0
      %v537 = vadd.f32 0.0, %v536
      %538 = vmatmul.f32.gmra.mxu0 %v445
      %v539 = vpop.f32.mrf.mxu0
      %v540 = vadd.f32 0.0, %v539
      %541 = vmatmul.f32.gmra.mxu0 %v447
      %v542 = vpop.f32.mrf.mxu0
      %v543 = vadd.f32 0.0, %v542
      %544 = vmatmul.f32.gmra.mxu0 %v449
      %v545 = vpop.f32.mrf.mxu0
      %v546 = vadd.f32 0.0, %v545
      %547 = vmatmul.f32.gmra.mxu0 %v451
      %v548 = vpop.f32.mrf.mxu0
      %v549 = vadd.f32 0.0, %v548
      %550 = vmatmul.f32.gmra.mxu0 %v453
      %v551 = vpop.f32.mrf.mxu0
      %v552 = vadd.f32 0.0, %v551
      %553 = vmatmul.f32.gmra.mxu0 %v455
      %v554 = vpop.f32.mrf.mxu0
      %v555 = vadd.f32 0.0, %v554
      %556 = vmatmul.f32.gmra.mxu0 %v457
      %v557 = vpop.f32.mrf.mxu0
      %v558 = vadd.f32 0.0, %v557
      %559 = vmatmul.f32.gmra.mxu0 %v459
      %v560 = vpop.f32.mrf.mxu0
      %v561 = vadd.f32 0.0, %v560
      %562 = vmatmul.f32.gmra.mxu0 %v461
      %v563 = vpop.f32.mrf.mxu0
      %v564 = vadd.f32 0.0, %v563
      %565 = vmatmul.f32.gmra.mxu0 %v463
      %v566 = vpop.f32.mrf.mxu0
      %v567 = vadd.f32 0.0, %v566
      %568 = vmatmul.f32.gmra.mxu0 %v465
      %v569 = vpop.f32.mrf.mxu0
      %v570 = vadd.f32 0.0, %v569
      %571 = vmatmul.f32.gmra.mxu0 %v467
      %v572 = vpop.f32.mrf.mxu0
      %v573 = vadd.f32 0.0, %v572
      %574 = vmatmul.f32.gmra.mxu0 %v469
      %v575 = vpop.f32.mrf.mxu0
      %v576 = vadd.f32 0.0, %v575
      %577 = vmatmul.f32.gmra.mxu0 %v471
      %v578 = vpop.f32.mrf.mxu0
      %v579 = vadd.f32 0.0, %v578
      %580 = vmatmul.f32.gmra.mxu0 %v473
      %v581 = vpop.f32.mrf.mxu0
      %v582 = vadd.f32 0.0, %v581
      %583 = vmatmul.f32.gmra.mxu0 %v475
      %v584 = vpop.f32.mrf.mxu0
      %v585 = vadd.f32 0.0, %v584
      %586 = vmatmul.f32.gmra.mxu0 %v477
      %v587 = vpop.f32.mrf.mxu0
      %v588 = vadd.f32 0.0, %v587
      %589 = vmatmul.f32.gmra.mxu0 %v479
      %v590 = vpop.f32.mrf.mxu0
      %v591 = vadd.f32 0.0, %v590
      %592 = vmatmul.f32.gmra.mxu0 %v481
      %v593 = vpop.f32.mrf.mxu0
      %v594 = vadd.f32 0.0, %v593
      %595 = vdwg.mxu0
      %v596 = vsel %vm418, %v218, 0
      %v598 = vsel %vm418, %v219, 0
      %v600 = vsel %vm418, %v221, 0
      %v602 = vsel %vm418, %v222, 0
      %v604 = vsel %vm418, %v224, 0
      %v606 = vsel %vm418, %v225, 0
      %v608 = vsel %vm418, %v227, 0
      %v610 = vsel %vm418, %v228, 0
      %v612 = vsel %vm418, %v230, 0
      %v614 = vsel %vm418, %v231, 0
      %v616 = vsel %vm418, %v233, 0
      %v618 = vsel %vm418, %v234, 0
      %v620 = vsel %vm418, %v236, 0
      %v622 = vsel %vm418, %v237, 0
      %v624 = vsel %vm418, %v239, 0
      %v626 = vsel %vm418, %v240, 0
      %v628 = vsel %vm418, %v242, 0
      %v630 = vsel %vm418, %v243, 0
      %v632 = vsel %vm418, %v245, 0
      %v634 = vsel %vm418, %v246, 0
      %v636 = vsel %vm418, %v248, 0
      %v638 = vsel %vm418, %v249, 0
      %v640 = vsel %vm418, %v251, 0
      %v642 = vsel %vm418, %v252, 0
      %v644 = vsel %vm418, %v254, 0
      %v646 = vsel %vm418, %v255, 0
      %v648 = vsel %vm418, %v257, 0
      %v650 = vsel %vm418, %v258, 0
      %v652 = vsel %vm418, %v260, 0
      %v654 = vsel %vm418, %v261, 0
      %v656 = vsel %vm418, %v263, 0
      %v658 = vsel %vm418, %v264, 0
      %660 = vmatpush.msra.mxu0 0.0
      %661 = vmatpush.msra.mxu0 0.0
      %662 = vmatpush.msra.mxu0 0.0
      %663 = vmatpush.msra.mxu0 0.0
      %664 = vmatpush.msra.mxu0 0.0
      %665 = vmatpush.msra.mxu0 0.0
      %666 = vmatpush.msra.mxu0 0.0
      %667 = vmatpush.msra.mxu0 0.0
      %668 = vmatpush.msra.mxu0 %v279
      %669 = vmatpush.msra.mxu0 %v278
      %670 = vmatpush.msra.mxu0 %v277
      %671 = vmatpush.msra.mxu0 %v276
      %672 = vmatpush.msra.mxu0 %v275
      %673 = vmatpush.msra.mxu0 %v274
      %674 = vmatpush.msra.mxu0 %v273
      %675 = vmatpush.msra.mxu0 %v272
      %676 = vmatmul.f32.gmra.mxu0 %v596
      %v677 = vpop.f32.mrf.mxu0
      %v678 = vadd.f32 %v501, %v677
      %679 = vmatmul.f32.gmra.mxu0 %v598
      %v680 = vpop.f32.mrf.mxu0
      %v681 = vadd.f32 %v504, %v680
      %682 = vmatmul.f32.gmra.mxu0 %v600
      %v683 = vpop.f32.mrf.mxu0
      %v684 = vadd.f32 %v507, %v683
      %685 = vmatmul.f32.gmra.mxu0 %v602
      %v686 = vpop.f32.mrf.mxu0
      %v687 = vadd.f32 %v510, %v686
      %688 = vmatmul.f32.gmra.mxu0 %v604
      %v689 = vpop.f32.mrf.mxu0
      %v690 = vadd.f32 %v513, %v689
      %691 = vmatmul.f32.gmra.mxu0 %v606
      %v692 = vpop.f32.mrf.mxu0
      %v693 = vadd.f32 %v516, %v692
      %694 = vmatmul.f32.gmra.mxu0 %v608
      %v695 = vpop.f32.mrf.mxu0
      %v696 = vadd.f32 %v519, %v695
      %697 = vmatmul.f32.gmra.mxu0 %v610
      %v698 = vpop.f32.mrf.mxu0
      %v699 = vadd.f32 %v522, %v698
      %700 = vmatmul.f32.gmra.mxu0 %v612
      %v701 = vpop.f32.mrf.mxu0
      %v702 = vadd.f32 %v525, %v701
      %703 = vmatmul.f32.gmra.mxu0 %v614
      %v704 = vpop.f32.mrf.mxu0
      %v705 = vadd.f32 %v528, %v704
      %706 = vmatmul.f32.gmra.mxu0 %v616
      %v707 = vpop.f32.mrf.mxu0
      %v708 = vadd.f32 %v531, %v707
      %709 = vmatmul.f32.gmra.mxu0 %v618
      %v710 = vpop.f32.mrf.mxu0
      %v711 = vadd.f32 %v534, %v710
      %712 = vmatmul.f32.gmra.mxu0 %v620
      %v713 = vpop.f32.mrf.mxu0
      %v714 = vadd.f32 %v537, %v713
      %715 = vmatmul.f32.gmra.mxu0 %v622
      %v716 = vpop.f32.mrf.mxu0
      %v717 = vadd.f32 %v540, %v716
      %718 = vmatmul.f32.gmra.mxu0 %v624
      %v719 = vpop.f32.mrf.mxu0
      %v720 = vadd.f32 %v543, %v719
      %721 = vmatmul.f32.gmra.mxu0 %v626
      %v722 = vpop.f32.mrf.mxu0
      %v723 = vadd.f32 %v546, %v722
      %724 = vmatmul.f32.gmra.mxu0 %v628
      %v725 = vpop.f32.mrf.mxu0
      %v726 = vadd.f32 %v549, %v725
      %727 = vmatmul.f32.gmra.mxu0 %v630
      %v728 = vpop.f32.mrf.mxu0
      %v729 = vadd.f32 %v552, %v728
      %730 = vmatmul.f32.gmra.mxu0 %v632
      %v731 = vpop.f32.mrf.mxu0
      %v732 = vadd.f32 %v555, %v731
      %733 = vmatmul.f32.gmra.mxu0 %v634
      %v734 = vpop.f32.mrf.mxu0
      %v735 = vadd.f32 %v558, %v734
      %736 = vmatmul.f32.gmra.mxu0 %v636
      %v737 = vpop.f32.mrf.mxu0
      %v738 = vadd.f32 %v561, %v737
      %739 = vmatmul.f32.gmra.mxu0 %v638
      %v740 = vpop.f32.mrf.mxu0
      %v741 = vadd.f32 %v564, %v740
      %742 = vmatmul.f32.gmra.mxu0 %v640
      %v743 = vpop.f32.mrf.mxu0
      %v744 = vadd.f32 %v567, %v743
      %745 = vmatmul.f32.gmra.mxu0 %v642
      %v746 = vpop.f32.mrf.mxu0
      %v747 = vadd.f32 %v570, %v746
      %748 = vmatmul.f32.gmra.mxu0 %v644
      %v749 = vpop.f32.mrf.mxu0
      %v750 = vadd.f32 %v573, %v749
      %751 = vmatmul.f32.gmra.mxu0 %v646
      %v752 = vpop.f32.mrf.mxu0
      %v753 = vadd.f32 %v576, %v752
      %754 = vmatmul.f32.gmra.mxu0 %v648
      %v755 = vpop.f32.mrf.mxu0
      %v756 = vadd.f32 %v579, %v755
      %757 = vmatmul.f32.gmra.mxu0 %v650
      %v758 = vpop.f32.mrf.mxu0
      %v759 = vadd.f32 %v582, %v758
      %760 = vmatmul.f32.gmra.mxu0 %v652
      %v761 = vpop.f32.mrf.mxu0
      %v762 = vadd.f32 %v585, %v761
      %763 = vmatmul.f32.gmra.mxu0 %v654
      %v764 = vpop.f32.mrf.mxu0
      %v765 = vadd.f32 %v588, %v764
      %766 = vmatmul.f32.gmra.mxu0 %v656
      %v767 = vpop.f32.mrf.mxu0
      %v768 = vadd.f32 %v591, %v767
      %769 = vmatmul.f32.gmra.mxu0 %v658
      %v770 = vpop.f32.mrf.mxu0
      %v771 = vadd.f32 %v594, %v770
      %772 = vdwg.mxu0
      %vm773 = vcmask 1045504
      %v774 = vrot.slane %v218, 2
      %v775 = vrot.slane %v219, 2
      %v776 = vsel %vm773, %v774, %v775
      %v777 = vrot.slane %v220, 2
      %v778 = vsel %vm773, %v775, %v777
      %v779 = vrot.slane %v221, 2
      %v780 = vrot.slane %v222, 2
      %v781 = vsel %vm773, %v779, %v780
      %v782 = vrot.slane %v223, 2
      %v783 = vsel %vm773, %v780, %v782
      %v784 = vrot.slane %v224, 2
      %v785 = vrot.slane %v225, 2
      %v786 = vsel %vm773, %v784, %v785
      %v787 = vrot.slane %v226, 2
      %v788 = vsel %vm773, %v785, %v787
      %v789 = vrot.slane %v227, 2
      %v790 = vrot.slane %v228, 2
      %v791 = vsel %vm773, %v789, %v790
      %v792 = vrot.slane %v229, 2
      %v793 = vsel %vm773, %v790, %v792
      %v794 = vrot.slane %v230, 2
      %v795 = vrot.slane %v231, 2
      %v796 = vsel %vm773, %v794, %v795
      %v797 = vrot.slane %v232, 2
      %v798 = vsel %vm773, %v795, %v797
      %v799 = vrot.slane %v233, 2
      %v800 = vrot.slane %v234, 2
      %v801 = vsel %vm773, %v799, %v800
      %v802 = vrot.slane %v235, 2
      %v803 = vsel %vm773, %v800, %v802
      %v804 = vrot.slane %v236, 2
      %v805 = vrot.slane %v237, 2
      %v806 = vsel %vm773, %v804, %v805
      %v807 = vrot.slane %v238, 2
      %v808 = vsel %vm773, %v805, %v807
      %v809 = vrot.slane %v239, 2
      %v810 = vrot.slane %v240, 2
      %v811 = vsel %vm773, %v809, %v810
      %v812 = vrot.slane %v241, 2
      %v813 = vsel %vm773, %v810, %v812
      %v814 = vrot.slane %v242, 2
      %v815 = vrot.slane %v243, 2
      %v816 = vsel %vm773, %v814, %v815
      %v817 = vrot.slane %v244, 2
      %v818 = vsel %vm773, %v815, %v817
      %v819 = vrot.slane %v245, 2
      %v820 = vrot.slane %v246, 2
      %v821 = vsel %vm773, %v819, %v820
      %v822 = vrot.slane %v247, 2
      %v823 = vsel %vm773, %v820, %v822
      %v824 = vrot.slane %v248, 2
      %v825 = vrot.slane %v249, 2
      %v826 = vsel %vm773, %v824, %v825
      %v827 = vrot.slane %v250, 2
      %v828 = vsel %vm773, %v825, %v827
      %v829 = vrot.slane %v251, 2
      %v830 = vrot.slane %v252, 2
      %v831 = vsel %vm773, %v829, %v830
      %v832 = vrot.slane %v253, 2
      %v833 = vsel %vm773, %v830, %v832
      %v834 = vrot.slane %v254, 2
      %v835 = vrot.slane %v255, 2
      %v836 = vsel %vm773, %v834, %v835
      %v837 = vrot.slane %v256, 2
      %v838 = vsel %vm773, %v835, %v837
      %v839 = vrot.slane %v257, 2
      %v840 = vrot.slane %v258, 2
      %v841 = vsel %vm773, %v839, %v840
      %v842 = vrot.slane %v259, 2
      %v843 = vsel %vm773, %v840, %v842
      %v844 = vrot.slane %v260, 2
      %v845 = vrot.slane %v261, 2
      %v846 = vsel %vm773, %v844, %v845
      %v847 = vrot.slane %v262, 2
      %v848 = vsel %vm773, %v845, %v847
      %v849 = vrot.slane %v263, 2
      %v850 = vrot.slane %v264, 2
      %v851 = vsel %vm773, %v849, %v850
      %v852 = vrot.slane %v265, 2
      %v853 = vsel %vm773, %v850, %v852
      %s854 = scalar_lea.vmem %s1, 128
      %v855 = vld [vmem:[%s854] sm:$0xff]
      %v856 = vld [vmem:[%s854 + $0x8] sm:$0xff]
      %v857 = vld [vmem:[%s854 + $0x10] sm:$0xff]
      %v858 = vld [vmem:[%s854 + $0x18] sm:$0xff]
      %v859 = vld [vmem:[%s854 + $0x20] sm:$0xff]
      %v860 = vld [vmem:[%s854 + $0x28] sm:$0xff]
      %v861 = vld [vmem:[%s854 + $0x30] sm:$0xff]
      %v862 = vld [vmem:[%s854 + $0x38] sm:$0xff]
      %v863 = vsel %vm418, %v776, 0
      %v865 = vsel %vm418, %v778, 0
      %v867 = vsel %vm418, %v781, 0
      %v869 = vsel %vm418, %v783, 0
      %v871 = vsel %vm418, %v786, 0
      %v873 = vsel %vm418, %v788, 0
      %v875 = vsel %vm418, %v791, 0
      %v877 = vsel %vm418, %v793, 0
      %v879 = vsel %vm418, %v796, 0
      %v881 = vsel %vm418, %v798, 0
      %v883 = vsel %vm418, %v801, 0
      %v885 = vsel %vm418, %v803, 0
      %v887 = vsel %vm418, %v806, 0
      %v889 = vsel %vm418, %v808, 0
      %v891 = vsel %vm418, %v811, 0
      %v893 = vsel %vm418, %v813, 0
      %v895 = vsel %vm418, %v816, 0
      %v897 = vsel %vm418, %v818, 0
      %v899 = vsel %vm418, %v821, 0
      %v901 = vsel %vm418, %v823, 0
      %v903 = vsel %vm418, %v826, 0
      %v905 = vsel %vm418, %v828, 0
      %v907 = vsel %vm418, %v831, 0
      %v909 = vsel %vm418, %v833, 0
      %v911 = vsel %vm418, %v836, 0
      %v913 = vsel %vm418, %v838, 0
      %v915 = vsel %vm418, %v841, 0
      %v917 = vsel %vm418, %v843, 0
      %v919 = vsel %vm418, %v846, 0
      %v921 = vsel %vm418, %v848, 0
      %v923 = vsel %vm418, %v851, 0
      %v925 = vsel %vm418, %v853, 0
      %927 = vmatpush.msra.mxu0 0.0
      %928 = vmatpush.msra.mxu0 0.0
      %929 = vmatpush.msra.mxu0 0.0
      %930 = vmatpush.msra.mxu0 0.0
      %931 = vmatpush.msra.mxu0 0.0
      %932 = vmatpush.msra.mxu0 0.0
      %933 = vmatpush.msra.mxu0 0.0
      %934 = vmatpush.msra.mxu0 0.0
      %935 = vmatpush.msra.mxu0 %v862
      %936 = vmatpush.msra.mxu0 %v861
      %937 = vmatpush.msra.mxu0 %v860
      %938 = vmatpush.msra.mxu0 %v859
      %939 = vmatpush.msra.mxu0 %v858
      %940 = vmatpush.msra.mxu0 %v857
      %941 = vmatpush.msra.mxu0 %v856
      %942 = vmatpush.msra.mxu0 %v855
      %943 = vmatmul.f32.gmra.mxu0 %v863
      %v944 = vpop.f32.mrf.mxu0
      %v945 = vadd.f32 0.0, %v944
      %946 = vmatmul.f32.gmra.mxu0 %v865
      %v947 = vpop.f32.mrf.mxu0
      %v948 = vadd.f32 0.0, %v947
      %949 = vmatmul.f32.gmra.mxu0 %v867
      %v950 = vpop.f32.mrf.mxu0
      %v951 = vadd.f32 0.0, %v950
      %952 = vmatmul.f32.gmra.mxu0 %v869
      %v953 = vpop.f32.mrf.mxu0
      %v954 = vadd.f32 0.0, %v953
      %955 = vmatmul.f32.gmra.mxu0 %v871
      %v956 = vpop.f32.mrf.mxu0
      %v957 = vadd.f32 0.0, %v956
      %958 = vmatmul.f32.gmra.mxu0 %v873
      %v959 = vpop.f32.mrf.mxu0
      %v960 = vadd.f32 0.0, %v959
      %961 = vmatmul.f32.gmra.mxu0 %v875
      %v962 = vpop.f32.mrf.mxu0
      %v963 = vadd.f32 0.0, %v962
      %964 = vmatmul.f32.gmra.mxu0 %v877
      %v965 = vpop.f32.mrf.mxu0
      %v966 = vadd.f32 0.0, %v965
      %967 = vmatmul.f32.gmra.mxu0 %v879
      %v968 = vpop.f32.mrf.mxu0
      %v969 = vadd.f32 0.0, %v968
      %970 = vmatmul.f32.gmra.mxu0 %v881
      %v971 = vpop.f32.mrf.mxu0
      %v972 = vadd.f32 0.0, %v971
      %973 = vmatmul.f32.gmra.mxu0 %v883
      %v974 = vpop.f32.mrf.mxu0
      %v975 = vadd.f32 0.0, %v974
      %976 = vmatmul.f32.gmra.mxu0 %v885
      %v977 = vpop.f32.mrf.mxu0
      %v978 = vadd.f32 0.0, %v977
      %979 = vmatmul.f32.gmra.mxu0 %v887
      %v980 = vpop.f32.mrf.mxu0
      %v981 = vadd.f32 0.0, %v980
      %982 = vmatmul.f32.gmra.mxu0 %v889
      %v983 = vpop.f32.mrf.mxu0
      %v984 = vadd.f32 0.0, %v983
      %985 = vmatmul.f32.gmra.mxu0 %v891
      %v986 = vpop.f32.mrf.mxu0
      %v987 = vadd.f32 0.0, %v986
      %988 = vmatmul.f32.gmra.mxu0 %v893
      %v989 = vpop.f32.mrf.mxu0
      %v990 = vadd.f32 0.0, %v989
      %991 = vmatmul.f32.gmra.mxu0 %v895
      %v992 = vpop.f32.mrf.mxu0
      %v993 = vadd.f32 0.0, %v992
      %994 = vmatmul.f32.gmra.mxu0 %v897
      %v995 = vpop.f32.mrf.mxu0
      %v996 = vadd.f32 0.0, %v995
      %997 = vmatmul.f32.gmra.mxu0 %v899
      %v998 = vpop.f32.mrf.mxu0
      %v999 = vadd.f32 0.0, %v998
      %1000 = vmatmul.f32.gmra.mxu0 %v901
      %v1001 = vpop.f32.mrf.mxu0
      %v1002 = vadd.f32 0.0, %v1001
      %1003 = vmatmul.f32.gmra.mxu0 %v903
      %v1004 = vpop.f32.mrf.mxu0
      %v1005 = vadd.f32 0.0, %v1004
      %1006 = vmatmul.f32.gmra.mxu0 %v905
      %v1007 = vpop.f32.mrf.mxu0
      %v1008 = vadd.f32 0.0, %v1007
      %1009 = vmatmul.f32.gmra.mxu0 %v907
      %v1010 = vpop.f32.mrf.mxu0
      %v1011 = vadd.f32 0.0, %v1010
      %1012 = vmatmul.f32.gmra.mxu0 %v909
      %v1013 = vpop.f32.mrf.mxu0
      %v1014 = vadd.f32 0.0, %v1013
      %1015 = vmatmul.f32.gmra.mxu0 %v911
      %v1016 = vpop.f32.mrf.mxu0
      %v1017 = vadd.f32 0.0, %v1016
      %1018 = vmatmul.f32.gmra.mxu0 %v913
      %v1019 = vpop.f32.mrf.mxu0
      %v1020 = vadd.f32 0.0, %v1019
      %1021 = vmatmul.f32.gmra.mxu0 %v915
      %v1022 = vpop.f32.mrf.mxu0
      %v1023 = vadd.f32 0.0, %v1022
      %1024 = vmatmul.f32.gmra.mxu0 %v917
      %v1025 = vpop.f32.mrf.mxu0
      %v1026 = vadd.f32 0.0, %v1025
      %1027 = vmatmul.f32.gmra.mxu0 %v919
      %v1028 = vpop.f32.mrf.mxu0
      %v1029 = vadd.f32 0.0, %v1028
      %1030 = vmatmul.f32.gmra.mxu0 %v921
      %v1031 = vpop.f32.mrf.mxu0
      %v1032 = vadd.f32 0.0, %v1031
      %1033 = vmatmul.f32.gmra.mxu0 %v923
      %v1034 = vpop.f32.mrf.mxu0
      %v1035 = vadd.f32 0.0, %v1034
      %1036 = vmatmul.f32.gmra.mxu0 %v925
      %v1037 = vpop.f32.mrf.mxu0
      %v1038 = vadd.f32 0.0, %v1037
      %1039 = vdwg.mxu0
      %v1040 = vadd.f32 %v678, %v945
      %v1041 = vadd.f32 %v681, %v948
      %v1042 = vadd.f32 %v684, %v951
      %v1043 = vadd.f32 %v687, %v954
      %v1044 = vadd.f32 %v690, %v957
      %v1045 = vadd.f32 %v693, %v960
      %v1046 = vadd.f32 %v696, %v963
      %v1047 = vadd.f32 %v699, %v966
      %v1048 = vadd.f32 %v702, %v969
      %v1049 = vadd.f32 %v705, %v972
      %v1050 = vadd.f32 %v708, %v975
      %v1051 = vadd.f32 %v711, %v978
      %v1052 = vadd.f32 %v714, %v981
      %v1053 = vadd.f32 %v717, %v984
      %v1054 = vadd.f32 %v720, %v987
      %v1055 = vadd.f32 %v723, %v990
      %v1056 = vadd.f32 %v726, %v993
      %v1057 = vadd.f32 %v729, %v996
      %v1058 = vadd.f32 %v732, %v999
      %v1059 = vadd.f32 %v735, %v1002
      %v1060 = vadd.f32 %v738, %v1005
      %v1061 = vadd.f32 %v741, %v1008
      %v1062 = vadd.f32 %v744, %v1011
      %v1063 = vadd.f32 %v747, %v1014
      %v1064 = vadd.f32 %v750, %v1017
      %v1065 = vadd.f32 %v753, %v1020
      %v1066 = vadd.f32 %v756, %v1023
      %v1067 = vadd.f32 %v759, %v1026
      %v1068 = vadd.f32 %v762, %v1029
      %v1069 = vadd.f32 %v765, %v1032
      %v1070 = vadd.f32 %v768, %v1035
      %v1071 = vadd.f32 %v771, %v1038
      %s1072 = scalar_lea.vmem %s1, 192
      %v1073 = vld [vmem:[%s1072] sm:$0xff]
      %v1074 = vld [vmem:[%s1072 + $0x8] sm:$0xff]
      %v1075 = vld [vmem:[%s1072 + $0x10] sm:$0xff]
      %v1076 = vld [vmem:[%s1072 + $0x18] sm:$0xff]
      %v1077 = vld [vmem:[%s1072 + $0x20] sm:$0xff]
      %v1078 = vld [vmem:[%s1072 + $0x28] sm:$0xff]
      %v1079 = vld [vmem:[%s1072 + $0x30] sm:$0xff]
      %v1080 = vld [vmem:[%s1072 + $0x38] sm:$0xff]
      %v1082 = vsel %vm418, %v266, 0
      %v1085 = vsel %vm418, %v267, 0
      %1087 = vmatpush.msra.mxu0 0.0
      %1088 = vmatpush.msra.mxu0 0.0
      %1089 = vmatpush.msra.mxu0 0.0
      %1090 = vmatpush.msra.mxu0 0.0
      %1091 = vmatpush.msra.mxu0 0.0
      %1092 = vmatpush.msra.mxu0 0.0
      %1093 = vmatpush.msra.mxu0 0.0
      %1094 = vmatpush.msra.mxu0 0.0
      %1095 = vmatpush.msra.mxu0 %v1080
      %1096 = vmatpush.msra.mxu0 %v1079
      %1097 = vmatpush.msra.mxu0 %v1078
      %1098 = vmatpush.msra.mxu0 %v1077
      %1099 = vmatpush.msra.mxu0 %v1076
      %1100 = vmatpush.msra.mxu0 %v1075
      %1101 = vmatpush.msra.mxu0 %v1074
      %1102 = vmatpush.msra.mxu0 %v1073
      %1103 = vmatmul.f32.gmra.mxu0 %v600
      %v1104 = vpop.f32.mrf.mxu0
      %v1105 = vadd.f32 0.0, %v1104
      %1106 = vmatmul.f32.gmra.mxu0 %v602
      %v1107 = vpop.f32.mrf.mxu0
      %v1108 = vadd.f32 0.0, %v1107
      %1109 = vmatmul.f32.gmra.mxu0 %v604
      %v1110 = vpop.f32.mrf.mxu0
      %v1111 = vadd.f32 0.0, %v1110
      %1112 = vmatmul.f32.gmra.mxu0 %v606
      %v1113 = vpop.f32.mrf.mxu0
      %v1114 = vadd.f32 0.0, %v1113
      %1115 = vmatmul.f32.gmra.mxu0 %v608
      %v1116 = vpop.f32.mrf.mxu0
      %v1117 = vadd.f32 0.0, %v1116
      %1118 = vmatmul.f32.gmra.mxu0 %v610
      %v1119 = vpop.f32.mrf.mxu0
      %v1120 = vadd.f32 0.0, %v1119
      %1121 = vmatmul.f32.gmra.mxu0 %v612
      %v1122 = vpop.f32.mrf.mxu0
      %v1123 = vadd.f32 0.0, %v1122
      %1124 = vmatmul.f32.gmra.mxu0 %v614
      %v1125 = vpop.f32.mrf.mxu0
      %v1126 = vadd.f32 0.0, %v1125
      %1127 = vmatmul.f32.gmra.mxu0 %v616
      %v1128 = vpop.f32.mrf.mxu0
      %v1129 = vadd.f32 0.0, %v1128
      %1130 = vmatmul.f32.gmra.mxu0 %v618
      %v1131 = vpop.f32.mrf.mxu0
      %v1132 = vadd.f32 0.0, %v1131
      %1133 = vmatmul.f32.gmra.mxu0 %v620
      %v1134 = vpop.f32.mrf.mxu0
      %v1135 = vadd.f32 0.0, %v1134
      %1136 = vmatmul.f32.gmra.mxu0 %v622
      %v1137 = vpop.f32.mrf.mxu0
      %v1138 = vadd.f32 0.0, %v1137
      %1139 = vmatmul.f32.gmra.mxu0 %v624
      %v1140 = vpop.f32.mrf.mxu0
      %v1141 = vadd.f32 0.0, %v1140
      %1142 = vmatmul.f32.gmra.mxu0 %v626
      %v1143 = vpop.f32.mrf.mxu0
      %v1144 = vadd.f32 0.0, %v1143
      %1145 = vmatmul.f32.gmra.mxu0 %v628
      %v1146 = vpop.f32.mrf.mxu0
      %v1147 = vadd.f32 0.0, %v1146
      %1148 = vmatmul.f32.gmra.mxu0 %v630
      %v1149 = vpop.f32.mrf.mxu0
      %v1150 = vadd.f32 0.0, %v1149
      %1151 = vmatmul.f32.gmra.mxu0 %v632
      %v1152 = vpop.f32.mrf.mxu0
      %v1153 = vadd.f32 0.0, %v1152
      %1154 = vmatmul.f32.gmra.mxu0 %v634
      %v1155 = vpop.f32.mrf.mxu0
      %v1156 = vadd.f32 0.0, %v1155
      %1157 = vmatmul.f32.gmra.mxu0 %v636
      %v1158 = vpop.f32.mrf.mxu0
      %v1159 = vadd.f32 0.0, %v1158
      %1160 = vmatmul.f32.gmra.mxu0 %v638
      %v1161 = vpop.f32.mrf.mxu0
      %v1162 = vadd.f32 0.0, %v1161
      %1163 = vmatmul.f32.gmra.mxu0 %v640
      %v1164 = vpop.f32.mrf.mxu0
      %v1165 = vadd.f32 0.0, %v1164
      %1166 = vmatmul.f32.gmra.mxu0 %v642
      %v1167 = vpop.f32.mrf.mxu0
      %v1168 = vadd.f32 0.0, %v1167
      %1169 = vmatmul.f32.gmra.mxu0 %v644
      %v1170 = vpop.f32.mrf.mxu0
      %v1171 = vadd.f32 0.0, %v1170
      %1172 = vmatmul.f32.gmra.mxu0 %v646
      %v1173 = vpop.f32.mrf.mxu0
      %v1174 = vadd.f32 0.0, %v1173
      %1175 = vmatmul.f32.gmra.mxu0 %v648
      %v1176 = vpop.f32.mrf.mxu0
      %v1177 = vadd.f32 0.0, %v1176
      %1178 = vmatmul.f32.gmra.mxu0 %v650
      %v1179 = vpop.f32.mrf.mxu0
      %v1180 = vadd.f32 0.0, %v1179
      %1181 = vmatmul.f32.gmra.mxu0 %v652
      %v1182 = vpop.f32.mrf.mxu0
      %v1183 = vadd.f32 0.0, %v1182
      %1184 = vmatmul.f32.gmra.mxu0 %v654
      %v1185 = vpop.f32.mrf.mxu0
      %v1186 = vadd.f32 0.0, %v1185
      %1187 = vmatmul.f32.gmra.mxu0 %v656
      %v1188 = vpop.f32.mrf.mxu0
      %v1189 = vadd.f32 0.0, %v1188
      %1190 = vmatmul.f32.gmra.mxu0 %v658
      %v1191 = vpop.f32.mrf.mxu0
      %v1192 = vadd.f32 0.0, %v1191
      %1193 = vmatmul.f32.gmra.mxu0 %v1082
      %v1194 = vpop.f32.mrf.mxu0
      %v1195 = vadd.f32 0.0, %v1194
      %1196 = vmatmul.f32.gmra.mxu0 %v1085
      %v1197 = vpop.f32.mrf.mxu0
      %v1198 = vadd.f32 0.0, %v1197
      %1199 = vdwg.mxu0
      %v1200 = vadd.f32 %v1040, %v1105
      %v1201 = vadd.f32 %v1041, %v1108
      %v1202 = vadd.f32 %v1042, %v1111
      %v1203 = vadd.f32 %v1043, %v1114
      %v1204 = vadd.f32 %v1044, %v1117
      %v1205 = vadd.f32 %v1045, %v1120
      %v1206 = vadd.f32 %v1046, %v1123
      %v1207 = vadd.f32 %v1047, %v1126
      %v1208 = vadd.f32 %v1048, %v1129
      %v1209 = vadd.f32 %v1049, %v1132
      %v1210 = vadd.f32 %v1050, %v1135
      %v1211 = vadd.f32 %v1051, %v1138
      %v1212 = vadd.f32 %v1052, %v1141
      %v1213 = vadd.f32 %v1053, %v1144
      %v1214 = vadd.f32 %v1054, %v1147
      %v1215 = vadd.f32 %v1055, %v1150
      %v1216 = vadd.f32 %v1056, %v1153
      %v1217 = vadd.f32 %v1057, %v1156
      %v1218 = vadd.f32 %v1058, %v1159
      %v1219 = vadd.f32 %v1059, %v1162
      %v1220 = vadd.f32 %v1060, %v1165
      %v1221 = vadd.f32 %v1061, %v1168
      %v1222 = vadd.f32 %v1062, %v1171
      %v1223 = vadd.f32 %v1063, %v1174
      %v1224 = vadd.f32 %v1064, %v1177
      %v1225 = vadd.f32 %v1065, %v1180
      %v1226 = vadd.f32 %v1066, %v1183
      %v1227 = vadd.f32 %v1067, %v1186
      %v1228 = vadd.f32 %v1068, %v1189
      %v1229 = vadd.f32 %v1069, %v1192
      %v1230 = vadd.f32 %v1070, %v1195
      %v1231 = vadd.f32 %v1071, %v1198
      %v1233 = vrot.slane %v266, 1
      %v1234 = vrot.slane %v267, 1
      %v1235 = vsel %vm328, %v1233, %v1234
      %v1236 = vrot.slane %v268, 1
      %v1237 = vsel %vm328, %v1234, %v1236
      %s1238 = scalar_lea.vmem %s1, 256
      %v1239 = vld [vmem:[%s1238] sm:$0xff]
      %v1240 = vld [vmem:[%s1238 + $0x8] sm:$0xff]
      %v1241 = vld [vmem:[%s1238 + $0x10] sm:$0xff]
      %v1242 = vld [vmem:[%s1238 + $0x18] sm:$0xff]
      %v1243 = vld [vmem:[%s1238 + $0x20] sm:$0xff]
      %v1244 = vld [vmem:[%s1238 + $0x28] sm:$0xff]
      %v1245 = vld [vmem:[%s1238 + $0x30] sm:$0xff]
      %v1246 = vld [vmem:[%s1238 + $0x38] sm:$0xff]
      %v1247 = vsel %vm418, %v1235, 0
      %v1249 = vsel %vm418, %v1237, 0
      %1251 = vmatpush.msra.mxu0 0.0
      %1252 = vmatpush.msra.mxu0 0.0
      %1253 = vmatpush.msra.mxu0 0.0
      %1254 = vmatpush.msra.mxu0 0.0
      %1255 = vmatpush.msra.mxu0 0.0
      %1256 = vmatpush.msra.mxu0 0.0
      %1257 = vmatpush.msra.mxu0 0.0
      %1258 = vmatpush.msra.mxu0 0.0
      %1259 = vmatpush.msra.mxu0 %v1246
      %1260 = vmatpush.msra.mxu0 %v1245
      %1261 = vmatpush.msra.mxu0 %v1244
      %1262 = vmatpush.msra.mxu0 %v1243
      %1263 = vmatpush.msra.mxu0 %v1242
      %1264 = vmatpush.msra.mxu0 %v1241
      %1265 = vmatpush.msra.mxu0 %v1240
      %1266 = vmatpush.msra.mxu0 %v1239
      %1267 = vmatmul.f32.gmra.mxu0 %v423
      %v1268 = vpop.f32.mrf.mxu0
      %v1269 = vadd.f32 0.0, %v1268
      %1270 = vmatmul.f32.gmra.mxu0 %v425
      %v1271 = vpop.f32.mrf.mxu0
      %v1272 = vadd.f32 0.0, %v1271
      %1273 = vmatmul.f32.gmra.mxu0 %v427
      %v1274 = vpop.f32.mrf.mxu0
      %v1275 = vadd.f32 0.0, %v1274
      %1276 = vmatmul.f32.gmra.mxu0 %v429
      %v1277 = vpop.f32.mrf.mxu0
      %v1278 = vadd.f32 0.0, %v1277
      %1279 = vmatmul.f32.gmra.mxu0 %v431
      %v1280 = vpop.f32.mrf.mxu0
      %v1281 = vadd.f32 0.0, %v1280
      %1282 = vmatmul.f32.gmra.mxu0 %v433
      %v1283 = vpop.f32.mrf.mxu0
      %v1284 = vadd.f32 0.0, %v1283
      %1285 = vmatmul.f32.gmra.mxu0 %v435
      %v1286 = vpop.f32.mrf.mxu0
      %v1287 = vadd.f32 0.0, %v1286
      %1288 = vmatmul.f32.gmra.mxu0 %v437
      %v1289 = vpop.f32.mrf.mxu0
      %v1290 = vadd.f32 0.0, %v1289
      %1291 = vmatmul.f32.gmra.mxu0 %v439
      %v1292 = vpop.f32.mrf.mxu0
      %v1293 = vadd.f32 0.0, %v1292
      %1294 = vmatmul.f32.gmra.mxu0 %v441
      %v1295 = vpop.f32.mrf.mxu0
      %v1296 = vadd.f32 0.0, %v1295
      %1297 = vmatmul.f32.gmra.mxu0 %v443
      %v1298 = vpop.f32.mrf.mxu0
      %v1299 = vadd.f32 0.0, %v1298
      %1300 = vmatmul.f32.gmra.mxu0 %v445
      %v1301 = vpop.f32.mrf.mxu0
      %v1302 = vadd.f32 0.0, %v1301
      %1303 = vmatmul.f32.gmra.mxu0 %v447
      %v1304 = vpop.f32.mrf.mxu0
      %v1305 = vadd.f32 0.0, %v1304
      %1306 = vmatmul.f32.gmra.mxu0 %v449
      %v1307 = vpop.f32.mrf.mxu0
      %v1308 = vadd.f32 0.0, %v1307
      %1309 = vmatmul.f32.gmra.mxu0 %v451
      %v1310 = vpop.f32.mrf.mxu0
      %v1311 = vadd.f32 0.0, %v1310
      %1312 = vmatmul.f32.gmra.mxu0 %v453
      %v1313 = vpop.f32.mrf.mxu0
      %v1314 = vadd.f32 0.0, %v1313
      %1315 = vmatmul.f32.gmra.mxu0 %v455
      %v1316 = vpop.f32.mrf.mxu0
      %v1317 = vadd.f32 0.0, %v1316
      %1318 = vmatmul.f32.gmra.mxu0 %v457
      %v1319 = vpop.f32.mrf.mxu0
      %v1320 = vadd.f32 0.0, %v1319
      %1321 = vmatmul.f32.gmra.mxu0 %v459
      %v1322 = vpop.f32.mrf.mxu0
      %v1323 = vadd.f32 0.0, %v1322
      %1324 = vmatmul.f32.gmra.mxu0 %v461
      %v1325 = vpop.f32.mrf.mxu0
      %v1326 = vadd.f32 0.0, %v1325
      %1327 = vmatmul.f32.gmra.mxu0 %v463
      %v1328 = vpop.f32.mrf.mxu0
      %v1329 = vadd.f32 0.0, %v1328
      %1330 = vmatmul.f32.gmra.mxu0 %v465
      %v1331 = vpop.f32.mrf.mxu0
      %v1332 = vadd.f32 0.0, %v1331
      %1333 = vmatmul.f32.gmra.mxu0 %v467
      %v1334 = vpop.f32.mrf.mxu0
      %v1335 = vadd.f32 0.0, %v1334
      %1336 = vmatmul.f32.gmra.mxu0 %v469
      %v1337 = vpop.f32.mrf.mxu0
      %v1338 = vadd.f32 0.0, %v1337
      %1339 = vmatmul.f32.gmra.mxu0 %v471
      %v1340 = vpop.f32.mrf.mxu0
      %v1341 = vadd.f32 0.0, %v1340
      %1342 = vmatmul.f32.gmra.mxu0 %v473
      %v1343 = vpop.f32.mrf.mxu0
      %v1344 = vadd.f32 0.0, %v1343
      %1345 = vmatmul.f32.gmra.mxu0 %v475
      %v1346 = vpop.f32.mrf.mxu0
      %v1347 = vadd.f32 0.0, %v1346
      %1348 = vmatmul.f32.gmra.mxu0 %v477
      %v1349 = vpop.f32.mrf.mxu0
      %v1350 = vadd.f32 0.0, %v1349
      %1351 = vmatmul.f32.gmra.mxu0 %v479
      %v1352 = vpop.f32.mrf.mxu0
      %v1353 = vadd.f32 0.0, %v1352
      %1354 = vmatmul.f32.gmra.mxu0 %v481
      %v1355 = vpop.f32.mrf.mxu0
      %v1356 = vadd.f32 0.0, %v1355
      %1357 = vmatmul.f32.gmra.mxu0 %v1247
      %v1358 = vpop.f32.mrf.mxu0
      %v1359 = vadd.f32 0.0, %v1358
      %1360 = vmatmul.f32.gmra.mxu0 %v1249
      %v1361 = vpop.f32.mrf.mxu0
      %v1362 = vadd.f32 0.0, %v1361
      %1363 = vdwg.mxu0
      %v1364 = vadd.f32 %v1200, %v1269
      %v1365 = vadd.f32 %v1201, %v1272
      %v1366 = vadd.f32 %v1202, %v1275
      %v1367 = vadd.f32 %v1203, %v1278
      %v1368 = vadd.f32 %v1204, %v1281
      %v1369 = vadd.f32 %v1205, %v1284
      %v1370 = vadd.f32 %v1206, %v1287
      %v1371 = vadd.f32 %v1207, %v1290
      %v1372 = vadd.f32 %v1208, %v1293
      %v1373 = vadd.f32 %v1209, %v1296
      %v1374 = vadd.f32 %v1210, %v1299
      %v1375 = vadd.f32 %v1211, %v1302
      %v1376 = vadd.f32 %v1212, %v1305
      %v1377 = vadd.f32 %v1213, %v1308
      %v1378 = vadd.f32 %v1214, %v1311
      %v1379 = vadd.f32 %v1215, %v1314
      %v1380 = vadd.f32 %v1216, %v1317
      %v1381 = vadd.f32 %v1217, %v1320
      %v1382 = vadd.f32 %v1218, %v1323
      %v1383 = vadd.f32 %v1219, %v1326
      %v1384 = vadd.f32 %v1220, %v1329
      %v1385 = vadd.f32 %v1221, %v1332
      %v1386 = vadd.f32 %v1222, %v1335
      %v1387 = vadd.f32 %v1223, %v1338
      %v1388 = vadd.f32 %v1224, %v1341
      %v1389 = vadd.f32 %v1225, %v1344
      %v1390 = vadd.f32 %v1226, %v1347
      %v1391 = vadd.f32 %v1227, %v1350
      %v1392 = vadd.f32 %v1228, %v1353
      %v1393 = vadd.f32 %v1229, %v1356
      %v1394 = vadd.f32 %v1230, %v1359
      %v1395 = vadd.f32 %v1231, %v1362
      %v1396 = vrot.slane %v266, 2
      %v1397 = vrot.slane %v267, 2
      %v1398 = vsel %vm773, %v1396, %v1397
      %v1399 = vrot.slane %v268, 2
      %v1400 = vsel %vm773, %v1397, %v1399
      %s1401 = scalar_lea.vmem %s1, 320
      %v1402 = vld [vmem:[%s1401] sm:$0xff]
      %v1403 = vld [vmem:[%s1401 + $0x8] sm:$0xff]
      %v1404 = vld [vmem:[%s1401 + $0x10] sm:$0xff]
      %v1405 = vld [vmem:[%s1401 + $0x18] sm:$0xff]
      %v1406 = vld [vmem:[%s1401 + $0x20] sm:$0xff]
      %v1407 = vld [vmem:[%s1401 + $0x28] sm:$0xff]
      %v1408 = vld [vmem:[%s1401 + $0x30] sm:$0xff]
      %v1409 = vld [vmem:[%s1401 + $0x38] sm:$0xff]
      %v1410 = vsel %vm418, %v1398, 0
      %v1412 = vsel %vm418, %v1400, 0
      %1414 = vmatpush.msra.mxu0 0.0
      %1415 = vmatpush.msra.mxu0 0.0
      %1416 = vmatpush.msra.mxu0 0.0
      %1417 = vmatpush.msra.mxu0 0.0
      %1418 = vmatpush.msra.mxu0 0.0
      %1419 = vmatpush.msra.mxu0 0.0
      %1420 = vmatpush.msra.mxu0 0.0
      %1421 = vmatpush.msra.mxu0 0.0
      %1422 = vmatpush.msra.mxu0 %v1409
      %1423 = vmatpush.msra.mxu0 %v1408
      %1424 = vmatpush.msra.mxu0 %v1407
      %1425 = vmatpush.msra.mxu0 %v1406
      %1426 = vmatpush.msra.mxu0 %v1405
      %1427 = vmatpush.msra.mxu0 %v1404
      %1428 = vmatpush.msra.mxu0 %v1403
      %1429 = vmatpush.msra.mxu0 %v1402
      %1430 = vmatmul.f32.gmra.mxu0 %v867
      %v1431 = vpop.f32.mrf.mxu0
      %v1432 = vadd.f32 0.0, %v1431
      %1433 = vmatmul.f32.gmra.mxu0 %v869
      %v1434 = vpop.f32.mrf.mxu0
      %v1435 = vadd.f32 0.0, %v1434
      %1436 = vmatmul.f32.gmra.mxu0 %v871
      %v1437 = vpop.f32.mrf.mxu0
      %v1438 = vadd.f32 0.0, %v1437
      %1439 = vmatmul.f32.gmra.mxu0 %v873
      %v1440 = vpop.f32.mrf.mxu0
      %v1441 = vadd.f32 0.0, %v1440
      %1442 = vmatmul.f32.gmra.mxu0 %v875
      %v1443 = vpop.f32.mrf.mxu0
      %v1444 = vadd.f32 0.0, %v1443
      %1445 = vmatmul.f32.gmra.mxu0 %v877
      %v1446 = vpop.f32.mrf.mxu0
      %v1447 = vadd.f32 0.0, %v1446
      %1448 = vmatmul.f32.gmra.mxu0 %v879
      %v1449 = vpop.f32.mrf.mxu0
      %v1450 = vadd.f32 0.0, %v1449
      %1451 = vmatmul.f32.gmra.mxu0 %v881
      %v1452 = vpop.f32.mrf.mxu0
      %v1453 = vadd.f32 0.0, %v1452
      %1454 = vmatmul.f32.gmra.mxu0 %v883
      %v1455 = vpop.f32.mrf.mxu0
      %v1456 = vadd.f32 0.0, %v1455
      %1457 = vmatmul.f32.gmra.mxu0 %v885
      %v1458 = vpop.f32.mrf.mxu0
      %v1459 = vadd.f32 0.0, %v1458
      %1460 = vmatmul.f32.gmra.mxu0 %v887
      %v1461 = vpop.f32.mrf.mxu0
      %v1462 = vadd.f32 0.0, %v1461
      %1463 = vmatmul.f32.gmra.mxu0 %v889
      %v1464 = vpop.f32.mrf.mxu0
      %v1465 = vadd.f32 0.0, %v1464
      %1466 = vmatmul.f32.gmra.mxu0 %v891
      %v1467 = vpop.f32.mrf.mxu0
      %v1468 = vadd.f32 0.0, %v1467
      %1469 = vmatmul.f32.gmra.mxu0 %v893
      %v1470 = vpop.f32.mrf.mxu0
      %v1471 = vadd.f32 0.0, %v1470
      %1472 = vmatmul.f32.gmra.mxu0 %v895
      %v1473 = vpop.f32.mrf.mxu0
      %v1474 = vadd.f32 0.0, %v1473
      %1475 = vmatmul.f32.gmra.mxu0 %v897
      %v1476 = vpop.f32.mrf.mxu0
      %v1477 = vadd.f32 0.0, %v1476
      %1478 = vmatmul.f32.gmra.mxu0 %v899
      %v1479 = vpop.f32.mrf.mxu0
      %v1480 = vadd.f32 0.0, %v1479
      %1481 = vmatmul.f32.gmra.mxu0 %v901
      %v1482 = vpop.f32.mrf.mxu0
      %v1483 = vadd.f32 0.0, %v1482
      %1484 = vmatmul.f32.gmra.mxu0 %v903
      %v1485 = vpop.f32.mrf.mxu0
      %v1486 = vadd.f32 0.0, %v1485
      %1487 = vmatmul.f32.gmra.mxu0 %v905
      %v1488 = vpop.f32.mrf.mxu0
      %v1489 = vadd.f32 0.0, %v1488
      %1490 = vmatmul.f32.gmra.mxu0 %v907
      %v1491 = vpop.f32.mrf.mxu0
      %v1492 = vadd.f32 0.0, %v1491
      %1493 = vmatmul.f32.gmra.mxu0 %v909
      %v1494 = vpop.f32.mrf.mxu0
      %v1495 = vadd.f32 0.0, %v1494
      %1496 = vmatmul.f32.gmra.mxu0 %v911
      %v1497 = vpop.f32.mrf.mxu0
      %v1498 = vadd.f32 0.0, %v1497
      %1499 = vmatmul.f32.gmra.mxu0 %v913
      %v1500 = vpop.f32.mrf.mxu0
      %v1501 = vadd.f32 0.0, %v1500
      %1502 = vmatmul.f32.gmra.mxu0 %v915
      %v1503 = vpop.f32.mrf.mxu0
      %v1504 = vadd.f32 0.0, %v1503
      %1505 = vmatmul.f32.gmra.mxu0 %v917
      %v1506 = vpop.f32.mrf.mxu0
      %v1507 = vadd.f32 0.0, %v1506
      %1508 = vmatmul.f32.gmra.mxu0 %v919
      %v1509 = vpop.f32.mrf.mxu0
      %v1510 = vadd.f32 0.0, %v1509
      %1511 = vmatmul.f32.gmra.mxu0 %v921
      %v1512 = vpop.f32.mrf.mxu0
      %v1513 = vadd.f32 0.0, %v1512
      %1514 = vmatmul.f32.gmra.mxu0 %v923
      %v1515 = vpop.f32.mrf.mxu0
      %v1516 = vadd.f32 0.0, %v1515
      %1517 = vmatmul.f32.gmra.mxu0 %v925
      %v1518 = vpop.f32.mrf.mxu0
      %v1519 = vadd.f32 0.0, %v1518
      %1520 = vmatmul.f32.gmra.mxu0 %v1410
      %v1521 = vpop.f32.mrf.mxu0
      %v1522 = vadd.f32 0.0, %v1521
      %1523 = vmatmul.f32.gmra.mxu0 %v1412
      %v1524 = vpop.f32.mrf.mxu0
      %v1525 = vadd.f32 0.0, %v1524
      %1526 = vdwg.mxu0
      %v1527 = vadd.f32 %v1364, %v1432
      %v1528 = vadd.f32 %v1365, %v1435
      %v1529 = vadd.f32 %v1366, %v1438
      %v1530 = vadd.f32 %v1367, %v1441
      %v1531 = vadd.f32 %v1368, %v1444
      %v1532 = vadd.f32 %v1369, %v1447
      %v1533 = vadd.f32 %v1370, %v1450
      %v1534 = vadd.f32 %v1371, %v1453
      %v1535 = vadd.f32 %v1372, %v1456
      %v1536 = vadd.f32 %v1373, %v1459
      %v1537 = vadd.f32 %v1374, %v1462
      %v1538 = vadd.f32 %v1375, %v1465
      %v1539 = vadd.f32 %v1376, %v1468
      %v1540 = vadd.f32 %v1377, %v1471
      %v1541 = vadd.f32 %v1378, %v1474
      %v1542 = vadd.f32 %v1379, %v1477
      %v1543 = vadd.f32 %v1380, %v1480
      %v1544 = vadd.f32 %v1381, %v1483
      %v1545 = vadd.f32 %v1382, %v1486
      %v1546 = vadd.f32 %v1383, %v1489
      %v1547 = vadd.f32 %v1384, %v1492
      %v1548 = vadd.f32 %v1385, %v1495
      %v1549 = vadd.f32 %v1386, %v1498
      %v1550 = vadd.f32 %v1387, %v1501
      %v1551 = vadd.f32 %v1388, %v1504
      %v1552 = vadd.f32 %v1389, %v1507
      %v1553 = vadd.f32 %v1390, %v1510
      %v1554 = vadd.f32 %v1391, %v1513
      %v1555 = vadd.f32 %v1392, %v1516
      %v1556 = vadd.f32 %v1393, %v1519
      %v1557 = vadd.f32 %v1394, %v1522
      %v1558 = vadd.f32 %v1395, %v1525
      %s1559 = scalar_lea.vmem %s1, 384
      %v1560 = vld [vmem:[%s1559] sm:$0xff]
      %v1561 = vld [vmem:[%s1559 + $0x8] sm:$0xff]
      %v1562 = vld [vmem:[%s1559 + $0x10] sm:$0xff]
      %v1563 = vld [vmem:[%s1559 + $0x18] sm:$0xff]
      %v1564 = vld [vmem:[%s1559 + $0x20] sm:$0xff]
      %v1565 = vld [vmem:[%s1559 + $0x28] sm:$0xff]
      %v1566 = vld [vmem:[%s1559 + $0x30] sm:$0xff]
      %v1567 = vld [vmem:[%s1559 + $0x38] sm:$0xff]
      %v1569 = vsel %vm418, %v269, 0
      %v1572 = vsel %vm418, %v270, 0
      %1574 = vmatpush.msra.mxu0 0.0
      %1575 = vmatpush.msra.mxu0 0.0
      %1576 = vmatpush.msra.mxu0 0.0
      %1577 = vmatpush.msra.mxu0 0.0
      %1578 = vmatpush.msra.mxu0 0.0
      %1579 = vmatpush.msra.mxu0 0.0
      %1580 = vmatpush.msra.mxu0 0.0
      %1581 = vmatpush.msra.mxu0 0.0
      %1582 = vmatpush.msra.mxu0 %v1567
      %1583 = vmatpush.msra.mxu0 %v1566
      %1584 = vmatpush.msra.mxu0 %v1565
      %1585 = vmatpush.msra.mxu0 %v1564
      %1586 = vmatpush.msra.mxu0 %v1563
      %1587 = vmatpush.msra.mxu0 %v1562
      %1588 = vmatpush.msra.mxu0 %v1561
      %1589 = vmatpush.msra.mxu0 %v1560
      %1590 = vmatmul.f32.gmra.mxu0 %v604
      %v1591 = vpop.f32.mrf.mxu0
      %v1592 = vadd.f32 0.0, %v1591
      %1593 = vmatmul.f32.gmra.mxu0 %v606
      %v1594 = vpop.f32.mrf.mxu0
      %v1595 = vadd.f32 0.0, %v1594
      %1596 = vmatmul.f32.gmra.mxu0 %v608
      %v1597 = vpop.f32.mrf.mxu0
      %v1598 = vadd.f32 0.0, %v1597
      %1599 = vmatmul.f32.gmra.mxu0 %v610
      %v1600 = vpop.f32.mrf.mxu0
      %v1601 = vadd.f32 0.0, %v1600
      %1602 = vmatmul.f32.gmra.mxu0 %v612
      %v1603 = vpop.f32.mrf.mxu0
      %v1604 = vadd.f32 0.0, %v1603
      %1605 = vmatmul.f32.gmra.mxu0 %v614
      %v1606 = vpop.f32.mrf.mxu0
      %v1607 = vadd.f32 0.0, %v1606
      %1608 = vmatmul.f32.gmra.mxu0 %v616
      %v1609 = vpop.f32.mrf.mxu0
      %v1610 = vadd.f32 0.0, %v1609
      %1611 = vmatmul.f32.gmra.mxu0 %v618
      %v1612 = vpop.f32.mrf.mxu0
      %v1613 = vadd.f32 0.0, %v1612
      %1614 = vmatmul.f32.gmra.mxu0 %v620
      %v1615 = vpop.f32.mrf.mxu0
      %v1616 = vadd.f32 0.0, %v1615
      %1617 = vmatmul.f32.gmra.mxu0 %v622
      %v1618 = vpop.f32.mrf.mxu0
      %v1619 = vadd.f32 0.0, %v1618
      %1620 = vmatmul.f32.gmra.mxu0 %v624
      %v1621 = vpop.f32.mrf.mxu0
      %v1622 = vadd.f32 0.0, %v1621
      %1623 = vmatmul.f32.gmra.mxu0 %v626
      %v1624 = vpop.f32.mrf.mxu0
      %v1625 = vadd.f32 0.0, %v1624
      %1626 = vmatmul.f32.gmra.mxu0 %v628
      %v1627 = vpop.f32.mrf.mxu0
      %v1628 = vadd.f32 0.0, %v1627
      %1629 = vmatmul.f32.gmra.mxu0 %v630
      %v1630 = vpop.f32.mrf.mxu0
      %v1631 = vadd.f32 0.0, %v1630
      %1632 = vmatmul.f32.gmra.mxu0 %v632
      %v1633 = vpop.f32.mrf.mxu0
      %v1634 = vadd.f32 0.0, %v1633
      %1635 = vmatmul.f32.gmra.mxu0 %v634
      %v1636 = vpop.f32.mrf.mxu0
      %v1637 = vadd.f32 0.0, %v1636
      %1638 = vmatmul.f32.gmra.mxu0 %v636
      %v1639 = vpop.f32.mrf.mxu0
      %v1640 = vadd.f32 0.0, %v1639
      %1641 = vmatmul.f32.gmra.mxu0 %v638
      %v1642 = vpop.f32.mrf.mxu0
      %v1643 = vadd.f32 0.0, %v1642
      %1644 = vmatmul.f32.gmra.mxu0 %v640
      %v1645 = vpop.f32.mrf.mxu0
      %v1646 = vadd.f32 0.0, %v1645
      %1647 = vmatmul.f32.gmra.mxu0 %v642
      %v1648 = vpop.f32.mrf.mxu0
      %v1649 = vadd.f32 0.0, %v1648
      %1650 = vmatmul.f32.gmra.mxu0 %v644
      %v1651 = vpop.f32.mrf.mxu0
      %v1652 = vadd.f32 0.0, %v1651
      %1653 = vmatmul.f32.gmra.mxu0 %v646
      %v1654 = vpop.f32.mrf.mxu0
      %v1655 = vadd.f32 0.0, %v1654
      %1656 = vmatmul.f32.gmra.mxu0 %v648
      %v1657 = vpop.f32.mrf.mxu0
      %v1658 = vadd.f32 0.0, %v1657
      %1659 = vmatmul.f32.gmra.mxu0 %v650
      %v1660 = vpop.f32.mrf.mxu0
      %v1661 = vadd.f32 0.0, %v1660
      %1662 = vmatmul.f32.gmra.mxu0 %v652
      %v1663 = vpop.f32.mrf.mxu0
      %v1664 = vadd.f32 0.0, %v1663
      %1665 = vmatmul.f32.gmra.mxu0 %v654
      %v1666 = vpop.f32.mrf.mxu0
      %v1667 = vadd.f32 0.0, %v1666
      %1668 = vmatmul.f32.gmra.mxu0 %v656
      %v1669 = vpop.f32.mrf.mxu0
      %v1670 = vadd.f32 0.0, %v1669
      %1671 = vmatmul.f32.gmra.mxu0 %v658
      %v1672 = vpop.f32.mrf.mxu0
      %v1673 = vadd.f32 0.0, %v1672
      %1674 = vmatmul.f32.gmra.mxu0 %v1082
      %v1675 = vpop.f32.mrf.mxu0
      %v1676 = vadd.f32 0.0, %v1675
      %1677 = vmatmul.f32.gmra.mxu0 %v1085
      %v1678 = vpop.f32.mrf.mxu0
      %v1679 = vadd.f32 0.0, %v1678
      %1680 = vmatmul.f32.gmra.mxu0 %v1569
      %v1681 = vpop.f32.mrf.mxu0
      %v1682 = vadd.f32 0.0, %v1681
      %1683 = vmatmul.f32.gmra.mxu0 %v1572
      %v1684 = vpop.f32.mrf.mxu0
      %v1685 = vadd.f32 0.0, %v1684
      %1686 = vdwg.mxu0
      %v1687 = vadd.f32 %v1527, %v1592
      %v1688 = vadd.f32 %v1528, %v1595
      %v1689 = vadd.f32 %v1529, %v1598
      %v1690 = vadd.f32 %v1530, %v1601
      %v1691 = vadd.f32 %v1531, %v1604
      %v1692 = vadd.f32 %v1532, %v1607
      %v1693 = vadd.f32 %v1533, %v1610
      %v1694 = vadd.f32 %v1534, %v1613
      %v1695 = vadd.f32 %v1535, %v1616
      %v1696 = vadd.f32 %v1536, %v1619
      %v1697 = vadd.f32 %v1537, %v1622
      %v1698 = vadd.f32 %v1538, %v1625
      %v1699 = vadd.f32 %v1539, %v1628
      %v1700 = vadd.f32 %v1540, %v1631
      %v1701 = vadd.f32 %v1541, %v1634
      %v1702 = vadd.f32 %v1542, %v1637
      %v1703 = vadd.f32 %v1543, %v1640
      %v1704 = vadd.f32 %v1544, %v1643
      %v1705 = vadd.f32 %v1545, %v1646
      %v1706 = vadd.f32 %v1546, %v1649
      %v1707 = vadd.f32 %v1547, %v1652
      %v1708 = vadd.f32 %v1548, %v1655
      %v1709 = vadd.f32 %v1549, %v1658
      %v1710 = vadd.f32 %v1550, %v1661
      %v1711 = vadd.f32 %v1551, %v1664
      %v1712 = vadd.f32 %v1552, %v1667
      %v1713 = vadd.f32 %v1553, %v1670
      %v1714 = vadd.f32 %v1554, %v1673
      %v1715 = vadd.f32 %v1555, %v1676
      %v1716 = vadd.f32 %v1556, %v1679
      %v1717 = vadd.f32 %v1557, %v1682
      %v1718 = vadd.f32 %v1558, %v1685
      %v1720 = vrot.slane %v269, 1
      %v1721 = vrot.slane %v270, 1
      %v1722 = vsel %vm328, %v1720, %v1721
      %v1723 = vrot.slane %v271, 1
      %v1724 = vsel %vm328, %v1721, %v1723
      %s1725 = scalar_lea.vmem %s1, 448
      %v1726 = vld [vmem:[%s1725] sm:$0xff]
      %v1727 = vld [vmem:[%s1725 + $0x8] sm:$0xff]
      %v1728 = vld [vmem:[%s1725 + $0x10] sm:$0xff]
      %v1729 = vld [vmem:[%s1725 + $0x18] sm:$0xff]
      %v1730 = vld [vmem:[%s1725 + $0x20] sm:$0xff]
      %v1731 = vld [vmem:[%s1725 + $0x28] sm:$0xff]
      %v1732 = vld [vmem:[%s1725 + $0x30] sm:$0xff]
      %v1733 = vld [vmem:[%s1725 + $0x38] sm:$0xff]
      %v1734 = vsel %vm418, %v1722, 0
      %v1736 = vsel %vm418, %v1724, 0
      %1738 = vmatpush.msra.mxu0 0.0
      %1739 = vmatpush.msra.mxu0 0.0
      %1740 = vmatpush.msra.mxu0 0.0
      %1741 = vmatpush.msra.mxu0 0.0
      %1742 = vmatpush.msra.mxu0 0.0
      %1743 = vmatpush.msra.mxu0 0.0
      %1744 = vmatpush.msra.mxu0 0.0
      %1745 = vmatpush.msra.mxu0 0.0
      %1746 = vmatpush.msra.mxu0 %v1733
      %1747 = vmatpush.msra.mxu0 %v1732
      %1748 = vmatpush.msra.mxu0 %v1731
      %1749 = vmatpush.msra.mxu0 %v1730
      %1750 = vmatpush.msra.mxu0 %v1729
      %1751 = vmatpush.msra.mxu0 %v1728
      %1752 = vmatpush.msra.mxu0 %v1727
      %1753 = vmatpush.msra.mxu0 %v1726
      %1754 = vmatmul.f32.gmra.mxu0 %v427
      %v1755 = vpop.f32.mrf.mxu0
      %v1756 = vadd.f32 0.0, %v1755
      %1757 = vmatmul.f32.gmra.mxu0 %v429
      %v1758 = vpop.f32.mrf.mxu0
      %v1759 = vadd.f32 0.0, %v1758
      %1760 = vmatmul.f32.gmra.mxu0 %v431
      %v1761 = vpop.f32.mrf.mxu0
      %v1762 = vadd.f32 0.0, %v1761
      %1763 = vmatmul.f32.gmra.mxu0 %v433
      %v1764 = vpop.f32.mrf.mxu0
      %v1765 = vadd.f32 0.0, %v1764
      %1766 = vmatmul.f32.gmra.mxu0 %v435
      %v1767 = vpop.f32.mrf.mxu0
      %v1768 = vadd.f32 0.0, %v1767
      %1769 = vmatmul.f32.gmra.mxu0 %v437
      %v1770 = vpop.f32.mrf.mxu0
      %v1771 = vadd.f32 0.0, %v1770
      %1772 = vmatmul.f32.gmra.mxu0 %v439
      %v1773 = vpop.f32.mrf.mxu0
      %v1774 = vadd.f32 0.0, %v1773
      %1775 = vmatmul.f32.gmra.mxu0 %v441
      %v1776 = vpop.f32.mrf.mxu0
      %v1777 = vadd.f32 0.0, %v1776
      %1778 = vmatmul.f32.gmra.mxu0 %v443
      %v1779 = vpop.f32.mrf.mxu0
      %v1780 = vadd.f32 0.0, %v1779
      %1781 = vmatmul.f32.gmra.mxu0 %v445
      %v1782 = vpop.f32.mrf.mxu0
      %v1783 = vadd.f32 0.0, %v1782
      %1784 = vmatmul.f32.gmra.mxu0 %v447
      %v1785 = vpop.f32.mrf.mxu0
      %v1786 = vadd.f32 0.0, %v1785
      %1787 = vmatmul.f32.gmra.mxu0 %v449
      %v1788 = vpop.f32.mrf.mxu0
      %v1789 = vadd.f32 0.0, %v1788
      %1790 = vmatmul.f32.gmra.mxu0 %v451
      %v1791 = vpop.f32.mrf.mxu0
      %v1792 = vadd.f32 0.0, %v1791
      %1793 = vmatmul.f32.gmra.mxu0 %v453
      %v1794 = vpop.f32.mrf.mxu0
      %v1795 = vadd.f32 0.0, %v1794
      %1796 = vmatmul.f32.gmra.mxu0 %v455
      %v1797 = vpop.f32.mrf.mxu0
      %v1798 = vadd.f32 0.0, %v1797
      %1799 = vmatmul.f32.gmra.mxu0 %v457
      %v1800 = vpop.f32.mrf.mxu0
      %v1801 = vadd.f32 0.0, %v1800
      %1802 = vmatmul.f32.gmra.mxu0 %v459
      %v1803 = vpop.f32.mrf.mxu0
      %v1804 = vadd.f32 0.0, %v1803
      %1805 = vmatmul.f32.gmra.mxu0 %v461
      %v1806 = vpop.f32.mrf.mxu0
      %v1807 = vadd.f32 0.0, %v1806
      %1808 = vmatmul.f32.gmra.mxu0 %v463
      %v1809 = vpop.f32.mrf.mxu0
      %v1810 = vadd.f32 0.0, %v1809
      %1811 = vmatmul.f32.gmra.mxu0 %v465
      %v1812 = vpop.f32.mrf.mxu0
      %v1813 = vadd.f32 0.0, %v1812
      %1814 = vmatmul.f32.gmra.mxu0 %v467
      %v1815 = vpop.f32.mrf.mxu0
      %v1816 = vadd.f32 0.0, %v1815
      %1817 = vmatmul.f32.gmra.mxu0 %v469
      %v1818 = vpop.f32.mrf.mxu0
      %v1819 = vadd.f32 0.0, %v1818
      %1820 = vmatmul.f32.gmra.mxu0 %v471
      %v1821 = vpop.f32.mrf.mxu0
      %v1822 = vadd.f32 0.0, %v1821
      %1823 = vmatmul.f32.gmra.mxu0 %v473
      %v1824 = vpop.f32.mrf.mxu0
      %v1825 = vadd.f32 0.0, %v1824
      %1826 = vmatmul.f32.gmra.mxu0 %v475
      %v1827 = vpop.f32.mrf.mxu0
      %v1828 = vadd.f32 0.0, %v1827
      %1829 = vmatmul.f32.gmra.mxu0 %v477
      %v1830 = vpop.f32.mrf.mxu0
      %v1831 = vadd.f32 0.0, %v1830
      %1832 = vmatmul.f32.gmra.mxu0 %v479
      %v1833 = vpop.f32.mrf.mxu0
      %v1834 = vadd.f32 0.0, %v1833
      %1835 = vmatmul.f32.gmra.mxu0 %v481
      %v1836 = vpop.f32.mrf.mxu0
      %v1837 = vadd.f32 0.0, %v1836
      %1838 = vmatmul.f32.gmra.mxu0 %v1247
      %v1839 = vpop.f32.mrf.mxu0
      %v1840 = vadd.f32 0.0, %v1839
      %1841 = vmatmul.f32.gmra.mxu0 %v1249
      %v1842 = vpop.f32.mrf.mxu0
      %v1843 = vadd.f32 0.0, %v1842
      %1844 = vmatmul.f32.gmra.mxu0 %v1734
      %v1845 = vpop.f32.mrf.mxu0
      %v1846 = vadd.f32 0.0, %v1845
      %1847 = vmatmul.f32.gmra.mxu0 %v1736
      %v1848 = vpop.f32.mrf.mxu0
      %v1849 = vadd.f32 0.0, %v1848
      %1850 = vdwg.mxu0
      %v1851 = vadd.f32 %v1687, %v1756
      %v1852 = vadd.f32 %v1688, %v1759
      %v1853 = vadd.f32 %v1689, %v1762
      %v1854 = vadd.f32 %v1690, %v1765
      %v1855 = vadd.f32 %v1691, %v1768
      %v1856 = vadd.f32 %v1692, %v1771
      %v1857 = vadd.f32 %v1693, %v1774
      %v1858 = vadd.f32 %v1694, %v1777
      %v1859 = vadd.f32 %v1695, %v1780
      %v1860 = vadd.f32 %v1696, %v1783
      %v1861 = vadd.f32 %v1697, %v1786
      %v1862 = vadd.f32 %v1698, %v1789
      %v1863 = vadd.f32 %v1699, %v1792
      %v1864 = vadd.f32 %v1700, %v1795
      %v1865 = vadd.f32 %v1701, %v1798
      %v1866 = vadd.f32 %v1702, %v1801
      %v1867 = vadd.f32 %v1703, %v1804
      %v1868 = vadd.f32 %v1704, %v1807
      %v1869 = vadd.f32 %v1705, %v1810
      %v1870 = vadd.f32 %v1706, %v1813
      %v1871 = vadd.f32 %v1707, %v1816
      %v1872 = vadd.f32 %v1708, %v1819
      %v1873 = vadd.f32 %v1709, %v1822
      %v1874 = vadd.f32 %v1710, %v1825
      %v1875 = vadd.f32 %v1711, %v1828
      %v1876 = vadd.f32 %v1712, %v1831
      %v1877 = vadd.f32 %v1713, %v1834
      %v1878 = vadd.f32 %v1714, %v1837
      %v1879 = vadd.f32 %v1715, %v1840
      %v1880 = vadd.f32 %v1716, %v1843
      %v1881 = vadd.f32 %v1717, %v1846
      %v1882 = vadd.f32 %v1718, %v1849
      %v1883 = vrot.slane %v269, 2
      %v1884 = vrot.slane %v270, 2
      %v1885 = vsel %vm773, %v1883, %v1884
      %v1886 = vrot.slane %v271, 2
      %v1887 = vsel %vm773, %v1884, %v1886
      %s1888 = scalar_lea.vmem %s1, 512
      %v1889 = vld [vmem:[%s1888] sm:$0xff]
      %v1890 = vld [vmem:[%s1888 + $0x8] sm:$0xff]
      %v1891 = vld [vmem:[%s1888 + $0x10] sm:$0xff]
      %v1892 = vld [vmem:[%s1888 + $0x18] sm:$0xff]
      %v1893 = vld [vmem:[%s1888 + $0x20] sm:$0xff]
      %v1894 = vld [vmem:[%s1888 + $0x28] sm:$0xff]
      %v1895 = vld [vmem:[%s1888 + $0x30] sm:$0xff]
      %v1896 = vld [vmem:[%s1888 + $0x38] sm:$0xff]
      %v1897 = vsel %vm418, %v1885, 0
      %v1899 = vsel %vm418, %v1887, 0
      %1901 = vmatpush.msra.mxu0 0.0
      %1902 = vmatpush.msra.mxu0 0.0
      %1903 = vmatpush.msra.mxu0 0.0
      %1904 = vmatpush.msra.mxu0 0.0
      %1905 = vmatpush.msra.mxu0 0.0
      %1906 = vmatpush.msra.mxu0 0.0
      %1907 = vmatpush.msra.mxu0 0.0
      %1908 = vmatpush.msra.mxu0 0.0
      %1909 = vmatpush.msra.mxu0 %v1896
      %1910 = vmatpush.msra.mxu0 %v1895
      %1911 = vmatpush.msra.mxu0 %v1894
      %1912 = vmatpush.msra.mxu0 %v1893
      %1913 = vmatpush.msra.mxu0 %v1892
      %1914 = vmatpush.msra.mxu0 %v1891
      %1915 = vmatpush.msra.mxu0 %v1890
      %1916 = vmatpush.msra.mxu0 %v1889
      %1917 = vmatmul.f32.gmra.mxu0 %v871
      %v1918 = vpop.f32.mrf.mxu0
      %v1919 = vadd.f32 0.0, %v1918
      %1920 = vmatmul.f32.gmra.mxu0 %v873
      %v1921 = vpop.f32.mrf.mxu0
      %v1922 = vadd.f32 0.0, %v1921
      %1923 = vmatmul.f32.gmra.mxu0 %v875
      %v1924 = vpop.f32.mrf.mxu0
      %v1925 = vadd.f32 0.0, %v1924
      %1926 = vmatmul.f32.gmra.mxu0 %v877
      %v1927 = vpop.f32.mrf.mxu0
      %v1928 = vadd.f32 0.0, %v1927
      %1929 = vmatmul.f32.gmra.mxu0 %v879
      %v1930 = vpop.f32.mrf.mxu0
      %v1931 = vadd.f32 0.0, %v1930
      %1932 = vmatmul.f32.gmra.mxu0 %v881
      %v1933 = vpop.f32.mrf.mxu0
      %v1934 = vadd.f32 0.0, %v1933
      %1935 = vmatmul.f32.gmra.mxu0 %v883
      %v1936 = vpop.f32.mrf.mxu0
      %v1937 = vadd.f32 0.0, %v1936
      %1938 = vmatmul.f32.gmra.mxu0 %v885
      %v1939 = vpop.f32.mrf.mxu0
      %v1940 = vadd.f32 0.0, %v1939
      %1941 = vmatmul.f32.gmra.mxu0 %v887
      %v1942 = vpop.f32.mrf.mxu0
      %v1943 = vadd.f32 0.0, %v1942
      %1944 = vmatmul.f32.gmra.mxu0 %v889
      %v1945 = vpop.f32.mrf.mxu0
      %v1946 = vadd.f32 0.0, %v1945
      %1947 = vmatmul.f32.gmra.mxu0 %v891
      %v1948 = vpop.f32.mrf.mxu0
      %v1949 = vadd.f32 0.0, %v1948
      %1950 = vmatmul.f32.gmra.mxu0 %v893
      %v1951 = vpop.f32.mrf.mxu0
      %v1952 = vadd.f32 0.0, %v1951
      %1953 = vmatmul.f32.gmra.mxu0 %v895
      %v1954 = vpop.f32.mrf.mxu0
      %v1955 = vadd.f32 0.0, %v1954
      %1956 = vmatmul.f32.gmra.mxu0 %v897
      %v1957 = vpop.f32.mrf.mxu0
      %v1958 = vadd.f32 0.0, %v1957
      %1959 = vmatmul.f32.gmra.mxu0 %v899
      %v1960 = vpop.f32.mrf.mxu0
      %v1961 = vadd.f32 0.0, %v1960
      %1962 = vmatmul.f32.gmra.mxu0 %v901
      %v1963 = vpop.f32.mrf.mxu0
      %v1964 = vadd.f32 0.0, %v1963
      %1965 = vmatmul.f32.gmra.mxu0 %v903
      %v1966 = vpop.f32.mrf.mxu0
      %v1967 = vadd.f32 0.0, %v1966
      %1968 = vmatmul.f32.gmra.mxu0 %v905
      %v1969 = vpop.f32.mrf.mxu0
      %v1970 = vadd.f32 0.0, %v1969
      %1971 = vmatmul.f32.gmra.mxu0 %v907
      %v1972 = vpop.f32.mrf.mxu0
      %v1973 = vadd.f32 0.0, %v1972
      %1974 = vmatmul.f32.gmra.mxu0 %v909
      %v1975 = vpop.f32.mrf.mxu0
      %v1976 = vadd.f32 0.0, %v1975
      %1977 = vmatmul.f32.gmra.mxu0 %v911
      %v1978 = vpop.f32.mrf.mxu0
      %v1979 = vadd.f32 0.0, %v1978
      %1980 = vmatmul.f32.gmra.mxu0 %v913
      %v1981 = vpop.f32.mrf.mxu0
      %v1982 = vadd.f32 0.0, %v1981
      %1983 = vmatmul.f32.gmra.mxu0 %v915
      %v1984 = vpop.f32.mrf.mxu0
      %v1985 = vadd.f32 0.0, %v1984
      %1986 = vmatmul.f32.gmra.mxu0 %v917
      %v1987 = vpop.f32.mrf.mxu0
      %v1988 = vadd.f32 0.0, %v1987
      %1989 = vmatmul.f32.gmra.mxu0 %v919
      %v1990 = vpop.f32.mrf.mxu0
      %v1991 = vadd.f32 0.0, %v1990
      %1992 = vmatmul.f32.gmra.mxu0 %v921
      %v1993 = vpop.f32.mrf.mxu0
      %v1994 = vadd.f32 0.0, %v1993
      %1995 = vmatmul.f32.gmra.mxu0 %v923
      %v1996 = vpop.f32.mrf.mxu0
      %v1997 = vadd.f32 0.0, %v1996
      %1998 = vmatmul.f32.gmra.mxu0 %v925
      %v1999 = vpop.f32.mrf.mxu0
      %v2000 = vadd.f32 0.0, %v1999
      %2001 = vmatmul.f32.gmra.mxu0 %v1410
      %v2002 = vpop.f32.mrf.mxu0
      %v2003 = vadd.f32 0.0, %v2002
      %2004 = vmatmul.f32.gmra.mxu0 %v1412
      %v2005 = vpop.f32.mrf.mxu0
      %v2006 = vadd.f32 0.0, %v2005
      %2007 = vmatmul.f32.gmra.mxu0 %v1897
      %v2008 = vpop.f32.mrf.mxu0
      %v2009 = vadd.f32 0.0, %v2008
      %2010 = vmatmul.f32.gmra.mxu0 %v1899
      %v2011 = vpop.f32.mrf.mxu0
      %v2012 = vadd.f32 0.0, %v2011
      %2013 = vdwg.mxu0
      %v2014 = vadd.f32 %v1851, %v1919
      %v2015 = vadd.f32 %v1852, %v1922
      %v2016 = vadd.f32 %v1853, %v1925
      %v2017 = vadd.f32 %v1854, %v1928
      %v2018 = vadd.f32 %v1855, %v1931
      %v2019 = vadd.f32 %v1856, %v1934
      %v2020 = vadd.f32 %v1857, %v1937
      %v2021 = vadd.f32 %v1858, %v1940
      %v2022 = vadd.f32 %v1859, %v1943
      %v2023 = vadd.f32 %v1860, %v1946
      %v2024 = vadd.f32 %v1861, %v1949
      %v2025 = vadd.f32 %v1862, %v1952
      %v2026 = vadd.f32 %v1863, %v1955
      %v2027 = vadd.f32 %v1864, %v1958
      %v2028 = vadd.f32 %v1865, %v1961
      %v2029 = vadd.f32 %v1866, %v1964
      %v2030 = vadd.f32 %v1867, %v1967
      %v2031 = vadd.f32 %v1868, %v1970
      %v2032 = vadd.f32 %v1869, %v1973
      %v2033 = vadd.f32 %v1870, %v1976
      %v2034 = vadd.f32 %v1871, %v1979
      %v2035 = vadd.f32 %v1872, %v1982
      %v2036 = vadd.f32 %v1873, %v1985
      %v2037 = vadd.f32 %v1874, %v1988
      %v2038 = vadd.f32 %v1875, %v1991
      %v2039 = vadd.f32 %v1876, %v1994
      %v2040 = vadd.f32 %v1877, %v1997
      %v2041 = vadd.f32 %v1878, %v2000
      %v2042 = vadd.f32 %v1879, %v2003
      %v2043 = vadd.f32 %v1880, %v2006
      %v2044 = vadd.f32 %v1881, %v2009
      %v2045 = vadd.f32 %v1882, %v2012
      %v2046 = vld [vmem:[%s2] sm:$0x1]
      %v2048 = vperm.slane %v2046, 0
      %v2050 = vadd.f32 %v2014, %v2048
      %v2051 = vadd.f32 %v2015, %v2048
      %v2052 = vadd.f32 %v2016, %v2048
      %v2053 = vadd.f32 %v2017, %v2048
      %v2054 = vadd.f32 %v2018, %v2048
      %v2055 = vadd.f32 %v2019, %v2048
      %v2056 = vadd.f32 %v2020, %v2048
      %v2057 = vadd.f32 %v2021, %v2048
      %v2058 = vadd.f32 %v2022, %v2048
      %v2059 = vadd.f32 %v2023, %v2048
      %v2060 = vadd.f32 %v2024, %v2048
      %v2061 = vadd.f32 %v2025, %v2048
      %v2062 = vadd.f32 %v2026, %v2048
      %v2063 = vadd.f32 %v2027, %v2048
      %v2064 = vadd.f32 %v2028, %v2048
      %v2065 = vadd.f32 %v2029, %v2048
      %v2066 = vadd.f32 %v2030, %v2048
      %v2067 = vadd.f32 %v2031, %v2048
      %v2068 = vadd.f32 %v2032, %v2048
      %v2069 = vadd.f32 %v2033, %v2048
      %v2070 = vadd.f32 %v2034, %v2048
      %v2071 = vadd.f32 %v2035, %v2048
      %v2072 = vadd.f32 %v2036, %v2048
      %v2073 = vadd.f32 %v2037, %v2048
      %v2074 = vadd.f32 %v2038, %v2048
      %v2075 = vadd.f32 %v2039, %v2048
      %v2076 = vadd.f32 %v2040, %v2048
      %v2077 = vadd.f32 %v2041, %v2048
      %v2078 = vadd.f32 %v2042, %v2048
      %v2079 = vadd.f32 %v2043, %v2048
      %v2080 = vadd.f32 %v2044, %v2048
      %v2081 = vadd.f32 %v2045, %v2048
      %v2082 = vld [vmem:[%s212] sm:$0xff]
      %v2083 = vld [vmem:[%s212 + $0x8] sm:$0xff]
      %v2084 = vld [vmem:[%s212 + $0x10] sm:$0xff]
      %v2085 = vld [vmem:[%s212 + $0x18] sm:$0xff]
      %v2086 = vld [vmem:[%s212 + $0x20] sm:$0xff]
      %v2087 = vld [vmem:[%s212 + $0x28] sm:$0xff]
      %v2088 = vld [vmem:[%s212 + $0x30] sm:$0xff]
      %v2089 = vld [vmem:[%s212 + $0x38] sm:$0xff]
      %v2090 = vld [vmem:[%s212 + $0x40] sm:$0xff]
      %v2091 = vld [vmem:[%s212 + $0x48] sm:$0xff]
      %v2092 = vld [vmem:[%s212 + $0x50] sm:$0xff]
      %v2093 = vld [vmem:[%s212 + $0x58] sm:$0xff]
      %v2094 = vld [vmem:[%s212 + $0x60] sm:$0xff]
      %v2095 = vld [vmem:[%s212 + $0x68] sm:$0xff]
      %v2096 = vld [vmem:[%s212 + $0x70] sm:$0xff]
      %v2097 = vld [vmem:[%s212 + $0x78] sm:$0xff]
      %v2098 = vld [vmem:[%s212 + $0x80] sm:$0xff]
      %v2099 = vld [vmem:[%s212 + $0x88] sm:$0xff]
      %v2100 = vld [vmem:[%s212 + $0x90] sm:$0xff]
      %v2101 = vld [vmem:[%s212 + $0x98] sm:$0xff]
      %v2102 = vld [vmem:[%s212 + $0xa0] sm:$0xff]
      %v2103 = vld [vmem:[%s212 + $0xa8] sm:$0xff]
      %v2104 = vld [vmem:[%s212 + $0xb0] sm:$0xff]
      %v2105 = vld [vmem:[%s212 + $0xb8] sm:$0xff]
      %v2106 = vld [vmem:[%s212 + $0xc0] sm:$0xff]
      %v2107 = vld [vmem:[%s212 + $0xc8] sm:$0xff]
      %v2108 = vld [vmem:[%s212 + $0xd0] sm:$0xff]
      %v2109 = vld [vmem:[%s212 + $0xd8] sm:$0xff]
      %v2110 = vld [vmem:[%s212 + $0xe0] sm:$0xff]
      %v2111 = vld [vmem:[%s212 + $0xe8] sm:$0xff]
      %v2112 = vld [vmem:[%s212 + $0xf0] sm:$0xff]
      %v2113 = vld [vmem:[%s212 + $0xf8] sm:$0xff]
      %v2114 = vadd.f32 %v2050, %v2082
      %v2115 = vadd.f32 %v2051, %v2083
      %v2116 = vadd.f32 %v2052, %v2084
      %v2117 = vadd.f32 %v2053, %v2085
      %v2118 = vadd.f32 %v2054, %v2086
      %v2119 = vadd.f32 %v2055, %v2087
      %v2120 = vadd.f32 %v2056, %v2088
      %v2121 = vadd.f32 %v2057, %v2089
      %v2122 = vadd.f32 %v2058, %v2090
      %v2123 = vadd.f32 %v2059, %v2091
      %v2124 = vadd.f32 %v2060, %v2092
      %v2125 = vadd.f32 %v2061, %v2093
      %v2126 = vadd.f32 %v2062, %v2094
      %v2127 = vadd.f32 %v2063, %v2095
      %v2128 = vadd.f32 %v2064, %v2096
      %v2129 = vadd.f32 %v2065, %v2097
      %v2130 = vadd.f32 %v2066, %v2098
      %v2131 = vadd.f32 %v2067, %v2099
      %v2132 = vadd.f32 %v2068, %v2100
      %v2133 = vadd.f32 %v2069, %v2101
      %v2134 = vadd.f32 %v2070, %v2102
      %v2135 = vadd.f32 %v2071, %v2103
      %v2136 = vadd.f32 %v2072, %v2104
      %v2137 = vadd.f32 %v2073, %v2105
      %v2138 = vadd.f32 %v2074, %v2106
      %v2139 = vadd.f32 %v2075, %v2107
      %v2140 = vadd.f32 %v2076, %v2108
      %v2141 = vadd.f32 %v2077, %v2109
      %v2142 = vadd.f32 %v2078, %v2110
      %v2143 = vadd.f32 %v2079, %v2111
      %v2144 = vadd.f32 %v2080, %v2112
      %v2145 = vadd.f32 %v2081, %v2113
      %2146 = vst.msk [vmem:[%s217] sm:$0xff] %vm418, %v2114
      %2147 = vst.msk [vmem:[%s217 + $0x8] sm:$0xff] %vm418, %v2115
      %2148 = vst.msk [vmem:[%s217 + $0x10] sm:$0xff] %vm418, %v2116
      %2149 = vst.msk [vmem:[%s217 + $0x18] sm:$0xff] %vm418, %v2117
      %2150 = vst.msk [vmem:[%s217 + $0x20] sm:$0xff] %vm418, %v2118
      %2151 = vst.msk [vmem:[%s217 + $0x28] sm:$0xff] %vm418, %v2119
      %2152 = vst.msk [vmem:[%s217 + $0x30] sm:$0xff] %vm418, %v2120
      %2153 = vst.msk [vmem:[%s217 + $0x38] sm:$0xff] %vm418, %v2121
      %2154 = vst.msk [vmem:[%s217 + $0x40] sm:$0xff] %vm418, %v2122
      %2155 = vst.msk [vmem:[%s217 + $0x48] sm:$0xff] %vm418, %v2123
      %2156 = vst.msk [vmem:[%s217 + $0x50] sm:$0xff] %vm418, %v2124
      %2157 = vst.msk [vmem:[%s217 + $0x58] sm:$0xff] %vm418, %v2125
      %2158 = vst.msk [vmem:[%s217 + $0x60] sm:$0xff] %vm418, %v2126
      %2159 = vst.msk [vmem:[%s217 + $0x68] sm:$0xff] %vm418, %v2127
      %2160 = vst.msk [vmem:[%s217 + $0x70] sm:$0xff] %vm418, %v2128
      %2161 = vst.msk [vmem:[%s217 + $0x78] sm:$0xff] %vm418, %v2129
      %2162 = vst.msk [vmem:[%s217 + $0x80] sm:$0xff] %vm418, %v2130
      %2163 = vst.msk [vmem:[%s217 + $0x88] sm:$0xff] %vm418, %v2131
      %2164 = vst.msk [vmem:[%s217 + $0x90] sm:$0xff] %vm418, %v2132
      %2165 = vst.msk [vmem:[%s217 + $0x98] sm:$0xff] %vm418, %v2133
      %2166 = vst.msk [vmem:[%s217 + $0xa0] sm:$0xff] %vm418, %v2134
      %2167 = vst.msk [vmem:[%s217 + $0xa8] sm:$0xff] %vm418, %v2135
      %2168 = vst.msk [vmem:[%s217 + $0xb0] sm:$0xff] %vm418, %v2136
      %2169 = vst.msk [vmem:[%s217 + $0xb8] sm:$0xff] %vm418, %v2137
      %2170 = vst.msk [vmem:[%s217 + $0xc0] sm:$0xff] %vm418, %v2138
      %2171 = vst.msk [vmem:[%s217 + $0xc8] sm:$0xff] %vm418, %v2139
      %2172 = vst.msk [vmem:[%s217 + $0xd0] sm:$0xff] %vm418, %v2140
      %2173 = vst.msk [vmem:[%s217 + $0xd8] sm:$0xff] %vm418, %v2141
      %2174 = vst.msk [vmem:[%s217 + $0xe0] sm:$0xff] %vm418, %v2142
      %2175 = vst.msk [vmem:[%s217 + $0xe8] sm:$0xff] %vm418, %v2143
      %2176 = vst.msk [vmem:[%s217 + $0xf0] sm:$0xff] %vm418, %v2144
      %2177 = vst.msk [vmem:[%s217 + $0xf8] sm:$0xff] %vm418, %v2145
      %p2178 = scmp.lt.s32.totalorder %s15, 1
      %s2179 = scalar_select %p2178, %s15, 1
      %s2180 = smul.addr %s2179, 32
      %s2181 = smul.addr %s2180, 8
      %s2182 = scalar_lea.vmem %s4, %s2181
      // Predicated region
      $region37: #{dag_forward_pallas.12} parent=35 // pred_check
        %p2183 = pneg %p127
      $region38: #{dag_forward_pallas.12} parent=35 // pred_check_branch
        %2185 = sbr.rel (%p2183) target = $region40
      $region39: #{dag_forward_pallas.12} parent=35 // pred_region
        _
      $region40: #{dag_forward_pallas.12} parent=35 // pred_fallthru
        _
    $region36: #{dag_forward_pallas.12} parent=5 // pred_fallthru
      _
    %p2186 = scmp.le.s32.totalorder 2, %s10
    // Predicated region
    $region41: #{dag_forward_pallas.12} parent=5 // pred_check
      %p2187 = pneg %p2186
    $region42: #{dag_forward_pallas.12} parent=5 // pred_check_branch
      %2189 = sbr.rel (%p2187) target = $region44
    $region43: #{dag_forward_pallas.12} parent=5 // pred_region
      %s2190 = ssub.s32 %s10, 2
      // Predicated region
      $region45: #{dag_forward_pallas.12} parent=43 // pred_check
        %p2191 = pneg %p133
      $region46: #{dag_forward_pallas.12} parent=43 // pred_check_branch
        %2193 = sbr.rel (%p2191) target = $region48
      $region47: #{dag_forward_pallas.12} parent=43 // pred_region
        %p2194 = scmp.lt.s32.totalorder %s16, 1
        %s2195 = scalar_select %p2194, %s16, 1
        %s2196 = smul.addr %s2195, 32
        %s2197 = smul.addr %s2196, 8
        %s2198 = scalar_lea.vmem %s4, %s2197
      $region48: #{dag_forward_pallas.12} parent=43 // pred_fallthru
        _
    $region44: #{dag_forward_pallas.12} parent=5 // pred_fallthru
      _
  $region6: #{dag_forward_pallas.12} parent=0 // loop_footer
    %s14 = sadd.s32 1, %s10
  $region7: #{dag_forward_pallas.12} parent=0 // loop_footer_branch
    %9 = sbr.rel target = $region3
  $region8: #{dag_forward_pallas.12} parent=0 // loop_exit
    _

// kernel: dag_forward_pallas.9
$region0: #{dag_forward_pallas.9}
  #allocation0 [shape = 'u32[]', space=smem, size = 0x4, offset = 0x4, fixed_abs, tag = 'smem constant byte address 0x4 - core index']
  #allocation1 [shape = 'u32[72,128]{1,0:T(1,128)}', space=vmem, size = 0x9000, scoped, tag = 'internal scratch']
  %s0 = inlined_call_operand.vmem [shape: f32[2,18,18,64], index: 0, kind: input, shape index: {}]
  %s1 = inlined_call_operand.vmem [shape: f32[2,16,16,64], index: 1, kind: input, shape index: {}]
  %s2 = inlined_call_operand.vmem [shape: f32[2,9,64], index: 2, kind: input, shape index: {}]
  %s3 = inlined_call_operand.vmem [shape: f32[64,64], index: 3, kind: input, shape index: {}]
  %s4 = inlined_call_operand.vmem [shape: f32[1,64], index: 4, kind: input, shape index: {}]
  %s5 = inlined_call_operand.vmem [shape: f32[2,1,64], index: 5, kind: input, shape index: {}]
  %s6 = inlined_call_operand.vmem [shape: f32[2,16,16,64], index: 6, kind: output, shape index: {}]
  %s7 = sld [smem:[#allocation0]]
  $region57: #{dag_forward_pallas.9} parent=0
    _
  %s9 = ssub.s32 1, %s7
  %s10 = scalar_select 0, %s9, %s7
  loop: start=0, step=1, limit=4
  $region2: #{dag_forward_pallas.9} parent=0 // loop_pre_header
    _
  $region3: #{dag_forward_pallas.9} parent=0 // loop_header
    %s12 = sphi 0, %s16
    %p13 = scmp.ge.s32.totalorder %s12, 4
    %s22 = sphi 0, %s24
    %s25 = sphi 0, %s22
    %s26 = sphi 0, %s25
    %s42 = sphi 0, %s26
    %s48 = sphi 0, %s50
    %s51 = sphi 0, %s48
    %s52 = sphi 0, %s51
    %s68 = sphi 0, %s52
    %s74 = sphi 0, %s76
    %s77 = sphi 0, %s74
    %s78 = sphi 0, %s77
    %s94 = sphi 0, %s78
    %s98 = sphi 0, %s98
    %s100 = sphi 0, %s98
    %s101 = sphi 0, %s100
    %s115 = sphi 0, %s101
    %s119 = sphi 0, %s119
    %s121 = sphi 0, %s119
    %s122 = sphi 0, %s121
    %s136 = sphi 0, %s122
    %s142 = sphi 0, %s144
    %s145 = sphi 0, %s142
    %s146 = sphi 0, %s145
    %s162 = sphi 0, %s146
    %s168 = sphi 0, %s170
    %s171 = sphi 0, %s168
    %s172 = sphi 0, %s171
    %s188 = sphi 0, %s172
  $region4: #{dag_forward_pallas.9} parent=0 // loop_header_branch
    %15 = sbr.rel (%p13) target = $region8
  $region5: #{dag_forward_pallas.9} parent=0 // loop_body
    %s17 = ssub.s32 %s12, 1
    %s18 = ssub.s32 %s12, 2
    %s19 = sadd.s32 %s12, 1
    %s20 = ssub.s32 %s12, %s19
    %p21 = scmp.eq.s32.totalorder %s20, 0
    %s23 = sadd.s32 %s22, 1
    %s24 = scalar_select %p21, %s22, %s23
    %p27 = pneg %p21
    %p28 = scmp.eq.s32.totalorder %s12, 1
    %p29 = por %p27, %p28
    %p30 = scmp.ne.s32.totalorder %s22, %s25
    %p31 = scmp.eq.s32.totalorder %s12, 0
    %p32 = por %p30, %p31
    %p33 = scmp.ne.s32.totalorder %s22, %s25
    %p34 = scmp.eq.s32.totalorder %s17, 1
    %p35 = por %p33, %p34
    %p36 = scmp.ne.s32.totalorder %s25, %s26
    %p37 = scmp.eq.s32.totalorder %s17, 0
    %p38 = por %p36, %p37
    %p39 = scmp.ne.s32.totalorder %s25, %s26
    %p40 = scmp.eq.s32.totalorder %s18, 1
    %p41 = por %p39, %p40
    %p43 = scmp.ne.s32.totalorder %s26, %s42
    %p44 = scmp.eq.s32.totalorder %s18, 0
    %p45 = por %p43, %p44
    %s46 = ssub.s32 %s12, %s19
    %p47 = scmp.eq.s32.totalorder %s46, 0
    %s49 = sadd.s32 %s48, 1
    %s50 = scalar_select %p47, %s48, %s49
    %p53 = pneg %p47
    %p54 = scmp.eq.s32.totalorder %s12, 1
    %p55 = por %p53, %p54
    %p56 = scmp.ne.s32.totalorder %s48, %s51
    %p57 = scmp.eq.s32.totalorder %s12, 0
    %p58 = por %p56, %p57
    %p59 = scmp.ne.s32.totalorder %s48, %s51
    %p60 = scmp.eq.s32.totalorder %s17, 1
    %p61 = por %p59, %p60
    %p62 = scmp.ne.s32.totalorder %s51, %s52
    %p63 = scmp.eq.s32.totalorder %s17, 0
    %p64 = por %p62, %p63
    %p65 = scmp.ne.s32.totalorder %s51, %s52
    %p66 = scmp.eq.s32.totalorder %s18, 1
    %p67 = por %p65, %p66
    %p69 = scmp.ne.s32.totalorder %s52, %s68
    %p70 = scmp.eq.s32.totalorder %s18, 0
    %p71 = por %p69, %p70
    %s72 = ssub.s32 %s12, %s19
    %p73 = scmp.eq.s32.totalorder %s72, 0
    %s75 = sadd.s32 %s74, 1
    %s76 = scalar_select %p73, %s74, %s75
    %p79 = pneg %p73
    %p80 = scmp.eq.s32.totalorder %s12, 1
    %p81 = por %p79, %p80
    %p82 = scmp.ne.s32.totalorder %s74, %s77
    %p83 = scmp.eq.s32.totalorder %s12, 0
    %p84 = por %p82, %p83
    %p85 = scmp.ne.s32.totalorder %s74, %s77
    %p86 = scmp.eq.s32.totalorder %s17, 1
    %p87 = por %p85, %p86
    %p88 = scmp.ne.s32.totalorder %s77, %s78
    %p89 = scmp.eq.s32.totalorder %s17, 0
    %p90 = por %p88, %p89
    %p91 = scmp.ne.s32.totalorder %s77, %s78
    %p92 = scmp.eq.s32.totalorder %s18, 1
    %p93 = por %p91, %p92
    %p95 = scmp.ne.s32.totalorder %s78, %s94
    %p96 = scmp.eq.s32.totalorder %s18, 0
    %p97 = por %p95, %p96
    %s99 = sadd.s32 %s98, 1
    %p102 = scmp.eq.s32.totalorder %s12, 1
    %p103 = scmp.ne.s32.totalorder %s98, %s100
    %p104 = scmp.eq.s32.totalorder %s12, 0
    %p105 = por %p103, %p104
    %p106 = scmp.ne.s32.totalorder %s98, %s100
    %p107 = scmp.eq.s32.totalorder %s17, 1
    %p108 = por %p106, %p107
    %p109 = scmp.ne.s32.totalorder %s100, %s101
    %p110 = scmp.eq.s32.totalorder %s17, 0
    %p111 = por %p109, %p110
    %p112 = scmp.ne.s32.totalorder %s100, %s101
    %p113 = scmp.eq.s32.totalorder %s18, 1
    %p114 = por %p112, %p113
    %p116 = scmp.ne.s32.totalorder %s101, %s115
    %p117 = scmp.eq.s32.totalorder %s18, 0
    %p118 = por %p116, %p117
    %s120 = sadd.s32 %s119, 1
    %p123 = scmp.eq.s32.totalorder %s12, 1
    %p124 = scmp.ne.s32.totalorder %s119, %s121
    %p125 = scmp.eq.s32.totalorder %s12, 0
    %p126 = por %p124, %p125
    %p127 = scmp.ne.s32.totalorder %s119, %s121
    %p128 = scmp.eq.s32.totalorder %s17, 1
    %p129 = por %p127, %p128
    %p130 = scmp.ne.s32.totalorder %s121, %s122
    %p131 = scmp.eq.s32.totalorder %s17, 0
    %p132 = por %p130, %p131
    %p133 = scmp.ne.s32.totalorder %s121, %s122
    %p134 = scmp.eq.s32.totalorder %s18, 1
    %p135 = por %p133, %p134
    %p137 = scmp.ne.s32.totalorder %s122, %s136
    %p138 = scmp.eq.s32.totalorder %s18, 0
    %p139 = por %p137, %p138
    %s140 = ssub.s32 %s12, %s19
    %p141 = scmp.eq.s32.totalorder %s140, 0
    %s143 = sadd.s32 %s142, 1
    %s144 = scalar_select %p141, %s142, %s143
    %p147 = pneg %p141
    %p148 = scmp.eq.s32.totalorder %s12, 1
    %p149 = por %p147, %p148
    %p150 = scmp.ne.s32.totalorder %s142, %s145
    %p151 = scmp.eq.s32.totalorder %s12, 0
    %p152 = por %p150, %p151
    %p153 = scmp.ne.s32.totalorder %s142, %s145
    %p154 = scmp.eq.s32.totalorder %s17, 1
    %p155 = por %p153, %p154
    %p156 = scmp.ne.s32.totalorder %s145, %s146
    %p157 = scmp.eq.s32.totalorder %s17, 0
    %p158 = por %p156, %p157
    %p159 = scmp.ne.s32.totalorder %s145, %s146
    %p160 = scmp.eq.s32.totalorder %s18, 1
    %p161 = por %p159, %p160
    %p163 = scmp.ne.s32.totalorder %s146, %s162
    %p164 = scmp.eq.s32.totalorder %s18, 0
    %p165 = por %p163, %p164
    %s166 = ssub.s32 %s12, %s19
    %p167 = scmp.eq.s32.totalorder %s166, 0
    %s169 = sadd.s32 %s168, 1
    %s170 = scalar_select %p167, %s168, %s169
    %p173 = pneg %p167
    %p174 = scmp.eq.s32.totalorder %s12, 1
    %p175 = por %p173, %p174
    %p176 = scmp.ne.s32.totalorder %s168, %s171
    %p177 = scmp.eq.s32.totalorder %s12, 0
    %p178 = por %p176, %p177
    %p179 = scmp.ne.s32.totalorder %s168, %s171
    %p180 = scmp.eq.s32.totalorder %s17, 1
    %p181 = por %p179, %p180
    %p182 = scmp.ne.s32.totalorder %s171, %s172
    %p183 = scmp.eq.s32.totalorder %s17, 0
    %p184 = por %p182, %p183
    %p185 = scmp.ne.s32.totalorder %s171, %s172
    %p186 = scmp.eq.s32.totalorder %s18, 1
    %p187 = por %p185, %p186
    %p189 = scmp.ne.s32.totalorder %s172, %s188
    %p190 = scmp.eq.s32.totalorder %s18, 0
    %p191 = por %p189, %p190
    %p192 = scmp.le.s32.totalorder 1, %s12
    %p193 = scmp.lt.s32.totalorder %s12, 3
    %p194 = pnand %p192, %p193
    %p195 = pneg %p194
    // Predicated region
    $region9: #{dag_forward_pallas.9} parent=5 // pred_check
      _
    $region10: #{dag_forward_pallas.9} parent=5 // pred_check_branch
      %197 = sbr.rel (%p194) target = $region12
    $region11: #{dag_forward_pallas.9} parent=5 // pred_region
      %s198 = ssub.s32 %s12, 1
      // Predicated region
      $region13: #{dag_forward_pallas.9} parent=11 // pred_check
        %p199 = pneg %p111
      $region14: #{dag_forward_pallas.9} parent=11 // pred_check_branch
        %201 = sbr.rel (%p199) target = $region16
      $region15: #{dag_forward_pallas.9} parent=11 // pred_region
        _
      $region16: #{dag_forward_pallas.9} parent=11 // pred_fallthru
        _
      // Predicated region
      $region17: #{dag_forward_pallas.9} parent=11 // pred_check
        %p202 = pneg %p132
      $region18: #{dag_forward_pallas.9} parent=11 // pred_check_branch
        %204 = sbr.rel (%p202) target = $region20
      $region19: #{dag_forward_pallas.9} parent=11 // pred_region
        _
      $region20: #{dag_forward_pallas.9} parent=11 // pred_fallthru
        _
    $region12: #{dag_forward_pallas.9} parent=5 // pred_fallthru
      _
    %p205 = scmp.lt.s32.totalorder %s12, 2
    // Predicated region
    $region21: #{dag_forward_pallas.9} parent=5 // pred_check
      %p206 = pneg %p205
    $region22: #{dag_forward_pallas.9} parent=5 // pred_check_branch
      %208 = sbr.rel (%p206) target = $region24
    $region23: #{dag_forward_pallas.9} parent=5 // pred_region
      // Predicated region
      $region25: #{dag_forward_pallas.9} parent=23 // pred_check
        %p209 = pneg %p32
      $region26: #{dag_forward_pallas.9} parent=23 // pred_check_branch
        %211 = sbr.rel (%p209) target = $region28
      $region27: #{dag_forward_pallas.9} parent=23 // pred_region
        %p212 = scmp.lt.s32.totalorder %s12, 1
        %s213 = scalar_select %p212, %s12, 1
        %s214 = smul.addr %s213, 54
        %s215 = smul.addr %s214, 8
        %s216 = scalar_lea.vmem %s0, %s215
      $region28: #{dag_forward_pallas.9} parent=23 // pred_fallthru
        _
      // Predicated region
      $region29: #{dag_forward_pallas.9} parent=23 // pred_check
        %p217 = pneg %p58
      $region30: #{dag_forward_pallas.9} parent=23 // pred_check_branch
        %219 = sbr.rel (%p217) target = $region32
      $region31: #{dag_forward_pallas.9} parent=23 // pred_region
        %p220 = scmp.lt.s32.totalorder %s12, 1
        %s221 = scalar_select %p220, %s12, 1
        %s222 = smul.addr %s221, 32
        %s223 = smul.addr %s222, 8
        %s224 = scalar_lea.vmem %s1, %s223
      $region32: #{dag_forward_pallas.9} parent=23 // pred_fallthru
        _
      // Predicated region
      $region33: #{dag_forward_pallas.9} parent=23 // pred_check
        %p225 = pneg %p84
      $region34: #{dag_forward_pallas.9} parent=23 // pred_check_branch
        %227 = sbr.rel (%p225) target = $region36
      $region35: #{dag_forward_pallas.9} parent=23 // pred_region
        %p228 = scmp.lt.s32.totalorder %s12, 1
        %s229 = scalar_select %p228, %s12, 1
        %s230 = smul.addr %s229, 2
        %s231 = smul.addr %s230, 8
        %s232 = scalar_lea.vmem %s2, %s231
      $region36: #{dag_forward_pallas.9} parent=23 // pred_fallthru
        _
      // Predicated region
      $region37: #{dag_forward_pallas.9} parent=23 // pred_check
        %p233 = pneg %p152
      $region38: #{dag_forward_pallas.9} parent=23 // pred_check_branch
        %235 = sbr.rel (%p233) target = $region40
      $region39: #{dag_forward_pallas.9} parent=23 // pred_region
        %p236 = scmp.lt.s32.totalorder %s12, 1
        %s237 = scalar_select %p236, %s12, 1
        %s238 = scalar_lea.vmem %s5, %s237
      $region40: #{dag_forward_pallas.9} parent=23 // pred_fallthru
        _
    $region24: #{dag_forward_pallas.9} parent=5 // pred_fallthru
      _
    %p239 = scmp.le.s32.totalorder 1, %s12
    %p240 = scmp.lt.s32.totalorder %s12, 3
    %p241 = pnand %p239, %p240
    %p242 = pneg %p241
    // Predicated region
    $region41: #{dag_forward_pallas.9} parent=5 // pred_check
      _
    $region42: #{dag_forward_pallas.9} parent=5 // pred_check_branch
      %244 = sbr.rel (%p241) target = $region44
    $region43: #{dag_forward_pallas.9} parent=5 // pred_region
      %s245 = ssub.s32 %s12, 1
      %p246 = scmp.lt.s32.totalorder %s17, 1
      %s247 = scalar_select %p246, %s17, 1
      %s248 = smul.addr %s247, 54
      %s249 = smul.addr %s248, 8
      %s250 = scalar_lea.vmem %s0, %s249
      %p251 = pneg %p38
      %p252 = pneg %p35
      %p253 = scmp.lt.s32.totalorder %s17, 1
      %s254 = scalar_select %p253, %s17, 1
      %s255 = smul.addr %s254, 32
      %s256 = smul.addr %s255, 8
      %s257 = scalar_lea.vmem %s1, %s256
      %p258 = pneg %p64
      %p259 = pneg %p61
      %p260 = scmp.lt.s32.totalorder %s17, 1
      %s261 = scalar_select %p260, %s17, 1
      %s262 = smul.addr %s261, 2
      %s263 = smul.addr %s262, 8
      %s264 = scalar_lea.vmem %s2, %s263
      %p265 = pneg %p90
      %p266 = pneg %p87
      %p267 = pneg %p111
      %p268 = pneg %p108
      %p269 = pneg %p132
      %p270 = pneg %p129
      %p271 = scmp.lt.s32.totalorder %s17, 1
      %s272 = scalar_select %p271, %s17, 1
      %s273 = scalar_lea.vmem %s5, %s272
      %p274 = pneg %p158
      %p275 = pneg %p155
      %p276 = pneg %p184
      %p277 = pneg %p181
      %p278 = scmp.lt.s32.totalorder %s17, 1
      %s279 = scalar_select %p278, %s17, 1
      %s280 = smul.addr %s279, 32
      %s281 = smul.addr %s280, 8
      %s282 = scalar_lea.vmem %s6, %s281
      %p283 = scmp.lt.s32.totalorder %s17, 1
      %s284 = scalar_select %p283, %s17, 1
      %s285 = smul.addr %s284, 54
      %s286 = smul.addr %s285, 8
      %s287 = scalar_lea.vmem %s0, %s286
      %p288 = scmp.lt.s32.totalorder %s17, 1
      %s289 = scalar_select %p288, %s17, 1
      %s290 = smul.addr %s289, 32
      %s291 = smul.addr %s290, 8
      %s292 = scalar_lea.vmem %s1, %s291
      %p293 = scmp.lt.s32.totalorder %s17, 1
      %s294 = scalar_select %p293, %s17, 1
      %s295 = smul.addr %s294, 2
      %s296 = smul.addr %s295, 8
      %s297 = scalar_lea.vmem %s2, %s296
      %p298 = scmp.lt.s32.totalorder %s17, 1
      %s299 = scalar_select %p298, %s17, 1
      %s300 = scalar_lea.vmem %s5, %s299
      %p301 = scmp.lt.s32.totalorder %s17, 1
      %s302 = scalar_select %p301, %s17, 1
      %s303 = smul.addr %s302, 32
      %s304 = smul.addr %s303, 8
      %s305 = scalar_lea.vmem %s6, %s304
      %v306 = vld [vmem:[%s287] sm:$0xff]
      %v307 = vld [vmem:[%s287 + $0x8] sm:$0xff]
      %v308 = vld [vmem:[%s287 + $0x10] sm:$0x3]
      %v309 = vld [vmem:[%s287 + $0x18] sm:$0xff]
      %v310 = vld [vmem:[%s287 + $0x20] sm:$0xff]
      %v311 = vld [vmem:[%s287 + $0x28] sm:$0x3]
      %v312 = vld [vmem:[%s287 + $0x30] sm:$0xff]
      %v313 = vld [vmem:[%s287 + $0x38] sm:$0xff]
      %v314 = vld [vmem:[%s287 + $0x40] sm:$0x3]
      %v315 = vld [vmem:[%s287 + $0x48] sm:$0xff]
      %v316 = vld [vmem:[%s287 + $0x50] sm:$0xff]
      %v317 = vld [vmem:[%s287 + $0x58] sm:$0x3]
      %v318 = vld [vmem:[%s287 + $0x60] sm:$0xff]
      %v319 = vld [vmem:[%s287 + $0x68] sm:$0xff]
      %v320 = vld [vmem:[%s287 + $0x70] sm:$0x3]
      %v321 = vld [vmem:[%s287 + $0x78] sm:$0xff]
      %v322 = vld [vmem:[%s287 + $0x80] sm:$0xff]
      %v323 = vld [vmem:[%s287 + $0x88] sm:$0x3]
      %v324 = vld [vmem:[%s287 + $0x90] sm:$0xff]
      %v325 = vld [vmem:[%s287 + $0x98] sm:$0xff]
      %v326 = vld [vmem:[%s287 + $0xa0] sm:$0x3]
      %v327 = vld [vmem:[%s287 + $0xa8] sm:$0xff]
      %v328 = vld [vmem:[%s287 + $0xb0] sm:$0xff]
      %v329 = vld [vmem:[%s287 + $0xb8] sm:$0x3]
      %v330 = vld [vmem:[%s287 + $0xc0] sm:$0xff]
      %v331 = vld [vmem:[%s287 + $0xc8] sm:$0xff]
      %v332 = vld [vmem:[%s287 + $0xd0] sm:$0x3]
      %v333 = vld [vmem:[%s287 + $0xd8] sm:$0xff]
      %v334 = vld [vmem:[%s287 + $0xe0] sm:$0xff]
      %v335 = vld [vmem:[%s287 + $0xe8] sm:$0x3]
      %v336 = vld [vmem:[%s287 + $0xf0] sm:$0xff]
      %v337 = vld [vmem:[%s287 + $0xf8] sm:$0xff]
      %v338 = vld [vmem:[%s287 + $0x100] sm:$0x3]
      %v339 = vld [vmem:[%s287 + $0x108] sm:$0xff]
      %v340 = vld [vmem:[%s287 + $0x110] sm:$0xff]
      %v341 = vld [vmem:[%s287 + $0x118] sm:$0x3]
      %v342 = vld [vmem:[%s287 + $0x120] sm:$0xff]
      %v343 = vld [vmem:[%s287 + $0x128] sm:$0xff]
      %v344 = vld [vmem:[%s287 + $0x130] sm:$0x3]
      %v345 = vld [vmem:[%s287 + $0x138] sm:$0xff]
      %v346 = vld [vmem:[%s287 + $0x140] sm:$0xff]
      %v347 = vld [vmem:[%s287 + $0x148] sm:$0x3]
      %v348 = vld [vmem:[%s287 + $0x150] sm:$0xff]
      %v349 = vld [vmem:[%s287 + $0x158] sm:$0xff]
      %v350 = vld [vmem:[%s287 + $0x160] sm:$0x3]
      %v351 = vld [vmem:[%s287 + $0x168] sm:$0xff]
      %v352 = vld [vmem:[%s287 + $0x170] sm:$0xff]
      %v353 = vld [vmem:[%s287 + $0x178] sm:$0x3]
      %v354 = vld [vmem:[%s287 + $0x180] sm:$0xff]
      %v355 = vld [vmem:[%s287 + $0x188] sm:$0xff]
      %v356 = vld [vmem:[%s287 + $0x190] sm:$0x3]
      %v357 = vld [vmem:[%s287 + $0x198] sm:$0xff]
      %v358 = vld [vmem:[%s287 + $0x1a0] sm:$0xff]
      %v359 = vld [vmem:[%s287 + $0x1a8] sm:$0x3]
      %v360 = vld [vmem:[%s297] sm:$0xff]
      %v361 = vld [vmem:[%s297 + $0x8] sm:$0x1]
      %v362 = vperm.slane %v360, 0
      %v363 = vmul.f32 %v306, %v362
      %v364 = vmul.f32 %v307, %v362
      %v365 = vmul.f32 %v309, %v362
      %v366 = vmul.f32 %v310, %v362
      %v367 = vmul.f32 %v312, %v362
      %v368 = vmul.f32 %v313, %v362
      %v369 = vmul.f32 %v315, %v362
      %v370 = vmul.f32 %v316, %v362
      %v371 = vmul.f32 %v318, %v362
      %v372 = vmul.f32 %v319, %v362
      %v373 = vmul.f32 %v321, %v362
      %v374 = vmul.f32 %v322, %v362
      %v375 = vmul.f32 %v324, %v362
      %v376 = vmul.f32 %v325, %v362
      %v377 = vmul.f32 %v327, %v362
      %v378 = vmul.f32 %v328, %v362
      %v379 = vmul.f32 %v330, %v362
      %v380 = vmul.f32 %v331, %v362
      %v381 = vmul.f32 %v333, %v362
      %v382 = vmul.f32 %v334, %v362
      %v383 = vmul.f32 %v336, %v362
      %v384 = vmul.f32 %v337, %v362
      %v385 = vmul.f32 %v339, %v362
      %v386 = vmul.f32 %v340, %v362
      %v387 = vmul.f32 %v342, %v362
      %v388 = vmul.f32 %v343, %v362
      %v389 = vmul.f32 %v345, %v362
      %v390 = vmul.f32 %v346, %v362
      %v391 = vmul.f32 %v348, %v362
      %v392 = vmul.f32 %v349, %v362
      %v393 = vmul.f32 %v351, %v362
      %v394 = vmul.f32 %v352, %v362
      %v395 = vadd.f32 %v363, 0.0
      %v396 = vadd.f32 %v364, 0.0
      %v397 = vadd.f32 %v365, 0.0
      %v398 = vadd.f32 %v366, 0.0
      %v399 = vadd.f32 %v367, 0.0
      %v400 = vadd.f32 %v368, 0.0
      %v401 = vadd.f32 %v369, 0.0
      %v402 = vadd.f32 %v370, 0.0
      %v403 = vadd.f32 %v371, 0.0
      %v404 = vadd.f32 %v372, 0.0
      %v405 = vadd.f32 %v373, 0.0
      %v406 = vadd.f32 %v374, 0.0
      %v407 = vadd.f32 %v375, 0.0
      %v408 = vadd.f32 %v376, 0.0
      %v409 = vadd.f32 %v377, 0.0
      %v410 = vadd.f32 %v378, 0.0
      %v411 = vadd.f32 %v379, 0.0
      %v412 = vadd.f32 %v380, 0.0
      %v413 = vadd.f32 %v381, 0.0
      %v414 = vadd.f32 %v382, 0.0
      %v415 = vadd.f32 %v383, 0.0
      %v416 = vadd.f32 %v384, 0.0
      %v417 = vadd.f32 %v385, 0.0
      %v418 = vadd.f32 %v386, 0.0
      %v419 = vadd.f32 %v387, 0.0
      %v420 = vadd.f32 %v388, 0.0
      %v421 = vadd.f32 %v389, 0.0
      %v422 = vadd.f32 %v390, 0.0
      %v423 = vadd.f32 %v391, 0.0
      %v424 = vadd.f32 %v392, 0.0
      %v425 = vadd.f32 %v393, 0.0
      %v426 = vadd.f32 %v394, 0.0
      %v427 = vperm.slane %v360, 1
      %v428 = vmul.f32 %v306, %v427
      %v429 = vmul.f32 %v307, %v427
      %v430 = vmul.f32 %v308, %v427
      %v431 = vmul.f32 %v309, %v427
      %v432 = vmul.f32 %v310, %v427
      %v433 = vmul.f32 %v311, %v427
      %v434 = vmul.f32 %v312, %v427
      %v435 = vmul.f32 %v313, %v427
      %v436 = vmul.f32 %v314, %v427
      %v437 = vmul.f32 %v315, %v427
      %v438 = vmul.f32 %v316, %v427
      %v439 = vmul.f32 %v317, %v427
      %v440 = vmul.f32 %v318, %v427
      %v441 = vmul.f32 %v319, %v427
      %v442 = vmul.f32 %v320, %v427
      %v443 = vmul.f32 %v321, %v427
      %v444 = vmul.f32 %v322, %v427
      %v445 = vmul.f32 %v323, %v427
      %v446 = vmul.f32 %v324, %v427
      %v447 = vmul.f32 %v325, %v427
      %v448 = vmul.f32 %v326, %v427
      %v449 = vmul.f32 %v327, %v427
      %v450 = vmul.f32 %v328, %v427
      %v451 = vmul.f32 %v329, %v427
      %v452 = vmul.f32 %v330, %v427
      %v453 = vmul.f32 %v331, %v427
      %v454 = vmul.f32 %v332, %v427
      %v455 = vmul.f32 %v333, %v427
      %v456 = vmul.f32 %v334, %v427
      %v457 = vmul.f32 %v335, %v427
      %v458 = vmul.f32 %v336, %v427
      %v459 = vmul.f32 %v337, %v427
      %v460 = vmul.f32 %v338, %v427
      %v461 = vmul.f32 %v339, %v427
      %v462 = vmul.f32 %v340, %v427
      %v463 = vmul.f32 %v341, %v427
      %v464 = vmul.f32 %v342, %v427
      %v465 = vmul.f32 %v343, %v427
      %v466 = vmul.f32 %v344, %v427
      %v467 = vmul.f32 %v345, %v427
      %v468 = vmul.f32 %v346, %v427
      %v469 = vmul.f32 %v347, %v427
      %v470 = vmul.f32 %v348, %v427
      %v471 = vmul.f32 %v349, %v427
      %v472 = vmul.f32 %v350, %v427
      %v473 = vmul.f32 %v351, %v427
      %v474 = vmul.f32 %v352, %v427
      %v475 = vmul.f32 %v353, %v427
      %vm524 = vcmask 1046528
      %v525 = vrot.slane %v428, 1
      %v526 = vrot.slane %v429, 1
      %v527 = vsel %vm524, %v525, %v526
      %v528 = vrot.slane %v430, 1
      %v529 = vsel %vm524, %v526, %v528
      %v530 = vrot.slane %v431, 1
      %v531 = vrot.slane %v432, 1
      %v532 = vsel %vm524, %v530, %v531
      %v533 = vrot.slane %v433, 1
      %v534 = vsel %vm524, %v531, %v533
      %v535 = vrot.slane %v434, 1
      %v536 = vrot.slane %v435, 1
      %v537 = vsel %vm524, %v535, %v536
      %v538 = vrot.slane %v436, 1
      %v539 = vsel %vm524, %v536, %v538
      %v540 = vrot.slane %v437, 1
      %v541 = vrot.slane %v438, 1
      %v542 = vsel %vm524, %v540, %v541
      %v543 = vrot.slane %v439, 1
      %v544 = vsel %vm524, %v541, %v543
      %v545 = vrot.slane %v440, 1
      %v546 = vrot.slane %v441, 1
      %v547 = vsel %vm524, %v545, %v546
      %v548 = vrot.slane %v442, 1
      %v549 = vsel %vm524, %v546, %v548
      %v550 = vrot.slane %v443, 1
      %v551 = vrot.slane %v444, 1
      %v552 = vsel %vm524, %v550, %v551
      %v553 = vrot.slane %v445, 1
      %v554 = vsel %vm524, %v551, %v553
      %v555 = vrot.slane %v446, 1
      %v556 = vrot.slane %v447, 1
      %v557 = vsel %vm524, %v555, %v556
      %v558 = vrot.slane %v448, 1
      %v559 = vsel %vm524, %v556, %v558
      %v560 = vrot.slane %v449, 1
      %v561 = vrot.slane %v450, 1
      %v562 = vsel %vm524, %v560, %v561
      %v563 = vrot.slane %v451, 1
      %v564 = vsel %vm524, %v561, %v563
      %v565 = vrot.slane %v452, 1
      %v566 = vrot.slane %v453, 1
      %v567 = vsel %vm524, %v565, %v566
      %v568 = vrot.slane %v454, 1
      %v569 = vsel %vm524, %v566, %v568
      %v570 = vrot.slane %v455, 1
      %v571 = vrot.slane %v456, 1
      %v572 = vsel %vm524, %v570, %v571
      %v573 = vrot.slane %v457, 1
      %v574 = vsel %vm524, %v571, %v573
      %v575 = vrot.slane %v458, 1
      %v576 = vrot.slane %v459, 1
      %v577 = vsel %vm524, %v575, %v576
      %v578 = vrot.slane %v460, 1
      %v579 = vsel %vm524, %v576, %v578
      %v580 = vrot.slane %v461, 1
      %v581 = vrot.slane %v462, 1
      %v582 = vsel %vm524, %v580, %v581
      %v583 = vrot.slane %v463, 1
      %v584 = vsel %vm524, %v581, %v583
      %v585 = vrot.slane %v464, 1
      %v586 = vrot.slane %v465, 1
      %v587 = vsel %vm524, %v585, %v586
      %v588 = vrot.slane %v466, 1
      %v589 = vsel %vm524, %v586, %v588
      %v590 = vrot.slane %v467, 1
      %v591 = vrot.slane %v468, 1
      %v592 = vsel %vm524, %v590, %v591
      %v593 = vrot.slane %v469, 1
      %v594 = vsel %vm524, %v591, %v593
      %v595 = vrot.slane %v470, 1
      %v596 = vrot.slane %v471, 1
      %v597 = vsel %vm524, %v595, %v596
      %v598 = vrot.slane %v472, 1
      %v599 = vsel %vm524, %v596, %v598
      %v600 = vrot.slane %v473, 1
      %v601 = vrot.slane %v474, 1
      %v602 = vsel %vm524, %v600, %v601
      %v603 = vrot.slane %v475, 1
      %v604 = vsel %vm524, %v601, %v603
      %v637 = vadd.f32 %v395, %v527
      %v638 = vadd.f32 %v396, %v529
      %v639 = vadd.f32 %v397, %v532
      %v640 = vadd.f32 %v398, %v534
      %v641 = vadd.f32 %v399, %v537
      %v642 = vadd.f32 %v400, %v539
      %v643 = vadd.f32 %v401, %v542
      %v644 = vadd.f32 %v402, %v544
      %v645 = vadd.f32 %v403, %v547
      %v646 = vadd.f32 %v404, %v549
      %v647 = vadd.f32 %v405, %v552
      %v648 = vadd.f32 %v406, %v554
      %v649 = vadd.f32 %v407, %v557
      %v650 = vadd.f32 %v408, %v559
      %v651 = vadd.f32 %v409, %v562
      %v652 = vadd.f32 %v410, %v564
      %v653 = vadd.f32 %v411, %v567
      %v654 = vadd.f32 %v412, %v569
      %v655 = vadd.f32 %v413, %v572
      %v656 = vadd.f32 %v414, %v574
      %v657 = vadd.f32 %v415, %v577
      %v658 = vadd.f32 %v416, %v579
      %v659 = vadd.f32 %v417, %v582
      %v660 = vadd.f32 %v418, %v584
      %v661 = vadd.f32 %v419, %v587
      %v662 = vadd.f32 %v420, %v589
      %v663 = vadd.f32 %v421, %v592
      %v664 = vadd.f32 %v422, %v594
      %v665 = vadd.f32 %v423, %v597
      %v666 = vadd.f32 %v424, %v599
      %v667 = vadd.f32 %v425, %v602
      %v668 = vadd.f32 %v426, %v604
      %v669 = vperm.slane %v360, 2
      %v670 = vmul.f32 %v306, %v669
      %v671 = vmul.f32 %v307, %v669
      %v672 = vmul.f32 %v308, %v669
      %v673 = vmul.f32 %v309, %v669
      %v674 = vmul.f32 %v310, %v669
      %v675 = vmul.f32 %v311, %v669
      %v676 = vmul.f32 %v312, %v669
      %v677 = vmul.f32 %v313, %v669
      %v678 = vmul.f32 %v314, %v669
      %v679 = vmul.f32 %v315, %v669
      %v680 = vmul.f32 %v316, %v669
      %v681 = vmul.f32 %v317, %v669
      %v682 = vmul.f32 %v318, %v669
      %v683 = vmul.f32 %v319, %v669
      %v684 = vmul.f32 %v320, %v669
      %v685 = vmul.f32 %v321, %v669
      %v686 = vmul.f32 %v322, %v669
      %v687 = vmul.f32 %v323, %v669
      %v688 = vmul.f32 %v324, %v669
      %v689 = vmul.f32 %v325, %v669
      %v690 = vmul.f32 %v326, %v669
      %v691 = vmul.f32 %v327, %v669
      %v692 = vmul.f32 %v328, %v669
      %v693 = vmul.f32 %v329, %v669
      %v694 = vmul.f32 %v330, %v669
      %v695 = vmul.f32 %v331, %v669
      %v696 = vmul.f32 %v332, %v669
      %v697 = vmul.f32 %v333, %v669
      %v698 = vmul.f32 %v334, %v669
      %v699 = vmul.f32 %v335, %v669
      %v700 = vmul.f32 %v336, %v669
      %v701 = vmul.f32 %v337, %v669
      %v702 = vmul.f32 %v338, %v669
      %v703 = vmul.f32 %v339, %v669
      %v704 = vmul.f32 %v340, %v669
      %v705 = vmul.f32 %v341, %v669
      %v706 = vmul.f32 %v342, %v669
      %v707 = vmul.f32 %v343, %v669
      %v708 = vmul.f32 %v344, %v669
      %v709 = vmul.f32 %v345, %v669
      %v710 = vmul.f32 %v346, %v669
      %v711 = vmul.f32 %v347, %v669
      %v712 = vmul.f32 %v348, %v669
      %v713 = vmul.f32 %v349, %v669
      %v714 = vmul.f32 %v350, %v669
      %v715 = vmul.f32 %v351, %v669
      %v716 = vmul.f32 %v352, %v669
      %v717 = vmul.f32 %v353, %v669
      %vm766 = vcmask 1045504
      %v767 = vrot.slane %v670, 2
      %v768 = vrot.slane %v671, 2
      %v769 = vsel %vm766, %v767, %v768
      %v770 = vrot.slane %v672, 2
      %v771 = vsel %vm766, %v768, %v770
      %v772 = vrot.slane %v673, 2
      %v773 = vrot.slane %v674, 2
      %v774 = vsel %vm766, %v772, %v773
      %v775 = vrot.slane %v675, 2
      %v776 = vsel %vm766, %v773, %v775
      %v777 = vrot.slane %v676, 2
      %v778 = vrot.slane %v677, 2
      %v779 = vsel %vm766, %v777, %v778
      %v780 = vrot.slane %v678, 2
      %v781 = vsel %vm766, %v778, %v780
      %v782 = vrot.slane %v679, 2
      %v783 = vrot.slane %v680, 2
      %v784 = vsel %vm766, %v782, %v783
      %v785 = vrot.slane %v681, 2
      %v786 = vsel %vm766, %v783, %v785
      %v787 = vrot.slane %v682, 2
      %v788 = vrot.slane %v683, 2
      %v789 = vsel %vm766, %v787, %v788
      %v790 = vrot.slane %v684, 2
      %v791 = vsel %vm766, %v788, %v790
      %v792 = vrot.slane %v685, 2
      %v793 = vrot.slane %v686, 2
      %v794 = vsel %vm766, %v792, %v793
      %v795 = vrot.slane %v687, 2
      %v796 = vsel %vm766, %v793, %v795
      %v797 = vrot.slane %v688, 2
      %v798 = vrot.slane %v689, 2
      %v799 = vsel %vm766, %v797, %v798
      %v800 = vrot.slane %v690, 2
      %v801 = vsel %vm766, %v798, %v800
      %v802 = vrot.slane %v691, 2
      %v803 = vrot.slane %v692, 2
      %v804 = vsel %vm766, %v802, %v803
      %v805 = vrot.slane %v693, 2
      %v806 = vsel %vm766, %v803, %v805
      %v807 = vrot.slane %v694, 2
      %v808 = vrot.slane %v695, 2
      %v809 = vsel %vm766, %v807, %v808
      %v810 = vrot.slane %v696, 2
      %v811 = vsel %vm766, %v808, %v810
      %v812 = vrot.slane %v697, 2
      %v813 = vrot.slane %v698, 2
      %v814 = vsel %vm766, %v812, %v813
      %v815 = vrot.slane %v699, 2
      %v816 = vsel %vm766, %v813, %v815
      %v817 = vrot.slane %v700, 2
      %v818 = vrot.slane %v701, 2
      %v819 = vsel %vm766, %v817, %v818
      %v820 = vrot.slane %v702, 2
      %v821 = vsel %vm766, %v818, %v820
      %v822 = vrot.slane %v703, 2
      %v823 = vrot.slane %v704, 2
      %v824 = vsel %vm766, %v822, %v823
      %v825 = vrot.slane %v705, 2
      %v826 = vsel %vm766, %v823, %v825
      %v827 = vrot.slane %v706, 2
      %v828 = vrot.slane %v707, 2
      %v829 = vsel %vm766, %v827, %v828
      %v830 = vrot.slane %v708, 2
      %v831 = vsel %vm766, %v828, %v830
      %v832 = vrot.slane %v709, 2
      %v833 = vrot.slane %v710, 2
      %v834 = vsel %vm766, %v832, %v833
      %v835 = vrot.slane %v711, 2
      %v836 = vsel %vm766, %v833, %v835
      %v837 = vrot.slane %v712, 2
      %v838 = vrot.slane %v713, 2
      %v839 = vsel %vm766, %v837, %v838
      %v840 = vrot.slane %v714, 2
      %v841 = vsel %vm766, %v838, %v840
      %v842 = vrot.slane %v715, 2
      %v843 = vrot.slane %v716, 2
      %v844 = vsel %vm766, %v842, %v843
      %v845 = vrot.slane %v717, 2
      %v846 = vsel %vm766, %v843, %v845
      %v879 = vadd.f32 %v637, %v769
      %v880 = vadd.f32 %v638, %v771
      %v881 = vadd.f32 %v639, %v774
      %v882 = vadd.f32 %v640, %v776
      %v883 = vadd.f32 %v641, %v779
      %v884 = vadd.f32 %v642, %v781
      %v885 = vadd.f32 %v643, %v784
      %v886 = vadd.f32 %v644, %v786
      %v887 = vadd.f32 %v645, %v789
      %v888 = vadd.f32 %v646, %v791
      %v889 = vadd.f32 %v647, %v794
      %v890 = vadd.f32 %v648, %v796
      %v891 = vadd.f32 %v649, %v799
      %v892 = vadd.f32 %v650, %v801
      %v893 = vadd.f32 %v651, %v804
      %v894 = vadd.f32 %v652, %v806
      %v895 = vadd.f32 %v653, %v809
      %v896 = vadd.f32 %v654, %v811
      %v897 = vadd.f32 %v655, %v814
      %v898 = vadd.f32 %v656, %v816
      %v899 = vadd.f32 %v657, %v819
      %v900 = vadd.f32 %v658, %v821
      %v901 = vadd.f32 %v659, %v824
      %v902 = vadd.f32 %v660, %v826
      %v903 = vadd.f32 %v661, %v829
      %v904 = vadd.f32 %v662, %v831
      %v905 = vadd.f32 %v663, %v834
      %v906 = vadd.f32 %v664, %v836
      %v907 = vadd.f32 %v665, %v839
      %v908 = vadd.f32 %v666, %v841
      %v909 = vadd.f32 %v667, %v844
      %v910 = vadd.f32 %v668, %v846
      %v911 = vperm.slane %v360, 3
      %v912 = vmul.f32 %v309, %v911
      %v913 = vmul.f32 %v310, %v911
      %v914 = vmul.f32 %v312, %v911
      %v915 = vmul.f32 %v313, %v911
      %v916 = vmul.f32 %v315, %v911
      %v917 = vmul.f32 %v316, %v911
      %v918 = vmul.f32 %v318, %v911
      %v919 = vmul.f32 %v319, %v911
      %v920 = vmul.f32 %v321, %v911
      %v921 = vmul.f32 %v322, %v911
      %v922 = vmul.f32 %v324, %v911
      %v923 = vmul.f32 %v325, %v911
      %v924 = vmul.f32 %v327, %v911
      %v925 = vmul.f32 %v328, %v911
      %v926 = vmul.f32 %v330, %v911
      %v927 = vmul.f32 %v331, %v911
      %v928 = vmul.f32 %v333, %v911
      %v929 = vmul.f32 %v334, %v911
      %v930 = vmul.f32 %v336, %v911
      %v931 = vmul.f32 %v337, %v911
      %v932 = vmul.f32 %v339, %v911
      %v933 = vmul.f32 %v340, %v911
      %v934 = vmul.f32 %v342, %v911
      %v935 = vmul.f32 %v343, %v911
      %v936 = vmul.f32 %v345, %v911
      %v937 = vmul.f32 %v346, %v911
      %v938 = vmul.f32 %v348, %v911
      %v939 = vmul.f32 %v349, %v911
      %v940 = vmul.f32 %v351, %v911
      %v941 = vmul.f32 %v352, %v911
      %v942 = vmul.f32 %v354, %v911
      %v943 = vmul.f32 %v355, %v911
      %v944 = vadd.f32 %v879, %v912
      %v945 = vadd.f32 %v880, %v913
      %v946 = vadd.f32 %v881, %v914
      %v947 = vadd.f32 %v882, %v915
      %v948 = vadd.f32 %v883, %v916
      %v949 = vadd.f32 %v884, %v917
      %v950 = vadd.f32 %v885, %v918
      %v951 = vadd.f32 %v886, %v919
      %v952 = vadd.f32 %v887, %v920
      %v953 = vadd.f32 %v888, %v921
      %v954 = vadd.f32 %v889, %v922
      %v955 = vadd.f32 %v890, %v923
      %v956 = vadd.f32 %v891, %v924
      %v957 = vadd.f32 %v892, %v925
      %v958 = vadd.f32 %v893, %v926
      %v959 = vadd.f32 %v894, %v927
      %v960 = vadd.f32 %v895, %v928
      %v961 = vadd.f32 %v896, %v929
      %v962 = vadd.f32 %v897, %v930
      %v963 = vadd.f32 %v898, %v931
      %v964 = vadd.f32 %v899, %v932
      %v965 = vadd.f32 %v900, %v933
      %v966 = vadd.f32 %v901, %v934
      %v967 = vadd.f32 %v902, %v935
      %v968 = vadd.f32 %v903, %v936
      %v969 = vadd.f32 %v904, %v937
      %v970 = vadd.f32 %v905, %v938
      %v971 = vadd.f32 %v906, %v939
      %v972 = vadd.f32 %v907, %v940
      %v973 = vadd.f32 %v908, %v941
      %v974 = vadd.f32 %v909, %v942
      %v975 = vadd.f32 %v910, %v943
      %v976 = vperm.slane %v360, 4
      %v977 = vmul.f32 %v309, %v976
      %v978 = vmul.f32 %v310, %v976
      %v979 = vmul.f32 %v311, %v976
      %v980 = vmul.f32 %v312, %v976
      %v981 = vmul.f32 %v313, %v976
      %v982 = vmul.f32 %v314, %v976
      %v983 = vmul.f32 %v315, %v976
      %v984 = vmul.f32 %v316, %v976
      %v985 = vmul.f32 %v317, %v976
      %v986 = vmul.f32 %v318, %v976
      %v987 = vmul.f32 %v319, %v976
      %v988 = vmul.f32 %v320, %v976
      %v989 = vmul.f32 %v321, %v976
      %v990 = vmul.f32 %v322, %v976
      %v991 = vmul.f32 %v323, %v976
      %v992 = vmul.f32 %v324, %v976
      %v993 = vmul.f32 %v325, %v976
      %v994 = vmul.f32 %v326, %v976
      %v995 = vmul.f32 %v327, %v976
      %v996 = vmul.f32 %v328, %v976
      %v997 = vmul.f32 %v329, %v976
      %v998 = vmul.f32 %v330, %v976
      %v999 = vmul.f32 %v331, %v976
      %v1000 = vmul.f32 %v332, %v976
      %v1001 = vmul.f32 %v333, %v976
      %v1002 = vmul.f32 %v334, %v976
      %v1003 = vmul.f32 %v335, %v976
      %v1004 = vmul.f32 %v336, %v976
      %v1005 = vmul.f32 %v337, %v976
      %v1006 = vmul.f32 %v338, %v976
      %v1007 = vmul.f32 %v339, %v976
      %v1008 = vmul.f32 %v340, %v976
      %v1009 = vmul.f32 %v341, %v976
      %v1010 = vmul.f32 %v342, %v976
      %v1011 = vmul.f32 %v343, %v976
      %v1012 = vmul.f32 %v344, %v976
      %v1013 = vmul.f32 %v345, %v976
      %v1014 = vmul.f32 %v346, %v976
      %v1015 = vmul.f32 %v347, %v976
      %v1016 = vmul.f32 %v348, %v976
      %v1017 = vmul.f32 %v349, %v976
      %v1018 = vmul.f32 %v350, %v976
      %v1019 = vmul.f32 %v351, %v976
      %v1020 = vmul.f32 %v352, %v976
      %v1021 = vmul.f32 %v353, %v976
      %v1022 = vmul.f32 %v354, %v976
      %v1023 = vmul.f32 %v355, %v976
      %v1024 = vmul.f32 %v356, %v976
      %v1073 = vrot.slane %v977, 1
      %v1074 = vrot.slane %v978, 1
      %v1075 = vsel %vm524, %v1073, %v1074
      %v1076 = vrot.slane %v979, 1
      %v1077 = vsel %vm524, %v1074, %v1076
      %v1078 = vrot.slane %v980, 1
      %v1079 = vrot.slane %v981, 1
      %v1080 = vsel %vm524, %v1078, %v1079
      %v1081 = vrot.slane %v982, 1
      %v1082 = vsel %vm524, %v1079, %v1081
      %v1083 = vrot.slane %v983, 1
      %v1084 = vrot.slane %v984, 1
      %v1085 = vsel %vm524, %v1083, %v1084
      %v1086 = vrot.slane %v985, 1
      %v1087 = vsel %vm524, %v1084, %v1086
      %v1088 = vrot.slane %v986, 1
      %v1089 = vrot.slane %v987, 1
      %v1090 = vsel %vm524, %v1088, %v1089
      %v1091 = vrot.slane %v988, 1
      %v1092 = vsel %vm524, %v1089, %v1091
      %v1093 = vrot.slane %v989, 1
      %v1094 = vrot.slane %v990, 1
      %v1095 = vsel %vm524, %v1093, %v1094
      %v1096 = vrot.slane %v991, 1
      %v1097 = vsel %vm524, %v1094, %v1096
      %v1098 = vrot.slane %v992, 1
      %v1099 = vrot.slane %v993, 1
      %v1100 = vsel %vm524, %v1098, %v1099
      %v1101 = vrot.slane %v994, 1
      %v1102 = vsel %vm524, %v1099, %v1101
      %v1103 = vrot.slane %v995, 1
      %v1104 = vrot.slane %v996, 1
      %v1105 = vsel %vm524, %v1103, %v1104
      %v1106 = vrot.slane %v997, 1
      %v1107 = vsel %vm524, %v1104, %v1106
      %v1108 = vrot.slane %v998, 1
      %v1109 = vrot.slane %v999, 1
      %v1110 = vsel %vm524, %v1108, %v1109
      %v1111 = vrot.slane %v1000, 1
      %v1112 = vsel %vm524, %v1109, %v1111
      %v1113 = vrot.slane %v1001, 1
      %v1114 = vrot.slane %v1002, 1
      %v1115 = vsel %vm524, %v1113, %v1114
      %v1116 = vrot.slane %v1003, 1
      %v1117 = vsel %vm524, %v1114, %v1116
      %v1118 = vrot.slane %v1004, 1
      %v1119 = vrot.slane %v1005, 1
      %v1120 = vsel %vm524, %v1118, %v1119
      %v1121 = vrot.slane %v1006, 1
      %v1122 = vsel %vm524, %v1119, %v1121
      %v1123 = vrot.slane %v1007, 1
      %v1124 = vrot.slane %v1008, 1
      %v1125 = vsel %vm524, %v1123, %v1124
      %v1126 = vrot.slane %v1009, 1
      %v1127 = vsel %vm524, %v1124, %v1126
      %v1128 = vrot.slane %v1010, 1
      %v1129 = vrot.slane %v1011, 1
      %v1130 = vsel %vm524, %v1128, %v1129
      %v1131 = vrot.slane %v1012, 1
      %v1132 = vsel %vm524, %v1129, %v1131
      %v1133 = vrot.slane %v1013, 1
      %v1134 = vrot.slane %v1014, 1
      %v1135 = vsel %vm524, %v1133, %v1134
      %v1136 = vrot.slane %v1015, 1
      %v1137 = vsel %vm524, %v1134, %v1136
      %v1138 = vrot.slane %v1016, 1
      %v1139 = vrot.slane %v1017, 1
      %v1140 = vsel %vm524, %v1138, %v1139
      %v1141 = vrot.slane %v1018, 1
      %v1142 = vsel %vm524, %v1139, %v1141
      %v1143 = vrot.slane %v1019, 1
      %v1144 = vrot.slane %v1020, 1
      %v1145 = vsel %vm524, %v1143, %v1144
      %v1146 = vrot.slane %v1021, 1
      %v1147 = vsel %vm524, %v1144, %v1146
      %v1148 = vrot.slane %v1022, 1
      %v1149 = vrot.slane %v1023, 1
      %v1150 = vsel %vm524, %v1148, %v1149
      %v1151 = vrot.slane %v1024, 1
      %v1152 = vsel %vm524, %v1149, %v1151
      %v1185 = vadd.f32 %v944, %v1075
      %v1186 = vadd.f32 %v945, %v1077
      %v1187 = vadd.f32 %v946, %v1080
      %v1188 = vadd.f32 %v947, %v1082
      %v1189 = vadd.f32 %v948, %v1085
      %v1190 = vadd.f32 %v949, %v1087
      %v1191 = vadd.f32 %v950, %v1090
      %v1192 = vadd.f32 %v951, %v1092
      %v1193 = vadd.f32 %v952, %v1095
      %v1194 = vadd.f32 %v953, %v1097
      %v1195 = vadd.f32 %v954, %v1100
      %v1196 = vadd.f32 %v955, %v1102
      %v1197 = vadd.f32 %v956, %v1105
      %v1198 = vadd.f32 %v957, %v1107
      %v1199 = vadd.f32 %v958, %v1110
      %v1200 = vadd.f32 %v959, %v1112
      %v1201 = vadd.f32 %v960, %v1115
      %v1202 = vadd.f32 %v961, %v1117
      %v1203 = vadd.f32 %v962, %v1120
      %v1204 = vadd.f32 %v963, %v1122
      %v1205 = vadd.f32 %v964, %v1125
      %v1206 = vadd.f32 %v965, %v1127
      %v1207 = vadd.f32 %v966, %v1130
      %v1208 = vadd.f32 %v967, %v1132
      %v1209 = vadd.f32 %v968, %v1135
      %v1210 = vadd.f32 %v969, %v1137
      %v1211 = vadd.f32 %v970, %v1140
      %v1212 = vadd.f32 %v971, %v1142
      %v1213 = vadd.f32 %v972, %v1145
      %v1214 = vadd.f32 %v973, %v1147
      %v1215 = vadd.f32 %v974, %v1150
      %v1216 = vadd.f32 %v975, %v1152
      %v1217 = vperm.slane %v360, 5
      %v1218 = vmul.f32 %v309, %v1217
      %v1219 = vmul.f32 %v310, %v1217
      %v1220 = vmul.f32 %v311, %v1217
      %v1221 = vmul.f32 %v312, %v1217
      %v1222 = vmul.f32 %v313, %v1217
      %v1223 = vmul.f32 %v314, %v1217
      %v1224 = vmul.f32 %v315, %v1217
      %v1225 = vmul.f32 %v316, %v1217
      %v1226 = vmul.f32 %v317, %v1217
      %v1227 = vmul.f32 %v318, %v1217
      %v1228 = vmul.f32 %v319, %v1217
      %v1229 = vmul.f32 %v320, %v1217
      %v1230 = vmul.f32 %v321, %v1217
      %v1231 = vmul.f32 %v322, %v1217
      %v1232 = vmul.f32 %v323, %v1217
      %v1233 = vmul.f32 %v324, %v1217
      %v1234 = vmul.f32 %v325, %v1217
      %v1235 = vmul.f32 %v326, %v1217
      %v1236 = vmul.f32 %v327, %v1217
      %v1237 = vmul.f32 %v328, %v1217
      %v1238 = vmul.f32 %v329, %v1217
      %v1239 = vmul.f32 %v330, %v1217
      %v1240 = vmul.f32 %v331, %v1217
      %v1241 = vmul.f32 %v332, %v1217
      %v1242 = vmul.f32 %v333, %v1217
      %v1243 = vmul.f32 %v334, %v1217
      %v1244 = vmul.f32 %v335, %v1217
      %v1245 = vmul.f32 %v336, %v1217
      %v1246 = vmul.f32 %v337, %v1217
      %v1247 = vmul.f32 %v338, %v1217
      %v1248 = vmul.f32 %v339, %v1217
      %v1249 = vmul.f32 %v340, %v1217
      %v1250 = vmul.f32 %v341, %v1217
      %v1251 = vmul.f32 %v342, %v1217
      %v1252 = vmul.f32 %v343, %v1217
      %v1253 = vmul.f32 %v344, %v1217
      %v1254 = vmul.f32 %v345, %v1217
      %v1255 = vmul.f32 %v346, %v1217
      %v1256 = vmul.f32 %v347, %v1217
      %v1257 = vmul.f32 %v348, %v1217
      %v1258 = vmul.f32 %v349, %v1217
      %v1259 = vmul.f32 %v350, %v1217
      %v1260 = vmul.f32 %v351, %v1217
      %v1261 = vmul.f32 %v352, %v1217
      %v1262 = vmul.f32 %v353, %v1217
      %v1263 = vmul.f32 %v354, %v1217
      %v1264 = vmul.f32 %v355, %v1217
      %v1265 = vmul.f32 %v356, %v1217
      %v1314 = vrot.slane %v1218, 2
      %v1315 = vrot.slane %v1219, 2
      %v1316 = vsel %vm766, %v1314, %v1315
      %v1317 = vrot.slane %v1220, 2
      %v1318 = vsel %vm766, %v1315, %v1317
      %v1319 = vrot.slane %v1221, 2
      %v1320 = vrot.slane %v1222, 2
      %v1321 = vsel %vm766, %v1319, %v1320
      %v1322 = vrot.slane %v1223, 2
      %v1323 = vsel %vm766, %v1320, %v1322
      %v1324 = vrot.slane %v1224, 2
      %v1325 = vrot.slane %v1225, 2
      %v1326 = vsel %vm766, %v1324, %v1325
      %v1327 = vrot.slane %v1226, 2
      %v1328 = vsel %vm766, %v1325, %v1327
      %v1329 = vrot.slane %v1227, 2
      %v1330 = vrot.slane %v1228, 2
      %v1331 = vsel %vm766, %v1329, %v1330
      %v1332 = vrot.slane %v1229, 2
      %v1333 = vsel %vm766, %v1330, %v1332
      %v1334 = vrot.slane %v1230, 2
      %v1335 = vrot.slane %v1231, 2
      %v1336 = vsel %vm766, %v1334, %v1335
      %v1337 = vrot.slane %v1232, 2
      %v1338 = vsel %vm766, %v1335, %v1337
      %v1339 = vrot.slane %v1233, 2
      %v1340 = vrot.slane %v1234, 2
      %v1341 = vsel %vm766, %v1339, %v1340
      %v1342 = vrot.slane %v1235, 2
      %v1343 = vsel %vm766, %v1340, %v1342
      %v1344 = vrot.slane %v1236, 2
      %v1345 = vrot.slane %v1237, 2
      %v1346 = vsel %vm766, %v1344, %v1345
      %v1347 = vrot.slane %v1238, 2
      %v1348 = vsel %vm766, %v1345, %v1347
      %v1349 = vrot.slane %v1239, 2
      %v1350 = vrot.slane %v1240, 2
      %v1351 = vsel %vm766, %v1349, %v1350
      %v1352 = vrot.slane %v1241, 2
      %v1353 = vsel %vm766, %v1350, %v1352
      %v1354 = vrot.slane %v1242, 2
      %v1355 = vrot.slane %v1243, 2
      %v1356 = vsel %vm766, %v1354, %v1355
      %v1357 = vrot.slane %v1244, 2
      %v1358 = vsel %vm766, %v1355, %v1357
      %v1359 = vrot.slane %v1245, 2
      %v1360 = vrot.slane %v1246, 2
      %v1361 = vsel %vm766, %v1359, %v1360
      %v1362 = vrot.slane %v1247, 2
      %v1363 = vsel %vm766, %v1360, %v1362
      %v1364 = vrot.slane %v1248, 2
      %v1365 = vrot.slane %v1249, 2
      %v1366 = vsel %vm766, %v1364, %v1365
      %v1367 = vrot.slane %v1250, 2
      %v1368 = vsel %vm766, %v1365, %v1367
      %v1369 = vrot.slane %v1251, 2
      %v1370 = vrot.slane %v1252, 2
      %v1371 = vsel %vm766, %v1369, %v1370
      %v1372 = vrot.slane %v1253, 2
      %v1373 = vsel %vm766, %v1370, %v1372
      %v1374 = vrot.slane %v1254, 2
      %v1375 = vrot.slane %v1255, 2
      %v1376 = vsel %vm766, %v1374, %v1375
      %v1377 = vrot.slane %v1256, 2
      %v1378 = vsel %vm766, %v1375, %v1377
      %v1379 = vrot.slane %v1257, 2
      %v1380 = vrot.slane %v1258, 2
      %v1381 = vsel %vm766, %v1379, %v1380
      %v1382 = vrot.slane %v1259, 2
      %v1383 = vsel %vm766, %v1380, %v1382
      %v1384 = vrot.slane %v1260, 2
      %v1385 = vrot.slane %v1261, 2
      %v1386 = vsel %vm766, %v1384, %v1385
      %v1387 = vrot.slane %v1262, 2
      %v1388 = vsel %vm766, %v1385, %v1387
      %v1389 = vrot.slane %v1263, 2
      %v1390 = vrot.slane %v1264, 2
      %v1391 = vsel %vm766, %v1389, %v1390
      %v1392 = vrot.slane %v1265, 2
      %v1393 = vsel %vm766, %v1390, %v1392
      %v1426 = vadd.f32 %v1185, %v1316
      %v1427 = vadd.f32 %v1186, %v1318
      %v1428 = vadd.f32 %v1187, %v1321
      %v1429 = vadd.f32 %v1188, %v1323
      %v1430 = vadd.f32 %v1189, %v1326
      %v1431 = vadd.f32 %v1190, %v1328
      %v1432 = vadd.f32 %v1191, %v1331
      %v1433 = vadd.f32 %v1192, %v1333
      %v1434 = vadd.f32 %v1193, %v1336
      %v1435 = vadd.f32 %v1194, %v1338
      %v1436 = vadd.f32 %v1195, %v1341
      %v1437 = vadd.f32 %v1196, %v1343
      %v1438 = vadd.f32 %v1197, %v1346
      %v1439 = vadd.f32 %v1198, %v1348
      %v1440 = vadd.f32 %v1199, %v1351
      %v1441 = vadd.f32 %v1200, %v1353
      %v1442 = vadd.f32 %v1201, %v1356
      %v1443 = vadd.f32 %v1202, %v1358
      %v1444 = vadd.f32 %v1203, %v1361
      %v1445 = vadd.f32 %v1204, %v1363
      %v1446 = vadd.f32 %v1205, %v1366
      %v1447 = vadd.f32 %v1206, %v1368
      %v1448 = vadd.f32 %v1207, %v1371
      %v1449 = vadd.f32 %v1208, %v1373
      %v1450 = vadd.f32 %v1209, %v1376
      %v1451 = vadd.f32 %v1210, %v1378
      %v1452 = vadd.f32 %v1211, %v1381
      %v1453 = vadd.f32 %v1212, %v1383
      %v1454 = vadd.f32 %v1213, %v1386
      %v1455 = vadd.f32 %v1214, %v1388
      %v1456 = vadd.f32 %v1215, %v1391
      %v1457 = vadd.f32 %v1216, %v1393
      %v1458 = vperm.slane %v360, 6
      %v1459 = vmul.f32 %v312, %v1458
      %v1460 = vmul.f32 %v313, %v1458
      %v1461 = vmul.f32 %v315, %v1458
      %v1462 = vmul.f32 %v316, %v1458
      %v1463 = vmul.f32 %v318, %v1458
      %v1464 = vmul.f32 %v319, %v1458
      %v1465 = vmul.f32 %v321, %v1458
      %v1466 = vmul.f32 %v322, %v1458
      %v1467 = vmul.f32 %v324, %v1458
      %v1468 = vmul.f32 %v325, %v1458
      %v1469 = vmul.f32 %v327, %v1458
      %v1470 = vmul.f32 %v328, %v1458
      %v1471 = vmul.f32 %v330, %v1458
      %v1472 = vmul.f32 %v331, %v1458
      %v1473 = vmul.f32 %v333, %v1458
      %v1474 = vmul.f32 %v334, %v1458
      %v1475 = vmul.f32 %v336, %v1458
      %v1476 = vmul.f32 %v337, %v1458
      %v1477 = vmul.f32 %v339, %v1458
      %v1478 = vmul.f32 %v340, %v1458
      %v1479 = vmul.f32 %v342, %v1458
      %v1480 = vmul.f32 %v343, %v1458
      %v1481 = vmul.f32 %v345, %v1458
      %v1482 = vmul.f32 %v346, %v1458
      %v1483 = vmul.f32 %v348, %v1458
      %v1484 = vmul.f32 %v349, %v1458
      %v1485 = vmul.f32 %v351, %v1458
      %v1486 = vmul.f32 %v352, %v1458
      %v1487 = vmul.f32 %v354, %v1458
      %v1488 = vmul.f32 %v355, %v1458
      %v1489 = vmul.f32 %v357, %v1458
      %v1490 = vmul.f32 %v358, %v1458
      %v1491 = vadd.f32 %v1426, %v1459
      %v1492 = vadd.f32 %v1427, %v1460
      %v1493 = vadd.f32 %v1428, %v1461
      %v1494 = vadd.f32 %v1429, %v1462
      %v1495 = vadd.f32 %v1430, %v1463
      %v1496 = vadd.f32 %v1431, %v1464
      %v1497 = vadd.f32 %v1432, %v1465
      %v1498 = vadd.f32 %v1433, %v1466
      %v1499 = vadd.f32 %v1434, %v1467
      %v1500 = vadd.f32 %v1435, %v1468
      %v1501 = vadd.f32 %v1436, %v1469
      %v1502 = vadd.f32 %v1437, %v1470
      %v1503 = vadd.f32 %v1438, %v1471
      %v1504 = vadd.f32 %v1439, %v1472
      %v1505 = vadd.f32 %v1440, %v1473
      %v1506 = vadd.f32 %v1441, %v1474
      %v1507 = vadd.f32 %v1442, %v1475
      %v1508 = vadd.f32 %v1443, %v1476
      %v1509 = vadd.f32 %v1444, %v1477
      %v1510 = vadd.f32 %v1445, %v1478
      %v1511 = vadd.f32 %v1446, %v1479
      %v1512 = vadd.f32 %v1447, %v1480
      %v1513 = vadd.f32 %v1448, %v1481
      %v1514 = vadd.f32 %v1449, %v1482
      %v1515 = vadd.f32 %v1450, %v1483
      %v1516 = vadd.f32 %v1451, %v1484
      %v1517 = vadd.f32 %v1452, %v1485
      %v1518 = vadd.f32 %v1453, %v1486
      %v1519 = vadd.f32 %v1454, %v1487
      %v1520 = vadd.f32 %v1455, %v1488
      %v1521 = vadd.f32 %v1456, %v1489
      %v1522 = vadd.f32 %v1457, %v1490
      %v1523 = vperm.slane %v360, 7
      %v1524 = vmul.f32 %v312, %v1523
      %v1525 = vmul.f32 %v313, %v1523
      %v1526 = vmul.f32 %v314, %v1523
      %v1527 = vmul.f32 %v315, %v1523
      %v1528 = vmul.f32 %v316, %v1523
      %v1529 = vmul.f32 %v317, %v1523
      %v1530 = vmul.f32 %v318, %v1523
      %v1531 = vmul.f32 %v319, %v1523
      %v1532 = vmul.f32 %v320, %v1523
      %v1533 = vmul.f32 %v321, %v1523
      %v1534 = vmul.f32 %v322, %v1523
      %v1535 = vmul.f32 %v323, %v1523
      %v1536 = vmul.f32 %v324, %v1523
      %v1537 = vmul.f32 %v325, %v1523
      %v1538 = vmul.f32 %v326, %v1523
      %v1539 = vmul.f32 %v327, %v1523
      %v1540 = vmul.f32 %v328, %v1523
      %v1541 = vmul.f32 %v329, %v1523
      %v1542 = vmul.f32 %v330, %v1523
      %v1543 = vmul.f32 %v331, %v1523
      %v1544 = vmul.f32 %v332, %v1523
      %v1545 = vmul.f32 %v333, %v1523
      %v1546 = vmul.f32 %v334, %v1523
      %v1547 = vmul.f32 %v335, %v1523
      %v1548 = vmul.f32 %v336, %v1523
      %v1549 = vmul.f32 %v337, %v1523
      %v1550 = vmul.f32 %v338, %v1523
      %v1551 = vmul.f32 %v339, %v1523
      %v1552 = vmul.f32 %v340, %v1523
      %v1553 = vmul.f32 %v341, %v1523
      %v1554 = vmul.f32 %v342, %v1523
      %v1555 = vmul.f32 %v343, %v1523
      %v1556 = vmul.f32 %v344, %v1523
      %v1557 = vmul.f32 %v345, %v1523
      %v1558 = vmul.f32 %v346, %v1523
      %v1559 = vmul.f32 %v347, %v1523
      %v1560 = vmul.f32 %v348, %v1523
      %v1561 = vmul.f32 %v349, %v1523
      %v1562 = vmul.f32 %v350, %v1523
      %v1563 = vmul.f32 %v351, %v1523
      %v1564 = vmul.f32 %v352, %v1523
      %v1565 = vmul.f32 %v353, %v1523
      %v1566 = vmul.f32 %v354, %v1523
      %v1567 = vmul.f32 %v355, %v1523
      %v1568 = vmul.f32 %v356, %v1523
      %v1569 = vmul.f32 %v357, %v1523
      %v1570 = vmul.f32 %v358, %v1523
      %v1571 = vmul.f32 %v359, %v1523
      %v1620 = vrot.slane %v1524, 1
      %v1621 = vrot.slane %v1525, 1
      %v1622 = vsel %vm524, %v1620, %v1621
      %v1623 = vrot.slane %v1526, 1
      %v1624 = vsel %vm524, %v1621, %v1623
      %v1625 = vrot.slane %v1527, 1
      %v1626 = vrot.slane %v1528, 1
      %v1627 = vsel %vm524, %v1625, %v1626
      %v1628 = vrot.slane %v1529, 1
      %v1629 = vsel %vm524, %v1626, %v1628
      %v1630 = vrot.slane %v1530, 1
      %v1631 = vrot.slane %v1531, 1
      %v1632 = vsel %vm524, %v1630, %v1631
      %v1633 = vrot.slane %v1532, 1
      %v1634 = vsel %vm524, %v1631, %v1633
      %v1635 = vrot.slane %v1533, 1
      %v1636 = vrot.slane %v1534, 1
      %v1637 = vsel %vm524, %v1635, %v1636
      %v1638 = vrot.slane %v1535, 1
      %v1639 = vsel %vm524, %v1636, %v1638
      %v1640 = vrot.slane %v1536, 1
      %v1641 = vrot.slane %v1537, 1
      %v1642 = vsel %vm524, %v1640, %v1641
      %v1643 = vrot.slane %v1538, 1
      %v1644 = vsel %vm524, %v1641, %v1643
      %v1645 = vrot.slane %v1539, 1
      %v1646 = vrot.slane %v1540, 1
      %v1647 = vsel %vm524, %v1645, %v1646
      %v1648 = vrot.slane %v1541, 1
      %v1649 = vsel %vm524, %v1646, %v1648
      %v1650 = vrot.slane %v1542, 1
      %v1651 = vrot.slane %v1543, 1
      %v1652 = vsel %vm524, %v1650, %v1651
      %v1653 = vrot.slane %v1544, 1
      %v1654 = vsel %vm524, %v1651, %v1653
      %v1655 = vrot.slane %v1545, 1
      %v1656 = vrot.slane %v1546, 1
      %v1657 = vsel %vm524, %v1655, %v1656
      %v1658 = vrot.slane %v1547, 1
      %v1659 = vsel %vm524, %v1656, %v1658
      %v1660 = vrot.slane %v1548, 1
      %v1661 = vrot.slane %v1549, 1
      %v1662 = vsel %vm524, %v1660, %v1661
      %v1663 = vrot.slane %v1550, 1
      %v1664 = vsel %vm524, %v1661, %v1663
      %v1665 = vrot.slane %v1551, 1
      %v1666 = vrot.slane %v1552, 1
      %v1667 = vsel %vm524, %v1665, %v1666
      %v1668 = vrot.slane %v1553, 1
      %v1669 = vsel %vm524, %v1666, %v1668
      %v1670 = vrot.slane %v1554, 1
      %v1671 = vrot.slane %v1555, 1
      %v1672 = vsel %vm524, %v1670, %v1671
      %v1673 = vrot.slane %v1556, 1
      %v1674 = vsel %vm524, %v1671, %v1673
      %v1675 = vrot.slane %v1557, 1
      %v1676 = vrot.slane %v1558, 1
      %v1677 = vsel %vm524, %v1675, %v1676
      %v1678 = vrot.slane %v1559, 1
      %v1679 = vsel %vm524, %v1676, %v1678
      %v1680 = vrot.slane %v1560, 1
      %v1681 = vrot.slane %v1561, 1
      %v1682 = vsel %vm524, %v1680, %v1681
      %v1683 = vrot.slane %v1562, 1
      %v1684 = vsel %vm524, %v1681, %v1683
      %v1685 = vrot.slane %v1563, 1
      %v1686 = vrot.slane %v1564, 1
      %v1687 = vsel %vm524, %v1685, %v1686
      %v1688 = vrot.slane %v1565, 1
      %v1689 = vsel %vm524, %v1686, %v1688
      %v1690 = vrot.slane %v1566, 1
      %v1691 = vrot.slane %v1567, 1
      %v1692 = vsel %vm524, %v1690, %v1691
      %v1693 = vrot.slane %v1568, 1
      %v1694 = vsel %vm524, %v1691, %v1693
      %v1695 = vrot.slane %v1569, 1
      %v1696 = vrot.slane %v1570, 1
      %v1697 = vsel %vm524, %v1695, %v1696
      %v1698 = vrot.slane %v1571, 1
      %v1699 = vsel %vm524, %v1696, %v1698
      %v1732 = vadd.f32 %v1491, %v1622
      %v1733 = vadd.f32 %v1492, %v1624
      %v1734 = vadd.f32 %v1493, %v1627
      %v1735 = vadd.f32 %v1494, %v1629
      %v1736 = vadd.f32 %v1495, %v1632
      %v1737 = vadd.f32 %v1496, %v1634
      %v1738 = vadd.f32 %v1497, %v1637
      %v1739 = vadd.f32 %v1498, %v1639
      %v1740 = vadd.f32 %v1499, %v1642
      %v1741 = vadd.f32 %v1500, %v1644
      %v1742 = vadd.f32 %v1501, %v1647
      %v1743 = vadd.f32 %v1502, %v1649
      %v1744 = vadd.f32 %v1503, %v1652
      %v1745 = vadd.f32 %v1504, %v1654
      %v1746 = vadd.f32 %v1505, %v1657
      %v1747 = vadd.f32 %v1506, %v1659
      %v1748 = vadd.f32 %v1507, %v1662
      %v1749 = vadd.f32 %v1508, %v1664
      %v1750 = vadd.f32 %v1509, %v1667
      %v1751 = vadd.f32 %v1510, %v1669
      %v1752 = vadd.f32 %v1511, %v1672
      %v1753 = vadd.f32 %v1512, %v1674
      %v1754 = vadd.f32 %v1513, %v1677
      %v1755 = vadd.f32 %v1514, %v1679
      %v1756 = vadd.f32 %v1515, %v1682
      %v1757 = vadd.f32 %v1516, %v1684
      %v1758 = vadd.f32 %v1517, %v1687
      %v1759 = vadd.f32 %v1518, %v1689
      %v1760 = vadd.f32 %v1519, %v1692
      %v1761 = vadd.f32 %v1520, %v1694
      %v1762 = vadd.f32 %v1521, %v1697
      %v1763 = vadd.f32 %v1522, %v1699
      %v1764 = vperm.slane %v361, 0
      %v1765 = vmul.f32 %v312, %v1764
      %v1766 = vmul.f32 %v313, %v1764
      %v1767 = vmul.f32 %v314, %v1764
      %v1768 = vmul.f32 %v315, %v1764
      %v1769 = vmul.f32 %v316, %v1764
      %v1770 = vmul.f32 %v317, %v1764
      %v1771 = vmul.f32 %v318, %v1764
      %v1772 = vmul.f32 %v319, %v1764
      %v1773 = vmul.f32 %v320, %v1764
      %v1774 = vmul.f32 %v321, %v1764
      %v1775 = vmul.f32 %v322, %v1764
      %v1776 = vmul.f32 %v323, %v1764
      %v1777 = vmul.f32 %v324, %v1764
      %v1778 = vmul.f32 %v325, %v1764
      %v1779 = vmul.f32 %v326, %v1764
      %v1780 = vmul.f32 %v327, %v1764
      %v1781 = vmul.f32 %v328, %v1764
      %v1782 = vmul.f32 %v329, %v1764
      %v1783 = vmul.f32 %v330, %v1764
      %v1784 = vmul.f32 %v331, %v1764
      %v1785 = vmul.f32 %v332, %v1764
      %v1786 = vmul.f32 %v333, %v1764
      %v1787 = vmul.f32 %v334, %v1764
      %v1788 = vmul.f32 %v335, %v1764
      %v1789 = vmul.f32 %v336, %v1764
      %v1790 = vmul.f32 %v337, %v1764
      %v1791 = vmul.f32 %v338, %v1764
      %v1792 = vmul.f32 %v339, %v1764
      %v1793 = vmul.f32 %v340, %v1764
      %v1794 = vmul.f32 %v341, %v1764
      %v1795 = vmul.f32 %v342, %v1764
      %v1796 = vmul.f32 %v343, %v1764
      %v1797 = vmul.f32 %v344, %v1764
      %v1798 = vmul.f32 %v345, %v1764
      %v1799 = vmul.f32 %v346, %v1764
      %v1800 = vmul.f32 %v347, %v1764
      %v1801 = vmul.f32 %v348, %v1764
      %v1802 = vmul.f32 %v349, %v1764
      %v1803 = vmul.f32 %v350, %v1764
      %v1804 = vmul.f32 %v351, %v1764
      %v1805 = vmul.f32 %v352, %v1764
      %v1806 = vmul.f32 %v353, %v1764
      %v1807 = vmul.f32 %v354, %v1764
      %v1808 = vmul.f32 %v355, %v1764
      %v1809 = vmul.f32 %v356, %v1764
      %v1810 = vmul.f32 %v357, %v1764
      %v1811 = vmul.f32 %v358, %v1764
      %v1812 = vmul.f32 %v359, %v1764
      %v1861 = vrot.slane %v1765, 2
      %v1862 = vrot.slane %v1766, 2
      %v1863 = vsel %vm766, %v1861, %v1862
      %v1864 = vrot.slane %v1767, 2
      %v1865 = vsel %vm766, %v1862, %v1864
      %v1866 = vrot.slane %v1768, 2
      %v1867 = vrot.slane %v1769, 2
      %v1868 = vsel %vm766, %v1866, %v1867
      %v1869 = vrot.slane %v1770, 2
      %v1870 = vsel %vm766, %v1867, %v1869
      %v1871 = vrot.slane %v1771, 2
      %v1872 = vrot.slane %v1772, 2
      %v1873 = vsel %vm766, %v1871, %v1872
      %v1874 = vrot.slane %v1773, 2
      %v1875 = vsel %vm766, %v1872, %v1874
      %v1876 = vrot.slane %v1774, 2
      %v1877 = vrot.slane %v1775, 2
      %v1878 = vsel %vm766, %v1876, %v1877
      %v1879 = vrot.slane %v1776, 2
      %v1880 = vsel %vm766, %v1877, %v1879
      %v1881 = vrot.slane %v1777, 2
      %v1882 = vrot.slane %v1778, 2
      %v1883 = vsel %vm766, %v1881, %v1882
      %v1884 = vrot.slane %v1779, 2
      %v1885 = vsel %vm766, %v1882, %v1884
      %v1886 = vrot.slane %v1780, 2
      %v1887 = vrot.slane %v1781, 2
      %v1888 = vsel %vm766, %v1886, %v1887
      %v1889 = vrot.slane %v1782, 2
      %v1890 = vsel %vm766, %v1887, %v1889
      %v1891 = vrot.slane %v1783, 2
      %v1892 = vrot.slane %v1784, 2
      %v1893 = vsel %vm766, %v1891, %v1892
      %v1894 = vrot.slane %v1785, 2
      %v1895 = vsel %vm766, %v1892, %v1894
      %v1896 = vrot.slane %v1786, 2
      %v1897 = vrot.slane %v1787, 2
      %v1898 = vsel %vm766, %v1896, %v1897
      %v1899 = vrot.slane %v1788, 2
      %v1900 = vsel %vm766, %v1897, %v1899
      %v1901 = vrot.slane %v1789, 2
      %v1902 = vrot.slane %v1790, 2
      %v1903 = vsel %vm766, %v1901, %v1902
      %v1904 = vrot.slane %v1791, 2
      %v1905 = vsel %vm766, %v1902, %v1904
      %v1906 = vrot.slane %v1792, 2
      %v1907 = vrot.slane %v1793, 2
      %v1908 = vsel %vm766, %v1906, %v1907
      %v1909 = vrot.slane %v1794, 2
      %v1910 = vsel %vm766, %v1907, %v1909
      %v1911 = vrot.slane %v1795, 2
      %v1912 = vrot.slane %v1796, 2
      %v1913 = vsel %vm766, %v1911, %v1912
      %v1914 = vrot.slane %v1797, 2
      %v1915 = vsel %vm766, %v1912, %v1914
      %v1916 = vrot.slane %v1798, 2
      %v1917 = vrot.slane %v1799, 2
      %v1918 = vsel %vm766, %v1916, %v1917
      %v1919 = vrot.slane %v1800, 2
      %v1920 = vsel %vm766, %v1917, %v1919
      %v1921 = vrot.slane %v1801, 2
      %v1922 = vrot.slane %v1802, 2
      %v1923 = vsel %vm766, %v1921, %v1922
      %v1924 = vrot.slane %v1803, 2
      %v1925 = vsel %vm766, %v1922, %v1924
      %v1926 = vrot.slane %v1804, 2
      %v1927 = vrot.slane %v1805, 2
      %v1928 = vsel %vm766, %v1926, %v1927
      %v1929 = vrot.slane %v1806, 2
      %v1930 = vsel %vm766, %v1927, %v1929
      %v1931 = vrot.slane %v1807, 2
      %v1932 = vrot.slane %v1808, 2
      %v1933 = vsel %vm766, %v1931, %v1932
      %v1934 = vrot.slane %v1809, 2
      %v1935 = vsel %vm766, %v1932, %v1934
      %v1936 = vrot.slane %v1810, 2
      %v1937 = vrot.slane %v1811, 2
      %v1938 = vsel %vm766, %v1936, %v1937
      %v1939 = vrot.slane %v1812, 2
      %v1940 = vsel %vm766, %v1937, %v1939
      %v1973 = vadd.f32 %v1732, %v1863
      %v1974 = vadd.f32 %v1733, %v1865
      %v1975 = vadd.f32 %v1734, %v1868
      %v1976 = vadd.f32 %v1735, %v1870
      %v1977 = vadd.f32 %v1736, %v1873
      %v1978 = vadd.f32 %v1737, %v1875
      %v1979 = vadd.f32 %v1738, %v1878
      %v1980 = vadd.f32 %v1739, %v1880
      %v1981 = vadd.f32 %v1740, %v1883
      %v1982 = vadd.f32 %v1741, %v1885
      %v1983 = vadd.f32 %v1742, %v1888
      %v1984 = vadd.f32 %v1743, %v1890
      %v1985 = vadd.f32 %v1744, %v1893
      %v1986 = vadd.f32 %v1745, %v1895
      %v1987 = vadd.f32 %v1746, %v1898
      %v1988 = vadd.f32 %v1747, %v1900
      %v1989 = vadd.f32 %v1748, %v1903
      %v1990 = vadd.f32 %v1749, %v1905
      %v1991 = vadd.f32 %v1750, %v1908
      %v1992 = vadd.f32 %v1751, %v1910
      %v1993 = vadd.f32 %v1752, %v1913
      %v1994 = vadd.f32 %v1753, %v1915
      %v1995 = vadd.f32 %v1754, %v1918
      %v1996 = vadd.f32 %v1755, %v1920
      %v1997 = vadd.f32 %v1756, %v1923
      %v1998 = vadd.f32 %v1757, %v1925
      %v1999 = vadd.f32 %v1758, %v1928
      %v2000 = vadd.f32 %v1759, %v1930
      %v2001 = vadd.f32 %v1760, %v1933
      %v2002 = vadd.f32 %v1761, %v1935
      %v2003 = vadd.f32 %v1762, %v1938
      %v2004 = vadd.f32 %v1763, %v1940
      %vm2005 = vcmp.gt.f32.partialorder %v1973, 0.0
      %vm2006 = vcmp.gt.f32.partialorder %v1974, 0.0
      %vm2007 = vcmp.gt.f32.partialorder %v1975, 0.0
      %vm2008 = vcmp.gt.f32.partialorder %v1976, 0.0
      %vm2009 = vcmp.gt.f32.partialorder %v1977, 0.0
      %vm2010 = vcmp.gt.f32.partialorder %v1978, 0.0
      %vm2011 = vcmp.gt.f32.partialorder %v1979, 0.0
      %vm2012 = vcmp.gt.f32.partialorder %v1980, 0.0
      %vm2013 = vcmp.gt.f32.partialorder %v1981, 0.0
      %vm2014 = vcmp.gt.f32.partialorder %v1982, 0.0
      %vm2015 = vcmp.gt.f32.partialorder %v1983, 0.0
      %vm2016 = vcmp.gt.f32.partialorder %v1984, 0.0
      %vm2017 = vcmp.gt.f32.partialorder %v1985, 0.0
      %vm2018 = vcmp.gt.f32.partialorder %v1986, 0.0
      %vm2019 = vcmp.gt.f32.partialorder %v1987, 0.0
      %vm2020 = vcmp.gt.f32.partialorder %v1988, 0.0
      %vm2021 = vcmp.gt.f32.partialorder %v1989, 0.0
      %vm2022 = vcmp.gt.f32.partialorder %v1990, 0.0
      %vm2023 = vcmp.gt.f32.partialorder %v1991, 0.0
      %vm2024 = vcmp.gt.f32.partialorder %v1992, 0.0
      %vm2025 = vcmp.gt.f32.partialorder %v1993, 0.0
      %vm2026 = vcmp.gt.f32.partialorder %v1994, 0.0
      %vm2027 = vcmp.gt.f32.partialorder %v1995, 0.0
      %vm2028 = vcmp.gt.f32.partialorder %v1996, 0.0
      %vm2029 = vcmp.gt.f32.partialorder %v1997, 0.0
      %vm2030 = vcmp.gt.f32.partialorder %v1998, 0.0
      %vm2031 = vcmp.gt.f32.partialorder %v1999, 0.0
      %vm2032 = vcmp.gt.f32.partialorder %v2000, 0.0
      %vm2033 = vcmp.gt.f32.partialorder %v2001, 0.0
      %vm2034 = vcmp.gt.f32.partialorder %v2002, 0.0
      %vm2035 = vcmp.gt.f32.partialorder %v2003, 0.0
      %vm2036 = vcmp.gt.f32.partialorder %v2004, 0.0
      %v2037 = vmul.f32 %v1973, 0.1
      %v2038 = vmul.f32 %v1974, 0.1
      %v2039 = vmul.f32 %v1975, 0.1
      %v2040 = vmul.f32 %v1976, 0.1
      %v2041 = vmul.f32 %v1977, 0.1
      %v2042 = vmul.f32 %v1978, 0.1
      %v2043 = vmul.f32 %v1979, 0.1
      %v2044 = vmul.f32 %v1980, 0.1
      %v2045 = vmul.f32 %v1981, 0.1
      %v2046 = vmul.f32 %v1982, 0.1
      %v2047 = vmul.f32 %v1983, 0.1
      %v2048 = vmul.f32 %v1984, 0.1
      %v2049 = vmul.f32 %v1985, 0.1
      %v2050 = vmul.f32 %v1986, 0.1
      %v2051 = vmul.f32 %v1987, 0.1
      %v2052 = vmul.f32 %v1988, 0.1
      %v2053 = vmul.f32 %v1989, 0.1
      %v2054 = vmul.f32 %v1990, 0.1
      %v2055 = vmul.f32 %v1991, 0.1
      %v2056 = vmul.f32 %v1992, 0.1
      %v2057 = vmul.f32 %v1993, 0.1
      %v2058 = vmul.f32 %v1994, 0.1
      %v2059 = vmul.f32 %v1995, 0.1
      %v2060 = vmul.f32 %v1996, 0.1
      %v2061 = vmul.f32 %v1997, 0.1
      %v2062 = vmul.f32 %v1998, 0.1
      %v2063 = vmul.f32 %v1999, 0.1
      %v2064 = vmul.f32 %v2000, 0.1
      %v2065 = vmul.f32 %v2001, 0.1
      %v2066 = vmul.f32 %v2002, 0.1
      %v2067 = vmul.f32 %v2003, 0.1
      %v2068 = vmul.f32 %v2004, 0.1
      %v2069 = vsel %vm2005, %v1973, %v2037
      %v2070 = vsel %vm2006, %v1974, %v2038
      %v2071 = vsel %vm2007, %v1975, %v2039
      %v2072 = vsel %vm2008, %v1976, %v2040
      %v2073 = vsel %vm2009, %v1977, %v2041
      %v2074 = vsel %vm2010, %v1978, %v2042
      %v2075 = vsel %vm2011, %v1979, %v2043
      %v2076 = vsel %vm2012, %v1980, %v2044
      %v2077 = vsel %vm2013, %v1981, %v2045
      %v2078 = vsel %vm2014, %v1982, %v2046
      %v2079 = vsel %vm2015, %v1983, %v2047
      %v2080 = vsel %vm2016, %v1984, %v2048
      %v2081 = vsel %vm2017, %v1985, %v2049
      %v2082 = vsel %vm2018, %v1986, %v2050
      %v2083 = vsel %vm2019, %v1987, %v2051
      %v2084 = vsel %vm2020, %v1988, %v2052
      %v2085 = vsel %vm2021, %v1989, %v2053
      %v2086 = vsel %vm2022, %v1990, %v2054
      %v2087 = vsel %vm2023, %v1991, %v2055
      %v2088 = vsel %vm2024, %v1992, %v2056
      %v2089 = vsel %vm2025, %v1993, %v2057
      %v2090 = vsel %vm2026, %v1994, %v2058
      %v2091 = vsel %vm2027, %v1995, %v2059
      %v2092 = vsel %vm2028, %v1996, %v2060
      %v2093 = vsel %vm2029, %v1997, %v2061
      %v2094 = vsel %vm2030, %v1998, %v2062
      %v2095 = vsel %vm2031, %v1999, %v2063
      %v2096 = vsel %vm2032, %v2000, %v2064
      %v2097 = vsel %vm2033, %v2001, %v2065
      %v2098 = vsel %vm2034, %v2002, %v2066
      %v2099 = vsel %vm2035, %v2003, %v2067
      %v2100 = vsel %vm2036, %v2004, %v2068
      %v2101 = vld [vmem:[%s3] sm:$0xff]
      %v2102 = vld [vmem:[%s3 + $0x8] sm:$0xff]
      %v2103 = vld [vmem:[%s3 + $0x10] sm:$0xff]
      %v2104 = vld [vmem:[%s3 + $0x18] sm:$0xff]
      %v2105 = vld [vmem:[%s3 + $0x20] sm:$0xff]
      %v2106 = vld [vmem:[%s3 + $0x28] sm:$0xff]
      %v2107 = vld [vmem:[%s3 + $0x30] sm:$0xff]
      %v2108 = vld [vmem:[%s3 + $0x38] sm:$0xff]
      %v2109 = vld [vmem:[%s4] sm:$0x1]
      %v2111 = vperm.slane %v2109, 0
      %vm2113 = vcmask 523264
      %v2115 = vsel %vm2113, %v2069, 0
      %v2118 = vsel %vm2113, %v2070, 0
      %v2121 = vsel %vm2113, %v2071, 0
      %v2124 = vsel %vm2113, %v2072, 0
      %v2127 = vsel %vm2113, %v2073, 0
      %v2130 = vsel %vm2113, %v2074, 0
      %v2133 = vsel %vm2113, %v2075, 0
      %v2136 = vsel %vm2113, %v2076, 0
      %v2139 = vsel %vm2113, %v2077, 0
      %v2142 = vsel %vm2113, %v2078, 0
      %v2145 = vsel %vm2113, %v2079, 0
      %v2148 = vsel %vm2113, %v2080, 0
      %v2151 = vsel %vm2113, %v2081, 0
      %v2154 = vsel %vm2113, %v2082, 0
      %v2157 = vsel %vm2113, %v2083, 0
      %v2160 = vsel %vm2113, %v2084, 0
      %v2163 = vsel %vm2113, %v2085, 0
      %v2166 = vsel %vm2113, %v2086, 0
      %v2169 = vsel %vm2113, %v2087, 0
      %v2172 = vsel %vm2113, %v2088, 0
      %v2175 = vsel %vm2113, %v2089, 0
      %v2178 = vsel %vm2113, %v2090, 0
      %v2181 = vsel %vm2113, %v2091, 0
      %v2184 = vsel %vm2113, %v2092, 0
      %v2187 = vsel %vm2113, %v2093, 0
      %v2190 = vsel %vm2113, %v2094, 0
      %v2193 = vsel %vm2113, %v2095, 0
      %v2196 = vsel %vm2113, %v2096, 0
      %v2199 = vsel %vm2113, %v2097, 0
      %v2202 = vsel %vm2113, %v2098, 0
      %v2205 = vsel %vm2113, %v2099, 0
      %v2208 = vsel %vm2113, %v2100, 0
      %2210 = vmatpush.msra.mxu0 0.0
      %2211 = vmatpush.msra.mxu0 0.0
      %2212 = vmatpush.msra.mxu0 0.0
      %2213 = vmatpush.msra.mxu0 0.0
      %2214 = vmatpush.msra.mxu0 0.0
      %2215 = vmatpush.msra.mxu0 0.0
      %2216 = vmatpush.msra.mxu0 0.0
      %2217 = vmatpush.msra.mxu0 0.0
      %2218 = vmatpush.msra.mxu0 %v2108
      %2219 = vmatpush.msra.mxu0 %v2107
      %2220 = vmatpush.msra.mxu0 %v2106
      %2221 = vmatpush.msra.mxu0 %v2105
      %2222 = vmatpush.msra.mxu0 %v2104
      %2223 = vmatpush.msra.mxu0 %v2103
      %2224 = vmatpush.msra.mxu0 %v2102
      %2225 = vmatpush.msra.mxu0 %v2101
      %2226 = vmatmul.f32.gmra.mxu0 %v2115
      %v2227 = vpop.f32.mrf.mxu0
      %v2228 = vadd.f32 %v2111, %v2227
      %2229 = vmatmul.f32.gmra.mxu0 %v2118
      %v2230 = vpop.f32.mrf.mxu0
      %v2231 = vadd.f32 %v2111, %v2230
      %2232 = vmatmul.f32.gmra.mxu0 %v2121
      %v2233 = vpop.f32.mrf.mxu0
      %v2234 = vadd.f32 %v2111, %v2233
      %2235 = vmatmul.f32.gmra.mxu0 %v2124
      %v2236 = vpop.f32.mrf.mxu0
      %v2237 = vadd.f32 %v2111, %v2236
      %2238 = vmatmul.f32.gmra.mxu0 %v2127
      %v2239 = vpop.f32.mrf.mxu0
      %v2240 = vadd.f32 %v2111, %v2239
      %2241 = vmatmul.f32.gmra.mxu0 %v2130
      %v2242 = vpop.f32.mrf.mxu0
      %v2243 = vadd.f32 %v2111, %v2242
      %2244 = vmatmul.f32.gmra.mxu0 %v2133
      %v2245 = vpop.f32.mrf.mxu0
      %v2246 = vadd.f32 %v2111, %v2245
      %2247 = vmatmul.f32.gmra.mxu0 %v2136
      %v2248 = vpop.f32.mrf.mxu0
      %v2249 = vadd.f32 %v2111, %v2248
      %2250 = vmatmul.f32.gmra.mxu0 %v2139
      %v2251 = vpop.f32.mrf.mxu0
      %v2252 = vadd.f32 %v2111, %v2251
      %2253 = vmatmul.f32.gmra.mxu0 %v2142
      %v2254 = vpop.f32.mrf.mxu0
      %v2255 = vadd.f32 %v2111, %v2254
      %2256 = vmatmul.f32.gmra.mxu0 %v2145
      %v2257 = vpop.f32.mrf.mxu0
      %v2258 = vadd.f32 %v2111, %v2257
      %2259 = vmatmul.f32.gmra.mxu0 %v2148
      %v2260 = vpop.f32.mrf.mxu0
      %v2261 = vadd.f32 %v2111, %v2260
      %2262 = vmatmul.f32.gmra.mxu0 %v2151
      %v2263 = vpop.f32.mrf.mxu0
      %v2264 = vadd.f32 %v2111, %v2263
      %2265 = vmatmul.f32.gmra.mxu0 %v2154
      %v2266 = vpop.f32.mrf.mxu0
      %v2267 = vadd.f32 %v2111, %v2266
      %2268 = vmatmul.f32.gmra.mxu0 %v2157
      %v2269 = vpop.f32.mrf.mxu0
      %v2270 = vadd.f32 %v2111, %v2269
      %2271 = vmatmul.f32.gmra.mxu0 %v2160
      %v2272 = vpop.f32.mrf.mxu0
      %v2273 = vadd.f32 %v2111, %v2272
      %2274 = vmatmul.f32.gmra.mxu0 %v2163
      %v2275 = vpop.f32.mrf.mxu0
      %v2276 = vadd.f32 %v2111, %v2275
      %2277 = vmatmul.f32.gmra.mxu0 %v2166
      %v2278 = vpop.f32.mrf.mxu0
      %v2279 = vadd.f32 %v2111, %v2278
      %2280 = vmatmul.f32.gmra.mxu0 %v2169
      %v2281 = vpop.f32.mrf.mxu0
      %v2282 = vadd.f32 %v2111, %v2281
      %2283 = vmatmul.f32.gmra.mxu0 %v2172
      %v2284 = vpop.f32.mrf.mxu0
      %v2285 = vadd.f32 %v2111, %v2284
      %2286 = vmatmul.f32.gmra.mxu0 %v2175
      %v2287 = vpop.f32.mrf.mxu0
      %v2288 = vadd.f32 %v2111, %v2287
      %2289 = vmatmul.f32.gmra.mxu0 %v2178
      %v2290 = vpop.f32.mrf.mxu0
      %v2291 = vadd.f32 %v2111, %v2290
      %2292 = vmatmul.f32.gmra.mxu0 %v2181
      %v2293 = vpop.f32.mrf.mxu0
      %v2294 = vadd.f32 %v2111, %v2293
      %2295 = vmatmul.f32.gmra.mxu0 %v2184
      %v2296 = vpop.f32.mrf.mxu0
      %v2297 = vadd.f32 %v2111, %v2296
      %2298 = vmatmul.f32.gmra.mxu0 %v2187
      %v2299 = vpop.f32.mrf.mxu0
      %v2300 = vadd.f32 %v2111, %v2299
      %2301 = vmatmul.f32.gmra.mxu0 %v2190
      %v2302 = vpop.f32.mrf.mxu0
      %v2303 = vadd.f32 %v2111, %v2302
      %2304 = vmatmul.f32.gmra.mxu0 %v2193
      %v2305 = vpop.f32.mrf.mxu0
      %v2306 = vadd.f32 %v2111, %v2305
      %2307 = vmatmul.f32.gmra.mxu0 %v2196
      %v2308 = vpop.f32.mrf.mxu0
      %v2309 = vadd.f32 %v2111, %v2308
      %2310 = vmatmul.f32.gmra.mxu0 %v2199
      %v2311 = vpop.f32.mrf.mxu0
      %v2312 = vadd.f32 %v2111, %v2311
      %2313 = vmatmul.f32.gmra.mxu0 %v2202
      %v2314 = vpop.f32.mrf.mxu0
      %v2315 = vadd.f32 %v2111, %v2314
      %2316 = vmatmul.f32.gmra.mxu0 %v2205
      %v2317 = vpop.f32.mrf.mxu0
      %v2318 = vadd.f32 %v2111, %v2317
      %2319 = vmatmul.f32.gmra.mxu0 %v2208
      %v2320 = vpop.f32.mrf.mxu0
      %v2321 = vadd.f32 %v2111, %v2320
      %2322 = vdwg.mxu0
      %v2323 = vld [vmem:[%s292] sm:$0xff]
      %v2324 = vld [vmem:[%s292 + $0x8] sm:$0xff]
      %v2325 = vld [vmem:[%s292 + $0x10] sm:$0xff]
      %v2326 = vld [vmem:[%s292 + $0x18] sm:$0xff]
      %v2327 = vld [vmem:[%s292 + $0x20] sm:$0xff]
      %v2328 = vld [vmem:[%s292 + $0x28] sm:$0xff]
      %v2329 = vld [vmem:[%s292 + $0x30] sm:$0xff]
      %v2330 = vld [vmem:[%s292 + $0x38] sm:$0xff]
      %v2331 = vld [vmem:[%s292 + $0x40] sm:$0xff]
      %v2332 = vld [vmem:[%s292 + $0x48] sm:$0xff]
      %v2333 = vld [vmem:[%s292 + $0x50] sm:$0xff]
      %v2334 = vld [vmem:[%s292 + $0x58] sm:$0xff]
      %v2335 = vld [vmem:[%s292 + $0x60] sm:$0xff]
      %v2336 = vld [vmem:[%s292 + $0x68] sm:$0xff]
      %v2337 = vld [vmem:[%s292 + $0x70] sm:$0xff]
      %v2338 = vld [vmem:[%s292 + $0x78] sm:$0xff]
      %v2339 = vld [vmem:[%s292 + $0x80] sm:$0xff]
      %v2340 = vld [vmem:[%s292 + $0x88] sm:$0xff]
      %v2341 = vld [vmem:[%s292 + $0x90] sm:$0xff]
      %v2342 = vld [vmem:[%s292 + $0x98] sm:$0xff]
      %v2343 = vld [vmem:[%s292 + $0xa0] sm:$0xff]
      %v2344 = vld [vmem:[%s292 + $0xa8] sm:$0xff]
      %v2345 = vld [vmem:[%s292 + $0xb0] sm:$0xff]
      %v2346 = vld [vmem:[%s292 + $0xb8] sm:$0xff]
      %v2347 = vld [vmem:[%s292 + $0xc0] sm:$0xff]
      %v2348 = vld [vmem:[%s292 + $0xc8] sm:$0xff]
      %v2349 = vld [vmem:[%s292 + $0xd0] sm:$0xff]
      %v2350 = vld [vmem:[%s292 + $0xd8] sm:$0xff]
      %v2351 = vld [vmem:[%s292 + $0xe0] sm:$0xff]
      %v2352 = vld [vmem:[%s292 + $0xe8] sm:$0xff]
      %v2353 = vld [vmem:[%s292 + $0xf0] sm:$0xff]
      %v2354 = vld [vmem:[%s292 + $0xf8] sm:$0xff]
      %v2355 = vld [vmem:[%s300] sm:$0x1]
      %v2357 = vperm.slane %v2355, 0
      %v2359 = vmul.f32 %v2323, %v2357
      %v2360 = vmul.f32 %v2324, %v2357
      %v2361 = vmul.f32 %v2325, %v2357
      %v2362 = vmul.f32 %v2326, %v2357
      %v2363 = vmul.f32 %v2327, %v2357
      %v2364 = vmul.f32 %v2328, %v2357
      %v2365 = vmul.f32 %v2329, %v2357
      %v2366 = vmul.f32 %v2330, %v2357
      %v2367 = vmul.f32 %v2331, %v2357
      %v2368 = vmul.f32 %v2332, %v2357
      %v2369 = vmul.f32 %v2333, %v2357
      %v2370 = vmul.f32 %v2334, %v2357
      %v2371 = vmul.f32 %v2335, %v2357
      %v2372 = vmul.f32 %v2336, %v2357
      %v2373 = vmul.f32 %v2337, %v2357
      %v2374 = vmul.f32 %v2338, %v2357
      %v2375 = vmul.f32 %v2339, %v2357
      %v2376 = vmul.f32 %v2340, %v2357
      %v2377 = vmul.f32 %v2341, %v2357
      %v2378 = vmul.f32 %v2342, %v2357
      %v2379 = vmul.f32 %v2343, %v2357
      %v2380 = vmul.f32 %v2344, %v2357
      %v2381 = vmul.f32 %v2345, %v2357
      %v2382 = vmul.f32 %v2346, %v2357
      %v2383 = vmul.f32 %v2347, %v2357
      %v2384 = vmul.f32 %v2348, %v2357
      %v2385 = vmul.f32 %v2349, %v2357
      %v2386 = vmul.f32 %v2350, %v2357
      %v2387 = vmul.f32 %v2351, %v2357
      %v2388 = vmul.f32 %v2352, %v2357
      %v2389 = vmul.f32 %v2353, %v2357
      %v2390 = vmul.f32 %v2354, %v2357
      %v2391 = vadd.f32 %v2228, %v2359
      %v2392 = vadd.f32 %v2231, %v2360
      %v2393 = vadd.f32 %v2234, %v2361
      %v2394 = vadd.f32 %v2237, %v2362
      %v2395 = vadd.f32 %v2240, %v2363
      %v2396 = vadd.f32 %v2243, %v2364
      %v2397 = vadd.f32 %v2246, %v2365
      %v2398 = vadd.f32 %v2249, %v2366
      %v2399 = vadd.f32 %v2252, %v2367
      %v2400 = vadd.f32 %v2255, %v2368
      %v2401 = vadd.f32 %v2258, %v2369
      %v2402 = vadd.f32 %v2261, %v2370
      %v2403 = vadd.f32 %v2264, %v2371
      %v2404 = vadd.f32 %v2267, %v2372
      %v2405 = vadd.f32 %v2270, %v2373
      %v2406 = vadd.f32 %v2273, %v2374
      %v2407 = vadd.f32 %v2276, %v2375
      %v2408 = vadd.f32 %v2279, %v2376
      %v2409 = vadd.f32 %v2282, %v2377
      %v2410 = vadd.f32 %v2285, %v2378
      %v2411 = vadd.f32 %v2288, %v2379
      %v2412 = vadd.f32 %v2291, %v2380
      %v2413 = vadd.f32 %v2294, %v2381
      %v2414 = vadd.f32 %v2297, %v2382
      %v2415 = vadd.f32 %v2300, %v2383
      %v2416 = vadd.f32 %v2303, %v2384
      %v2417 = vadd.f32 %v2306, %v2385
      %v2418 = vadd.f32 %v2309, %v2386
      %v2419 = vadd.f32 %v2312, %v2387
      %v2420 = vadd.f32 %v2315, %v2388
      %v2421 = vadd.f32 %v2318, %v2389
      %v2422 = vadd.f32 %v2321, %v2390
      %vm2423 = vcmp.gt.f32.partialorder %v2391, 0.0
      %vm2424 = vcmp.gt.f32.partialorder %v2392, 0.0
      %vm2425 = vcmp.gt.f32.partialorder %v2393, 0.0
      %vm2426 = vcmp.gt.f32.partialorder %v2394, 0.0
      %vm2427 = vcmp.gt.f32.partialorder %v2395, 0.0
      %vm2428 = vcmp.gt.f32.partialorder %v2396, 0.0
      %vm2429 = vcmp.gt.f32.partialorder %v2397, 0.0
      %vm2430 = vcmp.gt.f32.partialorder %v2398, 0.0
      %vm2431 = vcmp.gt.f32.partialorder %v2399, 0.0
      %vm2432 = vcmp.gt.f32.partialorder %v2400, 0.0
      %vm2433 = vcmp.gt.f32.partialorder %v2401, 0.0
      %vm2434 = vcmp.gt.f32.partialorder %v2402, 0.0
      %vm2435 = vcmp.gt.f32.partialorder %v2403, 0.0
      %vm2436 = vcmp.gt.f32.partialorder %v2404, 0.0
      %vm2437 = vcmp.gt.f32.partialorder %v2405, 0.0
      %vm2438 = vcmp.gt.f32.partialorder %v2406, 0.0
      %vm2439 = vcmp.gt.f32.partialorder %v2407, 0.0
      %vm2440 = vcmp.gt.f32.partialorder %v2408, 0.0
      %vm2441 = vcmp.gt.f32.partialorder %v2409, 0.0
      %vm2442 = vcmp.gt.f32.partialorder %v2410, 0.0
      %vm2443 = vcmp.gt.f32.partialorder %v2411, 0.0
      %vm2444 = vcmp.gt.f32.partialorder %v2412, 0.0
      %vm2445 = vcmp.gt.f32.partialorder %v2413, 0.0
      %vm2446 = vcmp.gt.f32.partialorder %v2414, 0.0
      %vm2447 = vcmp.gt.f32.partialorder %v2415, 0.0
      %vm2448 = vcmp.gt.f32.partialorder %v2416, 0.0
      %vm2449 = vcmp.gt.f32.partialorder %v2417, 0.0
      %vm2450 = vcmp.gt.f32.partialorder %v2418, 0.0
      %vm2451 = vcmp.gt.f32.partialorder %v2419, 0.0
      %vm2452 = vcmp.gt.f32.partialorder %v2420, 0.0
      %vm2453 = vcmp.gt.f32.partialorder %v2421, 0.0
      %vm2454 = vcmp.gt.f32.partialorder %v2422, 0.0
      %v2455 = vmul.f32 %v2391, 0.1
      %v2456 = vmul.f32 %v2392, 0.1
      %v2457 = vmul.f32 %v2393, 0.1
      %v2458 = vmul.f32 %v2394, 0.1
      %v2459 = vmul.f32 %v2395, 0.1
      %v2460 = vmul.f32 %v2396, 0.1
      %v2461 = vmul.f32 %v2397, 0.1
      %v2462 = vmul.f32 %v2398, 0.1
      %v2463 = vmul.f32 %v2399, 0.1
      %v2464 = vmul.f32 %v2400, 0.1
      %v2465 = vmul.f32 %v2401, 0.1
      %v2466 = vmul.f32 %v2402, 0.1
      %v2467 = vmul.f32 %v2403, 0.1
      %v2468 = vmul.f32 %v2404, 0.1
      %v2469 = vmul.f32 %v2405, 0.1
      %v2470 = vmul.f32 %v2406, 0.1
      %v2471 = vmul.f32 %v2407, 0.1
      %v2472 = vmul.f32 %v2408, 0.1
      %v2473 = vmul.f32 %v2409, 0.1
      %v2474 = vmul.f32 %v2410, 0.1
      %v2475 = vmul.f32 %v2411, 0.1
      %v2476 = vmul.f32 %v2412, 0.1
      %v2477 = vmul.f32 %v2413, 0.1
      %v2478 = vmul.f32 %v2414, 0.1
      %v2479 = vmul.f32 %v2415, 0.1
      %v2480 = vmul.f32 %v2416, 0.1
      %v2481 = vmul.f32 %v2417, 0.1
      %v2482 = vmul.f32 %v2418, 0.1
      %v2483 = vmul.f32 %v2419, 0.1
      %v2484 = vmul.f32 %v2420, 0.1
      %v2485 = vmul.f32 %v2421, 0.1
      %v2486 = vmul.f32 %v2422, 0.1
      %v2487 = vsel %vm2423, %v2391, %v2455
      %v2488 = vsel %vm2424, %v2392, %v2456
      %v2489 = vsel %vm2425, %v2393, %v2457
      %v2490 = vsel %vm2426, %v2394, %v2458
      %v2491 = vsel %vm2427, %v2395, %v2459
      %v2492 = vsel %vm2428, %v2396, %v2460
      %v2493 = vsel %vm2429, %v2397, %v2461
      %v2494 = vsel %vm2430, %v2398, %v2462
      %v2495 = vsel %vm2431, %v2399, %v2463
      %v2496 = vsel %vm2432, %v2400, %v2464
      %v2497 = vsel %vm2433, %v2401, %v2465
      %v2498 = vsel %vm2434, %v2402, %v2466
      %v2499 = vsel %vm2435, %v2403, %v2467
      %v2500 = vsel %vm2436, %v2404, %v2468
      %v2501 = vsel %vm2437, %v2405, %v2469
      %v2502 = vsel %vm2438, %v2406, %v2470
      %v2503 = vsel %vm2439, %v2407, %v2471
      %v2504 = vsel %vm2440, %v2408, %v2472
      %v2505 = vsel %vm2441, %v2409, %v2473
      %v2506 = vsel %vm2442, %v2410, %v2474
      %v2507 = vsel %vm2443, %v2411, %v2475
      %v2508 = vsel %vm2444, %v2412, %v2476
      %v2509 = vsel %vm2445, %v2413, %v2477
      %v2510 = vsel %vm2446, %v2414, %v2478
      %v2511 = vsel %vm2447, %v2415, %v2479
      %v2512 = vsel %vm2448, %v2416, %v2480
      %v2513 = vsel %vm2449, %v2417, %v2481
      %v2514 = vsel %vm2450, %v2418, %v2482
      %v2515 = vsel %vm2451, %v2419, %v2483
      %v2516 = vsel %vm2452, %v2420, %v2484
      %v2517 = vsel %vm2453, %v2421, %v2485
      %v2518 = vsel %vm2454, %v2422, %v2486
      %2519 = vst.msk [vmem:[%s305] sm:$0xff] %vm2113, %v2487
      %2520 = vst.msk [vmem:[%s305 + $0x8] sm:$0xff] %vm2113, %v2488
      %2521 = vst.msk [vmem:[%s305 + $0x10] sm:$0xff] %vm2113, %v2489
      %2522 = vst.msk [vmem:[%s305 + $0x18] sm:$0xff] %vm2113, %v2490
      %2523 = vst.msk [vmem:[%s305 + $0x20] sm:$0xff] %vm2113, %v2491
      %2524 = vst.msk [vmem:[%s305 + $0x28] sm:$0xff] %vm2113, %v2492
      %2525 = vst.msk [vmem:[%s305 + $0x30] sm:$0xff] %vm2113, %v2493
      %2526 = vst.msk [vmem:[%s305 + $0x38] sm:$0xff] %vm2113, %v2494
      %2527 = vst.msk [vmem:[%s305 + $0x40] sm:$0xff] %vm2113, %v2495
      %2528 = vst.msk [vmem:[%s305 + $0x48] sm:$0xff] %vm2113, %v2496
      %2529 = vst.msk [vmem:[%s305 + $0x50] sm:$0xff] %vm2113, %v2497
      %2530 = vst.msk [vmem:[%s305 + $0x58] sm:$0xff] %vm2113, %v2498
      %2531 = vst.msk [vmem:[%s305 + $0x60] sm:$0xff] %vm2113, %v2499
      %2532 = vst.msk [vmem:[%s305 + $0x68] sm:$0xff] %vm2113, %v2500
      %2533 = vst.msk [vmem:[%s305 + $0x70] sm:$0xff] %vm2113, %v2501
      %2534 = vst.msk [vmem:[%s305 + $0x78] sm:$0xff] %vm2113, %v2502
      %2535 = vst.msk [vmem:[%s305 + $0x80] sm:$0xff] %vm2113, %v2503
      %2536 = vst.msk [vmem:[%s305 + $0x88] sm:$0xff] %vm2113, %v2504
      %2537 = vst.msk [vmem:[%s305 + $0x90] sm:$0xff] %vm2113, %v2505
      %2538 = vst.msk [vmem:[%s305 + $0x98] sm:$0xff] %vm2113, %v2506
      %2539 = vst.msk [vmem:[%s305 + $0xa0] sm:$0xff] %vm2113, %v2507
      %2540 = vst.msk [vmem:[%s305 + $0xa8] sm:$0xff] %vm2113, %v2508
      %2541 = vst.msk [vmem:[%s305 + $0xb0] sm:$0xff] %vm2113, %v2509
      %2542 = vst.msk [vmem:[%s305 + $0xb8] sm:$0xff] %vm2113, %v2510
      %2543 = vst.msk [vmem:[%s305 + $0xc0] sm:$0xff] %vm2113, %v2511
      %2544 = vst.msk [vmem:[%s305 + $0xc8] sm:$0xff] %vm2113, %v2512
      %2545 = vst.msk [vmem:[%s305 + $0xd0] sm:$0xff] %vm2113, %v2513
      %2546 = vst.msk [vmem:[%s305 + $0xd8] sm:$0xff] %vm2113, %v2514
      %2547 = vst.msk [vmem:[%s305 + $0xe0] sm:$0xff] %vm2113, %v2515
      %2548 = vst.msk [vmem:[%s305 + $0xe8] sm:$0xff] %vm2113, %v2516
      %2549 = vst.msk [vmem:[%s305 + $0xf0] sm:$0xff] %vm2113, %v2517
      %2550 = vst.msk [vmem:[%s305 + $0xf8] sm:$0xff] %vm2113, %v2518
      %p2551 = scmp.lt.s32.totalorder %s17, 1
      %s2552 = scalar_select %p2551, %s17, 1
      %s2553 = smul.addr %s2552, 32
      %s2554 = smul.addr %s2553, 8
      %s2555 = scalar_lea.vmem %s6, %s2554
      // Predicated region
      $region45: #{dag_forward_pallas.9} parent=43 // pred_check
        %p2556 = pneg %p181
      $region46: #{dag_forward_pallas.9} parent=43 // pred_check_branch
        %2558 = sbr.rel (%p2556) target = $region48
      $region47: #{dag_forward_pallas.9} parent=43 // pred_region
        _
      $region48: #{dag_forward_pallas.9} parent=43 // pred_fallthru
        _
    $region44: #{dag_forward_pallas.9} parent=5 // pred_fallthru
      _
    %p2559 = scmp.le.s32.totalorder 2, %s12
    // Predicated region
    $region49: #{dag_forward_pallas.9} parent=5 // pred_check
      %p2560 = pneg %p2559
    $region50: #{dag_forward_pallas.9} parent=5 // pred_check_branch
      %2562 = sbr.rel (%p2560) target = $region52
    $region51: #{dag_forward_pallas.9} parent=5 // pred_region
      %s2563 = ssub.s32 %s12, 2
      // Predicated region
      $region53: #{dag_forward_pallas.9} parent=51 // pred_check
        %p2564 = pneg %p187
      $region54: #{dag_forward_pallas.9} parent=51 // pred_check_branch
        %2566 = sbr.rel (%p2564) target = $region56
      $region55: #{dag_forward_pallas.9} parent=51 // pred_region
        %p2567 = scmp.lt.s32.totalorder %s18, 1
        %s2568 = scalar_select %p2567, %s18, 1
        %s2569 = smul.addr %s2568, 32
        %s2570 = smul.addr %s2569, 8
        %s2571 = scalar_lea.vmem %s6, %s2570
      $region56: #{dag_forward_pallas.9} parent=51 // pred_fallthru
        _
    $region52: #{dag_forward_pallas.9} parent=5 // pred_fallthru
      _
  $region6: #{dag_forward_pallas.9} parent=0 // loop_footer
    %s16 = sadd.s32 1, %s12
  $region7: #{dag_forward_pallas.9} parent=0 // loop_footer_branch
    %11 = sbr.rel target = $region3
  $region8: #{dag_forward_pallas.9} parent=0 // loop_exit
    _

</llo_original>
